<compile_context>
chip_gen: v7x
topology: tpu7x:2x2x1
jax: 0.10.0
libtpu: 0.0.40
codegen_flags: <defaults>
</compile_context>

<pallas_src>
import jax
import jax.numpy as jnp
from jax.experimental import pallas as pl
from jax.experimental.pallas import tpu as pltpu

_SQRT2_INV = 0.7071067811865476
_LN_EPS = 1e-5  # torch.nn.LayerNorm default
_LANE = 128


# ---------------------------------------------------------------------------
# shared math helpers (used both inside the kernel and in the pure-JAX reference)
# ---------------------------------------------------------------------------
def _gelu(x):
    # exact (erf-based) GELU == torch.nn.GELU() default
    return 0.5 * x * (1.0 + jax.lax.erf(x * _SQRT2_INV))


def _ln_norm(x):
    # normalize over the last axis, biased variance, eps=1e-5, no affine
    mu = jnp.mean(x, axis=-1, keepdims=True)
    xc = x - mu
    var = jnp.mean(xc * xc, axis=-1, keepdims=True)
    return xc * jax.lax.rsqrt(var + _LN_EPS)


def _layernorm(x, gamma, beta):
    return _ln_norm(x) * gamma + beta


def _bf16_dot(a, b):
    # bf16 MXU inputs, f32 accumulation
    return jnp.dot(a.astype(jnp.bfloat16), b.astype(jnp.bfloat16),
                   preferred_element_type=jnp.float32)


# ---------------------------------------------------------------------------
# fused Pallas kernel: embed -> L mixer layers -> LN -> mean -> classifier
# ---------------------------------------------------------------------------
def _fused_mixer_kernel(x_ref, ew_ref, w1_ref, b1_ref, w2_ref, b2_ref,
                        w3_ref, w4_ref, vecc_ref, b3_ref, avg_ref, wc_ref,
                        bc_ref, o_ref):
    # x_ref : (TB*P, Din) bf16 patchified tokens of one batch tile
    # vecc_ref : (1+3L, C) f32 packed small vectors [emb_b, (g1, be1, b4) per layer]
    # b3_ref   : (L, H2) f32 channel-mixing hidden bias (LN2 affine pre-folded in)
    # o_ref : (TB, K_pad) lane-dense (128-multiple) padded logits
    num_layers = w1_ref.shape[0]

    # patch embedding: (TB*P, Din) @ (Din, C) + b
    x = _bf16_dot(x_ref[...], ew_ref[...]) + vecc_ref[0:1, :]      # (TB*P, C) f32

    for l in range(num_layers):   # static unroll; all weights already resident in VMEM
        r = 1 + 3 * l
        # --- token / patch mixing (MLP1), block-diagonal over the batch tile ---
        y = _layernorm(x, vecc_ref[r:r + 1, :], vecc_ref[r + 1:r + 2, :])   # (TB*P, C)
        h = _gelu(_bf16_dot(w1_ref[l], y) + b1_ref[l])             # (TB*H1, C)
        x = x + _bf16_dot(w2_ref[l], h) + b2_ref[l]                # (TB*P, C)

        # --- channel mixing (MLP2); LN2 affine folded into w3/b3 on the host ---
        y = _ln_norm(x)                                            # (TB*P, C)
        h = _gelu(_bf16_dot(y, w3_ref[l]) + b3_ref[l:l + 1, :])    # (TB*P, H2)
        x = x + _bf16_dot(h, w4_ref[l]) + vecc_ref[r + 2:r + 3, :] # (TB*P, C)

    # --- head: pre-head LN (affine + 1/P folded into wc/bc), patch-sum via MXU, classifier ---
    y = _ln_norm(x)                                                # (TB*P, C)
    s = _bf16_dot(avg_ref[...], y)                                 # (TB, C) per-sample patch sums
    o_ref[...] = _bf16_dot(s, wc_ref[...]) + bc_ref[...]           # (TB, K_pad)


# ---------------------------------------------------------------------------
# host-side packing / tiling helpers
# ---------------------------------------------------------------------------
def _weight_spec(shape, single_buffer):
    # grid-invariant (whole-array) block; index_map always returns block 0.
    nd = len(shape)
    index_map = lambda n, _nd=nd: (0,) * _nd
    if single_buffer and hasattr(pl, "Buffered"):
        # weights never change across grid steps -> single buffer halves their VMEM footprint
        return pl.BlockSpec(shape, index_map, pipeline_mode=pl.Buffered(1))
    return pl.BlockSpec(shape, index_map)


def _pick_batch_tile(n, p, h1, requested=None):
    """Per-generation batch tile: fill the MXU tile (128 rows on <=v5e, 256 on v6e/v7x),
    keep >=2 grid steps on v7x (2 TensorCores), stay a multiple of 8, and cap TB so the
    kron'd token-mixing weights (which grow as TB^2) stay small."""
    if requested is not None:
        tb = int(requested)
    else:
        kind = ""
        try:
            kind = jax.devices()[0].device_kind.lower()
        except Exception:
            pass
        target_rows = 256 if ("v6" in kind or "v7" in kind) else 128
        tb = max(8, target_rows // max(p, h1, 1))
        if "v7" in kind:
            # keep at least two "parallel" grid steps so both TensorCores get work
            half = max(8, (n // 2 // 8) * 8) if n >= 16 else 8
            tb = min(tb, half)
    tb = max(8, (tb // 8) * 8)
    return min(tb, 64)


def _padded_nbytes(a):
    s = a.shape
    lanes = -(-s[-1] // _LANE) * _LANE
    sub = -(-(s[-2] if a.ndim > 1 else 1) // 8) * 8
    lead = 1
    for d in s[:-2]:
        lead *= int(d)
    return lead * sub * lanes * a.dtype.itemsize


def _pack_params(params, tb, num_patches):
    """Re-layout canonical params for the fused kernel: bf16 matmul weights, per-layer stacks,
    TB-block-diagonal token-mixing weights, LN-affine / 1/P folding, packed small vectors,
    lane-padded (128) classifier."""
    bf16 = jnp.bfloat16
    eye = jnp.eye(tb, dtype=jnp.float32)
    layers = params["layers"]

    w1s = jnp.stack([jnp.kron(eye, lp["w1"]) for lp in layers]).astype(bf16)  # (L, TB*H1, TB*P)
    w2s = jnp.stack([jnp.kron(eye, lp["w2"]) for lp in layers]).astype(bf16)  # (L, TB*P, TB*H1)
    b1s = jnp.stack([jnp.tile(lp["b1"], (tb, 1)) for lp in layers])           # (L, TB*H1, 1)
    b2s = jnp.stack([jnp.tile(lp["b2"], (tb, 1)) for lp in layers])           # (L, TB*P, 1)

    # channel-mixing LN affine folded into w3/b3:  (xn*g + b) @ W == xn @ (g^T . W) + b @ W
    w3s = jnp.stack([lp["g2"].reshape(-1, 1) * lp["w3"] for lp in layers]).astype(bf16)  # (L, C, H2)
    b3s = jnp.concatenate([lp["b3"] + lp["be2"] @ lp["w3"] for lp in layers], axis=0)    # (L, H2)
    w4s = jnp.stack([lp["w4"] for lp in layers]).astype(bf16)                            # (L, H2, C)

    # small C-lane vectors packed into one array: [emb_b, (g1, be1, b4) per layer]
    rows = [params["emb_b"]]
    for lp in layers:
        rows += [lp["g1"], lp["be1"], lp["b4"]]
    vecc = jnp.concatenate(rows, axis=0)                                      # (1+3L, C)

    # per-sample SUM over patches as a block-diagonal all-ones matrix (exact in bf16);
    # the 1/P scale is folded into the classifier weight in f32 below.
    avg = jnp.kron(eye, jnp.ones((1, num_patches), jnp.float32)).astype(bf16)  # (TB, TB*P)

    # head LN affine + 1/P folded into classifier weight/bias, lane-padded to 128
    C, K = params["cls_w"].shape
    k_pad = -(-K // _LANE) * _LANE
    wc_eff = params["head_g"].reshape(-1, 1) * params["cls_w"] / float(num_patches)
    bc_eff = params["cls_b"] + params["head_b"] @ params["cls_w"]
    wc = jnp.zeros((C, k_pad), jnp.float32).at[:, :K].set(wc_eff).astype(bf16)
    bc = jnp.zeros((1, k_pad), jnp.float32).at[:, :K].set(bc_eff)

    args = (params["emb_w"].astype(bf16), w1s, b1s, w2s, b2s, w3s, w4s,
            vecc, b3s, avg, wc, bc)
    return args, K, k_pad


# ---------------------------------------------------------------------------
# pallas_call wrapper
# ---------------------------------------------------------------------------
def mlp_mixer_forward(params, x_img, t, *, t1, channels, patch_dim, batch_tile=None):
    x_tok = patchify(x_img, t, t1, channels, patch_dim)       # (N, P, Din)
    N, P, Din = x_tok.shape
    C = params["emb_w"].shape[1]
    H1 = params["layers"][0]["w1"].shape[0]
    H2 = params["layers"][0]["w3"].shape[1]

    tb = _pick_batch_tile(N, P, H1, batch_tile)
    n_pad = pl.cdiv(N, tb) * tb
    if n_pad != N:   # pad the batch so TB (a multiple of 8) always divides it
        x_tok = jnp.concatenate(
            [x_tok, jnp.zeros((n_pad - N, P, Din), x_tok.dtype)], axis=0)

    weight_args, K, k_pad = _pack_params(params, tb, P)
    # tokens-as-rows, 2-D, pre-cast to bf16 on the host (halves the per-step input DMA)
    x_rows = x_tok.reshape(n_pad * P, Din).astype(jnp.bfloat16)

    # static VMEM budget check (kron'd token-mixing weights grow as TB^2)
    pad_l = lambda v: -(-v // _LANE) * _LANE
    weights_b = sum(_padded_nbytes(a) for a in weight_args)
    act_b = (6 * tb * P * pad_l(max(C, H2)) + 2 * tb * H1 * pad_l(C)) * 4
    io_b = tb * P * pad_l(Din) * 2 + tb * k_pad * 4
    vmem_budget = 2 * (weights_b + io_b) + act_b
    assert vmem_budget < 48 * 1024 * 1024, (
        f"fused-mixer VMEM footprint ~{vmem_budget / 2**20:.1f} MiB too large for one "
        f"TensorCore; lower batch_tile")

    grid = (n_pad // tb,)
    out_shape = jax.ShapeDtypeStruct((n_pad, k_pad), jnp.float32)
    x_spec = pl.BlockSpec((tb * P, Din), lambda n: (n, 0))
    out_spec = pl.BlockSpec((tb, k_pad), lambda n: (n, 0))
    cparams = pltpu.CompilerParams(
        dimension_semantics=("parallel",),
        vmem_limit_bytes=int(min(96 * 2**20, max(32 * 2**20, 2 * vmem_budget))))

    def _run(single_buffer_weights):
        call = pl.pallas_call(
            _fused_mixer_kernel,
            out_shape=out_shape,
            grid=grid,
            in_specs=[x_spec] + [_weight_spec(a.shape, single_buffer_weights)
                                 for a in weight_args],
            out_specs=out_spec,
            compiler_params=cparams,
        )
        return call(x_rows, *weight_args)

    try:
        out_pad = jax.block_until_ready(_run(True))   # single-buffered resident weights
    except Exception:
        out_pad = _run(False)                          # fallback: default double buffering
    return out_pad[:N, :K]


# ---------------------------------------------------------------------------
# parameter init (deterministic, torch.nn.Linear-style uniform init) — canonical layout
# ---------------------------------------------------------------------------
def _linear_params(key, fan_in, fan_out):
    kw, kb = jax.random.split(key)
    bound = 1.0 / float(fan_in) ** 0.5
    w = jax.random.uniform(kw, (fan_out, fan_in), jnp.float32, -bound, bound)
    b = jax.random.uniform(kb, (fan_out,), jnp.float32, -bound, bound)
    return w, b


def init_params(key, *, channels, channel_dim, patch_dim, patch_mlp_dim,
                channel_mlp_dim, mixer_layer_num, class_num, num_patches):
    d_in = (channels + 1) * patch_dim * patch_dim
    keys = jax.random.split(key, 2 + mixer_layer_num)

    w_emb, b_emb = _linear_params(keys[0], d_in, channel_dim)
    params = {"emb_w": w_emb.T, "emb_b": b_emb[None, :], "layers": []}

    for i in range(mixer_layer_num):
        lk = jax.random.split(keys[2 + i], 4)
        w1, b1 = _linear_params(lk[0], num_patches, patch_mlp_dim)    # MLP1.linear1
        w2, b2 = _linear_params(lk[1], patch_mlp_dim, num_patches)    # MLP1.linear2
        w3, b3 = _linear_params(lk[2], channel_dim, channel_mlp_dim)  # MLP2.linear1
        w4, b4 = _linear_params(lk[3], channel_mlp_dim, channel_dim)  # MLP2.linear2
        params["layers"].append(dict(
            g1=jnp.ones((1, channel_dim), jnp.float32),
            be1=jnp.zeros((1, channel_dim), jnp.float32),
            w1=w1, b1=b1[:, None],            # (H1, P), (H1, 1)
            w2=w2, b2=b2[:, None],            # (P, H1), (P, 1)
            g2=jnp.ones((1, channel_dim), jnp.float32),
            be2=jnp.zeros((1, channel_dim), jnp.float32),
            w3=w3.T, b3=b3[None, :],          # (C, H2), (1, H2)
            w4=w4.T, b4=b4[None, :],          # (H2, C), (1, C)
        ))

    wc, bc = _linear_params(keys[1], channel_dim, class_num)
    params["head_g"] = jnp.ones((1, channel_dim), jnp.float32)
    params["head_b"] = jnp.zeros((1, channel_dim), jnp.float32)
    params["cls_w"] = wc.T            # (C, K)
    params["cls_b"] = bc[None, :]     # (1, K)
    return params


# ---------------------------------------------------------------------------
# plain-JAX glue: time channel + patchify (pure layout rearrange, like torch cat+rearrange)
# ---------------------------------------------------------------------------
def patchify(x_img, t, t1, channels, patch_dim):
    N, C, W, H = x_img.shape
    tmap = jnp.full((N, 1, W, H), jnp.float32(t) / jnp.float32(t1), dtype=jnp.float32)
    x = jnp.concatenate([x_img.astype(jnp.float32), tmap], axis=1)    # (N, C+1, W, H)
    p = patch_dim
    x = x.reshape(N, C + 1, W // p, p, H // p, p)
    x = x.transpose(0, 2, 4, 1, 3, 5)                                  # n w h c p1 p2
    return x.reshape(N, (W // p) * (H // p), (C + 1) * p * p)


# pure-JAX reference (same math as the torch module, no Pallas); matmul_dtype=bf16 mimics the
# kernel's MXU-input casts, matmul_dtype=f32 is the exact module semantics.
def _ref_forward(params, x_img, t, *, t1, channels, patch_dim, matmul_dtype=jnp.float32):
    md = matmul_dtype
    cast = lambda a: a.astype(md)
    dot = lambda a, b, eq: jnp.einsum(eq, cast(a), cast(b),
                                      preferred_element_type=jnp.float32)
    x = patchify(x_img, t, t1, channels, patch_dim)
    x = dot(x, params["emb_w"], "npd,dc->npc") + params["emb_b"]
    for lp in params["layers"]:
        y = _layernorm(x, lp["g1"], lp["be1"])
        h = _gelu(dot(lp["w1"], y, "hp,npc->nhc") + lp["b1"][None])
        x = x + dot(lp["w2"], h, "ph,nhc->npc") + lp["b2"][None]
        y = _layernorm(x, lp["g2"], lp["be2"])
        h = _gelu(dot(y, lp["w3"], "npc,ch->nph") + lp["b3"])
        x = x + dot(h, lp["w4"], "nph,hc->npc") + lp["b4"]
    y = _layernorm(x, params["head_g"], params["head_b"])
    m = jnp.mean(cast(y).astype(jnp.float32), axis=1)
    return dot(m, params["cls_w"], "nc,ck->nk") + params["cls_b"]


if __name__ == "__main__":
    # MNIST-ish config: 16x16 grayscale, 4x4 patches -> 16 patches of dim 32
    image_width = image_height = 16
    channels = 1
    channel_dim = 32
    patch_dim = 4
    patch_mlp_dim = 16
    channel_mlp_dim = 64
    mixer_layer_num = 2
    class_num = 10
    t1 = 1.0
    batch = 16           # TB auto-picked per TPU generation (8 on v5e/v7x, 16 on v6e)
    num_patches = image_width * image_height // patch_dim ** 2

    key = jax.random.PRNGKey(0)
    kp, kx = jax.random.split(key)
    params = init_params(kp, channels=channels, channel_dim=channel_dim,
                         patch_dim=patch_dim, patch_mlp_dim=patch_mlp_dim,
                         channel_mlp_dim=channel_mlp_dim,
                         mixer_layer_num=mixer_layer_num, class_num=class_num,
                         num_patches=num_patches)
    x = jax.random.normal(kx, (batch, channels, image_width, image_height), jnp.float32)
    t = 0.5

    out = mlp_mixer_forward(params, x, t, t1=t1, channels=channels,
                            patch_dim=patch_dim, batch_tile=None)
    out = jax.block_until_ready(out)
    assert out.shape == (batch, class_num), out.shape

    # logic check: reference with the same bf16 matmul casts -> should match very tightly
    ref_bf16 = _ref_forward(params, x, t, t1=t1, channels=channels,
                            patch_dim=patch_dim, matmul_dtype=jnp.bfloat16)
    assert jnp.allclose(out, ref_bf16, rtol=5e-3, atol=5e-3), (out, ref_bf16)

    # semantics check: full-f32 reference (module math) within bf16-matmul tolerance
    ref_f32 = _ref_forward(params, x, t, t1=t1, channels=channels,
                           patch_dim=patch_dim, matmul_dtype=jnp.float32)
    assert jnp.allclose(out, ref_f32, rtol=3e-2, atol=3e-2), (out, ref_f32)

    print("KERNEL_OK")
</pallas_src>

<mosaic_0001>
module attributes {stable_mosaic.version = 11 : i64} {
  func.func @_fused_mixer_kernel(%arg0: i32, %arg1: memref<128x32xbf16, #tpu.memory_space<vmem>>, %arg2: memref<32x32xbf16, #tpu.memory_space<vmem>>, %arg3: memref<2x128x128xbf16, #tpu.memory_space<vmem>>, %arg4: memref<2x128x1xf32, #tpu.memory_space<vmem>>, %arg5: memref<2x128x128xbf16, #tpu.memory_space<vmem>>, %arg6: memref<2x128x1xf32, #tpu.memory_space<vmem>>, %arg7: memref<2x32x64xbf16, #tpu.memory_space<vmem>>, %arg8: memref<2x64x32xbf16, #tpu.memory_space<vmem>>, %arg9: memref<7x32xf32, #tpu.memory_space<vmem>>, %arg10: memref<2x64xf32, #tpu.memory_space<vmem>>, %arg11: memref<8x128xbf16, #tpu.memory_space<vmem>>, %arg12: memref<32x128xbf16, #tpu.memory_space<vmem>>, %arg13: memref<1x128xf32, #tpu.memory_space<vmem>>, %arg14: memref<8x128xf32, #tpu.memory_space<vmem>>) attributes {dimension_semantics = [#tpu.dimension_semantics<parallel>], iteration_bounds = array<i64: 2>, scalar_prefetch = 0 : i64, scratch_operands = 0 : i64, tpu.core_type = #tpu.core_type<tc>, window_params = [{transform_indices = @transform_0, window_bounds = array<i64: 128, 32>}, {pipeline_mode = #tpu.pipeline_mode<synchronous>, transform_indices = @transform_1, window_bounds = array<i64: 32, 32>}, {pipeline_mode = #tpu.pipeline_mode<synchronous>, transform_indices = @transform_2, window_bounds = array<i64: 2, 128, 128>}, {pipeline_mode = #tpu.pipeline_mode<synchronous>, transform_indices = @transform_3, window_bounds = array<i64: 2, 128, 1>}, {pipeline_mode = #tpu.pipeline_mode<synchronous>, transform_indices = @transform_4, window_bounds = array<i64: 2, 128, 128>}, {pipeline_mode = #tpu.pipeline_mode<synchronous>, transform_indices = @transform_5, window_bounds = array<i64: 2, 128, 1>}, {pipeline_mode = #tpu.pipeline_mode<synchronous>, transform_indices = @transform_6, window_bounds = array<i64: 2, 32, 64>}, {pipeline_mode = #tpu.pipeline_mode<synchronous>, transform_indices = @transform_7, window_bounds = array<i64: 2, 64, 32>}, {pipeline_mode = #tpu.pipeline_mode<synchronous>, transform_indices = @transform_8, window_bounds = array<i64: 7, 32>}, {pipeline_mode = #tpu.pipeline_mode<synchronous>, transform_indices = @transform_9, window_bounds = array<i64: 2, 64>}, {pipeline_mode = #tpu.pipeline_mode<synchronous>, transform_indices = @transform_10, window_bounds = array<i64: 8, 128>}, {pipeline_mode = #tpu.pipeline_mode<synchronous>, transform_indices = @transform_11, window_bounds = array<i64: 32, 128>}, {pipeline_mode = #tpu.pipeline_mode<synchronous>, transform_indices = @transform_12, window_bounds = array<i64: 1, 128>}, {transform_indices = @transform_13, window_bounds = array<i64: 8, 128>}]} {
    %c0 = arith.constant 0 : index
    %c0_0 = arith.constant 0 : index
    %0 = vector.load %arg1[%c0, %c0_0] : memref<128x32xbf16, #tpu.memory_space<vmem>>, vector<128x32xbf16>
    %c0_1 = arith.constant 0 : index
    %c0_2 = arith.constant 0 : index
    %1 = vector.load %arg2[%c0_1, %c0_2] : memref<32x32xbf16, #tpu.memory_space<vmem>>, vector<32x32xbf16>
    %cst = arith.constant dense<0.000000e+00> : vector<128x32xf32>
    %2 = tpu.matmul %0, %1, %cst {dimension_numbers = #tpu.dot_dimension_numbers<[1], [0], [0], [1], [0, 0, 1, 1], [], []>} : vector<128x32xbf16>, vector<32x32xbf16>, vector<128x32xf32> -> vector<128x32xf32>
    %c0_3 = arith.constant 0 : index
    %c0_4 = arith.constant 0 : index
    %3 = vector.load %arg9[%c0_3, %c0_4] : memref<7x32xf32, #tpu.memory_space<vmem>>, vector<1x32xf32>
    %4 = vector.broadcast %3 : vector<1x32xf32> to vector<128x32xf32>
    %5 = arith.addf %2, %4 : vector<128x32xf32>
    %c1 = arith.constant 1 : index
    %c0_5 = arith.constant 0 : index
    %6 = vector.load %arg9[%c1, %c0_5] : memref<7x32xf32, #tpu.memory_space<vmem>>, vector<1x32xf32>
    %c2 = arith.constant 2 : index
    %c0_6 = arith.constant 0 : index
    %7 = vector.load %arg9[%c2, %c0_6] : memref<7x32xf32, #tpu.memory_space<vmem>>, vector<1x32xf32>
    %cst_7 = arith.constant dense<0.000000e+00> : vector<128xf32>
    %8 = vector.multi_reduction <add>, %5, %cst_7 [1] : vector<128x32xf32> to vector<128xf32>
    %9 = vector.shape_cast %8 : vector<128xf32> to vector<128x1xf32>
    %cst_8 = arith.constant 3.200000e+01 : f32
    %10 = vector.broadcast %cst_8 : f32 to vector<128x1xf32>
    %11 = arith.divf %9, %10 : vector<128x1xf32>
    %12 = vector.broadcast %11 : vector<128x1xf32> to vector<128x32xf32>
    %13 = arith.subf %5, %12 : vector<128x32xf32>
    %14 = arith.mulf %13, %13 : vector<128x32xf32>
    %cst_9 = arith.constant dense<0.000000e+00> : vector<128xf32>
    %15 = vector.multi_reduction <add>, %14, %cst_9 [1] : vector<128x32xf32> to vector<128xf32>
    %16 = vector.shape_cast %15 : vector<128xf32> to vector<128x1xf32>
    %cst_10 = arith.constant 3.200000e+01 : f32
    %17 = vector.broadcast %cst_10 : f32 to vector<128x1xf32>
    %18 = arith.divf %16, %17 : vector<128x1xf32>
    %cst_11 = arith.constant 9.99999974E-6 : f32
    %19 = vector.broadcast %cst_11 : f32 to vector<128x1xf32>
    %20 = arith.addf %18, %19 : vector<128x1xf32>
    %21 = math.rsqrt %20 : vector<128x1xf32>
    %22 = vector.broadcast %21 : vector<128x1xf32> to vector<128x32xf32>
    %23 = arith.mulf %13, %22 : vector<128x32xf32>
    %24 = vector.broadcast %6 : vector<1x32xf32> to vector<128x32xf32>
    %25 = arith.mulf %23, %24 : vector<128x32xf32>
    %26 = vector.broadcast %7 : vector<1x32xf32> to vector<128x32xf32>
    %27 = arith.addf %25, %26 : vector<128x32xf32>
    %c0_12 = arith.constant 0 : index
    %c0_13 = arith.constant 0 : index
    %c0_14 = arith.constant 0 : index
    %28 = vector.load %arg3[%c0_12, %c0_13, %c0_14] : memref<2x128x128xbf16, #tpu.memory_space<vmem>>, vector<1x128x128xbf16>
    %29 = vector.shape_cast %28 : vector<1x128x128xbf16> to vector<128x128xbf16>
    %30 = arith.truncf %27 : vector<128x32xf32> to vector<128x32xbf16>
    %cst_15 = arith.constant dense<0.000000e+00> : vector<128x32xf32>
    %31 = tpu.matmul %29, %30, %cst_15 {dimension_numbers = #tpu.dot_dimension_numbers<[1], [0], [0], [1], [0, 0, 1, 1], [], []>} : vector<128x128xbf16>, vector<128x32xbf16>, vector<128x32xf32> -> vector<128x32xf32>
    %c0_16 = arith.constant 0 : index
    %c0_17 = arith.constant 0 : index
    %c0_18 = arith.constant 0 : index
    %32 = vector.load %arg4[%c0_16, %c0_17, %c0_18] : memref<2x128x1xf32, #tpu.memory_space<vmem>>, vector<1x128x1xf32>
    %33 = vector.shape_cast %32 : vector<1x128x1xf32> to vector<128x1xf32>
    %34 = vector.broadcast %33 : vector<128x1xf32> to vector<128x32xf32>
    %35 = arith.addf %31, %34 : vector<128x32xf32>
    %cst_19 = arith.constant 5.000000e-01 : f32
    %36 = vector.broadcast %cst_19 : f32 to vector<128x32xf32>
    %37 = arith.mulf %36, %35 : vector<128x32xf32>
    %cst_20 = arith.constant 0.707106769 : f32
    %38 = vector.broadcast %cst_20 : f32 to vector<128x32xf32>
    %39 = arith.mulf %35, %38 : vector<128x32xf32>
    %40 = math.erf %39 : vector<128x32xf32>
    %cst_21 = arith.constant 1.000000e+00 : f32
    %41 = vector.broadcast %cst_21 : f32 to vector<128x32xf32>
    %42 = arith.addf %41, %40 : vector<128x32xf32>
    %43 = arith.mulf %37, %42 : vector<128x32xf32>
    %c0_22 = arith.constant 0 : index
    %c0_23 = arith.constant 0 : index
    %c0_24 = arith.constant 0 : index
    %44 = vector.load %arg5[%c0_22, %c0_23, %c0_24] : memref<2x128x128xbf16, #tpu.memory_space<vmem>>, vector<1x128x128xbf16>
    %45 = vector.shape_cast %44 : vector<1x128x128xbf16> to vector<128x128xbf16>
    %46 = arith.truncf %43 : vector<128x32xf32> to vector<128x32xbf16>
    %cst_25 = arith.constant dense<0.000000e+00> : vector<128x32xf32>
    %47 = tpu.matmul %45, %46, %cst_25 {dimension_numbers = #tpu.dot_dimension_numbers<[1], [0], [0], [1], [0, 0, 1, 1], [], []>} : vector<128x128xbf16>, vector<128x32xbf16>, vector<128x32xf32> -> vector<128x32xf32>
    %48 = arith.addf %5, %47 : vector<128x32xf32>
    %c0_26 = arith.constant 0 : index
    %c0_27 = arith.constant 0 : index
    %c0_28 = arith.constant 0 : index
    %49 = vector.load %arg6[%c0_26, %c0_27, %c0_28] : memref<2x128x1xf32, #tpu.memory_space<vmem>>, vector<1x128x1xf32>
    %50 = vector.shape_cast %49 : vector<1x128x1xf32> to vector<128x1xf32>
    %51 = vector.broadcast %50 : vector<128x1xf32> to vector<128x32xf32>
    %52 = arith.addf %48, %51 : vector<128x32xf32>
    %cst_29 = arith.constant dense<0.000000e+00> : vector<128xf32>
    %53 = vector.multi_reduction <add>, %52, %cst_29 [1] : vector<128x32xf32> to vector<128xf32>
    %54 = vector.shape_cast %53 : vector<128xf32> to vector<128x1xf32>
    %cst_30 = arith.constant 3.200000e+01 : f32
    %55 = vector.broadcast %cst_30 : f32 to vector<128x1xf32>
    %56 = arith.divf %54, %55 : vector<128x1xf32>
    %57 = vector.broadcast %56 : vector<128x1xf32> to vector<128x32xf32>
    %58 = arith.subf %52, %57 : vector<128x32xf32>
    %59 = arith.mulf %58, %58 : vector<128x32xf32>
    %cst_31 = arith.constant dense<0.000000e+00> : vector<128xf32>
    %60 = vector.multi_reduction <add>, %59, %cst_31 [1] : vector<128x32xf32> to vector<128xf32>
    %61 = vector.shape_cast %60 : vector<128xf32> to vector<128x1xf32>
    %cst_32 = arith.constant 3.200000e+01 : f32
    %62 = vector.broadcast %cst_32 : f32 to vector<128x1xf32>
    %63 = arith.divf %61, %62 : vector<128x1xf32>
    %cst_33 = arith.constant 9.99999974E-6 : f32
    %64 = vector.broadcast %cst_33 : f32 to vector<128x1xf32>
    %65 = arith.addf %63, %64 : vector<128x1xf32>
    %66 = math.rsqrt %65 : vector<128x1xf32>
    %67 = vector.broadcast %66 : vector<128x1xf32> to vector<128x32xf32>
    %68 = arith.mulf %58, %67 : vector<128x32xf32>
    %c0_34 = arith.constant 0 : index
    %c0_35 = arith.constant 0 : index
    %c0_36 = arith.constant 0 : index
    %69 = vector.load %arg7[%c0_34, %c0_35, %c0_36] : memref<2x32x64xbf16, #tpu.memory_space<vmem>>, vector<1x32x64xbf16>
    %70 = vector.shape_cast %69 : vector<1x32x64xbf16> to vector<32x64xbf16>
    %71 = arith.truncf %68 : vector<128x32xf32> to vector<128x32xbf16>
    %cst_37 = arith.constant dense<0.000000e+00> : vector<128x64xf32>
    %72 = tpu.matmul %71, %70, %cst_37 {dimension_numbers = #tpu.dot_dimension_numbers<[1], [0], [0], [1], [0, 0, 1, 1], [], []>} : vector<128x32xbf16>, vector<32x64xbf16>, vector<128x64xf32> -> vector<128x64xf32>
    %c0_38 = arith.constant 0 : index
    %c0_39 = arith.constant 0 : index
    %73 = vector.load %arg10[%c0_38, %c0_39] : memref<2x64xf32, #tpu.memory_space<vmem>>, vector<1x64xf32>
    %74 = vector.broadcast %73 : vector<1x64xf32> to vector<128x64xf32>
    %75 = arith.addf %72, %74 : vector<128x64xf32>
    %cst_40 = arith.constant 5.000000e-01 : f32
    %76 = vector.broadcast %cst_40 : f32 to vector<128x64xf32>
    %77 = arith.mulf %76, %75 : vector<128x64xf32>
    %cst_41 = arith.constant 0.707106769 : f32
    %78 = vector.broadcast %cst_41 : f32 to vector<128x64xf32>
    %79 = arith.mulf %75, %78 : vector<128x64xf32>
    %80 = math.erf %79 : vector<128x64xf32>
    %cst_42 = arith.constant 1.000000e+00 : f32
    %81 = vector.broadcast %cst_42 : f32 to vector<128x64xf32>
    %82 = arith.addf %81, %80 : vector<128x64xf32>
    %83 = arith.mulf %77, %82 : vector<128x64xf32>
    %c0_43 = arith.constant 0 : index
    %c0_44 = arith.constant 0 : index
    %c0_45 = arith.constant 0 : index
    %84 = vector.load %arg8[%c0_43, %c0_44, %c0_45] : memref<2x64x32xbf16, #tpu.memory_space<vmem>>, vector<1x64x32xbf16>
    %85 = vector.shape_cast %84 : vector<1x64x32xbf16> to vector<64x32xbf16>
    %86 = arith.truncf %83 : vector<128x64xf32> to vector<128x64xbf16>
    %cst_46 = arith.constant dense<0.000000e+00> : vector<128x32xf32>
    %87 = tpu.matmul %86, %85, %cst_46 {dimension_numbers = #tpu.dot_dimension_numbers<[1], [0], [0], [1], [0, 0, 1, 1], [], []>} : vector<128x64xbf16>, vector<64x32xbf16>, vector<128x32xf32> -> vector<128x32xf32>
    %88 = arith.addf %52, %87 : vector<128x32xf32>
    %c3 = arith.constant 3 : index
    %c0_47 = arith.constant 0 : index
    %89 = vector.load %arg9[%c3, %c0_47] : memref<7x32xf32, #tpu.memory_space<vmem>>, vector<1x32xf32>
    %90 = vector.broadcast %89 : vector<1x32xf32> to vector<128x32xf32>
    %91 = arith.addf %88, %90 : vector<128x32xf32>
    %c4 = arith.constant 4 : index
    %c0_48 = arith.constant 0 : index
    %92 = vector.load %arg9[%c4, %c0_48] : memref<7x32xf32, #tpu.memory_space<vmem>>, vector<1x32xf32>
    %c5 = arith.constant 5 : index
    %c0_49 = arith.constant 0 : index
    %93 = vector.load %arg9[%c5, %c0_49] : memref<7x32xf32, #tpu.memory_space<vmem>>, vector<1x32xf32>
    %cst_50 = arith.constant dense<0.000000e+00> : vector<128xf32>
    %94 = vector.multi_reduction <add>, %91, %cst_50 [1] : vector<128x32xf32> to vector<128xf32>
    %95 = vector.shape_cast %94 : vector<128xf32> to vector<128x1xf32>
    %cst_51 = arith.constant 3.200000e+01 : f32
    %96 = vector.broadcast %cst_51 : f32 to vector<128x1xf32>
    %97 = arith.divf %95, %96 : vector<128x1xf32>
    %98 = vector.broadcast %97 : vector<128x1xf32> to vector<128x32xf32>
    %99 = arith.subf %91, %98 : vector<128x32xf32>
    %100 = arith.mulf %99, %99 : vector<128x32xf32>
    %cst_52 = arith.constant dense<0.000000e+00> : vector<128xf32>
    %101 = vector.multi_reduction <add>, %100, %cst_52 [1] : vector<128x32xf32> to vector<128xf32>
    %102 = vector.shape_cast %101 : vector<128xf32> to vector<128x1xf32>
    %cst_53 = arith.constant 3.200000e+01 : f32
    %103 = vector.broadcast %cst_53 : f32 to vector<128x1xf32>
    %104 = arith.divf %102, %103 : vector<128x1xf32>
    %cst_54 = arith.constant 9.99999974E-6 : f32
    %105 = vector.broadcast %cst_54 : f32 to vector<128x1xf32>
    %106 = arith.addf %104, %105 : vector<128x1xf32>
    %107 = math.rsqrt %106 : vector<128x1xf32>
    %108 = vector.broadcast %107 : vector<128x1xf32> to vector<128x32xf32>
    %109 = arith.mulf %99, %108 : vector<128x32xf32>
    %110 = vector.broadcast %92 : vector<1x32xf32> to vector<128x32xf32>
    %111 = arith.mulf %109, %110 : vector<128x32xf32>
    %112 = vector.broadcast %93 : vector<1x32xf32> to vector<128x32xf32>
    %113 = arith.addf %111, %112 : vector<128x32xf32>
    %c1_55 = arith.constant 1 : index
    %c0_56 = arith.constant 0 : index
    %c0_57 = arith.constant 0 : index
    %114 = vector.load %arg3[%c1_55, %c0_56, %c0_57] : memref<2x128x128xbf16, #tpu.memory_space<vmem>>, vector<1x128x128xbf16>
    %115 = vector.shape_cast %114 : vector<1x128x128xbf16> to vector<128x128xbf16>
    %116 = arith.truncf %113 : vector<128x32xf32> to vector<128x32xbf16>
    %cst_58 = arith.constant dense<0.000000e+00> : vector<128x32xf32>
    %117 = tpu.matmul %115, %116, %cst_58 {dimension_numbers = #tpu.dot_dimension_numbers<[1], [0], [0], [1], [0, 0, 1, 1], [], []>} : vector<128x128xbf16>, vector<128x32xbf16>, vector<128x32xf32> -> vector<128x32xf32>
    %c1_59 = arith.constant 1 : index
    %c0_60 = arith.constant 0 : index
    %c0_61 = arith.constant 0 : index
    %118 = vector.load %arg4[%c1_59, %c0_60, %c0_61] : memref<2x128x1xf32, #tpu.memory_space<vmem>>, vector<1x128x1xf32>
    %119 = vector.shape_cast %118 : vector<1x128x1xf32> to vector<128x1xf32>
    %120 = vector.broadcast %119 : vector<128x1xf32> to vector<128x32xf32>
    %121 = arith.addf %117, %120 : vector<128x32xf32>
    %cst_62 = arith.constant 5.000000e-01 : f32
    %122 = vector.broadcast %cst_62 : f32 to vector<128x32xf32>
    %123 = arith.mulf %122, %121 : vector<128x32xf32>
    %cst_63 = arith.constant 0.707106769 : f32
    %124 = vector.broadcast %cst_63 : f32 to vector<128x32xf32>
    %125 = arith.mulf %121, %124 : vector<128x32xf32>
    %126 = math.erf %125 : vector<128x32xf32>
    %cst_64 = arith.constant 1.000000e+00 : f32
    %127 = vector.broadcast %cst_64 : f32 to vector<128x32xf32>
    %128 = arith.addf %127, %126 : vector<128x32xf32>
    %129 = arith.mulf %123, %128 : vector<128x32xf32>
    %c1_65 = arith.constant 1 : index
    %c0_66 = arith.constant 0 : index
    %c0_67 = arith.constant 0 : index
    %130 = vector.load %arg5[%c1_65, %c0_66, %c0_67] : memref<2x128x128xbf16, #tpu.memory_space<vmem>>, vector<1x128x128xbf16>
    %131 = vector.shape_cast %130 : vector<1x128x128xbf16> to vector<128x128xbf16>
    %132 = arith.truncf %129 : vector<128x32xf32> to vector<128x32xbf16>
    %cst_68 = arith.constant dense<0.000000e+00> : vector<128x32xf32>
    %133 = tpu.matmul %131, %132, %cst_68 {dimension_numbers = #tpu.dot_dimension_numbers<[1], [0], [0], [1], [0, 0, 1, 1], [], []>} : vector<128x128xbf16>, vector<128x32xbf16>, vector<128x32xf32> -> vector<128x32xf32>
    %134 = arith.addf %91, %133 : vector<128x32xf32>
    %c1_69 = arith.constant 1 : index
    %c0_70 = arith.constant 0 : index
    %c0_71 = arith.constant 0 : index
    %135 = vector.load %arg6[%c1_69, %c0_70, %c0_71] : memref<2x128x1xf32, #tpu.memory_space<vmem>>, vector<1x128x1xf32>
    %136 = vector.shape_cast %135 : vector<1x128x1xf32> to vector<128x1xf32>
    %137 = vector.broadcast %136 : vector<128x1xf32> to vector<128x32xf32>
    %138 = arith.addf %134, %137 : vector<128x32xf32>
    %cst_72 = arith.constant dense<0.000000e+00> : vector<128xf32>
    %139 = vector.multi_reduction <add>, %138, %cst_72 [1] : vector<128x32xf32> to vector<128xf32>
    %140 = vector.shape_cast %139 : vector<128xf32> to vector<128x1xf32>
    %cst_73 = arith.constant 3.200000e+01 : f32
    %141 = vector.broadcast %cst_73 : f32 to vector<128x1xf32>
    %142 = arith.divf %140, %141 : vector<128x1xf32>
    %143 = vector.broadcast %142 : vector<128x1xf32> to vector<128x32xf32>
    %144 = arith.subf %138, %143 : vector<128x32xf32>
    %145 = arith.mulf %144, %144 : vector<128x32xf32>
    %cst_74 = arith.constant dense<0.000000e+00> : vector<128xf32>
    %146 = vector.multi_reduction <add>, %145, %cst_74 [1] : vector<128x32xf32> to vector<128xf32>
    %147 = vector.shape_cast %146 : vector<128xf32> to vector<128x1xf32>
    %cst_75 = arith.constant 3.200000e+01 : f32
    %148 = vector.broadcast %cst_75 : f32 to vector<128x1xf32>
    %149 = arith.divf %147, %148 : vector<128x1xf32>
    %cst_76 = arith.constant 9.99999974E-6 : f32
    %150 = vector.broadcast %cst_76 : f32 to vector<128x1xf32>
    %151 = arith.addf %149, %150 : vector<128x1xf32>
    %152 = math.rsqrt %151 : vector<128x1xf32>
    %153 = vector.broadcast %152 : vector<128x1xf32> to vector<128x32xf32>
    %154 = arith.mulf %144, %153 : vector<128x32xf32>
    %c1_77 = arith.constant 1 : index
    %c0_78 = arith.constant 0 : index
    %c0_79 = arith.constant 0 : index
    %155 = vector.load %arg7[%c1_77, %c0_78, %c0_79] : memref<2x32x64xbf16, #tpu.memory_space<vmem>>, vector<1x32x64xbf16>
    %156 = vector.shape_cast %155 : vector<1x32x64xbf16> to vector<32x64xbf16>
    %157 = arith.truncf %154 : vector<128x32xf32> to vector<128x32xbf16>
    %cst_80 = arith.constant dense<0.000000e+00> : vector<128x64xf32>
    %158 = tpu.matmul %157, %156, %cst_80 {dimension_numbers = #tpu.dot_dimension_numbers<[1], [0], [0], [1], [0, 0, 1, 1], [], []>} : vector<128x32xbf16>, vector<32x64xbf16>, vector<128x64xf32> -> vector<128x64xf32>
    %c1_81 = arith.constant 1 : index
    %c0_82 = arith.constant 0 : index
    %159 = vector.load %arg10[%c1_81, %c0_82] : memref<2x64xf32, #tpu.memory_space<vmem>>, vector<1x64xf32>
    %160 = vector.broadcast %159 : vector<1x64xf32> to vector<128x64xf32>
    %161 = arith.addf %158, %160 : vector<128x64xf32>
    %cst_83 = arith.constant 5.000000e-01 : f32
    %162 = vector.broadcast %cst_83 : f32 to vector<128x64xf32>
    %163 = arith.mulf %162, %161 : vector<128x64xf32>
    %cst_84 = arith.constant 0.707106769 : f32
    %164 = vector.broadcast %cst_84 : f32 to vector<128x64xf32>
    %165 = arith.mulf %161, %164 : vector<128x64xf32>
    %166 = math.erf %165 : vector<128x64xf32>
    %cst_85 = arith.constant 1.000000e+00 : f32
    %167 = vector.broadcast %cst_85 : f32 to vector<128x64xf32>
    %168 = arith.addf %167, %166 : vector<128x64xf32>
    %169 = arith.mulf %163, %168 : vector<128x64xf32>
    %c1_86 = arith.constant 1 : index
    %c0_87 = arith.constant 0 : index
    %c0_88 = arith.constant 0 : index
    %170 = vector.load %arg8[%c1_86, %c0_87, %c0_88] : memref<2x64x32xbf16, #tpu.memory_space<vmem>>, vector<1x64x32xbf16>
    %171 = vector.shape_cast %170 : vector<1x64x32xbf16> to vector<64x32xbf16>
    %172 = arith.truncf %169 : vector<128x64xf32> to vector<128x64xbf16>
    %cst_89 = arith.constant dense<0.000000e+00> : vector<128x32xf32>
    %173 = tpu.matmul %172, %171, %cst_89 {dimension_numbers = #tpu.dot_dimension_numbers<[1], [0], [0], [1], [0, 0, 1, 1], [], []>} : vector<128x64xbf16>, vector<64x32xbf16>, vector<128x32xf32> -> vector<128x32xf32>
    %174 = arith.addf %138, %173 : vector<128x32xf32>
    %c6 = arith.constant 6 : index
    %c0_90 = arith.constant 0 : index
    %175 = vector.load %arg9[%c6, %c0_90] : memref<7x32xf32, #tpu.memory_space<vmem>>, vector<1x32xf32>
    %176 = vector.broadcast %175 : vector<1x32xf32> to vector<128x32xf32>
    %177 = arith.addf %174, %176 : vector<128x32xf32>
    %cst_91 = arith.constant dense<0.000000e+00> : vector<128xf32>
    %178 = vector.multi_reduction <add>, %177, %cst_91 [1] : vector<128x32xf32> to vector<128xf32>
    %179 = vector.shape_cast %178 : vector<128xf32> to vector<128x1xf32>
    %cst_92 = arith.constant 3.200000e+01 : f32
    %180 = vector.broadcast %cst_92 : f32 to vector<128x1xf32>
    %181 = arith.divf %179, %180 : vector<128x1xf32>
    %182 = vector.broadcast %181 : vector<128x1xf32> to vector<128x32xf32>
    %183 = arith.subf %177, %182 : vector<128x32xf32>
    %184 = arith.mulf %183, %183 : vector<128x32xf32>
    %cst_93 = arith.constant dense<0.000000e+00> : vector<128xf32>
    %185 = vector.multi_reduction <add>, %184, %cst_93 [1] : vector<128x32xf32> to vector<128xf32>
    %186 = vector.shape_cast %185 : vector<128xf32> to vector<128x1xf32>
    %cst_94 = arith.constant 3.200000e+01 : f32
    %187 = vector.broadcast %cst_94 : f32 to vector<128x1xf32>
    %188 = arith.divf %186, %187 : vector<128x1xf32>
    %cst_95 = arith.constant 9.99999974E-6 : f32
    %189 = vector.broadcast %cst_95 : f32 to vector<128x1xf32>
    %190 = arith.addf %188, %189 : vector<128x1xf32>
    %191 = math.rsqrt %190 : vector<128x1xf32>
    %192 = vector.broadcast %191 : vector<128x1xf32> to vector<128x32xf32>
    %193 = arith.mulf %183, %192 : vector<128x32xf32>
    %c0_96 = arith.constant 0 : index
    %c0_97 = arith.constant 0 : index
    %194 = vector.load %arg11[%c0_96, %c0_97] : memref<8x128xbf16, #tpu.memory_space<vmem>>, vector<8x128xbf16>
    %195 = arith.truncf %193 : vector<128x32xf32> to vector<128x32xbf16>
    %cst_98 = arith.constant dense<0.000000e+00> : vector<8x32xf32>
    %196 = tpu.matmul %194, %195, %cst_98 {dimension_numbers = #tpu.dot_dimension_numbers<[1], [0], [0], [1], [0, 0, 1, 1], [], []>} : vector<8x128xbf16>, vector<128x32xbf16>, vector<8x32xf32> -> vector<8x32xf32>
    %c0_99 = arith.constant 0 : index
    %c0_100 = arith.constant 0 : index
    %197 = vector.load %arg12[%c0_99, %c0_100] : memref<32x128xbf16, #tpu.memory_space<vmem>>, vector<32x128xbf16>
    %198 = arith.truncf %196 : vector<8x32xf32> to vector<8x32xbf16>
    %cst_101 = arith.constant dense<0.000000e+00> : vector<8x128xf32>
    %199 = tpu.matmul %198, %197, %cst_101 {dimension_numbers = #tpu.dot_dimension_numbers<[1], [0], [0], [1], [0, 0, 1, 1], [], []>} : vector<8x32xbf16>, vector<32x128xbf16>, vector<8x128xf32> -> vector<8x128xf32>
    %c0_102 = arith.constant 0 : index
    %c0_103 = arith.constant 0 : index
    %200 = vector.load %arg13[%c0_102, %c0_103] : memref<1x128xf32, #tpu.memory_space<vmem>>, vector<1x128xf32>
    %201 = vector.broadcast %200 : vector<1x128xf32> to vector<8x128xf32>
    %202 = arith.addf %199, %201 : vector<8x128xf32>
    %c0_104 = arith.constant 0 : index
    %c0_105 = arith.constant 0 : index
    %203 = vector.load %arg14[%c0_104, %c0_105] : memref<8x128xf32, #tpu.memory_space<vmem>>, vector<8x128xf32>
    tpu.vector_store %arg14[%c0_104, %c0_105], %202 {strides = array<i32>} : memref<8x128xf32, #tpu.memory_space<vmem>>, vector<8x128xf32>,
    return
  }
  func.func @transform_0(%arg0: i32) -> (i32, i32) {
    %c0_i32 = arith.constant 0 : i32
    %c0_i32_0 = arith.constant 0 : i32
    return %arg0, %c0_i32 : i32, i32
  }
  func.func @transform_1(%arg0: i32) -> (i32, i32) {
    %c0_i32 = arith.constant 0 : i32
    %c0_i32_0 = arith.constant 0 : i32
    %c0_i32_1 = arith.constant 0 : i32
    return %c0_i32, %c0_i32_0 : i32, i32
  }
  func.func @transform_2(%arg0: i32) -> (i32, i32, i32) {
    %c0_i32 = arith.constant 0 : i32
    %c0_i32_0 = arith.constant 0 : i32
    %c0_i32_1 = arith.constant 0 : i32
    %c0_i32_2 = arith.constant 0 : i32
    return %c0_i32, %c0_i32_0, %c0_i32_1 : i32, i32, i32
  }
  func.func @transform_3(%arg0: i32) -> (i32, i32, i32) {
    %c0_i32 = arith.constant 0 : i32
    %c0_i32_0 = arith.constant 0 : i32
    %c0_i32_1 = arith.constant 0 : i32
    %c0_i32_2 = arith.constant 0 : i32
    return %c0_i32, %c0_i32_0, %c0_i32_1 : i32, i32, i32
  }
  func.func @transform_4(%arg0: i32) -> (i32, i32, i32) {
    %c0_i32 = arith.constant 0 : i32
    %c0_i32_0 = arith.constant 0 : i32
    %c0_i32_1 = arith.constant 0 : i32
    %c0_i32_2 = arith.constant 0 : i32
    return %c0_i32, %c0_i32_0, %c0_i32_1 : i32, i32, i32
  }
  func.func @transform_5(%arg0: i32) -> (i32, i32, i32) {
    %c0_i32 = arith.constant 0 : i32
    %c0_i32_0 = arith.constant 0 : i32
    %c0_i32_1 = arith.constant 0 : i32
    %c0_i32_2 = arith.constant 0 : i32
    return %c0_i32, %c0_i32_0, %c0_i32_1 : i32, i32, i32
  }
  func.func @transform_6(%arg0: i32) -> (i32, i32, i32) {
    %c0_i32 = arith.constant 0 : i32
    %c0_i32_0 = arith.constant 0 : i32
    %c0_i32_1 = arith.constant 0 : i32
    %c0_i32_2 = arith.constant 0 : i32
    return %c0_i32, %c0_i32_0, %c0_i32_1 : i32, i32, i32
  }
  func.func @transform_7(%arg0: i32) -> (i32, i32, i32) {
    %c0_i32 = arith.constant 0 : i32
    %c0_i32_0 = arith.constant 0 : i32
    %c0_i32_1 = arith.constant 0 : i32
    %c0_i32_2 = arith.constant 0 : i32
    return %c0_i32, %c0_i32_0, %c0_i32_1 : i32, i32, i32
  }
  func.func @transform_8(%arg0: i32) -> (i32, i32) {
    %c0_i32 = arith.constant 0 : i32
    %c0_i32_0 = arith.constant 0 : i32
    %c0_i32_1 = arith.constant 0 : i32
    return %c0_i32, %c0_i32_0 : i32, i32
  }
  func.func @transform_9(%arg0: i32) -> (i32, i32) {
    %c0_i32 = arith.constant 0 : i32
    %c0_i32_0 = arith.constant 0 : i32
    %c0_i32_1 = arith.constant 0 : i32
    return %c0_i32, %c0_i32_0 : i32, i32
  }
  func.func @transform_10(%arg0: i32) -> (i32, i32) {
    %c0_i32 = arith.constant 0 : i32
    %c0_i32_0 = arith.constant 0 : i32
    %c0_i32_1 = arith.constant 0 : i32
    return %c0_i32, %c0_i32_0 : i32, i32
  }
  func.func @transform_11(%arg0: i32) -> (i32, i32) {
    %c0_i32 = arith.constant 0 : i32
    %c0_i32_0 = arith.constant 0 : i32
    %c0_i32_1 = arith.constant 0 : i32
    return %c0_i32, %c0_i32_0 : i32, i32
  }
  func.func @transform_12(%arg0: i32) -> (i32, i32) {
    %c0_i32 = arith.constant 0 : i32
    %c0_i32_0 = arith.constant 0 : i32
    %c0_i32_1 = arith.constant 0 : i32
    return %c0_i32, %c0_i32_0 : i32, i32
  }
  func.func @transform_13(%arg0: i32) -> (i32, i32) {
    %c0_i32 = arith.constant 0 : i32
    %c0_i32_0 = arith.constant 0 : i32
    return %arg0, %c0_i32 : i32, i32
  }
}

module attributes {stable_mosaic.version = 11 : i64} {
  func.func @_fused_mixer_kernel(%arg0: i32, %arg1: memref<128x32xbf16, #tpu.memory_space<vmem>>, %arg2: memref<32x32xbf16, #tpu.memory_space<vmem>>, %arg3: memref<2x128x128xbf16, #tpu.memory_space<vmem>>, %arg4: memref<2x128x1xf32, #tpu.memory_space<vmem>>, %arg5: memref<2x128x128xbf16, #tpu.memory_space<vmem>>, %arg6: memref<2x128x1xf32, #tpu.memory_space<vmem>>, %arg7: memref<2x32x64xbf16, #tpu.memory_space<vmem>>, %arg8: memref<2x64x32xbf16, #tpu.memory_space<vmem>>, %arg9: memref<7x32xf32, #tpu.memory_space<vmem>>, %arg10: memref<2x64xf32, #tpu.memory_space<vmem>>, %arg11: memref<8x128xbf16, #tpu.memory_space<vmem>>, %arg12: memref<32x128xbf16, #tpu.memory_space<vmem>>, %arg13: memref<1x128xf32, #tpu.memory_space<vmem>>, %arg14: memref<8x128xf32, #tpu.memory_space<vmem>>) attributes {dimension_semantics = [#tpu.dimension_semantics<parallel>], iteration_bounds = array<i64: 2>, scalar_prefetch = 0 : i64, scratch_operands = 0 : i64, tpu.core_type = #tpu.core_type<tc>, window_params = [{transform_indices = @transform_0, window_bounds = array<i64: 128, 32>}, {pipeline_mode = #tpu.pipeline_mode<synchronous>, transform_indices = @transform_1, window_bounds = array<i64: 32, 32>}, {pipeline_mode = #tpu.pipeline_mode<synchronous>, transform_indices = @transform_2, window_bounds = array<i64: 2, 128, 128>}, {pipeline_mode = #tpu.pipeline_mode<synchronous>, transform_indices = @transform_3, window_bounds = array<i64: 2, 128, 1>}, {pipeline_mode = #tpu.pipeline_mode<synchronous>, transform_indices = @transform_4, window_bounds = array<i64: 2, 128, 128>}, {pipeline_mode = #tpu.pipeline_mode<synchronous>, transform_indices = @transform_5, window_bounds = array<i64: 2, 128, 1>}, {pipeline_mode = #tpu.pipeline_mode<synchronous>, transform_indices = @transform_6, window_bounds = array<i64: 2, 32, 64>}, {pipeline_mode = #tpu.pipeline_mode<synchronous>, transform_indices = @transform_7, window_bounds = array<i64: 2, 64, 32>}, {pipeline_mode = #tpu.pipeline_mode<synchronous>, transform_indices = @transform_8, window_bounds = array<i64: 7, 32>}, {pipeline_mode = #tpu.pipeline_mode<synchronous>, transform_indices = @transform_9, window_bounds = array<i64: 2, 64>}, {pipeline_mode = #tpu.pipeline_mode<synchronous>, transform_indices = @transform_10, window_bounds = array<i64: 8, 128>}, {pipeline_mode = #tpu.pipeline_mode<synchronous>, transform_indices = @transform_11, window_bounds = array<i64: 32, 128>}, {pipeline_mode = #tpu.pipeline_mode<synchronous>, transform_indices = @transform_12, window_bounds = array<i64: 1, 128>}, {transform_indices = @transform_13, window_bounds = array<i64: 8, 128>}]} {
    %c0 = arith.constant 0 : index
    %c0_0 = arith.constant 0 : index
    %0 = vector.load %arg1[%c0, %c0_0] : memref<128x32xbf16, #tpu.memory_space<vmem>>, vector<128x32xbf16>
    %c0_1 = arith.constant 0 : index
    %c0_2 = arith.constant 0 : index
    %1 = vector.load %arg2[%c0_1, %c0_2] : memref<32x32xbf16, #tpu.memory_space<vmem>>, vector<32x32xbf16>
    %cst = arith.constant dense<0.000000e+00> : vector<128x32xf32>
    %2 = tpu.matmul %0, %1, %cst {dimension_numbers = #tpu.dot_dimension_numbers<[1], [0], [0], [1], [0, 0, 1, 1], [], []>} : vector<128x32xbf16>, vector<32x32xbf16>, vector<128x32xf32> -> vector<128x32xf32>
    %c0_3 = arith.constant 0 : index
    %c0_4 = arith.constant 0 : index
    %3 = vector.load %arg9[%c0_3, %c0_4] : memref<7x32xf32, #tpu.memory_space<vmem>>, vector<1x32xf32>
    %4 = vector.broadcast %3 : vector<1x32xf32> to vector<128x32xf32>
    %5 = arith.addf %2, %4 : vector<128x32xf32>
    %c1 = arith.constant 1 : index
    %c0_5 = arith.constant 0 : index
    %6 = vector.load %arg9[%c1, %c0_5] : memref<7x32xf32, #tpu.memory_space<vmem>>, vector<1x32xf32>
    %c2 = arith.constant 2 : index
    %c0_6 = arith.constant 0 : index
    %7 = vector.load %arg9[%c2, %c0_6] : memref<7x32xf32, #tpu.memory_space<vmem>>, vector<1x32xf32>
    %cst_7 = arith.constant dense<0.000000e+00> : vector<128xf32>
    %8 = vector.multi_reduction <add>, %5, %cst_7 [1] : vector<128x32xf32> to vector<128xf32>
    %9 = vector.shape_cast %8 : vector<128xf32> to vector<128x1xf32>
    %cst_8 = arith.constant 3.200000e+01 : f32
    %10 = vector.broadcast %cst_8 : f32 to vector<128x1xf32>
    %11 = arith.divf %9, %10 : vector<128x1xf32>
    %12 = vector.broadcast %11 : vector<128x1xf32> to vector<128x32xf32>
    %13 = arith.subf %5, %12 : vector<128x32xf32>
    %14 = arith.mulf %13, %13 : vector<128x32xf32>
    %cst_9 = arith.constant dense<0.000000e+00> : vector<128xf32>
    %15 = vector.multi_reduction <add>, %14, %cst_9 [1] : vector<128x32xf32> to vector<128xf32>
    %16 = vector.shape_cast %15 : vector<128xf32> to vector<128x1xf32>
    %cst_10 = arith.constant 3.200000e+01 : f32
    %17 = vector.broadcast %cst_10 : f32 to vector<128x1xf32>
    %18 = arith.divf %16, %17 : vector<128x1xf32>
    %cst_11 = arith.constant 9.99999974E-6 : f32
    %19 = vector.broadcast %cst_11 : f32 to vector<128x1xf32>
    %20 = arith.addf %18, %19 : vector<128x1xf32>
    %21 = math.rsqrt %20 : vector<128x1xf32>
    %22 = vector.broadcast %21 : vector<128x1xf32> to vector<128x32xf32>
    %23 = arith.mulf %13, %22 : vector<128x32xf32>
    %24 = vector.broadcast %6 : vector<1x32xf32> to vector<128x32xf32>
    %25 = arith.mulf %23, %24 : vector<128x32xf32>
    %26 = vector.broadcast %7 : vector<1x32xf32> to vector<128x32xf32>
    %27 = arith.addf %25, %26 : vector<128x32xf32>
    %c0_12 = arith.constant 0 : index
    %c0_13 = arith.constant 0 : index
    %c0_14 = arith.constant 0 : index
    %28 = vector.load %arg3[%c0_12, %c0_13, %c0_14] : memref<2x128x128xbf16, #tpu.memory_space<vmem>>, vector<1x128x128xbf16>
    %29 = vector.shape_cast %28 : vector<1x128x128xbf16> to vector<128x128xbf16>
    %30 = arith.truncf %27 : vector<128x32xf32> to vector<128x32xbf16>
    %cst_15 = arith.constant dense<0.000000e+00> : vector<128x32xf32>
    %31 = tpu.matmul %29, %30, %cst_15 {dimension_numbers = #tpu.dot_dimension_numbers<[1], [0], [0], [1], [0, 0, 1, 1], [], []>} : vector<128x128xbf16>, vector<128x32xbf16>, vector<128x32xf32> -> vector<128x32xf32>
    %c0_16 = arith.constant 0 : index
    %c0_17 = arith.constant 0 : index
    %c0_18 = arith.constant 0 : index
    %32 = vector.load %arg4[%c0_16, %c0_17, %c0_18] : memref<2x128x1xf32, #tpu.memory_space<vmem>>, vector<1x128x1xf32>
    %33 = vector.shape_cast %32 : vector<1x128x1xf32> to vector<128x1xf32>
    %34 = vector.broadcast %33 : vector<128x1xf32> to vector<128x32xf32>
    %35 = arith.addf %31, %34 : vector<128x32xf32>
    %cst_19 = arith.constant 5.000000e-01 : f32
    %36 = vector.broadcast %cst_19 : f32 to vector<128x32xf32>
    %37 = arith.mulf %36, %35 : vector<128x32xf32>
    %cst_20 = arith.constant 0.707106769 : f32
    %38 = vector.broadcast %cst_20 : f32 to vector<128x32xf32>
    %39 = arith.mulf %35, %38 : vector<128x32xf32>
    %40 = math.erf %39 : vector<128x32xf32>
    %cst_21 = arith.constant 1.000000e+00 : f32
    %41 = vector.broadcast %cst_21 : f32 to vector<128x32xf32>
    %42 = arith.addf %41, %40 : vector<128x32xf32>
    %43 = arith.mulf %37, %42 : vector<128x32xf32>
    %c0_22 = arith.constant 0 : index
    %c0_23 = arith.constant 0 : index
    %c0_24 = arith.constant 0 : index
    %44 = vector.load %arg5[%c0_22, %c0_23, %c0_24] : memref<2x128x128xbf16, #tpu.memory_space<vmem>>, vector<1x128x128xbf16>
    %45 = vector.shape_cast %44 : vector<1x128x128xbf16> to vector<128x128xbf16>
    %46 = arith.truncf %43 : vector<128x32xf32> to vector<128x32xbf16>
    %cst_25 = arith.constant dense<0.000000e+00> : vector<128x32xf32>
    %47 = tpu.matmul %45, %46, %cst_25 {dimension_numbers = #tpu.dot_dimension_numbers<[1], [0], [0], [1], [0, 0, 1, 1], [], []>} : vector<128x128xbf16>, vector<128x32xbf16>, vector<128x32xf32> -> vector<128x32xf32>
    %48 = arith.addf %5, %47 : vector<128x32xf32>
    %c0_26 = arith.constant 0 : index
    %c0_27 = arith.constant 0 : index
    %c0_28 = arith.constant 0 : index
    %49 = vector.load %arg6[%c0_26, %c0_27, %c0_28] : memref<2x128x1xf32, #tpu.memory_space<vmem>>, vector<1x128x1xf32>
    %50 = vector.shape_cast %49 : vector<1x128x1xf32> to vector<128x1xf32>
    %51 = vector.broadcast %50 : vector<128x1xf32> to vector<128x32xf32>
    %52 = arith.addf %48, %51 : vector<128x32xf32>
    %cst_29 = arith.constant dense<0.000000e+00> : vector<128xf32>
    %53 = vector.multi_reduction <add>, %52, %cst_29 [1] : vector<128x32xf32> to vector<128xf32>
    %54 = vector.shape_cast %53 : vector<128xf32> to vector<128x1xf32>
    %cst_30 = arith.constant 3.200000e+01 : f32
    %55 = vector.broadcast %cst_30 : f32 to vector<128x1xf32>
    %56 = arith.divf %54, %55 : vector<128x1xf32>
    %57 = vector.broadcast %56 : vector<128x1xf32> to vector<128x32xf32>
    %58 = arith.subf %52, %57 : vector<128x32xf32>
    %59 = arith.mulf %58, %58 : vector<128x32xf32>
    %cst_31 = arith.constant dense<0.000000e+00> : vector<128xf32>
    %60 = vector.multi_reduction <add>, %59, %cst_31 [1] : vector<128x32xf32> to vector<128xf32>
    %61 = vector.shape_cast %60 : vector<128xf32> to vector<128x1xf32>
    %cst_32 = arith.constant 3.200000e+01 : f32
    %62 = vector.broadcast %cst_32 : f32 to vector<128x1xf32>
    %63 = arith.divf %61, %62 : vector<128x1xf32>
    %cst_33 = arith.constant 9.99999974E-6 : f32
    %64 = vector.broadcast %cst_33 : f32 to vector<128x1xf32>
    %65 = arith.addf %63, %64 : vector<128x1xf32>
    %66 = math.rsqrt %65 : vector<128x1xf32>
    %67 = vector.broadcast %66 : vector<128x1xf32> to vector<128x32xf32>
    %68 = arith.mulf %58, %67 : vector<128x32xf32>
    %c0_34 = arith.constant 0 : index
    %c0_35 = arith.constant 0 : index
    %c0_36 = arith.constant 0 : index
    %69 = vector.load %arg7[%c0_34, %c0_35, %c0_36] : memref<2x32x64xbf16, #tpu.memory_space<vmem>>, vector<1x32x64xbf16>
    %70 = vector.shape_cast %69 : vector<1x32x64xbf16> to vector<32x64xbf16>
    %71 = arith.truncf %68 : vector<128x32xf32> to vector<128x32xbf16>
    %cst_37 = arith.constant dense<0.000000e+00> : vector<128x64xf32>
    %72 = tpu.matmul %71, %70, %cst_37 {dimension_numbers = #tpu.dot_dimension_numbers<[1], [0], [0], [1], [0, 0, 1, 1], [], []>} : vector<128x32xbf16>, vector<32x64xbf16>, vector<128x64xf32> -> vector<128x64xf32>
    %c0_38 = arith.constant 0 : index
    %c0_39 = arith.constant 0 : index
    %73 = vector.load %arg10[%c0_38, %c0_39] : memref<2x64xf32, #tpu.memory_space<vmem>>, vector<1x64xf32>
    %74 = vector.broadcast %73 : vector<1x64xf32> to vector<128x64xf32>
    %75 = arith.addf %72, %74 : vector<128x64xf32>
    %cst_40 = arith.constant 5.000000e-01 : f32
    %76 = vector.broadcast %cst_40 : f32 to vector<128x64xf32>
    %77 = arith.mulf %76, %75 : vector<128x64xf32>
    %cst_41 = arith.constant 0.707106769 : f32
    %78 = vector.broadcast %cst_41 : f32 to vector<128x64xf32>
    %79 = arith.mulf %75, %78 : vector<128x64xf32>
    %80 = math.erf %79 : vector<128x64xf32>
    %cst_42 = arith.constant 1.000000e+00 : f32
    %81 = vector.broadcast %cst_42 : f32 to vector<128x64xf32>
    %82 = arith.addf %81, %80 : vector<128x64xf32>
    %83 = arith.mulf %77, %82 : vector<128x64xf32>
    %c0_43 = arith.constant 0 : index
    %c0_44 = arith.constant 0 : index
    %c0_45 = arith.constant 0 : index
    %84 = vector.load %arg8[%c0_43, %c0_44, %c0_45] : memref<2x64x32xbf16, #tpu.memory_space<vmem>>, vector<1x64x32xbf16>
    %85 = vector.shape_cast %84 : vector<1x64x32xbf16> to vector<64x32xbf16>
    %86 = arith.truncf %83 : vector<128x64xf32> to vector<128x64xbf16>
    %cst_46 = arith.constant dense<0.000000e+00> : vector<128x32xf32>
    %87 = tpu.matmul %86, %85, %cst_46 {dimension_numbers = #tpu.dot_dimension_numbers<[1], [0], [0], [1], [0, 0, 1, 1], [], []>} : vector<128x64xbf16>, vector<64x32xbf16>, vector<128x32xf32> -> vector<128x32xf32>
    %88 = arith.addf %52, %87 : vector<128x32xf32>
    %c3 = arith.constant 3 : index
    %c0_47 = arith.constant 0 : index
    %89 = vector.load %arg9[%c3, %c0_47] : memref<7x32xf32, #tpu.memory_space<vmem>>, vector<1x32xf32>
    %90 = vector.broadcast %89 : vector<1x32xf32> to vector<128x32xf32>
    %91 = arith.addf %88, %90 : vector<128x32xf32>
    %c4 = arith.constant 4 : index
    %c0_48 = arith.constant 0 : index
    %92 = vector.load %arg9[%c4, %c0_48] : memref<7x32xf32, #tpu.memory_space<vmem>>, vector<1x32xf32>
    %c5 = arith.constant 5 : index
    %c0_49 = arith.constant 0 : index
    %93 = vector.load %arg9[%c5, %c0_49] : memref<7x32xf32, #tpu.memory_space<vmem>>, vector<1x32xf32>
    %cst_50 = arith.constant dense<0.000000e+00> : vector<128xf32>
    %94 = vector.multi_reduction <add>, %91, %cst_50 [1] : vector<128x32xf32> to vector<128xf32>
    %95 = vector.shape_cast %94 : vector<128xf32> to vector<128x1xf32>
    %cst_51 = arith.constant 3.200000e+01 : f32
    %96 = vector.broadcast %cst_51 : f32 to vector<128x1xf32>
    %97 = arith.divf %95, %96 : vector<128x1xf32>
    %98 = vector.broadcast %97 : vector<128x1xf32> to vector<128x32xf32>
    %99 = arith.subf %91, %98 : vector<128x32xf32>
    %100 = arith.mulf %99, %99 : vector<128x32xf32>
    %cst_52 = arith.constant dense<0.000000e+00> : vector<128xf32>
    %101 = vector.multi_reduction <add>, %100, %cst_52 [1] : vector<128x32xf32> to vector<128xf32>
    %102 = vector.shape_cast %101 : vector<128xf32> to vector<128x1xf32>
    %cst_53 = arith.constant 3.200000e+01 : f32
    %103 = vector.broadcast %cst_53 : f32 to vector<128x1xf32>
    %104 = arith.divf %102, %103 : vector<128x1xf32>
    %cst_54 = arith.constant 9.99999974E-6 : f32
    %105 = vector.broadcast %cst_54 : f32 to vector<128x1xf32>
    %106 = arith.addf %104, %105 : vector<128x1xf32>
    %107 = math.rsqrt %106 : vector<128x1xf32>
    %108 = vector.broadcast %107 : vector<128x1xf32> to vector<128x32xf32>
    %109 = arith.mulf %99, %108 : vector<128x32xf32>
    %110 = vector.broadcast %92 : vector<1x32xf32> to vector<128x32xf32>
    %111 = arith.mulf %109, %110 : vector<128x32xf32>
    %112 = vector.broadcast %93 : vector<1x32xf32> to vector<128x32xf32>
    %113 = arith.addf %111, %112 : vector<128x32xf32>
    %c1_55 = arith.constant 1 : index
    %c0_56 = arith.constant 0 : index
    %c0_57 = arith.constant 0 : index
    %114 = vector.load %arg3[%c1_55, %c0_56, %c0_57] : memref<2x128x128xbf16, #tpu.memory_space<vmem>>, vector<1x128x128xbf16>
    %115 = vector.shape_cast %114 : vector<1x128x128xbf16> to vector<128x128xbf16>
    %116 = arith.truncf %113 : vector<128x32xf32> to vector<128x32xbf16>
    %cst_58 = arith.constant dense<0.000000e+00> : vector<128x32xf32>
    %117 = tpu.matmul %115, %116, %cst_58 {dimension_numbers = #tpu.dot_dimension_numbers<[1], [0], [0], [1], [0, 0, 1, 1], [], []>} : vector<128x128xbf16>, vector<128x32xbf16>, vector<128x32xf32> -> vector<128x32xf32>
    %c1_59 = arith.constant 1 : index
    %c0_60 = arith.constant 0 : index
    %c0_61 = arith.constant 0 : index
    %118 = vector.load %arg4[%c1_59, %c0_60, %c0_61] : memref<2x128x1xf32, #tpu.memory_space<vmem>>, vector<1x128x1xf32>
    %119 = vector.shape_cast %118 : vector<1x128x1xf32> to vector<128x1xf32>
    %120 = vector.broadcast %119 : vector<128x1xf32> to vector<128x32xf32>
    %121 = arith.addf %117, %120 : vector<128x32xf32>
    %cst_62 = arith.constant 5.000000e-01 : f32
    %122 = vector.broadcast %cst_62 : f32 to vector<128x32xf32>
    %123 = arith.mulf %122, %121 : vector<128x32xf32>
    %cst_63 = arith.constant 0.707106769 : f32
    %124 = vector.broadcast %cst_63 : f32 to vector<128x32xf32>
    %125 = arith.mulf %121, %124 : vector<128x32xf32>
    %126 = math.erf %125 : vector<128x32xf32>
    %cst_64 = arith.constant 1.000000e+00 : f32
    %127 = vector.broadcast %cst_64 : f32 to vector<128x32xf32>
    %128 = arith.addf %127, %126 : vector<128x32xf32>
    %129 = arith.mulf %123, %128 : vector<128x32xf32>
    %c1_65 = arith.constant 1 : index
    %c0_66 = arith.constant 0 : index
    %c0_67 = arith.constant 0 : index
    %130 = vector.load %arg5[%c1_65, %c0_66, %c0_67] : memref<2x128x128xbf16, #tpu.memory_space<vmem>>, vector<1x128x128xbf16>
    %131 = vector.shape_cast %130 : vector<1x128x128xbf16> to vector<128x128xbf16>
    %132 = arith.truncf %129 : vector<128x32xf32> to vector<128x32xbf16>
    %cst_68 = arith.constant dense<0.000000e+00> : vector<128x32xf32>
    %133 = tpu.matmul %131, %132, %cst_68 {dimension_numbers = #tpu.dot_dimension_numbers<[1], [0], [0], [1], [0, 0, 1, 1], [], []>} : vector<128x128xbf16>, vector<128x32xbf16>, vector<128x32xf32> -> vector<128x32xf32>
    %134 = arith.addf %91, %133 : vector<128x32xf32>
    %c1_69 = arith.constant 1 : index
    %c0_70 = arith.constant 0 : index
    %c0_71 = arith.constant 0 : index
    %135 = vector.load %arg6[%c1_69, %c0_70, %c0_71] : memref<2x128x1xf32, #tpu.memory_space<vmem>>, vector<1x128x1xf32>
    %136 = vector.shape_cast %135 : vector<1x128x1xf32> to vector<128x1xf32>
    %137 = vector.broadcast %136 : vector<128x1xf32> to vector<128x32xf32>
    %138 = arith.addf %134, %137 : vector<128x32xf32>
    %cst_72 = arith.constant dense<0.000000e+00> : vector<128xf32>
    %139 = vector.multi_reduction <add>, %138, %cst_72 [1] : vector<128x32xf32> to vector<128xf32>
    %140 = vector.shape_cast %139 : vector<128xf32> to vector<128x1xf32>
    %cst_73 = arith.constant 3.200000e+01 : f32
    %141 = vector.broadcast %cst_73 : f32 to vector<128x1xf32>
    %142 = arith.divf %140, %141 : vector<128x1xf32>
    %143 = vector.broadcast %142 : vector<128x1xf32> to vector<128x32xf32>
    %144 = arith.subf %138, %143 : vector<128x32xf32>
    %145 = arith.mulf %144, %144 : vector<128x32xf32>
    %cst_74 = arith.constant dense<0.000000e+00> : vector<128xf32>
    %146 = vector.multi_reduction <add>, %145, %cst_74 [1] : vector<128x32xf32> to vector<128xf32>
    %147 = vector.shape_cast %146 : vector<128xf32> to vector<128x1xf32>
    %cst_75 = arith.constant 3.200000e+01 : f32
    %148 = vector.broadcast %cst_75 : f32 to vector<128x1xf32>
    %149 = arith.divf %147, %148 : vector<128x1xf32>
    %cst_76 = arith.constant 9.99999974E-6 : f32
    %150 = vector.broadcast %cst_76 : f32 to vector<128x1xf32>
    %151 = arith.addf %149, %150 : vector<128x1xf32>
    %152 = math.rsqrt %151 : vector<128x1xf32>
    %153 = vector.broadcast %152 : vector<128x1xf32> to vector<128x32xf32>
    %154 = arith.mulf %144, %153 : vector<128x32xf32>
    %c1_77 = arith.constant 1 : index
    %c0_78 = arith.constant 0 : index
    %c0_79 = arith.constant 0 : index
    %155 = vector.load %arg7[%c1_77, %c0_78, %c0_79] : memref<2x32x64xbf16, #tpu.memory_space<vmem>>, vector<1x32x64xbf16>
    %156 = vector.shape_cast %155 : vector<1x32x64xbf16> to vector<32x64xbf16>
    %157 = arith.truncf %154 : vector<128x32xf32> to vector<128x32xbf16>
    %cst_80 = arith.constant dense<0.000000e+00> : vector<128x64xf32>
    %158 = tpu.matmul %157, %156, %cst_80 {dimension_numbers = #tpu.dot_dimension_numbers<[1], [0], [0], [1], [0, 0, 1, 1], [], []>} : vector<128x32xbf16>, vector<32x64xbf16>, vector<128x64xf32> -> vector<128x64xf32>
    %c1_81 = arith.constant 1 : index
    %c0_82 = arith.constant 0 : index
    %159 = vector.load %arg10[%c1_81, %c0_82] : memref<2x64xf32, #tpu.memory_space<vmem>>, vector<1x64xf32>
    %160 = vector.broadcast %159 : vector<1x64xf32> to vector<128x64xf32>
    %161 = arith.addf %158, %160 : vector<128x64xf32>
    %cst_83 = arith.constant 5.000000e-01 : f32
    %162 = vector.broadcast %cst_83 : f32 to vector<128x64xf32>
    %163 = arith.mulf %162, %161 : vector<128x64xf32>
    %cst_84 = arith.constant 0.707106769 : f32
    %164 = vector.broadcast %cst_84 : f32 to vector<128x64xf32>
    %165 = arith.mulf %161, %164 : vector<128x64xf32>
    %166 = math.erf %165 : vector<128x64xf32>
    %cst_85 = arith.constant 1.000000e+00 : f32
    %167 = vector.broadcast %cst_85 : f32 to vector<128x64xf32>
    %168 = arith.addf %167, %166 : vector<128x64xf32>
    %169 = arith.mulf %163, %168 : vector<128x64xf32>
    %c1_86 = arith.constant 1 : index
    %c0_87 = arith.constant 0 : index
    %c0_88 = arith.constant 0 : index
    %170 = vector.load %arg8[%c1_86, %c0_87, %c0_88] : memref<2x64x32xbf16, #tpu.memory_space<vmem>>, vector<1x64x32xbf16>
    %171 = vector.shape_cast %170 : vector<1x64x32xbf16> to vector<64x32xbf16>
    %172 = arith.truncf %169 : vector<128x64xf32> to vector<128x64xbf16>
    %cst_89 = arith.constant dense<0.000000e+00> : vector<128x32xf32>
    %173 = tpu.matmul %172, %171, %cst_89 {dimension_numbers = #tpu.dot_dimension_numbers<[1], [0], [0], [1], [0, 0, 1, 1], [], []>} : vector<128x64xbf16>, vector<64x32xbf16>, vector<128x32xf32> -> vector<128x32xf32>
    %174 = arith.addf %138, %173 : vector<128x32xf32>
    %c6 = arith.constant 6 : index
    %c0_90 = arith.constant 0 : index
    %175 = vector.load %arg9[%c6, %c0_90] : memref<7x32xf32, #tpu.memory_space<vmem>>, vector<1x32xf32>
    %176 = vector.broadcast %175 : vector<1x32xf32> to vector<128x32xf32>
    %177 = arith.addf %174, %176 : vector<128x32xf32>
    %cst_91 = arith.constant dense<0.000000e+00> : vector<128xf32>
    %178 = vector.multi_reduction <add>, %177, %cst_91 [1] : vector<128x32xf32> to vector<128xf32>
    %179 = vector.shape_cast %178 : vector<128xf32> to vector<128x1xf32>
    %cst_92 = arith.constant 3.200000e+01 : f32
    %180 = vector.broadcast %cst_92 : f32 to vector<128x1xf32>
    %181 = arith.divf %179, %180 : vector<128x1xf32>
    %182 = vector.broadcast %181 : vector<128x1xf32> to vector<128x32xf32>
    %183 = arith.subf %177, %182 : vector<128x32xf32>
    %184 = arith.mulf %183, %183 : vector<128x32xf32>
    %cst_93 = arith.constant dense<0.000000e+00> : vector<128xf32>
    %185 = vector.multi_reduction <add>, %184, %cst_93 [1] : vector<128x32xf32> to vector<128xf32>
    %186 = vector.shape_cast %185 : vector<128xf32> to vector<128x1xf32>
    %cst_94 = arith.constant 3.200000e+01 : f32
    %187 = vector.broadcast %cst_94 : f32 to vector<128x1xf32>
    %188 = arith.divf %186, %187 : vector<128x1xf32>
    %cst_95 = arith.constant 9.99999974E-6 : f32
    %189 = vector.broadcast %cst_95 : f32 to vector<128x1xf32>
    %190 = arith.addf %188, %189 : vector<128x1xf32>
    %191 = math.rsqrt %190 : vector<128x1xf32>
    %192 = vector.broadcast %191 : vector<128x1xf32> to vector<128x32xf32>
    %193 = arith.mulf %183, %192 : vector<128x32xf32>
    %c0_96 = arith.constant 0 : index
    %c0_97 = arith.constant 0 : index
    %194 = vector.load %arg11[%c0_96, %c0_97] : memref<8x128xbf16, #tpu.memory_space<vmem>>, vector<8x128xbf16>
    %195 = arith.truncf %193 : vector<128x32xf32> to vector<128x32xbf16>
    %cst_98 = arith.constant dense<0.000000e+00> : vector<8x32xf32>
    %196 = tpu.matmul %194, %195, %cst_98 {dimension_numbers = #tpu.dot_dimension_numbers<[1], [0], [0], [1], [0, 0, 1, 1], [], []>} : vector<8x128xbf16>, vector<128x32xbf16>, vector<8x32xf32> -> vector<8x32xf32>
    %c0_99 = arith.constant 0 : index
    %c0_100 = arith.constant 0 : index
    %197 = vector.load %arg12[%c0_99, %c0_100] : memref<32x128xbf16, #tpu.memory_space<vmem>>, vector<32x128xbf16>
    %198 = arith.truncf %196 : vector<8x32xf32> to vector<8x32xbf16>
    %cst_101 = arith.constant dense<0.000000e+00> : vector<8x128xf32>
    %199 = tpu.matmul %198, %197, %cst_101 {dimension_numbers = #tpu.dot_dimension_numbers<[1], [0], [0], [1], [0, 0, 1, 1], [], []>} : vector<8x32xbf16>, vector<32x128xbf16>, vector<8x128xf32> -> vector<8x128xf32>
    %c0_102 = arith.constant 0 : index
    %c0_103 = arith.constant 0 : index
    %200 = vector.load %arg13[%c0_102, %c0_103] : memref<1x128xf32, #tpu.memory_space<vmem>>, vector<1x128xf32>
    %201 = vector.broadcast %200 : vector<1x128xf32> to vector<8x128xf32>
    %202 = arith.addf %199, %201 : vector<8x128xf32>
    %c0_104 = arith.constant 0 : index
    %c0_105 = arith.constant 0 : index
    %203 = vector.load %arg14[%c0_104, %c0_105] : memref<8x128xf32, #tpu.memory_space<vmem>>, vector<8x128xf32>
    tpu.vector_store %arg14[%c0_104, %c0_105], %202 {strides = array<i32>} : memref<8x128xf32, #tpu.memory_space<vmem>>, vector<8x128xf32>,
    return
  }
  func.func @transform_0(%arg0: i32) -> (i32, i32) {
    %c0_i32 = arith.constant 0 : i32
    %c0_i32_0 = arith.constant 0 : i32
    return %arg0, %c0_i32 : i32, i32
  }
  func.func @transform_1(%arg0: i32) -> (i32, i32) {
    %c0_i32 = arith.constant 0 : i32
    %c0_i32_0 = arith.constant 0 : i32
    %c0_i32_1 = arith.constant 0 : i32
    return %c0_i32, %c0_i32_0 : i32, i32
  }
  func.func @transform_2(%arg0: i32) -> (i32, i32, i32) {
    %c0_i32 = arith.constant 0 : i32
    %c0_i32_0 = arith.constant 0 : i32
    %c0_i32_1 = arith.constant 0 : i32
    %c0_i32_2 = arith.constant 0 : i32
    return %c0_i32, %c0_i32_0, %c0_i32_1 : i32, i32, i32
  }
  func.func @transform_3(%arg0: i32) -> (i32, i32, i32) {
    %c0_i32 = arith.constant 0 : i32
    %c0_i32_0 = arith.constant 0 : i32
    %c0_i32_1 = arith.constant 0 : i32
    %c0_i32_2 = arith.constant 0 : i32
    return %c0_i32, %c0_i32_0, %c0_i32_1 : i32, i32, i32
  }
  func.func @transform_4(%arg0: i32) -> (i32, i32, i32) {
    %c0_i32 = arith.constant 0 : i32
    %c0_i32_0 = arith.constant 0 : i32
    %c0_i32_1 = arith.constant 0 : i32
    %c0_i32_2 = arith.constant 0 : i32
    return %c0_i32, %c0_i32_0, %c0_i32_1 : i32, i32, i32
  }
  func.func @transform_5(%arg0: i32) -> (i32, i32, i32) {
    %c0_i32 = arith.constant 0 : i32
    %c0_i32_0 = arith.constant 0 : i32
    %c0_i32_1 = arith.constant 0 : i32
    %c0_i32_2 = arith.constant 0 : i32
    return %c0_i32, %c0_i32_0, %c0_i32_1 : i32, i32, i32
  }
  func.func @transform_6(%arg0: i32) -> (i32, i32, i32) {
    %c0_i32 = arith.constant 0 : i32
    %c0_i32_0 = arith.constant 0 : i32
    %c0_i32_1 = arith.constant 0 : i32
    %c0_i32_2 = arith.constant 0 : i32
    return %c0_i32, %c0_i32_0, %c0_i32_1 : i32, i32, i32
  }
  func.func @transform_7(%arg0: i32) -> (i32, i32, i32) {
    %c0_i32 = arith.constant 0 : i32
    %c0_i32_0 = arith.constant 0 : i32
    %c0_i32_1 = arith.constant 0 : i32
    %c0_i32_2 = arith.constant 0 : i32
    return %c0_i32, %c0_i32_0, %c0_i32_1 : i32, i32, i32
  }
  func.func @transform_8(%arg0: i32) -> (i32, i32) {
    %c0_i32 = arith.constant 0 : i32
    %c0_i32_0 = arith.constant 0 : i32
    %c0_i32_1 = arith.constant 0 : i32
    return %c0_i32, %c0_i32_0 : i32, i32
  }
  func.func @transform_9(%arg0: i32) -> (i32, i32) {
    %c0_i32 = arith.constant 0 : i32
    %c0_i32_0 = arith.constant 0 : i32
    %c0_i32_1 = arith.constant 0 : i32
    return %c0_i32, %c0_i32_0 : i32, i32
  }
  func.func @transform_10(%arg0: i32) -> (i32, i32) {
    %c0_i32 = arith.constant 0 : i32
    %c0_i32_0 = arith.constant 0 : i32
    %c0_i32_1 = arith.constant 0 : i32
    return %c0_i32, %c0_i32_0 : i32, i32
  }
  func.func @transform_11(%arg0: i32) -> (i32, i32) {
    %c0_i32 = arith.constant 0 : i32
    %c0_i32_0 = arith.constant 0 : i32
    %c0_i32_1 = arith.constant 0 : i32
    return %c0_i32, %c0_i32_0 : i32, i32
  }
  func.func @transform_12(%arg0: i32) -> (i32, i32) {
    %c0_i32 = arith.constant 0 : i32
    %c0_i32_0 = arith.constant 0 : i32
    %c0_i32_1 = arith.constant 0 : i32
    return %c0_i32, %c0_i32_0 : i32, i32
  }
  func.func @transform_13(%arg0: i32) -> (i32, i32) {
    %c0_i32 = arith.constant 0 : i32
    %c0_i32_0 = arith.constant 0 : i32
    return %arg0, %c0_i32 : i32, i32
  }
}

</mosaic_0001>

<llo_original>
// kernel: tpu_custom_call.1
$region0: #{tpu_custom_call.1}
  #allocation0 [shape = 'u32[]', space=smem, size = 0x4, offset = 0x4, fixed_abs, tag = 'smem constant byte address 0x4 - core index']
  #allocation1 [shape = 'u32[144,128]{1,0:T(1,128)}', space=vmem, size = 0x12000, scoped, tag = 'internal scratch']
  %s0 = inlined_call_operand.vmem [shape: bf16[256,32], index: 0, kind: input, shape index: {}]
  %s1 = inlined_call_operand.vmem [shape: bf16[32,32], index: 1, kind: input, shape index: {}]
  %s2 = inlined_call_operand.vmem [shape: bf16[2,128,128], index: 2, kind: input, shape index: {}]
  %s3 = inlined_call_operand.vmem [shape: f32[2,128,1], index: 3, kind: input, shape index: {}]
  %s4 = inlined_call_operand.vmem [shape: bf16[2,128,128], index: 4, kind: input, shape index: {}]
  %s5 = inlined_call_operand.vmem [shape: f32[2,128,1], index: 5, kind: input, shape index: {}]
  %s6 = inlined_call_operand.vmem [shape: bf16[2,32,64], index: 6, kind: input, shape index: {}]
  %s7 = inlined_call_operand.vmem [shape: bf16[2,64,32], index: 7, kind: input, shape index: {}]
  %s8 = inlined_call_operand.vmem [shape: f32[7,32], index: 8, kind: input, shape index: {}]
  %s9 = inlined_call_operand.vmem [shape: f32[2,64], index: 9, kind: input, shape index: {}]
  %s10 = inlined_call_operand.vmem [shape: bf16[8,128], index: 10, kind: input, shape index: {}]
  %s11 = inlined_call_operand.vmem [shape: bf16[32,128], index: 11, kind: input, shape index: {}]
  %s12 = inlined_call_operand.vmem [shape: f32[1,128], index: 12, kind: input, shape index: {}]
  %s13 = inlined_call_operand.hbm [shape: f32[16,128], index: 13, kind: output, shape index: {}]
  %s14 = sld [smem:[#allocation0]]
  $region85: #{tpu_custom_call.1} parent=0
    _
  %s16 = ssub.s32 1, %s14
  %s17 = scalar_select 0, %s16, %s14
  $region1: #{tpu_custom_call.1} parent=0
    #allocation2 [shape = 'u8[8192]{0}', space=vmem, size = 0x2000, scoped, tag = 'output window, operand 0']
    #allocation3 [shape = 's32[2]{0}', space=sflag, size = 0x8, scoped, tag = 'scoped memory for tpu_custom_call.1']
    %18 = vsyncpa [#allocation3], 0
    %s19 = scalar_lea.sflag [#allocation3], 1
    %20 = vsyncpa %s19, 0
    loop: start=0, step=1, limit=4
    $region2: #{tpu_custom_call.1} parent=1 // loop_pre_header
      _
    $region3: #{tpu_custom_call.1} parent=1 // loop_header
      %s22 = sphi 0, %s26
      %p23 = scmp.ge.s32.totalorder %s22, 4
      %s32 = sphi 0, %s34
      %s35 = sphi 0, %s32
      %s36 = sphi 0, %s35
      %s52 = sphi 0, %s36
      %s56 = sphi 0, %s56
      %s58 = sphi 0, %s56
      %s59 = sphi 0, %s58
      %s73 = sphi 0, %s59
      %s77 = sphi 0, %s77
      %s79 = sphi 0, %s77
      %s80 = sphi 0, %s79
      %s94 = sphi 0, %s80
      %s98 = sphi 0, %s98
      %s100 = sphi 0, %s98
      %s101 = sphi 0, %s100
      %s115 = sphi 0, %s101
      %s119 = sphi 0, %s119
      %s121 = sphi 0, %s119
      %s122 = sphi 0, %s121
      %s136 = sphi 0, %s122
      %s140 = sphi 0, %s140
      %s142 = sphi 0, %s140
      %s143 = sphi 0, %s142
      %s157 = sphi 0, %s143
      %s161 = sphi 0, %s161
      %s163 = sphi 0, %s161
      %s164 = sphi 0, %s163
      %s178 = sphi 0, %s164
      %s182 = sphi 0, %s182
      %s184 = sphi 0, %s182
      %s185 = sphi 0, %s184
      %s199 = sphi 0, %s185
      %s203 = sphi 0, %s203
      %s205 = sphi 0, %s203
      %s206 = sphi 0, %s205
      %s220 = sphi 0, %s206
      %s224 = sphi 0, %s224
      %s226 = sphi 0, %s224
      %s227 = sphi 0, %s226
      %s241 = sphi 0, %s227
      %s245 = sphi 0, %s245
      %s247 = sphi 0, %s245
      %s248 = sphi 0, %s247
      %s262 = sphi 0, %s248
      %s266 = sphi 0, %s266
      %s268 = sphi 0, %s266
      %s269 = sphi 0, %s268
      %s283 = sphi 0, %s269
      %s287 = sphi 0, %s287
      %s289 = sphi 0, %s287
      %s290 = sphi 0, %s289
      %s304 = sphi 0, %s290
      %s310 = sphi 0, %s312
      %s313 = sphi 0, %s310
      %s314 = sphi 0, %s313
      %s330 = sphi 0, %s314
    $region4: #{tpu_custom_call.1} parent=1 // loop_header_branch
      %25 = sbr.rel (%p23) target = $region8
    $region5: #{tpu_custom_call.1} parent=1 // loop_body
      %s27 = ssub.s32 %s22, 1
      %s28 = ssub.s32 %s22, 2
      %s29 = sadd.s32 %s22, 1
      %s30 = ssub.s32 %s22, %s29
      %p31 = scmp.eq.s32.totalorder %s30, 0
      %s33 = sadd.s32 %s32, 1
      %s34 = scalar_select %p31, %s32, %s33
      %p37 = pneg %p31
      %p38 = scmp.eq.s32.totalorder %s22, 1
      %p39 = por %p37, %p38
      %p40 = scmp.ne.s32.totalorder %s32, %s35
      %p41 = scmp.eq.s32.totalorder %s22, 0
      %p42 = por %p40, %p41
      %p43 = scmp.ne.s32.totalorder %s32, %s35
      %p44 = scmp.eq.s32.totalorder %s27, 1
      %p45 = por %p43, %p44
      %p46 = scmp.ne.s32.totalorder %s35, %s36
      %p47 = scmp.eq.s32.totalorder %s27, 0
      %p48 = por %p46, %p47
      %p49 = scmp.ne.s32.totalorder %s35, %s36
      %p50 = scmp.eq.s32.totalorder %s28, 1
      %p51 = por %p49, %p50
      %p53 = scmp.ne.s32.totalorder %s36, %s52
      %p54 = scmp.eq.s32.totalorder %s28, 0
      %p55 = por %p53, %p54
      %s57 = sadd.s32 %s56, 1
      %p60 = scmp.eq.s32.totalorder %s22, 1
      %p61 = scmp.ne.s32.totalorder %s56, %s58
      %p62 = scmp.eq.s32.totalorder %s22, 0
      %p63 = por %p61, %p62
      %p64 = scmp.ne.s32.totalorder %s56, %s58
      %p65 = scmp.eq.s32.totalorder %s27, 1
      %p66 = por %p64, %p65
      %p67 = scmp.ne.s32.totalorder %s58, %s59
      %p68 = scmp.eq.s32.totalorder %s27, 0
      %p69 = por %p67, %p68
      %p70 = scmp.ne.s32.totalorder %s58, %s59
      %p71 = scmp.eq.s32.totalorder %s28, 1
      %p72 = por %p70, %p71
      %p74 = scmp.ne.s32.totalorder %s59, %s73
      %p75 = scmp.eq.s32.totalorder %s28, 0
      %p76 = por %p74, %p75
      %s78 = sadd.s32 %s77, 1
      %p81 = scmp.eq.s32.totalorder %s22, 1
      %p82 = scmp.ne.s32.totalorder %s77, %s79
      %p83 = scmp.eq.s32.totalorder %s22, 0
      %p84 = por %p82, %p83
      %p85 = scmp.ne.s32.totalorder %s77, %s79
      %p86 = scmp.eq.s32.totalorder %s27, 1
      %p87 = por %p85, %p86
      %p88 = scmp.ne.s32.totalorder %s79, %s80
      %p89 = scmp.eq.s32.totalorder %s27, 0
      %p90 = por %p88, %p89
      %p91 = scmp.ne.s32.totalorder %s79, %s80
      %p92 = scmp.eq.s32.totalorder %s28, 1
      %p93 = por %p91, %p92
      %p95 = scmp.ne.s32.totalorder %s80, %s94
      %p96 = scmp.eq.s32.totalorder %s28, 0
      %p97 = por %p95, %p96
      %s99 = sadd.s32 %s98, 1
      %p102 = scmp.eq.s32.totalorder %s22, 1
      %p103 = scmp.ne.s32.totalorder %s98, %s100
      %p104 = scmp.eq.s32.totalorder %s22, 0
      %p105 = por %p103, %p104
      %p106 = scmp.ne.s32.totalorder %s98, %s100
      %p107 = scmp.eq.s32.totalorder %s27, 1
      %p108 = por %p106, %p107
      %p109 = scmp.ne.s32.totalorder %s100, %s101
      %p110 = scmp.eq.s32.totalorder %s27, 0
      %p111 = por %p109, %p110
      %p112 = scmp.ne.s32.totalorder %s100, %s101
      %p113 = scmp.eq.s32.totalorder %s28, 1
      %p114 = por %p112, %p113
      %p116 = scmp.ne.s32.totalorder %s101, %s115
      %p117 = scmp.eq.s32.totalorder %s28, 0
      %p118 = por %p116, %p117
      %s120 = sadd.s32 %s119, 1
      %p123 = scmp.eq.s32.totalorder %s22, 1
      %p124 = scmp.ne.s32.totalorder %s119, %s121
      %p125 = scmp.eq.s32.totalorder %s22, 0
      %p126 = por %p124, %p125
      %p127 = scmp.ne.s32.totalorder %s119, %s121
      %p128 = scmp.eq.s32.totalorder %s27, 1
      %p129 = por %p127, %p128
      %p130 = scmp.ne.s32.totalorder %s121, %s122
      %p131 = scmp.eq.s32.totalorder %s27, 0
      %p132 = por %p130, %p131
      %p133 = scmp.ne.s32.totalorder %s121, %s122
      %p134 = scmp.eq.s32.totalorder %s28, 1
      %p135 = por %p133, %p134
      %p137 = scmp.ne.s32.totalorder %s122, %s136
      %p138 = scmp.eq.s32.totalorder %s28, 0
      %p139 = por %p137, %p138
      %s141 = sadd.s32 %s140, 1
      %p144 = scmp.eq.s32.totalorder %s22, 1
      %p145 = scmp.ne.s32.totalorder %s140, %s142
      %p146 = scmp.eq.s32.totalorder %s22, 0
      %p147 = por %p145, %p146
      %p148 = scmp.ne.s32.totalorder %s140, %s142
      %p149 = scmp.eq.s32.totalorder %s27, 1
      %p150 = por %p148, %p149
      %p151 = scmp.ne.s32.totalorder %s142, %s143
      %p152 = scmp.eq.s32.totalorder %s27, 0
      %p153 = por %p151, %p152
      %p154 = scmp.ne.s32.totalorder %s142, %s143
      %p155 = scmp.eq.s32.totalorder %s28, 1
      %p156 = por %p154, %p155
      %p158 = scmp.ne.s32.totalorder %s143, %s157
      %p159 = scmp.eq.s32.totalorder %s28, 0
      %p160 = por %p158, %p159
      %s162 = sadd.s32 %s161, 1
      %p165 = scmp.eq.s32.totalorder %s22, 1
      %p166 = scmp.ne.s32.totalorder %s161, %s163
      %p167 = scmp.eq.s32.totalorder %s22, 0
      %p168 = por %p166, %p167
      %p169 = scmp.ne.s32.totalorder %s161, %s163
      %p170 = scmp.eq.s32.totalorder %s27, 1
      %p171 = por %p169, %p170
      %p172 = scmp.ne.s32.totalorder %s163, %s164
      %p173 = scmp.eq.s32.totalorder %s27, 0
      %p174 = por %p172, %p173
      %p175 = scmp.ne.s32.totalorder %s163, %s164
      %p176 = scmp.eq.s32.totalorder %s28, 1
      %p177 = por %p175, %p176
      %p179 = scmp.ne.s32.totalorder %s164, %s178
      %p180 = scmp.eq.s32.totalorder %s28, 0
      %p181 = por %p179, %p180
      %s183 = sadd.s32 %s182, 1
      %p186 = scmp.eq.s32.totalorder %s22, 1
      %p187 = scmp.ne.s32.totalorder %s182, %s184
      %p188 = scmp.eq.s32.totalorder %s22, 0
      %p189 = por %p187, %p188
      %p190 = scmp.ne.s32.totalorder %s182, %s184
      %p191 = scmp.eq.s32.totalorder %s27, 1
      %p192 = por %p190, %p191
      %p193 = scmp.ne.s32.totalorder %s184, %s185
      %p194 = scmp.eq.s32.totalorder %s27, 0
      %p195 = por %p193, %p194
      %p196 = scmp.ne.s32.totalorder %s184, %s185
      %p197 = scmp.eq.s32.totalorder %s28, 1
      %p198 = por %p196, %p197
      %p200 = scmp.ne.s32.totalorder %s185, %s199
      %p201 = scmp.eq.s32.totalorder %s28, 0
      %p202 = por %p200, %p201
      %s204 = sadd.s32 %s203, 1
      %p207 = scmp.eq.s32.totalorder %s22, 1
      %p208 = scmp.ne.s32.totalorder %s203, %s205
      %p209 = scmp.eq.s32.totalorder %s22, 0
      %p210 = por %p208, %p209
      %p211 = scmp.ne.s32.totalorder %s203, %s205
      %p212 = scmp.eq.s32.totalorder %s27, 1
      %p213 = por %p211, %p212
      %p214 = scmp.ne.s32.totalorder %s205, %s206
      %p215 = scmp.eq.s32.totalorder %s27, 0
      %p216 = por %p214, %p215
      %p217 = scmp.ne.s32.totalorder %s205, %s206
      %p218 = scmp.eq.s32.totalorder %s28, 1
      %p219 = por %p217, %p218
      %p221 = scmp.ne.s32.totalorder %s206, %s220
      %p222 = scmp.eq.s32.totalorder %s28, 0
      %p223 = por %p221, %p222
      %s225 = sadd.s32 %s224, 1
      %p228 = scmp.eq.s32.totalorder %s22, 1
      %p229 = scmp.ne.s32.totalorder %s224, %s226
      %p230 = scmp.eq.s32.totalorder %s22, 0
      %p231 = por %p229, %p230
      %p232 = scmp.ne.s32.totalorder %s224, %s226
      %p233 = scmp.eq.s32.totalorder %s27, 1
      %p234 = por %p232, %p233
      %p235 = scmp.ne.s32.totalorder %s226, %s227
      %p236 = scmp.eq.s32.totalorder %s27, 0
      %p237 = por %p235, %p236
      %p238 = scmp.ne.s32.totalorder %s226, %s227
      %p239 = scmp.eq.s32.totalorder %s28, 1
      %p240 = por %p238, %p239
      %p242 = scmp.ne.s32.totalorder %s227, %s241
      %p243 = scmp.eq.s32.totalorder %s28, 0
      %p244 = por %p242, %p243
      %s246 = sadd.s32 %s245, 1
      %p249 = scmp.eq.s32.totalorder %s22, 1
      %p250 = scmp.ne.s32.totalorder %s245, %s247
      %p251 = scmp.eq.s32.totalorder %s22, 0
      %p252 = por %p250, %p251
      %p253 = scmp.ne.s32.totalorder %s245, %s247
      %p254 = scmp.eq.s32.totalorder %s27, 1
      %p255 = por %p253, %p254
      %p256 = scmp.ne.s32.totalorder %s247, %s248
      %p257 = scmp.eq.s32.totalorder %s27, 0
      %p258 = por %p256, %p257
      %p259 = scmp.ne.s32.totalorder %s247, %s248
      %p260 = scmp.eq.s32.totalorder %s28, 1
      %p261 = por %p259, %p260
      %p263 = scmp.ne.s32.totalorder %s248, %s262
      %p264 = scmp.eq.s32.totalorder %s28, 0
      %p265 = por %p263, %p264
      %s267 = sadd.s32 %s266, 1
      %p270 = scmp.eq.s32.totalorder %s22, 1
      %p271 = scmp.ne.s32.totalorder %s266, %s268
      %p272 = scmp.eq.s32.totalorder %s22, 0
      %p273 = por %p271, %p272
      %p274 = scmp.ne.s32.totalorder %s266, %s268
      %p275 = scmp.eq.s32.totalorder %s27, 1
      %p276 = por %p274, %p275
      %p277 = scmp.ne.s32.totalorder %s268, %s269
      %p278 = scmp.eq.s32.totalorder %s27, 0
      %p279 = por %p277, %p278
      %p280 = scmp.ne.s32.totalorder %s268, %s269
      %p281 = scmp.eq.s32.totalorder %s28, 1
      %p282 = por %p280, %p281
      %p284 = scmp.ne.s32.totalorder %s269, %s283
      %p285 = scmp.eq.s32.totalorder %s28, 0
      %p286 = por %p284, %p285
      %s288 = sadd.s32 %s287, 1
      %p291 = scmp.eq.s32.totalorder %s22, 1
      %p292 = scmp.ne.s32.totalorder %s287, %s289
      %p293 = scmp.eq.s32.totalorder %s22, 0
      %p294 = por %p292, %p293
      %p295 = scmp.ne.s32.totalorder %s287, %s289
      %p296 = scmp.eq.s32.totalorder %s27, 1
      %p297 = por %p295, %p296
      %p298 = scmp.ne.s32.totalorder %s289, %s290
      %p299 = scmp.eq.s32.totalorder %s27, 0
      %p300 = por %p298, %p299
      %p301 = scmp.ne.s32.totalorder %s289, %s290
      %p302 = scmp.eq.s32.totalorder %s28, 1
      %p303 = por %p301, %p302
      %p305 = scmp.ne.s32.totalorder %s290, %s304
      %p306 = scmp.eq.s32.totalorder %s28, 0
      %p307 = por %p305, %p306
      %s308 = ssub.s32 %s22, %s29
      %p309 = scmp.eq.s32.totalorder %s308, 0
      %s311 = sadd.s32 %s310, 1
      %s312 = scalar_select %p309, %s310, %s311
      %p315 = pneg %p309
      %p316 = scmp.eq.s32.totalorder %s22, 1
      %p317 = por %p315, %p316
      %p318 = scmp.ne.s32.totalorder %s310, %s313
      %p319 = scmp.eq.s32.totalorder %s22, 0
      %p320 = por %p318, %p319
      %p321 = scmp.ne.s32.totalorder %s310, %s313
      %p322 = scmp.eq.s32.totalorder %s27, 1
      %p323 = por %p321, %p322
      %p324 = scmp.ne.s32.totalorder %s313, %s314
      %p325 = scmp.eq.s32.totalorder %s27, 0
      %p326 = por %p324, %p325
      %p327 = scmp.ne.s32.totalorder %s313, %s314
      %p328 = scmp.eq.s32.totalorder %s28, 1
      %p329 = por %p327, %p328
      %p331 = scmp.ne.s32.totalorder %s314, %s330
      %p332 = scmp.eq.s32.totalorder %s28, 0
      %p333 = por %p331, %p332
      %p334 = scmp.le.s32.totalorder 1, %s22
      %p335 = scmp.lt.s32.totalorder %s22, 3
      %p336 = pnand %p334, %p335
      %p337 = pneg %p336
      // Predicated region
      $region9: #{tpu_custom_call.1} parent=5 // pred_check
        _
      $region10: #{tpu_custom_call.1} parent=5 // pred_check_branch
        %339 = sbr.rel (%p336) target = $region12
      $region11: #{tpu_custom_call.1} parent=5 // pred_region
        %s340 = ssub.s32 %s22, 1
        // Predicated region
        $region13: #{tpu_custom_call.1} parent=11 // pred_check
          %p341 = pneg %p69
        $region14: #{tpu_custom_call.1} parent=11 // pred_check_branch
          %343 = sbr.rel (%p341) target = $region16
        $region15: #{tpu_custom_call.1} parent=11 // pred_region
          _
        $region16: #{tpu_custom_call.1} parent=11 // pred_fallthru
          _
        // Predicated region
        $region17: #{tpu_custom_call.1} parent=11 // pred_check
          %p344 = pneg %p90
        $region18: #{tpu_custom_call.1} parent=11 // pred_check_branch
          %346 = sbr.rel (%p344) target = $region20
        $region19: #{tpu_custom_call.1} parent=11 // pred_region
          _
        $region20: #{tpu_custom_call.1} parent=11 // pred_fallthru
          _
        // Predicated region
        $region21: #{tpu_custom_call.1} parent=11 // pred_check
          %p347 = pneg %p111
        $region22: #{tpu_custom_call.1} parent=11 // pred_check_branch
          %349 = sbr.rel (%p347) target = $region24
        $region23: #{tpu_custom_call.1} parent=11 // pred_region
          _
        $region24: #{tpu_custom_call.1} parent=11 // pred_fallthru
          _
        // Predicated region
        $region25: #{tpu_custom_call.1} parent=11 // pred_check
          %p350 = pneg %p132
        $region26: #{tpu_custom_call.1} parent=11 // pred_check_branch
          %352 = sbr.rel (%p350) target = $region28
        $region27: #{tpu_custom_call.1} parent=11 // pred_region
          _
        $region28: #{tpu_custom_call.1} parent=11 // pred_fallthru
          _
        // Predicated region
        $region29: #{tpu_custom_call.1} parent=11 // pred_check
          %p353 = pneg %p153
        $region30: #{tpu_custom_call.1} parent=11 // pred_check_branch
          %355 = sbr.rel (%p353) target = $region32
        $region31: #{tpu_custom_call.1} parent=11 // pred_region
          _
        $region32: #{tpu_custom_call.1} parent=11 // pred_fallthru
          _
        // Predicated region
        $region33: #{tpu_custom_call.1} parent=11 // pred_check
          %p356 = pneg %p174
        $region34: #{tpu_custom_call.1} parent=11 // pred_check_branch
          %358 = sbr.rel (%p356) target = $region36
        $region35: #{tpu_custom_call.1} parent=11 // pred_region
          _
        $region36: #{tpu_custom_call.1} parent=11 // pred_fallthru
          _
        // Predicated region
        $region37: #{tpu_custom_call.1} parent=11 // pred_check
          %p359 = pneg %p195
        $region38: #{tpu_custom_call.1} parent=11 // pred_check_branch
          %361 = sbr.rel (%p359) target = $region40
        $region39: #{tpu_custom_call.1} parent=11 // pred_region
          _
        $region40: #{tpu_custom_call.1} parent=11 // pred_fallthru
          _
        // Predicated region
        $region41: #{tpu_custom_call.1} parent=11 // pred_check
          %p362 = pneg %p216
        $region42: #{tpu_custom_call.1} parent=11 // pred_check_branch
          %364 = sbr.rel (%p362) target = $region44
        $region43: #{tpu_custom_call.1} parent=11 // pred_region
          _
        $region44: #{tpu_custom_call.1} parent=11 // pred_fallthru
          _
        // Predicated region
        $region45: #{tpu_custom_call.1} parent=11 // pred_check
          %p365 = pneg %p237
        $region46: #{tpu_custom_call.1} parent=11 // pred_check_branch
          %367 = sbr.rel (%p365) target = $region48
        $region47: #{tpu_custom_call.1} parent=11 // pred_region
          _
        $region48: #{tpu_custom_call.1} parent=11 // pred_fallthru
          _
        // Predicated region
        $region49: #{tpu_custom_call.1} parent=11 // pred_check
          %p368 = pneg %p258
        $region50: #{tpu_custom_call.1} parent=11 // pred_check_branch
          %370 = sbr.rel (%p368) target = $region52
        $region51: #{tpu_custom_call.1} parent=11 // pred_region
          _
        $region52: #{tpu_custom_call.1} parent=11 // pred_fallthru
          _
        // Predicated region
        $region53: #{tpu_custom_call.1} parent=11 // pred_check
          %p371 = pneg %p279
        $region54: #{tpu_custom_call.1} parent=11 // pred_check_branch
          %373 = sbr.rel (%p371) target = $region56
        $region55: #{tpu_custom_call.1} parent=11 // pred_region
          _
        $region56: #{tpu_custom_call.1} parent=11 // pred_fallthru
          _
        // Predicated region
        $region57: #{tpu_custom_call.1} parent=11 // pred_check
          %p374 = pneg %p300
        $region58: #{tpu_custom_call.1} parent=11 // pred_check_branch
          %376 = sbr.rel (%p374) target = $region60
        $region59: #{tpu_custom_call.1} parent=11 // pred_region
          _
        $region60: #{tpu_custom_call.1} parent=11 // pred_fallthru
          _
      $region12: #{tpu_custom_call.1} parent=5 // pred_fallthru
        _
      %p377 = scmp.lt.s32.totalorder %s22, 2
      // Predicated region
      $region61: #{tpu_custom_call.1} parent=5 // pred_check
        %p378 = pneg %p377
      $region62: #{tpu_custom_call.1} parent=5 // pred_check_branch
        %380 = sbr.rel (%p378) target = $region64
      $region63: #{tpu_custom_call.1} parent=5 // pred_region
        // Predicated region
        $region65: #{tpu_custom_call.1} parent=63 // pred_check
          %p381 = pneg %p42
        $region66: #{tpu_custom_call.1} parent=63 // pred_check_branch
          %383 = sbr.rel (%p381) target = $region68
        $region67: #{tpu_custom_call.1} parent=63 // pred_region
          %s384 = smul.u32 16, %s22
          %p385 = scmp.lt.s32.totalorder %s384, 31
          %s386 = scalar_select %p385, %s384, 31
          %s387 = smul.addr %s386, 4
          %s388 = scalar_lea.vmem %s0, %s387
          %s389 = smul.u32 16, %s22
        $region68: #{tpu_custom_call.1} parent=63 // pred_fallthru
          _
      $region64: #{tpu_custom_call.1} parent=5 // pred_fallthru
        _
      %p390 = scmp.le.s32.totalorder 1, %s22
      %p391 = scmp.lt.s32.totalorder %s22, 3
      %p392 = pnand %p390, %p391
      %p393 = pneg %p392
      // Predicated region
      $region69: #{tpu_custom_call.1} parent=5 // pred_check
        _
      $region70: #{tpu_custom_call.1} parent=5 // pred_check_branch
        %395 = sbr.rel (%p392) target = $region72
      $region71: #{tpu_custom_call.1} parent=5 // pred_region
        %s396 = ssub.s32 %s22, 1
        %s397 = smul.u32 16, %s27
        %p398 = scmp.lt.s32.totalorder %s397, 31
        %s399 = scalar_select %p398, %s397, 31
        %s400 = smul.addr %s399, 4
        %s401 = scalar_lea.vmem %s0, %s400
        %p402 = pneg %p48
        %p403 = pneg %p45
        %p404 = pneg %p69
        %p405 = pneg %p66
        %p406 = pneg %p90
        %p407 = pneg %p87
        %p408 = pneg %p111
        %p409 = pneg %p108
        %p410 = pneg %p132
        %p411 = pneg %p129
        %p412 = pneg %p153
        %p413 = pneg %p150
        %p414 = pneg %p174
        %p415 = pneg %p171
        %p416 = pneg %p195
        %p417 = pneg %p192
        %p418 = pneg %p216
        %p419 = pneg %p213
        %p420 = pneg %p237
        %p421 = pneg %p234
        %p422 = pneg %p258
        %p423 = pneg %p255
        %p424 = pneg %p279
        %p425 = pneg %p276
        %p426 = pneg %p300
        %p427 = pneg %p297
        %p428 = pneg %p326
        %p429 = pneg %p323
        %s430 = sand.u32 %s313, 1
        %s431 = scalar_lea.sflag [#allocation3], %s430
        %s432 = sand.u32 %s313, 1
        %s433 = smul.addr %s432, 8
        %s434 = scalar_lea.vmem [#allocation2], %s433
        %s435 = smul.u32 16, %s27
        %p436 = scmp.lt.s32.totalorder %s435, 31
        %s437 = scalar_select %p436, %s435, 31
        %s438 = smul.addr %s437, 4
        %s439 = scalar_lea.vmem %s0, %s438
        %s440 = smul.u32 16, %s27
        %v442 = vld [vmem:[%s439] sm:$0xf]
        %v443 = vld [vmem:[%s439 + $0x4] sm:$0xf]
        %v444 = vld [vmem:[%s439 + $0x8] sm:$0xf]
        %v445 = vld [vmem:[%s439 + $0xc] sm:$0xf]
        %v446 = vld [vmem:[%s439 + $0x10] sm:$0xf]
        %v447 = vld [vmem:[%s439 + $0x14] sm:$0xf]
        %v448 = vld [vmem:[%s439 + $0x18] sm:$0xf]
        %v449 = vld [vmem:[%s439 + $0x1c] sm:$0xf]
        %v450 = vld [vmem:[%s439 + $0x20] sm:$0xf]
        %v451 = vld [vmem:[%s439 + $0x24] sm:$0xf]
        %v452 = vld [vmem:[%s439 + $0x28] sm:$0xf]
        %v453 = vld [vmem:[%s439 + $0x2c] sm:$0xf]
        %v454 = vld [vmem:[%s439 + $0x30] sm:$0xf]
        %v455 = vld [vmem:[%s439 + $0x34] sm:$0xf]
        %v456 = vld [vmem:[%s439 + $0x38] sm:$0xf]
        %v457 = vld [vmem:[%s439 + $0x3c] sm:$0xf]
        %v458 = vld [vmem:[%s1] sm:$0xf]
        %v459 = vld [vmem:[%s1 + $0x4] sm:$0xf]
        %v460 = vld [vmem:[%s1 + $0x8] sm:$0xf]
        %v461 = vld [vmem:[%s1 + $0xc] sm:$0xf]
        %v462 = vld [vmem:[%s8] sm:$0x1]
        %v463 = vlaneseq
        %v464 = vshrl.u32 %v463, 7
        %v465 = vsub.s32 0, %v464
        %v466 = vrot.slane %v462, %v465
        %v483 = vunpack.c.l.b16 %v442
        %v484 = vunpack.c.l.b16 %v443
        %v485 = vunpack.c.l.b16 %v444
        %v486 = vunpack.c.l.b16 %v445
        %v487 = vunpack.c.l.b16 %v446
        %v488 = vunpack.c.l.b16 %v447
        %v489 = vunpack.c.l.b16 %v448
        %v490 = vunpack.c.l.b16 %v449
        %v491 = vunpack.c.l.b16 %v450
        %v492 = vunpack.c.l.b16 %v451
        %v493 = vunpack.c.l.b16 %v452
        %v494 = vunpack.c.l.b16 %v453
        %v495 = vunpack.c.l.b16 %v454
        %v496 = vunpack.c.l.b16 %v455
        %v497 = vunpack.c.l.b16 %v456
        %v498 = vunpack.c.l.b16 %v457
        %v499 = vpack.c.b16 %v484, %v483
        %v500 = vpack.c.b16 %v486, %v485
        %v501 = vpack.c.b16 %v488, %v487
        %v502 = vpack.c.b16 %v490, %v489
        %v503 = vpack.c.b16 %v492, %v491
        %v504 = vpack.c.b16 %v494, %v493
        %v505 = vpack.c.b16 %v496, %v495
        %v506 = vpack.c.b16 %v498, %v497
        %v511 = vunpack.c.l.b16 %v458
        %v512 = vunpack.c.l.b16 %v459
        %v513 = vunpack.c.l.b16 %v460
        %v514 = vunpack.c.l.b16 %v461
        %v515 = vpack.c.b16 %v512, %v511
        %v516 = vpack.c.b16 %v514, %v513
        %vm519 = vcmask 261120
        %v521 = vsel %vm519, %v499, 0
        %v524 = vsel %vm519, %v500, 0
        %v527 = vsel %vm519, %v501, 0
        %v530 = vsel %vm519, %v502, 0
        %v533 = vsel %vm519, %v503, 0
        %v536 = vsel %vm519, %v504, 0
        %v539 = vsel %vm519, %v505, 0
        %v542 = vsel %vm519, %v506, 0
        %544 = vmatprep.subr.bf16.mxu0 0
        %545 = vmatpush1.bf16.msra.mxu0 %v515
        %546 = vmatprep.subr.bf16.mxu0 0
        %547 = vmatpush1.bf16.msra.mxu0 %v516
        %548 = vmatprep.subr.bf16.mxu0 0
        %549 = vmatpush1.bf16.msra.mxu0 0
        %550 = vmatprep.subr.bf16.mxu0 0
        %551 = vmatpush1.bf16.msra.mxu0 0
        %552 = vmatprep.subr.bf16.mxu0 0
        %553 = vmatpush1.bf16.msra.mxu0 0
        %554 = vmatprep.subr.bf16.mxu0 0
        %555 = vmatpush1.bf16.msra.mxu0 0
        %556 = vmatprep.subr.bf16.mxu0 0
        %557 = vmatpush1.bf16.msra.mxu0 0
        %558 = vmatprep.subr.bf16.mxu0 0
        %559 = vmatpush1.bf16.msra.mxu0 0
        %560 = vmatprep.subr.bf16.mxu0 0
        %561 = vmatpush1.bf16.msra.mxu0 0
        %562 = vmatprep.subr.bf16.mxu0 0
        %563 = vmatpush1.bf16.msra.mxu0 0
        %564 = vmatprep.subr.bf16.mxu0 0
        %565 = vmatpush1.bf16.msra.mxu0 0
        %566 = vmatprep.subr.bf16.mxu0 0
        %567 = vmatpush1.bf16.msra.mxu0 0
        %568 = vmatprep.subr.bf16.mxu0 0
        %569 = vmatpush1.bf16.msra.mxu0 0
        %570 = vmatprep.subr.bf16.mxu0 0
        %571 = vmatpush1.bf16.msra.mxu0 0
        %572 = vmatprep.subr.bf16.mxu0 0
        %573 = vmatpush1.bf16.msra.mxu0 0
        %574 = vmatprep.subr.bf16.mxu0 0
        %575 = vmatpush1.bf16.msra.mxu0 0
        %576 = vmatprep.mubr.bf16.mxu0 0
        %577 = vmatmul.mubr.bf16.gmra.mrb[0].mxu0 %v521
        %v578 = vpop.f32.mrb[0].mxu0
        %v579 = vadd.f32 %v466, %v578
        %v580 = vpop.f32.mrb[0].mxu0
        %v581 = vpop.f32.mrb[0].mxu0
        %v582 = vadd.f32 %v466, %v581
        %v583 = vpop.f32.mrb[0].mxu0
        %584 = vmatprep.mubr.bf16.mxu0 0
        %585 = vmatmul.mubr.bf16.gmra.mrb[0].mxu0 %v524
        %v586 = vpop.f32.mrb[0].mxu0
        %v587 = vadd.f32 %v466, %v586
        %v588 = vpop.f32.mrb[0].mxu0
        %v589 = vpop.f32.mrb[0].mxu0
        %v590 = vadd.f32 %v466, %v589
        %v591 = vpop.f32.mrb[0].mxu0
        %592 = vmatprep.mubr.bf16.mxu0 0
        %593 = vmatmul.mubr.bf16.gmra.mrb[0].mxu0 %v527
        %v594 = vpop.f32.mrb[0].mxu0
        %v595 = vadd.f32 %v466, %v594
        %v596 = vpop.f32.mrb[0].mxu0
        %v597 = vpop.f32.mrb[0].mxu0
        %v598 = vadd.f32 %v466, %v597
        %v599 = vpop.f32.mrb[0].mxu0
        %600 = vmatprep.mubr.bf16.mxu0 0
        %601 = vmatmul.mubr.bf16.gmra.mrb[0].mxu0 %v530
        %v602 = vpop.f32.mrb[0].mxu0
        %v603 = vadd.f32 %v466, %v602
        %v604 = vpop.f32.mrb[0].mxu0
        %v605 = vpop.f32.mrb[0].mxu0
        %v606 = vadd.f32 %v466, %v605
        %v607 = vpop.f32.mrb[0].mxu0
        %608 = vmatprep.mubr.bf16.mxu0 0
        %609 = vmatmul.mubr.bf16.gmra.mrb[0].mxu0 %v533
        %v610 = vpop.f32.mrb[0].mxu0
        %v611 = vadd.f32 %v466, %v610
        %v612 = vpop.f32.mrb[0].mxu0
        %v613 = vpop.f32.mrb[0].mxu0
        %v614 = vadd.f32 %v466, %v613
        %v615 = vpop.f32.mrb[0].mxu0
        %616 = vmatprep.mubr.bf16.mxu0 0
        %617 = vmatmul.mubr.bf16.gmra.mrb[0].mxu0 %v536
        %v618 = vpop.f32.mrb[0].mxu0
        %v619 = vadd.f32 %v466, %v618
        %v620 = vpop.f32.mrb[0].mxu0
        %v621 = vpop.f32.mrb[0].mxu0
        %v622 = vadd.f32 %v466, %v621
        %v623 = vpop.f32.mrb[0].mxu0
        %624 = vmatprep.mubr.bf16.mxu0 0
        %625 = vmatmul.mubr.bf16.gmra.mrb[0].mxu0 %v539
        %v626 = vpop.f32.mrb[0].mxu0
        %v627 = vadd.f32 %v466, %v626
        %v628 = vpop.f32.mrb[0].mxu0
        %v629 = vpop.f32.mrb[0].mxu0
        %v630 = vadd.f32 %v466, %v629
        %v631 = vpop.f32.mrb[0].mxu0
        %632 = vmatprep.mubr.bf16.mxu0 0
        %633 = vmatmul.mubr.bf16.gmra.mrb[0].mxu0 %v542
        %v634 = vpop.f32.mrb[0].mxu0
        %v635 = vadd.f32 %v466, %v634
        %v636 = vpop.f32.mrb[0].mxu0
        %v637 = vpop.f32.mrb[0].mxu0
        %v638 = vadd.f32 %v466, %v637
        %v639 = vpop.f32.mrb[0].mxu0
        %640 = vdwg.mxu0
        %v641 = vld [vmem:[%s8 + $0x1] sm:$0x1]
        %v642 = vld [vmem:[%s8 + $0x2] sm:$0x1]
        %v643 = vsel %vm519, %v579, 0.0
        %644 = vadd.xlane.f32.xlu0 %v643
        %v645 = vpop.xlane.xlu0 %644
        %v646 = vsel %vm519, %v582, 0.0
        %647 = vadd.xlane.f32.xlu0 %v646
        %v648 = vpop.xlane.xlu0 %647
        %v649 = vsel %vm519, %v587, 0.0
        %650 = vadd.xlane.f32.xlu0 %v649
        %v651 = vpop.xlane.xlu0 %650
        %v652 = vsel %vm519, %v590, 0.0
        %653 = vadd.xlane.f32.xlu0 %v652
        %v654 = vpop.xlane.xlu0 %653
        %v655 = vsel %vm519, %v595, 0.0
        %656 = vadd.xlane.f32.xlu0 %v655
        %v657 = vpop.xlane.xlu0 %656
        %v658 = vsel %vm519, %v598, 0.0
        %659 = vadd.xlane.f32.xlu0 %v658
        %v660 = vpop.xlane.xlu0 %659
        %v661 = vsel %vm519, %v603, 0.0
        %662 = vadd.xlane.f32.xlu0 %v661
        %v663 = vpop.xlane.xlu0 %662
        %v664 = vsel %vm519, %v606, 0.0
        %665 = vadd.xlane.f32.xlu0 %v664
        %v666 = vpop.xlane.xlu0 %665
        %v667 = vsel %vm519, %v611, 0.0
        %668 = vadd.xlane.f32.xlu0 %v667
        %v669 = vpop.xlane.xlu0 %668
        %v670 = vsel %vm519, %v614, 0.0
        %671 = vadd.xlane.f32.xlu0 %v670
        %v672 = vpop.xlane.xlu0 %671
        %v673 = vsel %vm519, %v619, 0.0
        %674 = vadd.xlane.f32.xlu0 %v673
        %v675 = vpop.xlane.xlu0 %674
        %v676 = vsel %vm519, %v622, 0.0
        %677 = vadd.xlane.f32.xlu0 %v676
        %v678 = vpop.xlane.xlu0 %677
        %v679 = vsel %vm519, %v627, 0.0
        %680 = vadd.xlane.f32.xlu0 %v679
        %v681 = vpop.xlane.xlu0 %680
        %v682 = vsel %vm519, %v630, 0.0
        %683 = vadd.xlane.f32.xlu0 %v682
        %v684 = vpop.xlane.xlu0 %683
        %v685 = vsel %vm519, %v635, 0.0
        %686 = vadd.xlane.f32.xlu0 %v685
        %v687 = vpop.xlane.xlu0 %686
        %v688 = vsel %vm519, %v638, 0.0
        %689 = vadd.xlane.f32.xlu0 %v688
        %v690 = vpop.xlane.xlu0 %689
        %v691 = vrcp.pop 32.0
        %v692 = vmul.f32 %v645, %v691
        %v693 = vmul.f32 %v648, %v691
        %v694 = vmul.f32 %v651, %v691
        %v695 = vmul.f32 %v654, %v691
        %v696 = vmul.f32 %v657, %v691
        %v697 = vmul.f32 %v660, %v691
        %v698 = vmul.f32 %v663, %v691
        %v699 = vmul.f32 %v666, %v691
        %v700 = vmul.f32 %v669, %v691
        %v701 = vmul.f32 %v672, %v691
        %v702 = vmul.f32 %v675, %v691
        %v703 = vmul.f32 %v678, %v691
        %v704 = vmul.f32 %v681, %v691
        %v705 = vmul.f32 %v684, %v691
        %v706 = vmul.f32 %v687, %v691
        %v707 = vmul.f32 %v690, %v691
        %v708 = vsub.f32 %v579, %v692
        %v709 = vsub.f32 %v582, %v693
        %v710 = vsub.f32 %v587, %v694
        %v711 = vsub.f32 %v590, %v695
        %v712 = vsub.f32 %v595, %v696
        %v713 = vsub.f32 %v598, %v697
        %v714 = vsub.f32 %v603, %v698
        %v715 = vsub.f32 %v606, %v699
        %v716 = vsub.f32 %v611, %v700
        %v717 = vsub.f32 %v614, %v701
        %v718 = vsub.f32 %v619, %v702
        %v719 = vsub.f32 %v622, %v703
        %v720 = vsub.f32 %v627, %v704
        %v721 = vsub.f32 %v630, %v705
        %v722 = vsub.f32 %v635, %v706
        %v723 = vsub.f32 %v638, %v707
        %v724 = vmul.f32 %v708, %v708
        %v725 = vmul.f32 %v709, %v709
        %v726 = vmul.f32 %v710, %v710
        %v727 = vmul.f32 %v711, %v711
        %v728 = vmul.f32 %v712, %v712
        %v729 = vmul.f32 %v713, %v713
        %v730 = vmul.f32 %v714, %v714
        %v731 = vmul.f32 %v715, %v715
        %v732 = vmul.f32 %v716, %v716
        %v733 = vmul.f32 %v717, %v717
        %v734 = vmul.f32 %v718, %v718
        %v735 = vmul.f32 %v719, %v719
        %v736 = vmul.f32 %v720, %v720
        %v737 = vmul.f32 %v721, %v721
        %v738 = vmul.f32 %v722, %v722
        %v739 = vmul.f32 %v723, %v723
        %v740 = vsel %vm519, %v724, 0.0
        %741 = vadd.xlane.f32.xlu0 %v740
        %v742 = vpop.xlane.xlu0 %741
        %v743 = vsel %vm519, %v725, 0.0
        %744 = vadd.xlane.f32.xlu0 %v743
        %v745 = vpop.xlane.xlu0 %744
        %v746 = vsel %vm519, %v726, 0.0
        %747 = vadd.xlane.f32.xlu0 %v746
        %v748 = vpop.xlane.xlu0 %747
        %v749 = vsel %vm519, %v727, 0.0
        %750 = vadd.xlane.f32.xlu0 %v749
        %v751 = vpop.xlane.xlu0 %750
        %v752 = vsel %vm519, %v728, 0.0
        %753 = vadd.xlane.f32.xlu0 %v752
        %v754 = vpop.xlane.xlu0 %753
        %v755 = vsel %vm519, %v729, 0.0
        %756 = vadd.xlane.f32.xlu0 %v755
        %v757 = vpop.xlane.xlu0 %756
        %v758 = vsel %vm519, %v730, 0.0
        %759 = vadd.xlane.f32.xlu0 %v758
        %v760 = vpop.xlane.xlu0 %759
        %v761 = vsel %vm519, %v731, 0.0
        %762 = vadd.xlane.f32.xlu0 %v761
        %v763 = vpop.xlane.xlu0 %762
        %v764 = vsel %vm519, %v732, 0.0
        %765 = vadd.xlane.f32.xlu0 %v764
        %v766 = vpop.xlane.xlu0 %765
        %v767 = vsel %vm519, %v733, 0.0
        %768 = vadd.xlane.f32.xlu0 %v767
        %v769 = vpop.xlane.xlu0 %768
        %v770 = vsel %vm519, %v734, 0.0
        %771 = vadd.xlane.f32.xlu0 %v770
        %v772 = vpop.xlane.xlu0 %771
        %v773 = vsel %vm519, %v735, 0.0
        %774 = vadd.xlane.f32.xlu0 %v773
        %v775 = vpop.xlane.xlu0 %774
        %v776 = vsel %vm519, %v736, 0.0
        %777 = vadd.xlane.f32.xlu0 %v776
        %v778 = vpop.xlane.xlu0 %777
        %v779 = vsel %vm519, %v737, 0.0
        %780 = vadd.xlane.f32.xlu0 %v779
        %v781 = vpop.xlane.xlu0 %780
        %v782 = vsel %vm519, %v738, 0.0
        %783 = vadd.xlane.f32.xlu0 %v782
        %v784 = vpop.xlane.xlu0 %783
        %v785 = vsel %vm519, %v739, 0.0
        %786 = vadd.xlane.f32.xlu0 %v785
        %v787 = vpop.xlane.xlu0 %786
        %v788 = vmul.f32 %v742, %v691
        %v789 = vmul.f32 %v745, %v691
        %v790 = vmul.f32 %v748, %v691
        %v791 = vmul.f32 %v751, %v691
        %v792 = vmul.f32 %v754, %v691
        %v793 = vmul.f32 %v757, %v691
        %v794 = vmul.f32 %v760, %v691
        %v795 = vmul.f32 %v763, %v691
        %v796 = vmul.f32 %v766, %v691
        %v797 = vmul.f32 %v769, %v691
        %v798 = vmul.f32 %v772, %v691
        %v799 = vmul.f32 %v775, %v691
        %v800 = vmul.f32 %v778, %v691
        %v801 = vmul.f32 %v781, %v691
        %v802 = vmul.f32 %v784, %v691
        %v803 = vmul.f32 %v787, %v691
        %v804 = vadd.f32 %v788, 1e-05
        %v805 = vadd.f32 %v789, 1e-05
        %v806 = vadd.f32 %v790, 1e-05
        %v807 = vadd.f32 %v791, 1e-05
        %v808 = vadd.f32 %v792, 1e-05
        %v809 = vadd.f32 %v793, 1e-05
        %v810 = vadd.f32 %v794, 1e-05
        %v811 = vadd.f32 %v795, 1e-05
        %v812 = vadd.f32 %v796, 1e-05
        %v813 = vadd.f32 %v797, 1e-05
        %v814 = vadd.f32 %v798, 1e-05
        %v815 = vadd.f32 %v799, 1e-05
        %v816 = vadd.f32 %v800, 1e-05
        %v817 = vadd.f32 %v801, 1e-05
        %v818 = vadd.f32 %v802, 1e-05
        %v819 = vadd.f32 %v803, 1e-05
        %v820 = vrsqrt.pop %v804
        %v821 = vrsqrt.pop %v805
        %v822 = vrsqrt.pop %v806
        %v823 = vrsqrt.pop %v807
        %v824 = vrsqrt.pop %v808
        %v825 = vrsqrt.pop %v809
        %v826 = vrsqrt.pop %v810
        %v827 = vrsqrt.pop %v811
        %v828 = vrsqrt.pop %v812
        %v829 = vrsqrt.pop %v813
        %v830 = vrsqrt.pop %v814
        %v831 = vrsqrt.pop %v815
        %v832 = vrsqrt.pop %v816
        %v833 = vrsqrt.pop %v817
        %v834 = vrsqrt.pop %v818
        %v835 = vrsqrt.pop %v819
        %v836 = vmul.f32 %v708, %v820
        %v837 = vmul.f32 %v709, %v821
        %v838 = vmul.f32 %v710, %v822
        %v839 = vmul.f32 %v711, %v823
        %v840 = vmul.f32 %v712, %v824
        %v841 = vmul.f32 %v713, %v825
        %v842 = vmul.f32 %v714, %v826
        %v843 = vmul.f32 %v715, %v827
        %v844 = vmul.f32 %v716, %v828
        %v845 = vmul.f32 %v717, %v829
        %v846 = vmul.f32 %v718, %v830
        %v847 = vmul.f32 %v719, %v831
        %v848 = vmul.f32 %v720, %v832
        %v849 = vmul.f32 %v721, %v833
        %v850 = vmul.f32 %v722, %v834
        %v851 = vmul.f32 %v723, %v835
        %v852 = vlaneseq
        %v853 = vshrl.u32 %v852, 7
        %v854 = vsub.s32 0, %v853
        %v855 = vrot.slane %v641, %v854
        %v856 = vmul.f32 %v836, %v855
        %v857 = vmul.f32 %v837, %v855
        %v858 = vmul.f32 %v838, %v855
        %v859 = vmul.f32 %v839, %v855
        %v860 = vmul.f32 %v840, %v855
        %v861 = vmul.f32 %v841, %v855
        %v862 = vmul.f32 %v842, %v855
        %v863 = vmul.f32 %v843, %v855
        %v864 = vmul.f32 %v844, %v855
        %v865 = vmul.f32 %v845, %v855
        %v866 = vmul.f32 %v846, %v855
        %v867 = vmul.f32 %v847, %v855
        %v868 = vmul.f32 %v848, %v855
        %v869 = vmul.f32 %v849, %v855
        %v870 = vmul.f32 %v850, %v855
        %v871 = vmul.f32 %v851, %v855
        %v872 = vlaneseq
        %v873 = vshrl.u32 %v872, 7
        %v874 = vsub.s32 0, %v873
        %v875 = vrot.slane %v642, %v874
        %v876 = vadd.f32 %v856, %v875
        %v877 = vadd.f32 %v857, %v875
        %v878 = vadd.f32 %v858, %v875
        %v879 = vadd.f32 %v859, %v875
        %v880 = vadd.f32 %v860, %v875
        %v881 = vadd.f32 %v861, %v875
        %v882 = vadd.f32 %v862, %v875
        %v883 = vadd.f32 %v863, %v875
        %v884 = vadd.f32 %v864, %v875
        %v885 = vadd.f32 %v865, %v875
        %v886 = vadd.f32 %v866, %v875
        %v887 = vadd.f32 %v867, %v875
        %v888 = vadd.f32 %v868, %v875
        %v889 = vadd.f32 %v869, %v875
        %v890 = vadd.f32 %v870, %v875
        %v891 = vadd.f32 %v871, %v875
        %v892 = vld [vmem:[%s2] sm:$0xf]
        %v893 = vld [vmem:[%s2 + $0x4] sm:$0xf]
        %v894 = vld [vmem:[%s2 + $0x8] sm:$0xf]
        %v895 = vld [vmem:[%s2 + $0xc] sm:$0xf]
        %v896 = vld [vmem:[%s2 + $0x10] sm:$0xf]
        %v897 = vld [vmem:[%s2 + $0x14] sm:$0xf]
        %v898 = vld [vmem:[%s2 + $0x18] sm:$0xf]
        %v899 = vld [vmem:[%s2 + $0x1c] sm:$0xf]
        %v900 = vld [vmem:[%s2 + $0x20] sm:$0xf]
        %v901 = vld [vmem:[%s2 + $0x24] sm:$0xf]
        %v902 = vld [vmem:[%s2 + $0x28] sm:$0xf]
        %v903 = vld [vmem:[%s2 + $0x2c] sm:$0xf]
        %v904 = vld [vmem:[%s2 + $0x30] sm:$0xf]
        %v905 = vld [vmem:[%s2 + $0x34] sm:$0xf]
        %v906 = vld [vmem:[%s2 + $0x38] sm:$0xf]
        %v907 = vld [vmem:[%s2 + $0x3c] sm:$0xf]
        %v908 = vpack.c.bf16 %v877, %v876
        %v909 = vpack.c.bf16 %v879, %v878
        %v910 = vpack.c.bf16 %v881, %v880
        %v911 = vpack.c.bf16 %v883, %v882
        %v912 = vpack.c.bf16 %v885, %v884
        %v913 = vpack.c.bf16 %v887, %v886
        %v914 = vpack.c.bf16 %v889, %v888
        %v915 = vpack.c.bf16 %v891, %v890
        %v916 = vld [vmem:[%s3] sm:$0xff]
        %v917 = vld [vmem:[%s3 + $0x8] sm:$0xff]
        %v918 = vld [vmem:[%s3 + $0x10] sm:$0xff]
        %v919 = vld [vmem:[%s3 + $0x18] sm:$0xff]
        %v920 = vld [vmem:[%s3 + $0x20] sm:$0xff]
        %v921 = vld [vmem:[%s3 + $0x28] sm:$0xff]
        %v922 = vld [vmem:[%s3 + $0x30] sm:$0xff]
        %v923 = vld [vmem:[%s3 + $0x38] sm:$0xff]
        %v924 = vld [vmem:[%s3 + $0x40] sm:$0xff]
        %v925 = vld [vmem:[%s3 + $0x48] sm:$0xff]
        %v926 = vld [vmem:[%s3 + $0x50] sm:$0xff]
        %v927 = vld [vmem:[%s3 + $0x58] sm:$0xff]
        %v928 = vld [vmem:[%s3 + $0x60] sm:$0xff]
        %v929 = vld [vmem:[%s3 + $0x68] sm:$0xff]
        %v930 = vld [vmem:[%s3 + $0x70] sm:$0xff]
        %v931 = vld [vmem:[%s3 + $0x78] sm:$0xff]
        %933 = vset.pattern.permute.xlu0 0
        %934 = vperm.xlu0 %933, %v916
        %v935 = vpop.permute.xlu0 %934
        %938 = vset.pattern.permute.xlu0 0
        %939 = vperm.xlu0 %938, %v917
        %v940 = vpop.permute.xlu0 %939
        %943 = vset.pattern.permute.xlu0 0
        %944 = vperm.xlu0 %943, %v918
        %v945 = vpop.permute.xlu0 %944
        %948 = vset.pattern.permute.xlu0 0
        %949 = vperm.xlu0 %948, %v919
        %v950 = vpop.permute.xlu0 %949
        %953 = vset.pattern.permute.xlu0 0
        %954 = vperm.xlu0 %953, %v920
        %v955 = vpop.permute.xlu0 %954
        %958 = vset.pattern.permute.xlu0 0
        %959 = vperm.xlu0 %958, %v921
        %v960 = vpop.permute.xlu0 %959
        %963 = vset.pattern.permute.xlu0 0
        %964 = vperm.xlu0 %963, %v922
        %v965 = vpop.permute.xlu0 %964
        %968 = vset.pattern.permute.xlu0 0
        %969 = vperm.xlu0 %968, %v923
        %v970 = vpop.permute.xlu0 %969
        %973 = vset.pattern.permute.xlu0 0
        %974 = vperm.xlu0 %973, %v924
        %v975 = vpop.permute.xlu0 %974
        %978 = vset.pattern.permute.xlu0 0
        %979 = vperm.xlu0 %978, %v925
        %v980 = vpop.permute.xlu0 %979
        %983 = vset.pattern.permute.xlu0 0
        %984 = vperm.xlu0 %983, %v926
        %v985 = vpop.permute.xlu0 %984
        %988 = vset.pattern.permute.xlu0 0
        %989 = vperm.xlu0 %988, %v927
        %v990 = vpop.permute.xlu0 %989
        %993 = vset.pattern.permute.xlu0 0
        %994 = vperm.xlu0 %993, %v928
        %v995 = vpop.permute.xlu0 %994
        %998 = vset.pattern.permute.xlu0 0
        %999 = vperm.xlu0 %998, %v929
        %v1000 = vpop.permute.xlu0 %999
        %1003 = vset.pattern.permute.xlu0 0
        %1004 = vperm.xlu0 %1003, %v930
        %v1005 = vpop.permute.xlu0 %1004
        %1008 = vset.pattern.permute.xlu0 0
        %1009 = vperm.xlu0 %1008, %v931
        %v1010 = vpop.permute.xlu0 %1009
        %v1028 = vunpack.c.l.b16 %v892
        %v1029 = vunpack.c.l.b16 %v893
        %v1030 = vunpack.c.l.b16 %v894
        %v1031 = vunpack.c.l.b16 %v895
        %v1032 = vunpack.c.l.b16 %v896
        %v1033 = vunpack.c.l.b16 %v897
        %v1034 = vunpack.c.l.b16 %v898
        %v1035 = vunpack.c.l.b16 %v899
        %v1036 = vunpack.c.l.b16 %v900
        %v1037 = vunpack.c.l.b16 %v901
        %v1038 = vunpack.c.l.b16 %v902
        %v1039 = vunpack.c.l.b16 %v903
        %v1040 = vunpack.c.l.b16 %v904
        %v1041 = vunpack.c.l.b16 %v905
        %v1042 = vunpack.c.l.b16 %v906
        %v1043 = vunpack.c.l.b16 %v907
        %v1044 = vpack.c.b16 %v1029, %v1028
        %v1045 = vpack.c.b16 %v1031, %v1030
        %v1046 = vpack.c.b16 %v1033, %v1032
        %v1047 = vpack.c.b16 %v1035, %v1034
        %v1048 = vpack.c.b16 %v1037, %v1036
        %v1049 = vpack.c.b16 %v1039, %v1038
        %v1050 = vpack.c.b16 %v1041, %v1040
        %v1051 = vpack.c.b16 %v1043, %v1042
        %1060 = vmatprep.subr.bf16.mxu0 0
        %1061 = vmatpush1.bf16.msra.mxu0 %v908
        %1062 = vmatprep.subr.bf16.mxu0 0
        %1063 = vmatpush1.bf16.msra.mxu0 %v909
        %1064 = vmatprep.subr.bf16.mxu0 0
        %1065 = vmatpush1.bf16.msra.mxu0 %v910
        %1066 = vmatprep.subr.bf16.mxu0 0
        %1067 = vmatpush1.bf16.msra.mxu0 %v911
        %1068 = vmatprep.subr.bf16.mxu0 0
        %1069 = vmatpush1.bf16.msra.mxu0 %v912
        %1070 = vmatprep.subr.bf16.mxu0 0
        %1071 = vmatpush1.bf16.msra.mxu0 %v913
        %1072 = vmatprep.subr.bf16.mxu0 0
        %1073 = vmatpush1.bf16.msra.mxu0 %v914
        %1074 = vmatprep.subr.bf16.mxu0 0
        %1075 = vmatpush1.bf16.msra.mxu0 %v915
        %1076 = vmatprep.subr.bf16.mxu0 0
        %1077 = vmatpush1.bf16.msra.mxu0 0
        %1078 = vmatprep.subr.bf16.mxu0 0
        %1079 = vmatpush1.bf16.msra.mxu0 0
        %1080 = vmatprep.subr.bf16.mxu0 0
        %1081 = vmatpush1.bf16.msra.mxu0 0
        %1082 = vmatprep.subr.bf16.mxu0 0
        %1083 = vmatpush1.bf16.msra.mxu0 0
        %1084 = vmatprep.subr.bf16.mxu0 0
        %1085 = vmatpush1.bf16.msra.mxu0 0
        %1086 = vmatprep.subr.bf16.mxu0 0
        %1087 = vmatpush1.bf16.msra.mxu0 0
        %1088 = vmatprep.subr.bf16.mxu0 0
        %1089 = vmatpush1.bf16.msra.mxu0 0
        %1090 = vmatprep.subr.bf16.mxu0 0
        %1091 = vmatpush1.bf16.msra.mxu0 0
        %1092 = vmatprep.mubr.bf16.mxu0 0
        %1093 = vmatmul.mubr.bf16.gmra.mrb[0].mxu0 %v1044
        %v1094 = vpop.f32.mrb[0].mxu0
        %v1095 = vadd.f32 %v935, %v1094
        %v1096 = vpop.f32.mrb[0].mxu0
        %v1097 = vpop.f32.mrb[0].mxu0
        %v1098 = vadd.f32 %v940, %v1097
        %v1099 = vpop.f32.mrb[0].mxu0
        %1100 = vmatprep.mubr.bf16.mxu0 0
        %1101 = vmatmul.mubr.bf16.gmra.mrb[0].mxu0 %v1045
        %v1102 = vpop.f32.mrb[0].mxu0
        %v1103 = vadd.f32 %v945, %v1102
        %v1104 = vpop.f32.mrb[0].mxu0
        %v1105 = vpop.f32.mrb[0].mxu0
        %v1106 = vadd.f32 %v950, %v1105
        %v1107 = vpop.f32.mrb[0].mxu0
        %1108 = vmatprep.mubr.bf16.mxu0 0
        %1109 = vmatmul.mubr.bf16.gmra.mrb[0].mxu0 %v1046
        %v1110 = vpop.f32.mrb[0].mxu0
        %v1111 = vadd.f32 %v955, %v1110
        %v1112 = vpop.f32.mrb[0].mxu0
        %v1113 = vpop.f32.mrb[0].mxu0
        %v1114 = vadd.f32 %v960, %v1113
        %v1115 = vpop.f32.mrb[0].mxu0
        %1116 = vmatprep.mubr.bf16.mxu0 0
        %1117 = vmatmul.mubr.bf16.gmra.mrb[0].mxu0 %v1047
        %v1118 = vpop.f32.mrb[0].mxu0
        %v1119 = vadd.f32 %v965, %v1118
        %v1120 = vpop.f32.mrb[0].mxu0
        %v1121 = vpop.f32.mrb[0].mxu0
        %v1122 = vadd.f32 %v970, %v1121
        %v1123 = vpop.f32.mrb[0].mxu0
        %1124 = vmatprep.mubr.bf16.mxu0 0
        %1125 = vmatmul.mubr.bf16.gmra.mrb[0].mxu0 %v1048
        %v1126 = vpop.f32.mrb[0].mxu0
        %v1127 = vadd.f32 %v975, %v1126
        %v1128 = vpop.f32.mrb[0].mxu0
        %v1129 = vpop.f32.mrb[0].mxu0
        %v1130 = vadd.f32 %v980, %v1129
        %v1131 = vpop.f32.mrb[0].mxu0
        %1132 = vmatprep.mubr.bf16.mxu0 0
        %1133 = vmatmul.mubr.bf16.gmra.mrb[0].mxu0 %v1049
        %v1134 = vpop.f32.mrb[0].mxu0
        %v1135 = vadd.f32 %v985, %v1134
        %v1136 = vpop.f32.mrb[0].mxu0
        %v1137 = vpop.f32.mrb[0].mxu0
        %v1138 = vadd.f32 %v990, %v1137
        %v1139 = vpop.f32.mrb[0].mxu0
        %1140 = vmatprep.mubr.bf16.mxu0 0
        %1141 = vmatmul.mubr.bf16.gmra.mrb[0].mxu0 %v1050
        %v1142 = vpop.f32.mrb[0].mxu0
        %v1143 = vadd.f32 %v995, %v1142
        %v1144 = vpop.f32.mrb[0].mxu0
        %v1145 = vpop.f32.mrb[0].mxu0
        %v1146 = vadd.f32 %v1000, %v1145
        %v1147 = vpop.f32.mrb[0].mxu0
        %1148 = vmatprep.mubr.bf16.mxu0 0
        %1149 = vmatmul.mubr.bf16.gmra.mrb[0].mxu0 %v1051
        %v1150 = vpop.f32.mrb[0].mxu0
        %v1151 = vadd.f32 %v1005, %v1150
        %v1152 = vpop.f32.mrb[0].mxu0
        %v1153 = vpop.f32.mrb[0].mxu0
        %v1154 = vadd.f32 %v1010, %v1153
        %v1155 = vpop.f32.mrb[0].mxu0
        %1156 = vdwg.mxu0
        %v1157 = vmul.f32 %v1095, 0.5
        %v1158 = vmul.f32 %v1098, 0.5
        %v1159 = vmul.f32 %v1103, 0.5
        %v1160 = vmul.f32 %v1106, 0.5
        %v1161 = vmul.f32 %v1111, 0.5
        %v1162 = vmul.f32 %v1114, 0.5
        %v1163 = vmul.f32 %v1119, 0.5
        %v1164 = vmul.f32 %v1122, 0.5
        %v1165 = vmul.f32 %v1127, 0.5
        %v1166 = vmul.f32 %v1130, 0.5
        %v1167 = vmul.f32 %v1135, 0.5
        %v1168 = vmul.f32 %v1138, 0.5
        %v1169 = vmul.f32 %v1143, 0.5
        %v1170 = vmul.f32 %v1146, 0.5
        %v1171 = vmul.f32 %v1151, 0.5
        %v1172 = vmul.f32 %v1154, 0.5
        %v1173 = vmul.f32 %v1095, 0.70710677
        %v1174 = vmul.f32 %v1098, 0.70710677
        %v1175 = vmul.f32 %v1103, 0.70710677
        %v1176 = vmul.f32 %v1106, 0.70710677
        %v1177 = vmul.f32 %v1111, 0.70710677
        %v1178 = vmul.f32 %v1114, 0.70710677
        %v1179 = vmul.f32 %v1119, 0.70710677
        %v1180 = vmul.f32 %v1122, 0.70710677
        %v1181 = vmul.f32 %v1127, 0.70710677
        %v1182 = vmul.f32 %v1130, 0.70710677
        %v1183 = vmul.f32 %v1135, 0.70710677
        %v1184 = vmul.f32 %v1138, 0.70710677
        %v1185 = vmul.f32 %v1143, 0.70710677
        %v1186 = vmul.f32 %v1146, 0.70710677
        %v1187 = vmul.f32 %v1151, 0.70710677
        %v1188 = vmul.f32 %v1154, 0.70710677
        %v1189 = verf.f32.pop %v1173
        %v1190 = verf.f32.pop %v1174
        %v1191 = verf.f32.pop %v1175
        %v1192 = verf.f32.pop %v1176
        %v1193 = verf.f32.pop %v1177
        %v1194 = verf.f32.pop %v1178
        %v1195 = verf.f32.pop %v1179
        %v1196 = verf.f32.pop %v1180
        %v1197 = verf.f32.pop %v1181
        %v1198 = verf.f32.pop %v1182
        %v1199 = verf.f32.pop %v1183
        %v1200 = verf.f32.pop %v1184
        %v1201 = verf.f32.pop %v1185
        %v1202 = verf.f32.pop %v1186
        %v1203 = verf.f32.pop %v1187
        %v1204 = verf.f32.pop %v1188
        %v1205 = vadd.f32 %v1189, 1.0
        %v1206 = vadd.f32 %v1190, 1.0
        %v1207 = vadd.f32 %v1191, 1.0
        %v1208 = vadd.f32 %v1192, 1.0
        %v1209 = vadd.f32 %v1193, 1.0
        %v1210 = vadd.f32 %v1194, 1.0
        %v1211 = vadd.f32 %v1195, 1.0
        %v1212 = vadd.f32 %v1196, 1.0
        %v1213 = vadd.f32 %v1197, 1.0
        %v1214 = vadd.f32 %v1198, 1.0
        %v1215 = vadd.f32 %v1199, 1.0
        %v1216 = vadd.f32 %v1200, 1.0
        %v1217 = vadd.f32 %v1201, 1.0
        %v1218 = vadd.f32 %v1202, 1.0
        %v1219 = vadd.f32 %v1203, 1.0
        %v1220 = vadd.f32 %v1204, 1.0
        %v1221 = vmul.f32 %v1157, %v1205
        %v1222 = vmul.f32 %v1158, %v1206
        %v1223 = vmul.f32 %v1159, %v1207
        %v1224 = vmul.f32 %v1160, %v1208
        %v1225 = vmul.f32 %v1161, %v1209
        %v1226 = vmul.f32 %v1162, %v1210
        %v1227 = vmul.f32 %v1163, %v1211
        %v1228 = vmul.f32 %v1164, %v1212
        %v1229 = vmul.f32 %v1165, %v1213
        %v1230 = vmul.f32 %v1166, %v1214
        %v1231 = vmul.f32 %v1167, %v1215
        %v1232 = vmul.f32 %v1168, %v1216
        %v1233 = vmul.f32 %v1169, %v1217
        %v1234 = vmul.f32 %v1170, %v1218
        %v1235 = vmul.f32 %v1171, %v1219
        %v1236 = vmul.f32 %v1172, %v1220
        %v1237 = vld [vmem:[%s4] sm:$0xf]
        %v1238 = vld [vmem:[%s4 + $0x4] sm:$0xf]
        %v1239 = vld [vmem:[%s4 + $0x8] sm:$0xf]
        %v1240 = vld [vmem:[%s4 + $0xc] sm:$0xf]
        %v1241 = vld [vmem:[%s4 + $0x10] sm:$0xf]
        %v1242 = vld [vmem:[%s4 + $0x14] sm:$0xf]
        %v1243 = vld [vmem:[%s4 + $0x18] sm:$0xf]
        %v1244 = vld [vmem:[%s4 + $0x1c] sm:$0xf]
        %v1245 = vld [vmem:[%s4 + $0x20] sm:$0xf]
        %v1246 = vld [vmem:[%s4 + $0x24] sm:$0xf]
        %v1247 = vld [vmem:[%s4 + $0x28] sm:$0xf]
        %v1248 = vld [vmem:[%s4 + $0x2c] sm:$0xf]
        %v1249 = vld [vmem:[%s4 + $0x30] sm:$0xf]
        %v1250 = vld [vmem:[%s4 + $0x34] sm:$0xf]
        %v1251 = vld [vmem:[%s4 + $0x38] sm:$0xf]
        %v1252 = vld [vmem:[%s4 + $0x3c] sm:$0xf]
        %v1253 = vpack.c.bf16 %v1222, %v1221
        %v1254 = vpack.c.bf16 %v1224, %v1223
        %v1255 = vpack.c.bf16 %v1226, %v1225
        %v1256 = vpack.c.bf16 %v1228, %v1227
        %v1257 = vpack.c.bf16 %v1230, %v1229
        %v1258 = vpack.c.bf16 %v1232, %v1231
        %v1259 = vpack.c.bf16 %v1234, %v1233
        %v1260 = vpack.c.bf16 %v1236, %v1235
        %v1277 = vunpack.c.l.b16 %v1237
        %v1278 = vunpack.c.l.b16 %v1238
        %v1279 = vunpack.c.l.b16 %v1239
        %v1280 = vunpack.c.l.b16 %v1240
        %v1281 = vunpack.c.l.b16 %v1241
        %v1282 = vunpack.c.l.b16 %v1242
        %v1283 = vunpack.c.l.b16 %v1243
        %v1284 = vunpack.c.l.b16 %v1244
        %v1285 = vunpack.c.l.b16 %v1245
        %v1286 = vunpack.c.l.b16 %v1246
        %v1287 = vunpack.c.l.b16 %v1247
        %v1288 = vunpack.c.l.b16 %v1248
        %v1289 = vunpack.c.l.b16 %v1249
        %v1290 = vunpack.c.l.b16 %v1250
        %v1291 = vunpack.c.l.b16 %v1251
        %v1292 = vunpack.c.l.b16 %v1252
        %v1293 = vpack.c.b16 %v1278, %v1277
        %v1294 = vpack.c.b16 %v1280, %v1279
        %v1295 = vpack.c.b16 %v1282, %v1281
        %v1296 = vpack.c.b16 %v1284, %v1283
        %v1297 = vpack.c.b16 %v1286, %v1285
        %v1298 = vpack.c.b16 %v1288, %v1287
        %v1299 = vpack.c.b16 %v1290, %v1289
        %v1300 = vpack.c.b16 %v1292, %v1291
        %1309 = vmatprep.subr.bf16.mxu0 0
        %1310 = vmatpush1.bf16.msra.mxu0 %v1253
        %1311 = vmatprep.subr.bf16.mxu0 0
        %1312 = vmatpush1.bf16.msra.mxu0 %v1254
        %1313 = vmatprep.subr.bf16.mxu0 0
        %1314 = vmatpush1.bf16.msra.mxu0 %v1255
        %1315 = vmatprep.subr.bf16.mxu0 0
        %1316 = vmatpush1.bf16.msra.mxu0 %v1256
        %1317 = vmatprep.subr.bf16.mxu0 0
        %1318 = vmatpush1.bf16.msra.mxu0 %v1257
        %1319 = vmatprep.subr.bf16.mxu0 0
        %1320 = vmatpush1.bf16.msra.mxu0 %v1258
        %1321 = vmatprep.subr.bf16.mxu0 0
        %1322 = vmatpush1.bf16.msra.mxu0 %v1259
        %1323 = vmatprep.subr.bf16.mxu0 0
        %1324 = vmatpush1.bf16.msra.mxu0 %v1260
        %1325 = vmatprep.subr.bf16.mxu0 0
        %1326 = vmatpush1.bf16.msra.mxu0 0
        %1327 = vmatprep.subr.bf16.mxu0 0
        %1328 = vmatpush1.bf16.msra.mxu0 0
        %1329 = vmatprep.subr.bf16.mxu0 0
        %1330 = vmatpush1.bf16.msra.mxu0 0
        %1331 = vmatprep.subr.bf16.mxu0 0
        %1332 = vmatpush1.bf16.msra.mxu0 0
        %1333 = vmatprep.subr.bf16.mxu0 0
        %1334 = vmatpush1.bf16.msra.mxu0 0
        %1335 = vmatprep.subr.bf16.mxu0 0
        %1336 = vmatpush1.bf16.msra.mxu0 0
        %1337 = vmatprep.subr.bf16.mxu0 0
        %1338 = vmatpush1.bf16.msra.mxu0 0
        %1339 = vmatprep.subr.bf16.mxu0 0
        %1340 = vmatpush1.bf16.msra.mxu0 0
        %1341 = vmatprep.mubr.bf16.mxu0 0
        %1342 = vmatmul.mubr.bf16.gmra.mrb[0].mxu0 %v1293
        %v1343 = vpop.f32.mrb[0].mxu0
        %v1344 = vadd.f32 0.0, %v1343
        %v1345 = vpop.f32.mrb[0].mxu0
        %v1346 = vpop.f32.mrb[0].mxu0
        %v1347 = vadd.f32 0.0, %v1346
        %v1348 = vpop.f32.mrb[0].mxu0
        %1349 = vmatprep.mubr.bf16.mxu0 0
        %1350 = vmatmul.mubr.bf16.gmra.mrb[0].mxu0 %v1294
        %v1351 = vpop.f32.mrb[0].mxu0
        %v1352 = vadd.f32 0.0, %v1351
        %v1353 = vpop.f32.mrb[0].mxu0
        %v1354 = vpop.f32.mrb[0].mxu0
        %v1355 = vadd.f32 0.0, %v1354
        %v1356 = vpop.f32.mrb[0].mxu0
        %1357 = vmatprep.mubr.bf16.mxu0 0
        %1358 = vmatmul.mubr.bf16.gmra.mrb[0].mxu0 %v1295
        %v1359 = vpop.f32.mrb[0].mxu0
        %v1360 = vadd.f32 0.0, %v1359
        %v1361 = vpop.f32.mrb[0].mxu0
        %v1362 = vpop.f32.mrb[0].mxu0
        %v1363 = vadd.f32 0.0, %v1362
        %v1364 = vpop.f32.mrb[0].mxu0
        %1365 = vmatprep.mubr.bf16.mxu0 0
        %1366 = vmatmul.mubr.bf16.gmra.mrb[0].mxu0 %v1296
        %v1367 = vpop.f32.mrb[0].mxu0
        %v1368 = vadd.f32 0.0, %v1367
        %v1369 = vpop.f32.mrb[0].mxu0
        %v1370 = vpop.f32.mrb[0].mxu0
        %v1371 = vadd.f32 0.0, %v1370
        %v1372 = vpop.f32.mrb[0].mxu0
        %1373 = vmatprep.mubr.bf16.mxu0 0
        %1374 = vmatmul.mubr.bf16.gmra.mrb[0].mxu0 %v1297
        %v1375 = vpop.f32.mrb[0].mxu0
        %v1376 = vadd.f32 0.0, %v1375
        %v1377 = vpop.f32.mrb[0].mxu0
        %v1378 = vpop.f32.mrb[0].mxu0
        %v1379 = vadd.f32 0.0, %v1378
        %v1380 = vpop.f32.mrb[0].mxu0
        %1381 = vmatprep.mubr.bf16.mxu0 0
        %1382 = vmatmul.mubr.bf16.gmra.mrb[0].mxu0 %v1298
        %v1383 = vpop.f32.mrb[0].mxu0
        %v1384 = vadd.f32 0.0, %v1383
        %v1385 = vpop.f32.mrb[0].mxu0
        %v1386 = vpop.f32.mrb[0].mxu0
        %v1387 = vadd.f32 0.0, %v1386
        %v1388 = vpop.f32.mrb[0].mxu0
        %1389 = vmatprep.mubr.bf16.mxu0 0
        %1390 = vmatmul.mubr.bf16.gmra.mrb[0].mxu0 %v1299
        %v1391 = vpop.f32.mrb[0].mxu0
        %v1392 = vadd.f32 0.0, %v1391
        %v1393 = vpop.f32.mrb[0].mxu0
        %v1394 = vpop.f32.mrb[0].mxu0
        %v1395 = vadd.f32 0.0, %v1394
        %v1396 = vpop.f32.mrb[0].mxu0
        %1397 = vmatprep.mubr.bf16.mxu0 0
        %1398 = vmatmul.mubr.bf16.gmra.mrb[0].mxu0 %v1300
        %v1399 = vpop.f32.mrb[0].mxu0
        %v1400 = vadd.f32 0.0, %v1399
        %v1401 = vpop.f32.mrb[0].mxu0
        %v1402 = vpop.f32.mrb[0].mxu0
        %v1403 = vadd.f32 0.0, %v1402
        %v1404 = vpop.f32.mrb[0].mxu0
        %1405 = vdwg.mxu0
        %v1406 = vadd.f32 %v579, %v1344
        %v1407 = vadd.f32 %v582, %v1347
        %v1408 = vadd.f32 %v587, %v1352
        %v1409 = vadd.f32 %v590, %v1355
        %v1410 = vadd.f32 %v595, %v1360
        %v1411 = vadd.f32 %v598, %v1363
        %v1412 = vadd.f32 %v603, %v1368
        %v1413 = vadd.f32 %v606, %v1371
        %v1414 = vadd.f32 %v611, %v1376
        %v1415 = vadd.f32 %v614, %v1379
        %v1416 = vadd.f32 %v619, %v1384
        %v1417 = vadd.f32 %v622, %v1387
        %v1418 = vadd.f32 %v627, %v1392
        %v1419 = vadd.f32 %v630, %v1395
        %v1420 = vadd.f32 %v635, %v1400
        %v1421 = vadd.f32 %v638, %v1403
        %v1422 = vld [vmem:[%s5] sm:$0xff]
        %v1423 = vld [vmem:[%s5 + $0x8] sm:$0xff]
        %v1424 = vld [vmem:[%s5 + $0x10] sm:$0xff]
        %v1425 = vld [vmem:[%s5 + $0x18] sm:$0xff]
        %v1426 = vld [vmem:[%s5 + $0x20] sm:$0xff]
        %v1427 = vld [vmem:[%s5 + $0x28] sm:$0xff]
        %v1428 = vld [vmem:[%s5 + $0x30] sm:$0xff]
        %v1429 = vld [vmem:[%s5 + $0x38] sm:$0xff]
        %v1430 = vld [vmem:[%s5 + $0x40] sm:$0xff]
        %v1431 = vld [vmem:[%s5 + $0x48] sm:$0xff]
        %v1432 = vld [vmem:[%s5 + $0x50] sm:$0xff]
        %v1433 = vld [vmem:[%s5 + $0x58] sm:$0xff]
        %v1434 = vld [vmem:[%s5 + $0x60] sm:$0xff]
        %v1435 = vld [vmem:[%s5 + $0x68] sm:$0xff]
        %v1436 = vld [vmem:[%s5 + $0x70] sm:$0xff]
        %v1437 = vld [vmem:[%s5 + $0x78] sm:$0xff]
        %1439 = vset.pattern.permute.xlu0 0
        %1440 = vperm.xlu0 %1439, %v1422
        %v1441 = vpop.permute.xlu0 %1440
        %1444 = vset.pattern.permute.xlu0 0
        %1445 = vperm.xlu0 %1444, %v1423
        %v1446 = vpop.permute.xlu0 %1445
        %1449 = vset.pattern.permute.xlu0 0
        %1450 = vperm.xlu0 %1449, %v1424
        %v1451 = vpop.permute.xlu0 %1450
        %1454 = vset.pattern.permute.xlu0 0
        %1455 = vperm.xlu0 %1454, %v1425
        %v1456 = vpop.permute.xlu0 %1455
        %1459 = vset.pattern.permute.xlu0 0
        %1460 = vperm.xlu0 %1459, %v1426
        %v1461 = vpop.permute.xlu0 %1460
        %1464 = vset.pattern.permute.xlu0 0
        %1465 = vperm.xlu0 %1464, %v1427
        %v1466 = vpop.permute.xlu0 %1465
        %1469 = vset.pattern.permute.xlu0 0
        %1470 = vperm.xlu0 %1469, %v1428
        %v1471 = vpop.permute.xlu0 %1470
        %1474 = vset.pattern.permute.xlu0 0
        %1475 = vperm.xlu0 %1474, %v1429
        %v1476 = vpop.permute.xlu0 %1475
        %1479 = vset.pattern.permute.xlu0 0
        %1480 = vperm.xlu0 %1479, %v1430
        %v1481 = vpop.permute.xlu0 %1480
        %1484 = vset.pattern.permute.xlu0 0
        %1485 = vperm.xlu0 %1484, %v1431
        %v1486 = vpop.permute.xlu0 %1485
        %1489 = vset.pattern.permute.xlu0 0
        %1490 = vperm.xlu0 %1489, %v1432
        %v1491 = vpop.permute.xlu0 %1490
        %1494 = vset.pattern.permute.xlu0 0
        %1495 = vperm.xlu0 %1494, %v1433
        %v1496 = vpop.permute.xlu0 %1495
        %1499 = vset.pattern.permute.xlu0 0
        %1500 = vperm.xlu0 %1499, %v1434
        %v1501 = vpop.permute.xlu0 %1500
        %1504 = vset.pattern.permute.xlu0 0
        %1505 = vperm.xlu0 %1504, %v1435
        %v1506 = vpop.permute.xlu0 %1505
        %1509 = vset.pattern.permute.xlu0 0
        %1510 = vperm.xlu0 %1509, %v1436
        %v1511 = vpop.permute.xlu0 %1510
        %1514 = vset.pattern.permute.xlu0 0
        %1515 = vperm.xlu0 %1514, %v1437
        %v1516 = vpop.permute.xlu0 %1515
        %v1518 = vadd.f32 %v1406, %v1441
        %v1519 = vadd.f32 %v1407, %v1446
        %v1520 = vadd.f32 %v1408, %v1451
        %v1521 = vadd.f32 %v1409, %v1456
        %v1522 = vadd.f32 %v1410, %v1461
        %v1523 = vadd.f32 %v1411, %v1466
        %v1524 = vadd.f32 %v1412, %v1471
        %v1525 = vadd.f32 %v1413, %v1476
        %v1526 = vadd.f32 %v1414, %v1481
        %v1527 = vadd.f32 %v1415, %v1486
        %v1528 = vadd.f32 %v1416, %v1491
        %v1529 = vadd.f32 %v1417, %v1496
        %v1530 = vadd.f32 %v1418, %v1501
        %v1531 = vadd.f32 %v1419, %v1506
        %v1532 = vadd.f32 %v1420, %v1511
        %v1533 = vadd.f32 %v1421, %v1516
        %v1534 = vsel %vm519, %v1518, 0.0
        %1535 = vadd.xlane.f32.xlu0 %v1534
        %v1536 = vpop.xlane.xlu0 %1535
        %v1537 = vsel %vm519, %v1519, 0.0
        %1538 = vadd.xlane.f32.xlu0 %v1537
        %v1539 = vpop.xlane.xlu0 %1538
        %v1540 = vsel %vm519, %v1520, 0.0
        %1541 = vadd.xlane.f32.xlu0 %v1540
        %v1542 = vpop.xlane.xlu0 %1541
        %v1543 = vsel %vm519, %v1521, 0.0
        %1544 = vadd.xlane.f32.xlu0 %v1543
        %v1545 = vpop.xlane.xlu0 %1544
        %v1546 = vsel %vm519, %v1522, 0.0
        %1547 = vadd.xlane.f32.xlu0 %v1546
        %v1548 = vpop.xlane.xlu0 %1547
        %v1549 = vsel %vm519, %v1523, 0.0
        %1550 = vadd.xlane.f32.xlu0 %v1549
        %v1551 = vpop.xlane.xlu0 %1550
        %v1552 = vsel %vm519, %v1524, 0.0
        %1553 = vadd.xlane.f32.xlu0 %v1552
        %v1554 = vpop.xlane.xlu0 %1553
        %v1555 = vsel %vm519, %v1525, 0.0
        %1556 = vadd.xlane.f32.xlu0 %v1555
        %v1557 = vpop.xlane.xlu0 %1556
        %v1558 = vsel %vm519, %v1526, 0.0
        %1559 = vadd.xlane.f32.xlu0 %v1558
        %v1560 = vpop.xlane.xlu0 %1559
        %v1561 = vsel %vm519, %v1527, 0.0
        %1562 = vadd.xlane.f32.xlu0 %v1561
        %v1563 = vpop.xlane.xlu0 %1562
        %v1564 = vsel %vm519, %v1528, 0.0
        %1565 = vadd.xlane.f32.xlu0 %v1564
        %v1566 = vpop.xlane.xlu0 %1565
        %v1567 = vsel %vm519, %v1529, 0.0
        %1568 = vadd.xlane.f32.xlu0 %v1567
        %v1569 = vpop.xlane.xlu0 %1568
        %v1570 = vsel %vm519, %v1530, 0.0
        %1571 = vadd.xlane.f32.xlu0 %v1570
        %v1572 = vpop.xlane.xlu0 %1571
        %v1573 = vsel %vm519, %v1531, 0.0
        %1574 = vadd.xlane.f32.xlu0 %v1573
        %v1575 = vpop.xlane.xlu0 %1574
        %v1576 = vsel %vm519, %v1532, 0.0
        %1577 = vadd.xlane.f32.xlu0 %v1576
        %v1578 = vpop.xlane.xlu0 %1577
        %v1579 = vsel %vm519, %v1533, 0.0
        %1580 = vadd.xlane.f32.xlu0 %v1579
        %v1581 = vpop.xlane.xlu0 %1580
        %v1582 = vmul.f32 %v1536, %v691
        %v1583 = vmul.f32 %v1539, %v691
        %v1584 = vmul.f32 %v1542, %v691
        %v1585 = vmul.f32 %v1545, %v691
        %v1586 = vmul.f32 %v1548, %v691
        %v1587 = vmul.f32 %v1551, %v691
        %v1588 = vmul.f32 %v1554, %v691
        %v1589 = vmul.f32 %v1557, %v691
        %v1590 = vmul.f32 %v1560, %v691
        %v1591 = vmul.f32 %v1563, %v691
        %v1592 = vmul.f32 %v1566, %v691
        %v1593 = vmul.f32 %v1569, %v691
        %v1594 = vmul.f32 %v1572, %v691
        %v1595 = vmul.f32 %v1575, %v691
        %v1596 = vmul.f32 %v1578, %v691
        %v1597 = vmul.f32 %v1581, %v691
        %v1598 = vsub.f32 %v1518, %v1582
        %v1599 = vsub.f32 %v1519, %v1583
        %v1600 = vsub.f32 %v1520, %v1584
        %v1601 = vsub.f32 %v1521, %v1585
        %v1602 = vsub.f32 %v1522, %v1586
        %v1603 = vsub.f32 %v1523, %v1587
        %v1604 = vsub.f32 %v1524, %v1588
        %v1605 = vsub.f32 %v1525, %v1589
        %v1606 = vsub.f32 %v1526, %v1590
        %v1607 = vsub.f32 %v1527, %v1591
        %v1608 = vsub.f32 %v1528, %v1592
        %v1609 = vsub.f32 %v1529, %v1593
        %v1610 = vsub.f32 %v1530, %v1594
        %v1611 = vsub.f32 %v1531, %v1595
        %v1612 = vsub.f32 %v1532, %v1596
        %v1613 = vsub.f32 %v1533, %v1597
        %v1614 = vmul.f32 %v1598, %v1598
        %v1615 = vmul.f32 %v1599, %v1599
        %v1616 = vmul.f32 %v1600, %v1600
        %v1617 = vmul.f32 %v1601, %v1601
        %v1618 = vmul.f32 %v1602, %v1602
        %v1619 = vmul.f32 %v1603, %v1603
        %v1620 = vmul.f32 %v1604, %v1604
        %v1621 = vmul.f32 %v1605, %v1605
        %v1622 = vmul.f32 %v1606, %v1606
        %v1623 = vmul.f32 %v1607, %v1607
        %v1624 = vmul.f32 %v1608, %v1608
        %v1625 = vmul.f32 %v1609, %v1609
        %v1626 = vmul.f32 %v1610, %v1610
        %v1627 = vmul.f32 %v1611, %v1611
        %v1628 = vmul.f32 %v1612, %v1612
        %v1629 = vmul.f32 %v1613, %v1613
        %v1630 = vsel %vm519, %v1614, 0.0
        %1631 = vadd.xlane.f32.xlu0 %v1630
        %v1632 = vpop.xlane.xlu0 %1631
        %v1633 = vsel %vm519, %v1615, 0.0
        %1634 = vadd.xlane.f32.xlu0 %v1633
        %v1635 = vpop.xlane.xlu0 %1634
        %v1636 = vsel %vm519, %v1616, 0.0
        %1637 = vadd.xlane.f32.xlu0 %v1636
        %v1638 = vpop.xlane.xlu0 %1637
        %v1639 = vsel %vm519, %v1617, 0.0
        %1640 = vadd.xlane.f32.xlu0 %v1639
        %v1641 = vpop.xlane.xlu0 %1640
        %v1642 = vsel %vm519, %v1618, 0.0
        %1643 = vadd.xlane.f32.xlu0 %v1642
        %v1644 = vpop.xlane.xlu0 %1643
        %v1645 = vsel %vm519, %v1619, 0.0
        %1646 = vadd.xlane.f32.xlu0 %v1645
        %v1647 = vpop.xlane.xlu0 %1646
        %v1648 = vsel %vm519, %v1620, 0.0
        %1649 = vadd.xlane.f32.xlu0 %v1648
        %v1650 = vpop.xlane.xlu0 %1649
        %v1651 = vsel %vm519, %v1621, 0.0
        %1652 = vadd.xlane.f32.xlu0 %v1651
        %v1653 = vpop.xlane.xlu0 %1652
        %v1654 = vsel %vm519, %v1622, 0.0
        %1655 = vadd.xlane.f32.xlu0 %v1654
        %v1656 = vpop.xlane.xlu0 %1655
        %v1657 = vsel %vm519, %v1623, 0.0
        %1658 = vadd.xlane.f32.xlu0 %v1657
        %v1659 = vpop.xlane.xlu0 %1658
        %v1660 = vsel %vm519, %v1624, 0.0
        %1661 = vadd.xlane.f32.xlu0 %v1660
        %v1662 = vpop.xlane.xlu0 %1661
        %v1663 = vsel %vm519, %v1625, 0.0
        %1664 = vadd.xlane.f32.xlu0 %v1663
        %v1665 = vpop.xlane.xlu0 %1664
        %v1666 = vsel %vm519, %v1626, 0.0
        %1667 = vadd.xlane.f32.xlu0 %v1666
        %v1668 = vpop.xlane.xlu0 %1667
        %v1669 = vsel %vm519, %v1627, 0.0
        %1670 = vadd.xlane.f32.xlu0 %v1669
        %v1671 = vpop.xlane.xlu0 %1670
        %v1672 = vsel %vm519, %v1628, 0.0
        %1673 = vadd.xlane.f32.xlu0 %v1672
        %v1674 = vpop.xlane.xlu0 %1673
        %v1675 = vsel %vm519, %v1629, 0.0
        %1676 = vadd.xlane.f32.xlu0 %v1675
        %v1677 = vpop.xlane.xlu0 %1676
        %v1678 = vmul.f32 %v1632, %v691
        %v1679 = vmul.f32 %v1635, %v691
        %v1680 = vmul.f32 %v1638, %v691
        %v1681 = vmul.f32 %v1641, %v691
        %v1682 = vmul.f32 %v1644, %v691
        %v1683 = vmul.f32 %v1647, %v691
        %v1684 = vmul.f32 %v1650, %v691
        %v1685 = vmul.f32 %v1653, %v691
        %v1686 = vmul.f32 %v1656, %v691
        %v1687 = vmul.f32 %v1659, %v691
        %v1688 = vmul.f32 %v1662, %v691
        %v1689 = vmul.f32 %v1665, %v691
        %v1690 = vmul.f32 %v1668, %v691
        %v1691 = vmul.f32 %v1671, %v691
        %v1692 = vmul.f32 %v1674, %v691
        %v1693 = vmul.f32 %v1677, %v691
        %v1694 = vadd.f32 %v1678, 1e-05
        %v1695 = vadd.f32 %v1679, 1e-05
        %v1696 = vadd.f32 %v1680, 1e-05
        %v1697 = vadd.f32 %v1681, 1e-05
        %v1698 = vadd.f32 %v1682, 1e-05
        %v1699 = vadd.f32 %v1683, 1e-05
        %v1700 = vadd.f32 %v1684, 1e-05
        %v1701 = vadd.f32 %v1685, 1e-05
        %v1702 = vadd.f32 %v1686, 1e-05
        %v1703 = vadd.f32 %v1687, 1e-05
        %v1704 = vadd.f32 %v1688, 1e-05
        %v1705 = vadd.f32 %v1689, 1e-05
        %v1706 = vadd.f32 %v1690, 1e-05
        %v1707 = vadd.f32 %v1691, 1e-05
        %v1708 = vadd.f32 %v1692, 1e-05
        %v1709 = vadd.f32 %v1693, 1e-05
        %v1710 = vrsqrt.pop %v1694
        %v1711 = vrsqrt.pop %v1695
        %v1712 = vrsqrt.pop %v1696
        %v1713 = vrsqrt.pop %v1697
        %v1714 = vrsqrt.pop %v1698
        %v1715 = vrsqrt.pop %v1699
        %v1716 = vrsqrt.pop %v1700
        %v1717 = vrsqrt.pop %v1701
        %v1718 = vrsqrt.pop %v1702
        %v1719 = vrsqrt.pop %v1703
        %v1720 = vrsqrt.pop %v1704
        %v1721 = vrsqrt.pop %v1705
        %v1722 = vrsqrt.pop %v1706
        %v1723 = vrsqrt.pop %v1707
        %v1724 = vrsqrt.pop %v1708
        %v1725 = vrsqrt.pop %v1709
        %v1726 = vmul.f32 %v1598, %v1710
        %v1727 = vmul.f32 %v1599, %v1711
        %v1728 = vmul.f32 %v1600, %v1712
        %v1729 = vmul.f32 %v1601, %v1713
        %v1730 = vmul.f32 %v1602, %v1714
        %v1731 = vmul.f32 %v1603, %v1715
        %v1732 = vmul.f32 %v1604, %v1716
        %v1733 = vmul.f32 %v1605, %v1717
        %v1734 = vmul.f32 %v1606, %v1718
        %v1735 = vmul.f32 %v1607, %v1719
        %v1736 = vmul.f32 %v1608, %v1720
        %v1737 = vmul.f32 %v1609, %v1721
        %v1738 = vmul.f32 %v1610, %v1722
        %v1739 = vmul.f32 %v1611, %v1723
        %v1740 = vmul.f32 %v1612, %v1724
        %v1741 = vmul.f32 %v1613, %v1725
        %v1742 = vld [vmem:[%s6] sm:$0xf]
        %v1743 = vld [vmem:[%s6 + $0x4] sm:$0xf]
        %v1744 = vld [vmem:[%s6 + $0x8] sm:$0xf]
        %v1745 = vld [vmem:[%s6 + $0xc] sm:$0xf]
        %v1746 = vpack.c.bf16 %v1727, %v1726
        %v1747 = vpack.c.bf16 %v1729, %v1728
        %v1748 = vpack.c.bf16 %v1731, %v1730
        %v1749 = vpack.c.bf16 %v1733, %v1732
        %v1750 = vpack.c.bf16 %v1735, %v1734
        %v1751 = vpack.c.bf16 %v1737, %v1736
        %v1752 = vpack.c.bf16 %v1739, %v1738
        %v1753 = vpack.c.bf16 %v1741, %v1740
        %v1754 = vld [vmem:[%s9] sm:$0x1]
        %v1755 = vlaneseq
        %v1756 = vshrl.u32 %v1755, 7
        %v1757 = vsub.s32 0, %v1756
        %v1758 = vrot.slane %v1754, %v1757
        %v1763 = vunpack.c.l.b16 %v1742
        %v1764 = vunpack.c.l.b16 %v1743
        %v1765 = vunpack.c.l.b16 %v1744
        %v1766 = vunpack.c.l.b16 %v1745
        %v1767 = vpack.c.b16 %v1764, %v1763
        %v1768 = vpack.c.b16 %v1766, %v1765
        %v1772 = vsel %vm519, %v1746, 0
        %v1775 = vsel %vm519, %v1747, 0
        %v1778 = vsel %vm519, %v1748, 0
        %v1781 = vsel %vm519, %v1749, 0
        %v1784 = vsel %vm519, %v1750, 0
        %v1787 = vsel %vm519, %v1751, 0
        %v1790 = vsel %vm519, %v1752, 0
        %v1793 = vsel %vm519, %v1753, 0
        %1795 = vmatprep.subr.bf16.mxu0 0
        %1796 = vmatpush1.bf16.msra.mxu0 %v1767
        %1797 = vmatprep.subr.bf16.mxu0 0
        %1798 = vmatpush1.bf16.msra.mxu0 %v1768
        %1799 = vmatprep.subr.bf16.mxu0 0
        %1800 = vmatpush1.bf16.msra.mxu0 0
        %1801 = vmatprep.subr.bf16.mxu0 0
        %1802 = vmatpush1.bf16.msra.mxu0 0
        %1803 = vmatprep.subr.bf16.mxu0 0
        %1804 = vmatpush1.bf16.msra.mxu0 0
        %1805 = vmatprep.subr.bf16.mxu0 0
        %1806 = vmatpush1.bf16.msra.mxu0 0
        %1807 = vmatprep.subr.bf16.mxu0 0
        %1808 = vmatpush1.bf16.msra.mxu0 0
        %1809 = vmatprep.subr.bf16.mxu0 0
        %1810 = vmatpush1.bf16.msra.mxu0 0
        %1811 = vmatprep.subr.bf16.mxu0 0
        %1812 = vmatpush1.bf16.msra.mxu0 0
        %1813 = vmatprep.subr.bf16.mxu0 0
        %1814 = vmatpush1.bf16.msra.mxu0 0
        %1815 = vmatprep.subr.bf16.mxu0 0
        %1816 = vmatpush1.bf16.msra.mxu0 0
        %1817 = vmatprep.subr.bf16.mxu0 0
        %1818 = vmatpush1.bf16.msra.mxu0 0
        %1819 = vmatprep.subr.bf16.mxu0 0
        %1820 = vmatpush1.bf16.msra.mxu0 0
        %1821 = vmatprep.subr.bf16.mxu0 0
        %1822 = vmatpush1.bf16.msra.mxu0 0
        %1823 = vmatprep.subr.bf16.mxu0 0
        %1824 = vmatpush1.bf16.msra.mxu0 0
        %1825 = vmatprep.subr.bf16.mxu0 0
        %1826 = vmatpush1.bf16.msra.mxu0 0
        %1827 = vmatprep.mubr.bf16.mxu0 0
        %1828 = vmatmul.mubr.bf16.gmra.mrb[0].mxu0 %v1772
        %v1829 = vpop.f32.mrb[0].mxu0
        %v1830 = vadd.f32 %v1758, %v1829
        %v1831 = vpop.f32.mrb[0].mxu0
        %v1832 = vpop.f32.mrb[0].mxu0
        %v1833 = vadd.f32 %v1758, %v1832
        %v1834 = vpop.f32.mrb[0].mxu0
        %1835 = vmatprep.mubr.bf16.mxu0 0
        %1836 = vmatmul.mubr.bf16.gmra.mrb[0].mxu0 %v1775
        %v1837 = vpop.f32.mrb[0].mxu0
        %v1838 = vadd.f32 %v1758, %v1837
        %v1839 = vpop.f32.mrb[0].mxu0
        %v1840 = vpop.f32.mrb[0].mxu0
        %v1841 = vadd.f32 %v1758, %v1840
        %v1842 = vpop.f32.mrb[0].mxu0
        %1843 = vmatprep.mubr.bf16.mxu0 0
        %1844 = vmatmul.mubr.bf16.gmra.mrb[0].mxu0 %v1778
        %v1845 = vpop.f32.mrb[0].mxu0
        %v1846 = vadd.f32 %v1758, %v1845
        %v1847 = vpop.f32.mrb[0].mxu0
        %v1848 = vpop.f32.mrb[0].mxu0
        %v1849 = vadd.f32 %v1758, %v1848
        %v1850 = vpop.f32.mrb[0].mxu0
        %1851 = vmatprep.mubr.bf16.mxu0 0
        %1852 = vmatmul.mubr.bf16.gmra.mrb[0].mxu0 %v1781
        %v1853 = vpop.f32.mrb[0].mxu0
        %v1854 = vadd.f32 %v1758, %v1853
        %v1855 = vpop.f32.mrb[0].mxu0
        %v1856 = vpop.f32.mrb[0].mxu0
        %v1857 = vadd.f32 %v1758, %v1856
        %v1858 = vpop.f32.mrb[0].mxu0
        %1859 = vmatprep.mubr.bf16.mxu0 0
        %1860 = vmatmul.mubr.bf16.gmra.mrb[0].mxu0 %v1784
        %v1861 = vpop.f32.mrb[0].mxu0
        %v1862 = vadd.f32 %v1758, %v1861
        %v1863 = vpop.f32.mrb[0].mxu0
        %v1864 = vpop.f32.mrb[0].mxu0
        %v1865 = vadd.f32 %v1758, %v1864
        %v1866 = vpop.f32.mrb[0].mxu0
        %1867 = vmatprep.mubr.bf16.mxu0 0
        %1868 = vmatmul.mubr.bf16.gmra.mrb[0].mxu0 %v1787
        %v1869 = vpop.f32.mrb[0].mxu0
        %v1870 = vadd.f32 %v1758, %v1869
        %v1871 = vpop.f32.mrb[0].mxu0
        %v1872 = vpop.f32.mrb[0].mxu0
        %v1873 = vadd.f32 %v1758, %v1872
        %v1874 = vpop.f32.mrb[0].mxu0
        %1875 = vmatprep.mubr.bf16.mxu0 0
        %1876 = vmatmul.mubr.bf16.gmra.mrb[0].mxu0 %v1790
        %v1877 = vpop.f32.mrb[0].mxu0
        %v1878 = vadd.f32 %v1758, %v1877
        %v1879 = vpop.f32.mrb[0].mxu0
        %v1880 = vpop.f32.mrb[0].mxu0
        %v1881 = vadd.f32 %v1758, %v1880
        %v1882 = vpop.f32.mrb[0].mxu0
        %1883 = vmatprep.mubr.bf16.mxu0 0
        %1884 = vmatmul.mubr.bf16.gmra.mrb[0].mxu0 %v1793
        %v1885 = vpop.f32.mrb[0].mxu0
        %v1886 = vadd.f32 %v1758, %v1885
        %v1887 = vpop.f32.mrb[0].mxu0
        %v1888 = vpop.f32.mrb[0].mxu0
        %v1889 = vadd.f32 %v1758, %v1888
        %v1890 = vpop.f32.mrb[0].mxu0
        %1891 = vdwg.mxu0
        %v1892 = vmul.f32 %v1830, 0.5
        %v1893 = vmul.f32 %v1833, 0.5
        %v1894 = vmul.f32 %v1838, 0.5
        %v1895 = vmul.f32 %v1841, 0.5
        %v1896 = vmul.f32 %v1846, 0.5
        %v1897 = vmul.f32 %v1849, 0.5
        %v1898 = vmul.f32 %v1854, 0.5
        %v1899 = vmul.f32 %v1857, 0.5
        %v1900 = vmul.f32 %v1862, 0.5
        %v1901 = vmul.f32 %v1865, 0.5
        %v1902 = vmul.f32 %v1870, 0.5
        %v1903 = vmul.f32 %v1873, 0.5
        %v1904 = vmul.f32 %v1878, 0.5
        %v1905 = vmul.f32 %v1881, 0.5
        %v1906 = vmul.f32 %v1886, 0.5
        %v1907 = vmul.f32 %v1889, 0.5
        %v1908 = vmul.f32 %v1830, 0.70710677
        %v1909 = vmul.f32 %v1833, 0.70710677
        %v1910 = vmul.f32 %v1838, 0.70710677
        %v1911 = vmul.f32 %v1841, 0.70710677
        %v1912 = vmul.f32 %v1846, 0.70710677
        %v1913 = vmul.f32 %v1849, 0.70710677
        %v1914 = vmul.f32 %v1854, 0.70710677
        %v1915 = vmul.f32 %v1857, 0.70710677
        %v1916 = vmul.f32 %v1862, 0.70710677
        %v1917 = vmul.f32 %v1865, 0.70710677
        %v1918 = vmul.f32 %v1870, 0.70710677
        %v1919 = vmul.f32 %v1873, 0.70710677
        %v1920 = vmul.f32 %v1878, 0.70710677
        %v1921 = vmul.f32 %v1881, 0.70710677
        %v1922 = vmul.f32 %v1886, 0.70710677
        %v1923 = vmul.f32 %v1889, 0.70710677
        %v1924 = verf.f32.pop %v1908
        %v1925 = verf.f32.pop %v1909
        %v1926 = verf.f32.pop %v1910
        %v1927 = verf.f32.pop %v1911
        %v1928 = verf.f32.pop %v1912
        %v1929 = verf.f32.pop %v1913
        %v1930 = verf.f32.pop %v1914
        %v1931 = verf.f32.pop %v1915
        %v1932 = verf.f32.pop %v1916
        %v1933 = verf.f32.pop %v1917
        %v1934 = verf.f32.pop %v1918
        %v1935 = verf.f32.pop %v1919
        %v1936 = verf.f32.pop %v1920
        %v1937 = verf.f32.pop %v1921
        %v1938 = verf.f32.pop %v1922
        %v1939 = verf.f32.pop %v1923
        %v1940 = vadd.f32 %v1924, 1.0
        %v1941 = vadd.f32 %v1925, 1.0
        %v1942 = vadd.f32 %v1926, 1.0
        %v1943 = vadd.f32 %v1927, 1.0
        %v1944 = vadd.f32 %v1928, 1.0
        %v1945 = vadd.f32 %v1929, 1.0
        %v1946 = vadd.f32 %v1930, 1.0
        %v1947 = vadd.f32 %v1931, 1.0
        %v1948 = vadd.f32 %v1932, 1.0
        %v1949 = vadd.f32 %v1933, 1.0
        %v1950 = vadd.f32 %v1934, 1.0
        %v1951 = vadd.f32 %v1935, 1.0
        %v1952 = vadd.f32 %v1936, 1.0
        %v1953 = vadd.f32 %v1937, 1.0
        %v1954 = vadd.f32 %v1938, 1.0
        %v1955 = vadd.f32 %v1939, 1.0
        %v1956 = vmul.f32 %v1892, %v1940
        %v1957 = vmul.f32 %v1893, %v1941
        %v1958 = vmul.f32 %v1894, %v1942
        %v1959 = vmul.f32 %v1895, %v1943
        %v1960 = vmul.f32 %v1896, %v1944
        %v1961 = vmul.f32 %v1897, %v1945
        %v1962 = vmul.f32 %v1898, %v1946
        %v1963 = vmul.f32 %v1899, %v1947
        %v1964 = vmul.f32 %v1900, %v1948
        %v1965 = vmul.f32 %v1901, %v1949
        %v1966 = vmul.f32 %v1902, %v1950
        %v1967 = vmul.f32 %v1903, %v1951
        %v1968 = vmul.f32 %v1904, %v1952
        %v1969 = vmul.f32 %v1905, %v1953
        %v1970 = vmul.f32 %v1906, %v1954
        %v1971 = vmul.f32 %v1907, %v1955
        %v1972 = vld [vmem:[%s7] sm:$0xf]
        %v1973 = vld [vmem:[%s7 + $0x4] sm:$0xf]
        %v1974 = vld [vmem:[%s7 + $0x8] sm:$0xf]
        %v1975 = vld [vmem:[%s7 + $0xc] sm:$0xf]
        %v1976 = vld [vmem:[%s7 + $0x10] sm:$0xf]
        %v1977 = vld [vmem:[%s7 + $0x14] sm:$0xf]
        %v1978 = vld [vmem:[%s7 + $0x18] sm:$0xf]
        %v1979 = vld [vmem:[%s7 + $0x1c] sm:$0xf]
        %v1980 = vpack.c.bf16 %v1957, %v1956
        %v1981 = vpack.c.bf16 %v1959, %v1958
        %v1982 = vpack.c.bf16 %v1961, %v1960
        %v1983 = vpack.c.bf16 %v1963, %v1962
        %v1984 = vpack.c.bf16 %v1965, %v1964
        %v1985 = vpack.c.bf16 %v1967, %v1966
        %v1986 = vpack.c.bf16 %v1969, %v1968
        %v1987 = vpack.c.bf16 %v1971, %v1970
        %v1996 = vunpack.c.l.b16 %v1972
        %v1997 = vunpack.c.l.b16 %v1973
        %v1998 = vunpack.c.l.b16 %v1974
        %v1999 = vunpack.c.l.b16 %v1975
        %v2000 = vunpack.c.l.b16 %v1976
        %v2001 = vunpack.c.l.b16 %v1977
        %v2002 = vunpack.c.l.b16 %v1978
        %v2003 = vunpack.c.l.b16 %v1979
        %v2004 = vpack.c.b16 %v1997, %v1996
        %v2005 = vpack.c.b16 %v1999, %v1998
        %v2006 = vpack.c.b16 %v2001, %v2000
        %v2007 = vpack.c.b16 %v2003, %v2002
        %vm2012 = vcmask 523264
        %v2014 = vsel %vm2012, %v1980, 0
        %v2017 = vsel %vm2012, %v1981, 0
        %v2020 = vsel %vm2012, %v1982, 0
        %v2023 = vsel %vm2012, %v1983, 0
        %v2026 = vsel %vm2012, %v1984, 0
        %v2029 = vsel %vm2012, %v1985, 0
        %v2032 = vsel %vm2012, %v1986, 0
        %v2035 = vsel %vm2012, %v1987, 0
        %2037 = vmatprep.subr.bf16.mxu0 0
        %2038 = vmatpush1.bf16.msra.mxu0 %v2004
        %2039 = vmatprep.subr.bf16.mxu0 0
        %2040 = vmatpush1.bf16.msra.mxu0 %v2005
        %2041 = vmatprep.subr.bf16.mxu0 0
        %2042 = vmatpush1.bf16.msra.mxu0 %v2006
        %2043 = vmatprep.subr.bf16.mxu0 0
        %2044 = vmatpush1.bf16.msra.mxu0 %v2007
        %2045 = vmatprep.subr.bf16.mxu0 0
        %2046 = vmatpush1.bf16.msra.mxu0 0
        %2047 = vmatprep.subr.bf16.mxu0 0
        %2048 = vmatpush1.bf16.msra.mxu0 0
        %2049 = vmatprep.subr.bf16.mxu0 0
        %2050 = vmatpush1.bf16.msra.mxu0 0
        %2051 = vmatprep.subr.bf16.mxu0 0
        %2052 = vmatpush1.bf16.msra.mxu0 0
        %2053 = vmatprep.subr.bf16.mxu0 0
        %2054 = vmatpush1.bf16.msra.mxu0 0
        %2055 = vmatprep.subr.bf16.mxu0 0
        %2056 = vmatpush1.bf16.msra.mxu0 0
        %2057 = vmatprep.subr.bf16.mxu0 0
        %2058 = vmatpush1.bf16.msra.mxu0 0
        %2059 = vmatprep.subr.bf16.mxu0 0
        %2060 = vmatpush1.bf16.msra.mxu0 0
        %2061 = vmatprep.subr.bf16.mxu0 0
        %2062 = vmatpush1.bf16.msra.mxu0 0
        %2063 = vmatprep.subr.bf16.mxu0 0
        %2064 = vmatpush1.bf16.msra.mxu0 0
        %2065 = vmatprep.subr.bf16.mxu0 0
        %2066 = vmatpush1.bf16.msra.mxu0 0
        %2067 = vmatprep.subr.bf16.mxu0 0
        %2068 = vmatpush1.bf16.msra.mxu0 0
        %2069 = vmatprep.mubr.bf16.mxu0 0
        %2070 = vmatmul.mubr.bf16.gmra.mrb[0].mxu0 %v2014
        %v2071 = vpop.f32.mrb[0].mxu0
        %v2072 = vadd.f32 0.0, %v2071
        %v2073 = vpop.f32.mrb[0].mxu0
        %v2074 = vpop.f32.mrb[0].mxu0
        %v2075 = vadd.f32 0.0, %v2074
        %v2076 = vpop.f32.mrb[0].mxu0
        %2077 = vmatprep.mubr.bf16.mxu0 0
        %2078 = vmatmul.mubr.bf16.gmra.mrb[0].mxu0 %v2017
        %v2079 = vpop.f32.mrb[0].mxu0
        %v2080 = vadd.f32 0.0, %v2079
        %v2081 = vpop.f32.mrb[0].mxu0
        %v2082 = vpop.f32.mrb[0].mxu0
        %v2083 = vadd.f32 0.0, %v2082
        %v2084 = vpop.f32.mrb[0].mxu0
        %2085 = vmatprep.mubr.bf16.mxu0 0
        %2086 = vmatmul.mubr.bf16.gmra.mrb[0].mxu0 %v2020
        %v2087 = vpop.f32.mrb[0].mxu0
        %v2088 = vadd.f32 0.0, %v2087
        %v2089 = vpop.f32.mrb[0].mxu0
        %v2090 = vpop.f32.mrb[0].mxu0
        %v2091 = vadd.f32 0.0, %v2090
        %v2092 = vpop.f32.mrb[0].mxu0
        %2093 = vmatprep.mubr.bf16.mxu0 0
        %2094 = vmatmul.mubr.bf16.gmra.mrb[0].mxu0 %v2023
        %v2095 = vpop.f32.mrb[0].mxu0
        %v2096 = vadd.f32 0.0, %v2095
        %v2097 = vpop.f32.mrb[0].mxu0
        %v2098 = vpop.f32.mrb[0].mxu0
        %v2099 = vadd.f32 0.0, %v2098
        %v2100 = vpop.f32.mrb[0].mxu0
        %2101 = vmatprep.mubr.bf16.mxu0 0
        %2102 = vmatmul.mubr.bf16.gmra.mrb[0].mxu0 %v2026
        %v2103 = vpop.f32.mrb[0].mxu0
        %v2104 = vadd.f32 0.0, %v2103
        %v2105 = vpop.f32.mrb[0].mxu0
        %v2106 = vpop.f32.mrb[0].mxu0
        %v2107 = vadd.f32 0.0, %v2106
        %v2108 = vpop.f32.mrb[0].mxu0
        %2109 = vmatprep.mubr.bf16.mxu0 0
        %2110 = vmatmul.mubr.bf16.gmra.mrb[0].mxu0 %v2029
        %v2111 = vpop.f32.mrb[0].mxu0
        %v2112 = vadd.f32 0.0, %v2111
        %v2113 = vpop.f32.mrb[0].mxu0
        %v2114 = vpop.f32.mrb[0].mxu0
        %v2115 = vadd.f32 0.0, %v2114
        %v2116 = vpop.f32.mrb[0].mxu0
        %2117 = vmatprep.mubr.bf16.mxu0 0
        %2118 = vmatmul.mubr.bf16.gmra.mrb[0].mxu0 %v2032
        %v2119 = vpop.f32.mrb[0].mxu0
        %v2120 = vadd.f32 0.0, %v2119
        %v2121 = vpop.f32.mrb[0].mxu0
        %v2122 = vpop.f32.mrb[0].mxu0
        %v2123 = vadd.f32 0.0, %v2122
        %v2124 = vpop.f32.mrb[0].mxu0
        %2125 = vmatprep.mubr.bf16.mxu0 0
        %2126 = vmatmul.mubr.bf16.gmra.mrb[0].mxu0 %v2035
        %v2127 = vpop.f32.mrb[0].mxu0
        %v2128 = vadd.f32 0.0, %v2127
        %v2129 = vpop.f32.mrb[0].mxu0
        %v2130 = vpop.f32.mrb[0].mxu0
        %v2131 = vadd.f32 0.0, %v2130
        %v2132 = vpop.f32.mrb[0].mxu0
        %2133 = vdwg.mxu0
        %v2134 = vadd.f32 %v1518, %v2072
        %v2135 = vadd.f32 %v1519, %v2075
        %v2136 = vadd.f32 %v1520, %v2080
        %v2137 = vadd.f32 %v1521, %v2083
        %v2138 = vadd.f32 %v1522, %v2088
        %v2139 = vadd.f32 %v1523, %v2091
        %v2140 = vadd.f32 %v1524, %v2096
        %v2141 = vadd.f32 %v1525, %v2099
        %v2142 = vadd.f32 %v1526, %v2104
        %v2143 = vadd.f32 %v1527, %v2107
        %v2144 = vadd.f32 %v1528, %v2112
        %v2145 = vadd.f32 %v1529, %v2115
        %v2146 = vadd.f32 %v1530, %v2120
        %v2147 = vadd.f32 %v1531, %v2123
        %v2148 = vadd.f32 %v1532, %v2128
        %v2149 = vadd.f32 %v1533, %v2131
        %v2150 = vld [vmem:[%s8 + $0x3] sm:$0x1]
        %v2151 = vlaneseq
        %v2152 = vshrl.u32 %v2151, 7
        %v2153 = vsub.s32 0, %v2152
        %v2154 = vrot.slane %v2150, %v2153
        %v2155 = vadd.f32 %v2134, %v2154
        %v2156 = vadd.f32 %v2135, %v2154
        %v2157 = vadd.f32 %v2136, %v2154
        %v2158 = vadd.f32 %v2137, %v2154
        %v2159 = vadd.f32 %v2138, %v2154
        %v2160 = vadd.f32 %v2139, %v2154
        %v2161 = vadd.f32 %v2140, %v2154
        %v2162 = vadd.f32 %v2141, %v2154
        %v2163 = vadd.f32 %v2142, %v2154
        %v2164 = vadd.f32 %v2143, %v2154
        %v2165 = vadd.f32 %v2144, %v2154
        %v2166 = vadd.f32 %v2145, %v2154
        %v2167 = vadd.f32 %v2146, %v2154
        %v2168 = vadd.f32 %v2147, %v2154
        %v2169 = vadd.f32 %v2148, %v2154
        %v2170 = vadd.f32 %v2149, %v2154
        %v2171 = vld [vmem:[%s8 + $0x4] sm:$0x1]
        %v2172 = vld [vmem:[%s8 + $0x5] sm:$0x1]
        %v2173 = vsel %vm519, %v2155, 0.0
        %2174 = vadd.xlane.f32.xlu0 %v2173
        %v2175 = vpop.xlane.xlu0 %2174
        %v2176 = vsel %vm519, %v2156, 0.0
        %2177 = vadd.xlane.f32.xlu0 %v2176
        %v2178 = vpop.xlane.xlu0 %2177
        %v2179 = vsel %vm519, %v2157, 0.0
        %2180 = vadd.xlane.f32.xlu0 %v2179
        %v2181 = vpop.xlane.xlu0 %2180
        %v2182 = vsel %vm519, %v2158, 0.0
        %2183 = vadd.xlane.f32.xlu0 %v2182
        %v2184 = vpop.xlane.xlu0 %2183
        %v2185 = vsel %vm519, %v2159, 0.0
        %2186 = vadd.xlane.f32.xlu0 %v2185
        %v2187 = vpop.xlane.xlu0 %2186
        %v2188 = vsel %vm519, %v2160, 0.0
        %2189 = vadd.xlane.f32.xlu0 %v2188
        %v2190 = vpop.xlane.xlu0 %2189
        %v2191 = vsel %vm519, %v2161, 0.0
        %2192 = vadd.xlane.f32.xlu0 %v2191
        %v2193 = vpop.xlane.xlu0 %2192
        %v2194 = vsel %vm519, %v2162, 0.0
        %2195 = vadd.xlane.f32.xlu0 %v2194
        %v2196 = vpop.xlane.xlu0 %2195
        %v2197 = vsel %vm519, %v2163, 0.0
        %2198 = vadd.xlane.f32.xlu0 %v2197
        %v2199 = vpop.xlane.xlu0 %2198
        %v2200 = vsel %vm519, %v2164, 0.0
        %2201 = vadd.xlane.f32.xlu0 %v2200
        %v2202 = vpop.xlane.xlu0 %2201
        %v2203 = vsel %vm519, %v2165, 0.0
        %2204 = vadd.xlane.f32.xlu0 %v2203
        %v2205 = vpop.xlane.xlu0 %2204
        %v2206 = vsel %vm519, %v2166, 0.0
        %2207 = vadd.xlane.f32.xlu0 %v2206
        %v2208 = vpop.xlane.xlu0 %2207
        %v2209 = vsel %vm519, %v2167, 0.0
        %2210 = vadd.xlane.f32.xlu0 %v2209
        %v2211 = vpop.xlane.xlu0 %2210
        %v2212 = vsel %vm519, %v2168, 0.0
        %2213 = vadd.xlane.f32.xlu0 %v2212
        %v2214 = vpop.xlane.xlu0 %2213
        %v2215 = vsel %vm519, %v2169, 0.0
        %2216 = vadd.xlane.f32.xlu0 %v2215
        %v2217 = vpop.xlane.xlu0 %2216
        %v2218 = vsel %vm519, %v2170, 0.0
        %2219 = vadd.xlane.f32.xlu0 %v2218
        %v2220 = vpop.xlane.xlu0 %2219
        %v2221 = vmul.f32 %v2175, %v691
        %v2222 = vmul.f32 %v2178, %v691
        %v2223 = vmul.f32 %v2181, %v691
        %v2224 = vmul.f32 %v2184, %v691
        %v2225 = vmul.f32 %v2187, %v691
        %v2226 = vmul.f32 %v2190, %v691
        %v2227 = vmul.f32 %v2193, %v691
        %v2228 = vmul.f32 %v2196, %v691
        %v2229 = vmul.f32 %v2199, %v691
        %v2230 = vmul.f32 %v2202, %v691
        %v2231 = vmul.f32 %v2205, %v691
        %v2232 = vmul.f32 %v2208, %v691
        %v2233 = vmul.f32 %v2211, %v691
        %v2234 = vmul.f32 %v2214, %v691
        %v2235 = vmul.f32 %v2217, %v691
        %v2236 = vmul.f32 %v2220, %v691
        %v2237 = vsub.f32 %v2155, %v2221
        %v2238 = vsub.f32 %v2156, %v2222
        %v2239 = vsub.f32 %v2157, %v2223
        %v2240 = vsub.f32 %v2158, %v2224
        %v2241 = vsub.f32 %v2159, %v2225
        %v2242 = vsub.f32 %v2160, %v2226
        %v2243 = vsub.f32 %v2161, %v2227
        %v2244 = vsub.f32 %v2162, %v2228
        %v2245 = vsub.f32 %v2163, %v2229
        %v2246 = vsub.f32 %v2164, %v2230
        %v2247 = vsub.f32 %v2165, %v2231
        %v2248 = vsub.f32 %v2166, %v2232
        %v2249 = vsub.f32 %v2167, %v2233
        %v2250 = vsub.f32 %v2168, %v2234
        %v2251 = vsub.f32 %v2169, %v2235
        %v2252 = vsub.f32 %v2170, %v2236
        %v2253 = vmul.f32 %v2237, %v2237
        %v2254 = vmul.f32 %v2238, %v2238
        %v2255 = vmul.f32 %v2239, %v2239
        %v2256 = vmul.f32 %v2240, %v2240
        %v2257 = vmul.f32 %v2241, %v2241
        %v2258 = vmul.f32 %v2242, %v2242
        %v2259 = vmul.f32 %v2243, %v2243
        %v2260 = vmul.f32 %v2244, %v2244
        %v2261 = vmul.f32 %v2245, %v2245
        %v2262 = vmul.f32 %v2246, %v2246
        %v2263 = vmul.f32 %v2247, %v2247
        %v2264 = vmul.f32 %v2248, %v2248
        %v2265 = vmul.f32 %v2249, %v2249
        %v2266 = vmul.f32 %v2250, %v2250
        %v2267 = vmul.f32 %v2251, %v2251
        %v2268 = vmul.f32 %v2252, %v2252
        %v2269 = vsel %vm519, %v2253, 0.0
        %2270 = vadd.xlane.f32.xlu0 %v2269
        %v2271 = vpop.xlane.xlu0 %2270
        %v2272 = vsel %vm519, %v2254, 0.0
        %2273 = vadd.xlane.f32.xlu0 %v2272
        %v2274 = vpop.xlane.xlu0 %2273
        %v2275 = vsel %vm519, %v2255, 0.0
        %2276 = vadd.xlane.f32.xlu0 %v2275
        %v2277 = vpop.xlane.xlu0 %2276
        %v2278 = vsel %vm519, %v2256, 0.0
        %2279 = vadd.xlane.f32.xlu0 %v2278
        %v2280 = vpop.xlane.xlu0 %2279
        %v2281 = vsel %vm519, %v2257, 0.0
        %2282 = vadd.xlane.f32.xlu0 %v2281
        %v2283 = vpop.xlane.xlu0 %2282
        %v2284 = vsel %vm519, %v2258, 0.0
        %2285 = vadd.xlane.f32.xlu0 %v2284
        %v2286 = vpop.xlane.xlu0 %2285
        %v2287 = vsel %vm519, %v2259, 0.0
        %2288 = vadd.xlane.f32.xlu0 %v2287
        %v2289 = vpop.xlane.xlu0 %2288
        %v2290 = vsel %vm519, %v2260, 0.0
        %2291 = vadd.xlane.f32.xlu0 %v2290
        %v2292 = vpop.xlane.xlu0 %2291
        %v2293 = vsel %vm519, %v2261, 0.0
        %2294 = vadd.xlane.f32.xlu0 %v2293
        %v2295 = vpop.xlane.xlu0 %2294
        %v2296 = vsel %vm519, %v2262, 0.0
        %2297 = vadd.xlane.f32.xlu0 %v2296
        %v2298 = vpop.xlane.xlu0 %2297
        %v2299 = vsel %vm519, %v2263, 0.0
        %2300 = vadd.xlane.f32.xlu0 %v2299
        %v2301 = vpop.xlane.xlu0 %2300
        %v2302 = vsel %vm519, %v2264, 0.0
        %2303 = vadd.xlane.f32.xlu0 %v2302
        %v2304 = vpop.xlane.xlu0 %2303
        %v2305 = vsel %vm519, %v2265, 0.0
        %2306 = vadd.xlane.f32.xlu0 %v2305
        %v2307 = vpop.xlane.xlu0 %2306
        %v2308 = vsel %vm519, %v2266, 0.0
        %2309 = vadd.xlane.f32.xlu0 %v2308
        %v2310 = vpop.xlane.xlu0 %2309
        %v2311 = vsel %vm519, %v2267, 0.0
        %2312 = vadd.xlane.f32.xlu0 %v2311
        %v2313 = vpop.xlane.xlu0 %2312
        %v2314 = vsel %vm519, %v2268, 0.0
        %2315 = vadd.xlane.f32.xlu0 %v2314
        %v2316 = vpop.xlane.xlu0 %2315
        %v2317 = vmul.f32 %v2271, %v691
        %v2318 = vmul.f32 %v2274, %v691
        %v2319 = vmul.f32 %v2277, %v691
        %v2320 = vmul.f32 %v2280, %v691
        %v2321 = vmul.f32 %v2283, %v691
        %v2322 = vmul.f32 %v2286, %v691
        %v2323 = vmul.f32 %v2289, %v691
        %v2324 = vmul.f32 %v2292, %v691
        %v2325 = vmul.f32 %v2295, %v691
        %v2326 = vmul.f32 %v2298, %v691
        %v2327 = vmul.f32 %v2301, %v691
        %v2328 = vmul.f32 %v2304, %v691
        %v2329 = vmul.f32 %v2307, %v691
        %v2330 = vmul.f32 %v2310, %v691
        %v2331 = vmul.f32 %v2313, %v691
        %v2332 = vmul.f32 %v2316, %v691
        %v2333 = vadd.f32 %v2317, 1e-05
        %v2334 = vadd.f32 %v2318, 1e-05
        %v2335 = vadd.f32 %v2319, 1e-05
        %v2336 = vadd.f32 %v2320, 1e-05
        %v2337 = vadd.f32 %v2321, 1e-05
        %v2338 = vadd.f32 %v2322, 1e-05
        %v2339 = vadd.f32 %v2323, 1e-05
        %v2340 = vadd.f32 %v2324, 1e-05
        %v2341 = vadd.f32 %v2325, 1e-05
        %v2342 = vadd.f32 %v2326, 1e-05
        %v2343 = vadd.f32 %v2327, 1e-05
        %v2344 = vadd.f32 %v2328, 1e-05
        %v2345 = vadd.f32 %v2329, 1e-05
        %v2346 = vadd.f32 %v2330, 1e-05
        %v2347 = vadd.f32 %v2331, 1e-05
        %v2348 = vadd.f32 %v2332, 1e-05
        %v2349 = vrsqrt.pop %v2333
        %v2350 = vrsqrt.pop %v2334
        %v2351 = vrsqrt.pop %v2335
        %v2352 = vrsqrt.pop %v2336
        %v2353 = vrsqrt.pop %v2337
        %v2354 = vrsqrt.pop %v2338
        %v2355 = vrsqrt.pop %v2339
        %v2356 = vrsqrt.pop %v2340
        %v2357 = vrsqrt.pop %v2341
        %v2358 = vrsqrt.pop %v2342
        %v2359 = vrsqrt.pop %v2343
        %v2360 = vrsqrt.pop %v2344
        %v2361 = vrsqrt.pop %v2345
        %v2362 = vrsqrt.pop %v2346
        %v2363 = vrsqrt.pop %v2347
        %v2364 = vrsqrt.pop %v2348
        %v2365 = vmul.f32 %v2237, %v2349
        %v2366 = vmul.f32 %v2238, %v2350
        %v2367 = vmul.f32 %v2239, %v2351
        %v2368 = vmul.f32 %v2240, %v2352
        %v2369 = vmul.f32 %v2241, %v2353
        %v2370 = vmul.f32 %v2242, %v2354
        %v2371 = vmul.f32 %v2243, %v2355
        %v2372 = vmul.f32 %v2244, %v2356
        %v2373 = vmul.f32 %v2245, %v2357
        %v2374 = vmul.f32 %v2246, %v2358
        %v2375 = vmul.f32 %v2247, %v2359
        %v2376 = vmul.f32 %v2248, %v2360
        %v2377 = vmul.f32 %v2249, %v2361
        %v2378 = vmul.f32 %v2250, %v2362
        %v2379 = vmul.f32 %v2251, %v2363
        %v2380 = vmul.f32 %v2252, %v2364
        %v2381 = vlaneseq
        %v2382 = vshrl.u32 %v2381, 7
        %v2383 = vsub.s32 0, %v2382
        %v2384 = vrot.slane %v2171, %v2383
        %v2385 = vmul.f32 %v2365, %v2384
        %v2386 = vmul.f32 %v2366, %v2384
        %v2387 = vmul.f32 %v2367, %v2384
        %v2388 = vmul.f32 %v2368, %v2384
        %v2389 = vmul.f32 %v2369, %v2384
        %v2390 = vmul.f32 %v2370, %v2384
        %v2391 = vmul.f32 %v2371, %v2384
        %v2392 = vmul.f32 %v2372, %v2384
        %v2393 = vmul.f32 %v2373, %v2384
        %v2394 = vmul.f32 %v2374, %v2384
        %v2395 = vmul.f32 %v2375, %v2384
        %v2396 = vmul.f32 %v2376, %v2384
        %v2397 = vmul.f32 %v2377, %v2384
        %v2398 = vmul.f32 %v2378, %v2384
        %v2399 = vmul.f32 %v2379, %v2384
        %v2400 = vmul.f32 %v2380, %v2384
        %v2401 = vlaneseq
        %v2402 = vshrl.u32 %v2401, 7
        %v2403 = vsub.s32 0, %v2402
        %v2404 = vrot.slane %v2172, %v2403
        %v2405 = vadd.f32 %v2385, %v2404
        %v2406 = vadd.f32 %v2386, %v2404
        %v2407 = vadd.f32 %v2387, %v2404
        %v2408 = vadd.f32 %v2388, %v2404
        %v2409 = vadd.f32 %v2389, %v2404
        %v2410 = vadd.f32 %v2390, %v2404
        %v2411 = vadd.f32 %v2391, %v2404
        %v2412 = vadd.f32 %v2392, %v2404
        %v2413 = vadd.f32 %v2393, %v2404
        %v2414 = vadd.f32 %v2394, %v2404
        %v2415 = vadd.f32 %v2395, %v2404
        %v2416 = vadd.f32 %v2396, %v2404
        %v2417 = vadd.f32 %v2397, %v2404
        %v2418 = vadd.f32 %v2398, %v2404
        %v2419 = vadd.f32 %v2399, %v2404
        %v2420 = vadd.f32 %v2400, %v2404
        %s2421 = scalar_lea.vmem %s2, 64
        %v2422 = vld [vmem:[%s2421] sm:$0xf]
        %v2423 = vld [vmem:[%s2421 + $0x4] sm:$0xf]
        %v2424 = vld [vmem:[%s2421 + $0x8] sm:$0xf]
        %v2425 = vld [vmem:[%s2421 + $0xc] sm:$0xf]
        %v2426 = vld [vmem:[%s2421 + $0x10] sm:$0xf]
        %v2427 = vld [vmem:[%s2421 + $0x14] sm:$0xf]
        %v2428 = vld [vmem:[%s2421 + $0x18] sm:$0xf]
        %v2429 = vld [vmem:[%s2421 + $0x1c] sm:$0xf]
        %v2430 = vld [vmem:[%s2421 + $0x20] sm:$0xf]
        %v2431 = vld [vmem:[%s2421 + $0x24] sm:$0xf]
        %v2432 = vld [vmem:[%s2421 + $0x28] sm:$0xf]
        %v2433 = vld [vmem:[%s2421 + $0x2c] sm:$0xf]
        %v2434 = vld [vmem:[%s2421 + $0x30] sm:$0xf]
        %v2435 = vld [vmem:[%s2421 + $0x34] sm:$0xf]
        %v2436 = vld [vmem:[%s2421 + $0x38] sm:$0xf]
        %v2437 = vld [vmem:[%s2421 + $0x3c] sm:$0xf]
        %v2438 = vpack.c.bf16 %v2406, %v2405
        %v2439 = vpack.c.bf16 %v2408, %v2407
        %v2440 = vpack.c.bf16 %v2410, %v2409
        %v2441 = vpack.c.bf16 %v2412, %v2411
        %v2442 = vpack.c.bf16 %v2414, %v2413
        %v2443 = vpack.c.bf16 %v2416, %v2415
        %v2444 = vpack.c.bf16 %v2418, %v2417
        %v2445 = vpack.c.bf16 %v2420, %v2419
        %s2446 = scalar_lea.vmem %s3, 128
        %v2447 = vld [vmem:[%s2446] sm:$0xff]
        %v2448 = vld [vmem:[%s2446 + $0x8] sm:$0xff]
        %v2449 = vld [vmem:[%s2446 + $0x10] sm:$0xff]
        %v2450 = vld [vmem:[%s2446 + $0x18] sm:$0xff]
        %v2451 = vld [vmem:[%s2446 + $0x20] sm:$0xff]
        %v2452 = vld [vmem:[%s2446 + $0x28] sm:$0xff]
        %v2453 = vld [vmem:[%s2446 + $0x30] sm:$0xff]
        %v2454 = vld [vmem:[%s2446 + $0x38] sm:$0xff]
        %v2455 = vld [vmem:[%s2446 + $0x40] sm:$0xff]
        %v2456 = vld [vmem:[%s2446 + $0x48] sm:$0xff]
        %v2457 = vld [vmem:[%s2446 + $0x50] sm:$0xff]
        %v2458 = vld [vmem:[%s2446 + $0x58] sm:$0xff]
        %v2459 = vld [vmem:[%s2446 + $0x60] sm:$0xff]
        %v2460 = vld [vmem:[%s2446 + $0x68] sm:$0xff]
        %v2461 = vld [vmem:[%s2446 + $0x70] sm:$0xff]
        %v2462 = vld [vmem:[%s2446 + $0x78] sm:$0xff]
        %2464 = vset.pattern.permute.xlu0 0
        %2465 = vperm.xlu0 %2464, %v2447
        %v2466 = vpop.permute.xlu0 %2465
        %2469 = vset.pattern.permute.xlu0 0
        %2470 = vperm.xlu0 %2469, %v2448
        %v2471 = vpop.permute.xlu0 %2470
        %2474 = vset.pattern.permute.xlu0 0
        %2475 = vperm.xlu0 %2474, %v2449
        %v2476 = vpop.permute.xlu0 %2475
        %2479 = vset.pattern.permute.xlu0 0
        %2480 = vperm.xlu0 %2479, %v2450
        %v2481 = vpop.permute.xlu0 %2480
        %2484 = vset.pattern.permute.xlu0 0
        %2485 = vperm.xlu0 %2484, %v2451
        %v2486 = vpop.permute.xlu0 %2485
        %2489 = vset.pattern.permute.xlu0 0
        %2490 = vperm.xlu0 %2489, %v2452
        %v2491 = vpop.permute.xlu0 %2490
        %2494 = vset.pattern.permute.xlu0 0
        %2495 = vperm.xlu0 %2494, %v2453
        %v2496 = vpop.permute.xlu0 %2495
        %2499 = vset.pattern.permute.xlu0 0
        %2500 = vperm.xlu0 %2499, %v2454
        %v2501 = vpop.permute.xlu0 %2500
        %2504 = vset.pattern.permute.xlu0 0
        %2505 = vperm.xlu0 %2504, %v2455
        %v2506 = vpop.permute.xlu0 %2505
        %2509 = vset.pattern.permute.xlu0 0
        %2510 = vperm.xlu0 %2509, %v2456
        %v2511 = vpop.permute.xlu0 %2510
        %2514 = vset.pattern.permute.xlu0 0
        %2515 = vperm.xlu0 %2514, %v2457
        %v2516 = vpop.permute.xlu0 %2515
        %2519 = vset.pattern.permute.xlu0 0
        %2520 = vperm.xlu0 %2519, %v2458
        %v2521 = vpop.permute.xlu0 %2520
        %2524 = vset.pattern.permute.xlu0 0
        %2525 = vperm.xlu0 %2524, %v2459
        %v2526 = vpop.permute.xlu0 %2525
        %2529 = vset.pattern.permute.xlu0 0
        %2530 = vperm.xlu0 %2529, %v2460
        %v2531 = vpop.permute.xlu0 %2530
        %2534 = vset.pattern.permute.xlu0 0
        %2535 = vperm.xlu0 %2534, %v2461
        %v2536 = vpop.permute.xlu0 %2535
        %2539 = vset.pattern.permute.xlu0 0
        %2540 = vperm.xlu0 %2539, %v2462
        %v2541 = vpop.permute.xlu0 %2540
        %v2559 = vunpack.c.l.b16 %v2422
        %v2560 = vunpack.c.l.b16 %v2423
        %v2561 = vunpack.c.l.b16 %v2424
        %v2562 = vunpack.c.l.b16 %v2425
        %v2563 = vunpack.c.l.b16 %v2426
        %v2564 = vunpack.c.l.b16 %v2427
        %v2565 = vunpack.c.l.b16 %v2428
        %v2566 = vunpack.c.l.b16 %v2429
        %v2567 = vunpack.c.l.b16 %v2430
        %v2568 = vunpack.c.l.b16 %v2431
        %v2569 = vunpack.c.l.b16 %v2432
        %v2570 = vunpack.c.l.b16 %v2433
        %v2571 = vunpack.c.l.b16 %v2434
        %v2572 = vunpack.c.l.b16 %v2435
        %v2573 = vunpack.c.l.b16 %v2436
        %v2574 = vunpack.c.l.b16 %v2437
        %v2575 = vpack.c.b16 %v2560, %v2559
        %v2576 = vpack.c.b16 %v2562, %v2561
        %v2577 = vpack.c.b16 %v2564, %v2563
        %v2578 = vpack.c.b16 %v2566, %v2565
        %v2579 = vpack.c.b16 %v2568, %v2567
        %v2580 = vpack.c.b16 %v2570, %v2569
        %v2581 = vpack.c.b16 %v2572, %v2571
        %v2582 = vpack.c.b16 %v2574, %v2573
        %2591 = vmatprep.subr.bf16.mxu0 0
        %2592 = vmatpush1.bf16.msra.mxu0 %v2438
        %2593 = vmatprep.subr.bf16.mxu0 0
        %2594 = vmatpush1.bf16.msra.mxu0 %v2439
        %2595 = vmatprep.subr.bf16.mxu0 0
        %2596 = vmatpush1.bf16.msra.mxu0 %v2440
        %2597 = vmatprep.subr.bf16.mxu0 0
        %2598 = vmatpush1.bf16.msra.mxu0 %v2441
        %2599 = vmatprep.subr.bf16.mxu0 0
        %2600 = vmatpush1.bf16.msra.mxu0 %v2442
        %2601 = vmatprep.subr.bf16.mxu0 0
        %2602 = vmatpush1.bf16.msra.mxu0 %v2443
        %2603 = vmatprep.subr.bf16.mxu0 0
        %2604 = vmatpush1.bf16.msra.mxu0 %v2444
        %2605 = vmatprep.subr.bf16.mxu0 0
        %2606 = vmatpush1.bf16.msra.mxu0 %v2445
        %2607 = vmatprep.subr.bf16.mxu0 0
        %2608 = vmatpush1.bf16.msra.mxu0 0
        %2609 = vmatprep.subr.bf16.mxu0 0
        %2610 = vmatpush1.bf16.msra.mxu0 0
        %2611 = vmatprep.subr.bf16.mxu0 0
        %2612 = vmatpush1.bf16.msra.mxu0 0
        %2613 = vmatprep.subr.bf16.mxu0 0
        %2614 = vmatpush1.bf16.msra.mxu0 0
        %2615 = vmatprep.subr.bf16.mxu0 0
        %2616 = vmatpush1.bf16.msra.mxu0 0
        %2617 = vmatprep.subr.bf16.mxu0 0
        %2618 = vmatpush1.bf16.msra.mxu0 0
        %2619 = vmatprep.subr.bf16.mxu0 0
        %2620 = vmatpush1.bf16.msra.mxu0 0
        %2621 = vmatprep.subr.bf16.mxu0 0
        %2622 = vmatpush1.bf16.msra.mxu0 0
        %2623 = vmatprep.mubr.bf16.mxu0 0
        %2624 = vmatmul.mubr.bf16.gmra.mrb[0].mxu0 %v2575
        %v2625 = vpop.f32.mrb[0].mxu0
        %v2626 = vadd.f32 %v2466, %v2625
        %v2627 = vpop.f32.mrb[0].mxu0
        %v2628 = vpop.f32.mrb[0].mxu0
        %v2629 = vadd.f32 %v2471, %v2628
        %v2630 = vpop.f32.mrb[0].mxu0
        %2631 = vmatprep.mubr.bf16.mxu0 0
        %2632 = vmatmul.mubr.bf16.gmra.mrb[0].mxu0 %v2576
        %v2633 = vpop.f32.mrb[0].mxu0
        %v2634 = vadd.f32 %v2476, %v2633
        %v2635 = vpop.f32.mrb[0].mxu0
        %v2636 = vpop.f32.mrb[0].mxu0
        %v2637 = vadd.f32 %v2481, %v2636
        %v2638 = vpop.f32.mrb[0].mxu0
        %2639 = vmatprep.mubr.bf16.mxu0 0
        %2640 = vmatmul.mubr.bf16.gmra.mrb[0].mxu0 %v2577
        %v2641 = vpop.f32.mrb[0].mxu0
        %v2642 = vadd.f32 %v2486, %v2641
        %v2643 = vpop.f32.mrb[0].mxu0
        %v2644 = vpop.f32.mrb[0].mxu0
        %v2645 = vadd.f32 %v2491, %v2644
        %v2646 = vpop.f32.mrb[0].mxu0
        %2647 = vmatprep.mubr.bf16.mxu0 0
        %2648 = vmatmul.mubr.bf16.gmra.mrb[0].mxu0 %v2578
        %v2649 = vpop.f32.mrb[0].mxu0
        %v2650 = vadd.f32 %v2496, %v2649
        %v2651 = vpop.f32.mrb[0].mxu0
        %v2652 = vpop.f32.mrb[0].mxu0
        %v2653 = vadd.f32 %v2501, %v2652
        %v2654 = vpop.f32.mrb[0].mxu0
        %2655 = vmatprep.mubr.bf16.mxu0 0
        %2656 = vmatmul.mubr.bf16.gmra.mrb[0].mxu0 %v2579
        %v2657 = vpop.f32.mrb[0].mxu0
        %v2658 = vadd.f32 %v2506, %v2657
        %v2659 = vpop.f32.mrb[0].mxu0
        %v2660 = vpop.f32.mrb[0].mxu0
        %v2661 = vadd.f32 %v2511, %v2660
        %v2662 = vpop.f32.mrb[0].mxu0
        %2663 = vmatprep.mubr.bf16.mxu0 0
        %2664 = vmatmul.mubr.bf16.gmra.mrb[0].mxu0 %v2580
        %v2665 = vpop.f32.mrb[0].mxu0
        %v2666 = vadd.f32 %v2516, %v2665
        %v2667 = vpop.f32.mrb[0].mxu0
        %v2668 = vpop.f32.mrb[0].mxu0
        %v2669 = vadd.f32 %v2521, %v2668
        %v2670 = vpop.f32.mrb[0].mxu0
        %2671 = vmatprep.mubr.bf16.mxu0 0
        %2672 = vmatmul.mubr.bf16.gmra.mrb[0].mxu0 %v2581
        %v2673 = vpop.f32.mrb[0].mxu0
        %v2674 = vadd.f32 %v2526, %v2673
        %v2675 = vpop.f32.mrb[0].mxu0
        %v2676 = vpop.f32.mrb[0].mxu0
        %v2677 = vadd.f32 %v2531, %v2676
        %v2678 = vpop.f32.mrb[0].mxu0
        %2679 = vmatprep.mubr.bf16.mxu0 0
        %2680 = vmatmul.mubr.bf16.gmra.mrb[0].mxu0 %v2582
        %v2681 = vpop.f32.mrb[0].mxu0
        %v2682 = vadd.f32 %v2536, %v2681
        %v2683 = vpop.f32.mrb[0].mxu0
        %v2684 = vpop.f32.mrb[0].mxu0
        %v2685 = vadd.f32 %v2541, %v2684
        %v2686 = vpop.f32.mrb[0].mxu0
        %2687 = vdwg.mxu0
        %v2688 = vmul.f32 %v2626, 0.5
        %v2689 = vmul.f32 %v2629, 0.5
        %v2690 = vmul.f32 %v2634, 0.5
        %v2691 = vmul.f32 %v2637, 0.5
        %v2692 = vmul.f32 %v2642, 0.5
        %v2693 = vmul.f32 %v2645, 0.5
        %v2694 = vmul.f32 %v2650, 0.5
        %v2695 = vmul.f32 %v2653, 0.5
        %v2696 = vmul.f32 %v2658, 0.5
        %v2697 = vmul.f32 %v2661, 0.5
        %v2698 = vmul.f32 %v2666, 0.5
        %v2699 = vmul.f32 %v2669, 0.5
        %v2700 = vmul.f32 %v2674, 0.5
        %v2701 = vmul.f32 %v2677, 0.5
        %v2702 = vmul.f32 %v2682, 0.5
        %v2703 = vmul.f32 %v2685, 0.5
        %v2704 = vmul.f32 %v2626, 0.70710677
        %v2705 = vmul.f32 %v2629, 0.70710677
        %v2706 = vmul.f32 %v2634, 0.70710677
        %v2707 = vmul.f32 %v2637, 0.70710677
        %v2708 = vmul.f32 %v2642, 0.70710677
        %v2709 = vmul.f32 %v2645, 0.70710677
        %v2710 = vmul.f32 %v2650, 0.70710677
        %v2711 = vmul.f32 %v2653, 0.70710677
        %v2712 = vmul.f32 %v2658, 0.70710677
        %v2713 = vmul.f32 %v2661, 0.70710677
        %v2714 = vmul.f32 %v2666, 0.70710677
        %v2715 = vmul.f32 %v2669, 0.70710677
        %v2716 = vmul.f32 %v2674, 0.70710677
        %v2717 = vmul.f32 %v2677, 0.70710677
        %v2718 = vmul.f32 %v2682, 0.70710677
        %v2719 = vmul.f32 %v2685, 0.70710677
        %v2720 = verf.f32.pop %v2704
        %v2721 = verf.f32.pop %v2705
        %v2722 = verf.f32.pop %v2706
        %v2723 = verf.f32.pop %v2707
        %v2724 = verf.f32.pop %v2708
        %v2725 = verf.f32.pop %v2709
        %v2726 = verf.f32.pop %v2710
        %v2727 = verf.f32.pop %v2711
        %v2728 = verf.f32.pop %v2712
        %v2729 = verf.f32.pop %v2713
        %v2730 = verf.f32.pop %v2714
        %v2731 = verf.f32.pop %v2715
        %v2732 = verf.f32.pop %v2716
        %v2733 = verf.f32.pop %v2717
        %v2734 = verf.f32.pop %v2718
        %v2735 = verf.f32.pop %v2719
        %v2736 = vadd.f32 %v2720, 1.0
        %v2737 = vadd.f32 %v2721, 1.0
        %v2738 = vadd.f32 %v2722, 1.0
        %v2739 = vadd.f32 %v2723, 1.0
        %v2740 = vadd.f32 %v2724, 1.0
        %v2741 = vadd.f32 %v2725, 1.0
        %v2742 = vadd.f32 %v2726, 1.0
        %v2743 = vadd.f32 %v2727, 1.0
        %v2744 = vadd.f32 %v2728, 1.0
        %v2745 = vadd.f32 %v2729, 1.0
        %v2746 = vadd.f32 %v2730, 1.0
        %v2747 = vadd.f32 %v2731, 1.0
        %v2748 = vadd.f32 %v2732, 1.0
        %v2749 = vadd.f32 %v2733, 1.0
        %v2750 = vadd.f32 %v2734, 1.0
        %v2751 = vadd.f32 %v2735, 1.0
        %v2752 = vmul.f32 %v2688, %v2736
        %v2753 = vmul.f32 %v2689, %v2737
        %v2754 = vmul.f32 %v2690, %v2738
        %v2755 = vmul.f32 %v2691, %v2739
        %v2756 = vmul.f32 %v2692, %v2740
        %v2757 = vmul.f32 %v2693, %v2741
        %v2758 = vmul.f32 %v2694, %v2742
        %v2759 = vmul.f32 %v2695, %v2743
        %v2760 = vmul.f32 %v2696, %v2744
        %v2761 = vmul.f32 %v2697, %v2745
        %v2762 = vmul.f32 %v2698, %v2746
        %v2763 = vmul.f32 %v2699, %v2747
        %v2764 = vmul.f32 %v2700, %v2748
        %v2765 = vmul.f32 %v2701, %v2749
        %v2766 = vmul.f32 %v2702, %v2750
        %v2767 = vmul.f32 %v2703, %v2751
        %s2768 = scalar_lea.vmem %s4, 64
        %v2769 = vld [vmem:[%s2768] sm:$0xf]
        %v2770 = vld [vmem:[%s2768 + $0x4] sm:$0xf]
        %v2771 = vld [vmem:[%s2768 + $0x8] sm:$0xf]
        %v2772 = vld [vmem:[%s2768 + $0xc] sm:$0xf]
        %v2773 = vld [vmem:[%s2768 + $0x10] sm:$0xf]
        %v2774 = vld [vmem:[%s2768 + $0x14] sm:$0xf]
        %v2775 = vld [vmem:[%s2768 + $0x18] sm:$0xf]
        %v2776 = vld [vmem:[%s2768 + $0x1c] sm:$0xf]
        %v2777 = vld [vmem:[%s2768 + $0x20] sm:$0xf]
        %v2778 = vld [vmem:[%s2768 + $0x24] sm:$0xf]
        %v2779 = vld [vmem:[%s2768 + $0x28] sm:$0xf]
        %v2780 = vld [vmem:[%s2768 + $0x2c] sm:$0xf]
        %v2781 = vld [vmem:[%s2768 + $0x30] sm:$0xf]
        %v2782 = vld [vmem:[%s2768 + $0x34] sm:$0xf]
        %v2783 = vld [vmem:[%s2768 + $0x38] sm:$0xf]
        %v2784 = vld [vmem:[%s2768 + $0x3c] sm:$0xf]
        %v2785 = vpack.c.bf16 %v2753, %v2752
        %v2786 = vpack.c.bf16 %v2755, %v2754
        %v2787 = vpack.c.bf16 %v2757, %v2756
        %v2788 = vpack.c.bf16 %v2759, %v2758
        %v2789 = vpack.c.bf16 %v2761, %v2760
        %v2790 = vpack.c.bf16 %v2763, %v2762
        %v2791 = vpack.c.bf16 %v2765, %v2764
        %v2792 = vpack.c.bf16 %v2767, %v2766
        %v2809 = vunpack.c.l.b16 %v2769
        %v2810 = vunpack.c.l.b16 %v2770
        %v2811 = vunpack.c.l.b16 %v2771
        %v2812 = vunpack.c.l.b16 %v2772
        %v2813 = vunpack.c.l.b16 %v2773
        %v2814 = vunpack.c.l.b16 %v2774
        %v2815 = vunpack.c.l.b16 %v2775
        %v2816 = vunpack.c.l.b16 %v2776
        %v2817 = vunpack.c.l.b16 %v2777
        %v2818 = vunpack.c.l.b16 %v2778
        %v2819 = vunpack.c.l.b16 %v2779
        %v2820 = vunpack.c.l.b16 %v2780
        %v2821 = vunpack.c.l.b16 %v2781
        %v2822 = vunpack.c.l.b16 %v2782
        %v2823 = vunpack.c.l.b16 %v2783
        %v2824 = vunpack.c.l.b16 %v2784
        %v2825 = vpack.c.b16 %v2810, %v2809
        %v2826 = vpack.c.b16 %v2812, %v2811
        %v2827 = vpack.c.b16 %v2814, %v2813
        %v2828 = vpack.c.b16 %v2816, %v2815
        %v2829 = vpack.c.b16 %v2818, %v2817
        %v2830 = vpack.c.b16 %v2820, %v2819
        %v2831 = vpack.c.b16 %v2822, %v2821
        %v2832 = vpack.c.b16 %v2824, %v2823
        %2841 = vmatprep.subr.bf16.mxu0 0
        %2842 = vmatpush1.bf16.msra.mxu0 %v2785
        %2843 = vmatprep.subr.bf16.mxu0 0
        %2844 = vmatpush1.bf16.msra.mxu0 %v2786
        %2845 = vmatprep.subr.bf16.mxu0 0
        %2846 = vmatpush1.bf16.msra.mxu0 %v2787
        %2847 = vmatprep.subr.bf16.mxu0 0
        %2848 = vmatpush1.bf16.msra.mxu0 %v2788
        %2849 = vmatprep.subr.bf16.mxu0 0
        %2850 = vmatpush1.bf16.msra.mxu0 %v2789
        %2851 = vmatprep.subr.bf16.mxu0 0
        %2852 = vmatpush1.bf16.msra.mxu0 %v2790
        %2853 = vmatprep.subr.bf16.mxu0 0
        %2854 = vmatpush1.bf16.msra.mxu0 %v2791
        %2855 = vmatprep.subr.bf16.mxu0 0
        %2856 = vmatpush1.bf16.msra.mxu0 %v2792
        %2857 = vmatprep.subr.bf16.mxu0 0
        %2858 = vmatpush1.bf16.msra.mxu0 0
        %2859 = vmatprep.subr.bf16.mxu0 0
        %2860 = vmatpush1.bf16.msra.mxu0 0
        %2861 = vmatprep.subr.bf16.mxu0 0
        %2862 = vmatpush1.bf16.msra.mxu0 0
        %2863 = vmatprep.subr.bf16.mxu0 0
        %2864 = vmatpush1.bf16.msra.mxu0 0
        %2865 = vmatprep.subr.bf16.mxu0 0
        %2866 = vmatpush1.bf16.msra.mxu0 0
        %2867 = vmatprep.subr.bf16.mxu0 0
        %2868 = vmatpush1.bf16.msra.mxu0 0
        %2869 = vmatprep.subr.bf16.mxu0 0
        %2870 = vmatpush1.bf16.msra.mxu0 0
        %2871 = vmatprep.subr.bf16.mxu0 0
        %2872 = vmatpush1.bf16.msra.mxu0 0
        %2873 = vmatprep.mubr.bf16.mxu0 0
        %2874 = vmatmul.mubr.bf16.gmra.mrb[0].mxu0 %v2825
        %v2875 = vpop.f32.mrb[0].mxu0
        %v2876 = vadd.f32 0.0, %v2875
        %v2877 = vpop.f32.mrb[0].mxu0
        %v2878 = vpop.f32.mrb[0].mxu0
        %v2879 = vadd.f32 0.0, %v2878
        %v2880 = vpop.f32.mrb[0].mxu0
        %2881 = vmatprep.mubr.bf16.mxu0 0
        %2882 = vmatmul.mubr.bf16.gmra.mrb[0].mxu0 %v2826
        %v2883 = vpop.f32.mrb[0].mxu0
        %v2884 = vadd.f32 0.0, %v2883
        %v2885 = vpop.f32.mrb[0].mxu0
        %v2886 = vpop.f32.mrb[0].mxu0
        %v2887 = vadd.f32 0.0, %v2886
        %v2888 = vpop.f32.mrb[0].mxu0
        %2889 = vmatprep.mubr.bf16.mxu0 0
        %2890 = vmatmul.mubr.bf16.gmra.mrb[0].mxu0 %v2827
        %v2891 = vpop.f32.mrb[0].mxu0
        %v2892 = vadd.f32 0.0, %v2891
        %v2893 = vpop.f32.mrb[0].mxu0
        %v2894 = vpop.f32.mrb[0].mxu0
        %v2895 = vadd.f32 0.0, %v2894
        %v2896 = vpop.f32.mrb[0].mxu0
        %2897 = vmatprep.mubr.bf16.mxu0 0
        %2898 = vmatmul.mubr.bf16.gmra.mrb[0].mxu0 %v2828
        %v2899 = vpop.f32.mrb[0].mxu0
        %v2900 = vadd.f32 0.0, %v2899
        %v2901 = vpop.f32.mrb[0].mxu0
        %v2902 = vpop.f32.mrb[0].mxu0
        %v2903 = vadd.f32 0.0, %v2902
        %v2904 = vpop.f32.mrb[0].mxu0
        %2905 = vmatprep.mubr.bf16.mxu0 0
        %2906 = vmatmul.mubr.bf16.gmra.mrb[0].mxu0 %v2829
        %v2907 = vpop.f32.mrb[0].mxu0
        %v2908 = vadd.f32 0.0, %v2907
        %v2909 = vpop.f32.mrb[0].mxu0
        %v2910 = vpop.f32.mrb[0].mxu0
        %v2911 = vadd.f32 0.0, %v2910
        %v2912 = vpop.f32.mrb[0].mxu0
        %2913 = vmatprep.mubr.bf16.mxu0 0
        %2914 = vmatmul.mubr.bf16.gmra.mrb[0].mxu0 %v2830
        %v2915 = vpop.f32.mrb[0].mxu0
        %v2916 = vadd.f32 0.0, %v2915
        %v2917 = vpop.f32.mrb[0].mxu0
        %v2918 = vpop.f32.mrb[0].mxu0
        %v2919 = vadd.f32 0.0, %v2918
        %v2920 = vpop.f32.mrb[0].mxu0
        %2921 = vmatprep.mubr.bf16.mxu0 0
        %2922 = vmatmul.mubr.bf16.gmra.mrb[0].mxu0 %v2831
        %v2923 = vpop.f32.mrb[0].mxu0
        %v2924 = vadd.f32 0.0, %v2923
        %v2925 = vpop.f32.mrb[0].mxu0
        %v2926 = vpop.f32.mrb[0].mxu0
        %v2927 = vadd.f32 0.0, %v2926
        %v2928 = vpop.f32.mrb[0].mxu0
        %2929 = vmatprep.mubr.bf16.mxu0 0
        %2930 = vmatmul.mubr.bf16.gmra.mrb[0].mxu0 %v2832
        %v2931 = vpop.f32.mrb[0].mxu0
        %v2932 = vadd.f32 0.0, %v2931
        %v2933 = vpop.f32.mrb[0].mxu0
        %v2934 = vpop.f32.mrb[0].mxu0
        %v2935 = vadd.f32 0.0, %v2934
        %v2936 = vpop.f32.mrb[0].mxu0
        %2937 = vdwg.mxu0
        %v2938 = vadd.f32 %v2155, %v2876
        %v2939 = vadd.f32 %v2156, %v2879
        %v2940 = vadd.f32 %v2157, %v2884
        %v2941 = vadd.f32 %v2158, %v2887
        %v2942 = vadd.f32 %v2159, %v2892
        %v2943 = vadd.f32 %v2160, %v2895
        %v2944 = vadd.f32 %v2161, %v2900
        %v2945 = vadd.f32 %v2162, %v2903
        %v2946 = vadd.f32 %v2163, %v2908
        %v2947 = vadd.f32 %v2164, %v2911
        %v2948 = vadd.f32 %v2165, %v2916
        %v2949 = vadd.f32 %v2166, %v2919
        %v2950 = vadd.f32 %v2167, %v2924
        %v2951 = vadd.f32 %v2168, %v2927
        %v2952 = vadd.f32 %v2169, %v2932
        %v2953 = vadd.f32 %v2170, %v2935
        %s2954 = scalar_lea.vmem %s5, 128
        %v2955 = vld [vmem:[%s2954] sm:$0xff]
        %v2956 = vld [vmem:[%s2954 + $0x8] sm:$0xff]
        %v2957 = vld [vmem:[%s2954 + $0x10] sm:$0xff]
        %v2958 = vld [vmem:[%s2954 + $0x18] sm:$0xff]
        %v2959 = vld [vmem:[%s2954 + $0x20] sm:$0xff]
        %v2960 = vld [vmem:[%s2954 + $0x28] sm:$0xff]
        %v2961 = vld [vmem:[%s2954 + $0x30] sm:$0xff]
        %v2962 = vld [vmem:[%s2954 + $0x38] sm:$0xff]
        %v2963 = vld [vmem:[%s2954 + $0x40] sm:$0xff]
        %v2964 = vld [vmem:[%s2954 + $0x48] sm:$0xff]
        %v2965 = vld [vmem:[%s2954 + $0x50] sm:$0xff]
        %v2966 = vld [vmem:[%s2954 + $0x58] sm:$0xff]
        %v2967 = vld [vmem:[%s2954 + $0x60] sm:$0xff]
        %v2968 = vld [vmem:[%s2954 + $0x68] sm:$0xff]
        %v2969 = vld [vmem:[%s2954 + $0x70] sm:$0xff]
        %v2970 = vld [vmem:[%s2954 + $0x78] sm:$0xff]
        %2972 = vset.pattern.permute.xlu0 0
        %2973 = vperm.xlu0 %2972, %v2955
        %v2974 = vpop.permute.xlu0 %2973
        %2977 = vset.pattern.permute.xlu0 0
        %2978 = vperm.xlu0 %2977, %v2956
        %v2979 = vpop.permute.xlu0 %2978
        %2982 = vset.pattern.permute.xlu0 0
        %2983 = vperm.xlu0 %2982, %v2957
        %v2984 = vpop.permute.xlu0 %2983
        %2987 = vset.pattern.permute.xlu0 0
        %2988 = vperm.xlu0 %2987, %v2958
        %v2989 = vpop.permute.xlu0 %2988
        %2992 = vset.pattern.permute.xlu0 0
        %2993 = vperm.xlu0 %2992, %v2959
        %v2994 = vpop.permute.xlu0 %2993
        %2997 = vset.pattern.permute.xlu0 0
        %2998 = vperm.xlu0 %2997, %v2960
        %v2999 = vpop.permute.xlu0 %2998
        %3002 = vset.pattern.permute.xlu0 0
        %3003 = vperm.xlu0 %3002, %v2961
        %v3004 = vpop.permute.xlu0 %3003
        %3007 = vset.pattern.permute.xlu0 0
        %3008 = vperm.xlu0 %3007, %v2962
        %v3009 = vpop.permute.xlu0 %3008
        %3012 = vset.pattern.permute.xlu0 0
        %3013 = vperm.xlu0 %3012, %v2963
        %v3014 = vpop.permute.xlu0 %3013
        %3017 = vset.pattern.permute.xlu0 0
        %3018 = vperm.xlu0 %3017, %v2964
        %v3019 = vpop.permute.xlu0 %3018
        %3022 = vset.pattern.permute.xlu0 0
        %3023 = vperm.xlu0 %3022, %v2965
        %v3024 = vpop.permute.xlu0 %3023
        %3027 = vset.pattern.permute.xlu0 0
        %3028 = vperm.xlu0 %3027, %v2966
        %v3029 = vpop.permute.xlu0 %3028
        %3032 = vset.pattern.permute.xlu0 0
        %3033 = vperm.xlu0 %3032, %v2967
        %v3034 = vpop.permute.xlu0 %3033
        %3037 = vset.pattern.permute.xlu0 0
        %3038 = vperm.xlu0 %3037, %v2968
        %v3039 = vpop.permute.xlu0 %3038
        %3042 = vset.pattern.permute.xlu0 0
        %3043 = vperm.xlu0 %3042, %v2969
        %v3044 = vpop.permute.xlu0 %3043
        %3047 = vset.pattern.permute.xlu0 0
        %3048 = vperm.xlu0 %3047, %v2970
        %v3049 = vpop.permute.xlu0 %3048
        %v3051 = vadd.f32 %v2938, %v2974
        %v3052 = vadd.f32 %v2939, %v2979
        %v3053 = vadd.f32 %v2940, %v2984
        %v3054 = vadd.f32 %v2941, %v2989
        %v3055 = vadd.f32 %v2942, %v2994
        %v3056 = vadd.f32 %v2943, %v2999
        %v3057 = vadd.f32 %v2944, %v3004
        %v3058 = vadd.f32 %v2945, %v3009
        %v3059 = vadd.f32 %v2946, %v3014
        %v3060 = vadd.f32 %v2947, %v3019
        %v3061 = vadd.f32 %v2948, %v3024
        %v3062 = vadd.f32 %v2949, %v3029
        %v3063 = vadd.f32 %v2950, %v3034
        %v3064 = vadd.f32 %v2951, %v3039
        %v3065 = vadd.f32 %v2952, %v3044
        %v3066 = vadd.f32 %v2953, %v3049
        %v3067 = vsel %vm519, %v3051, 0.0
        %3068 = vadd.xlane.f32.xlu0 %v3067
        %v3069 = vpop.xlane.xlu0 %3068
        %v3070 = vsel %vm519, %v3052, 0.0
        %3071 = vadd.xlane.f32.xlu0 %v3070
        %v3072 = vpop.xlane.xlu0 %3071
        %v3073 = vsel %vm519, %v3053, 0.0
        %3074 = vadd.xlane.f32.xlu0 %v3073
        %v3075 = vpop.xlane.xlu0 %3074
        %v3076 = vsel %vm519, %v3054, 0.0
        %3077 = vadd.xlane.f32.xlu0 %v3076
        %v3078 = vpop.xlane.xlu0 %3077
        %v3079 = vsel %vm519, %v3055, 0.0
        %3080 = vadd.xlane.f32.xlu0 %v3079
        %v3081 = vpop.xlane.xlu0 %3080
        %v3082 = vsel %vm519, %v3056, 0.0
        %3083 = vadd.xlane.f32.xlu0 %v3082
        %v3084 = vpop.xlane.xlu0 %3083
        %v3085 = vsel %vm519, %v3057, 0.0
        %3086 = vadd.xlane.f32.xlu0 %v3085
        %v3087 = vpop.xlane.xlu0 %3086
        %v3088 = vsel %vm519, %v3058, 0.0
        %3089 = vadd.xlane.f32.xlu0 %v3088
        %v3090 = vpop.xlane.xlu0 %3089
        %v3091 = vsel %vm519, %v3059, 0.0
        %3092 = vadd.xlane.f32.xlu0 %v3091
        %v3093 = vpop.xlane.xlu0 %3092
        %v3094 = vsel %vm519, %v3060, 0.0
        %3095 = vadd.xlane.f32.xlu0 %v3094
        %v3096 = vpop.xlane.xlu0 %3095
        %v3097 = vsel %vm519, %v3061, 0.0
        %3098 = vadd.xlane.f32.xlu0 %v3097
        %v3099 = vpop.xlane.xlu0 %3098
        %v3100 = vsel %vm519, %v3062, 0.0
        %3101 = vadd.xlane.f32.xlu0 %v3100
        %v3102 = vpop.xlane.xlu0 %3101
        %v3103 = vsel %vm519, %v3063, 0.0
        %3104 = vadd.xlane.f32.xlu0 %v3103
        %v3105 = vpop.xlane.xlu0 %3104
        %v3106 = vsel %vm519, %v3064, 0.0
        %3107 = vadd.xlane.f32.xlu0 %v3106
        %v3108 = vpop.xlane.xlu0 %3107
        %v3109 = vsel %vm519, %v3065, 0.0
        %3110 = vadd.xlane.f32.xlu0 %v3109
        %v3111 = vpop.xlane.xlu0 %3110
        %v3112 = vsel %vm519, %v3066, 0.0
        %3113 = vadd.xlane.f32.xlu0 %v3112
        %v3114 = vpop.xlane.xlu0 %3113
        %v3115 = vmul.f32 %v3069, %v691
        %v3116 = vmul.f32 %v3072, %v691
        %v3117 = vmul.f32 %v3075, %v691
        %v3118 = vmul.f32 %v3078, %v691
        %v3119 = vmul.f32 %v3081, %v691
        %v3120 = vmul.f32 %v3084, %v691
        %v3121 = vmul.f32 %v3087, %v691
        %v3122 = vmul.f32 %v3090, %v691
        %v3123 = vmul.f32 %v3093, %v691
        %v3124 = vmul.f32 %v3096, %v691
        %v3125 = vmul.f32 %v3099, %v691
        %v3126 = vmul.f32 %v3102, %v691
        %v3127 = vmul.f32 %v3105, %v691
        %v3128 = vmul.f32 %v3108, %v691
        %v3129 = vmul.f32 %v3111, %v691
        %v3130 = vmul.f32 %v3114, %v691
        %v3131 = vsub.f32 %v3051, %v3115
        %v3132 = vsub.f32 %v3052, %v3116
        %v3133 = vsub.f32 %v3053, %v3117
        %v3134 = vsub.f32 %v3054, %v3118
        %v3135 = vsub.f32 %v3055, %v3119
        %v3136 = vsub.f32 %v3056, %v3120
        %v3137 = vsub.f32 %v3057, %v3121
        %v3138 = vsub.f32 %v3058, %v3122
        %v3139 = vsub.f32 %v3059, %v3123
        %v3140 = vsub.f32 %v3060, %v3124
        %v3141 = vsub.f32 %v3061, %v3125
        %v3142 = vsub.f32 %v3062, %v3126
        %v3143 = vsub.f32 %v3063, %v3127
        %v3144 = vsub.f32 %v3064, %v3128
        %v3145 = vsub.f32 %v3065, %v3129
        %v3146 = vsub.f32 %v3066, %v3130
        %v3147 = vmul.f32 %v3131, %v3131
        %v3148 = vmul.f32 %v3132, %v3132
        %v3149 = vmul.f32 %v3133, %v3133
        %v3150 = vmul.f32 %v3134, %v3134
        %v3151 = vmul.f32 %v3135, %v3135
        %v3152 = vmul.f32 %v3136, %v3136
        %v3153 = vmul.f32 %v3137, %v3137
        %v3154 = vmul.f32 %v3138, %v3138
        %v3155 = vmul.f32 %v3139, %v3139
        %v3156 = vmul.f32 %v3140, %v3140
        %v3157 = vmul.f32 %v3141, %v3141
        %v3158 = vmul.f32 %v3142, %v3142
        %v3159 = vmul.f32 %v3143, %v3143
        %v3160 = vmul.f32 %v3144, %v3144
        %v3161 = vmul.f32 %v3145, %v3145
        %v3162 = vmul.f32 %v3146, %v3146
        %v3163 = vsel %vm519, %v3147, 0.0
        %3164 = vadd.xlane.f32.xlu0 %v3163
        %v3165 = vpop.xlane.xlu0 %3164
        %v3166 = vsel %vm519, %v3148, 0.0
        %3167 = vadd.xlane.f32.xlu0 %v3166
        %v3168 = vpop.xlane.xlu0 %3167
        %v3169 = vsel %vm519, %v3149, 0.0
        %3170 = vadd.xlane.f32.xlu0 %v3169
        %v3171 = vpop.xlane.xlu0 %3170
        %v3172 = vsel %vm519, %v3150, 0.0
        %3173 = vadd.xlane.f32.xlu0 %v3172
        %v3174 = vpop.xlane.xlu0 %3173
        %v3175 = vsel %vm519, %v3151, 0.0
        %3176 = vadd.xlane.f32.xlu0 %v3175
        %v3177 = vpop.xlane.xlu0 %3176
        %v3178 = vsel %vm519, %v3152, 0.0
        %3179 = vadd.xlane.f32.xlu0 %v3178
        %v3180 = vpop.xlane.xlu0 %3179
        %v3181 = vsel %vm519, %v3153, 0.0
        %3182 = vadd.xlane.f32.xlu0 %v3181
        %v3183 = vpop.xlane.xlu0 %3182
        %v3184 = vsel %vm519, %v3154, 0.0
        %3185 = vadd.xlane.f32.xlu0 %v3184
        %v3186 = vpop.xlane.xlu0 %3185
        %v3187 = vsel %vm519, %v3155, 0.0
        %3188 = vadd.xlane.f32.xlu0 %v3187
        %v3189 = vpop.xlane.xlu0 %3188
        %v3190 = vsel %vm519, %v3156, 0.0
        %3191 = vadd.xlane.f32.xlu0 %v3190
        %v3192 = vpop.xlane.xlu0 %3191
        %v3193 = vsel %vm519, %v3157, 0.0
        %3194 = vadd.xlane.f32.xlu0 %v3193
        %v3195 = vpop.xlane.xlu0 %3194
        %v3196 = vsel %vm519, %v3158, 0.0
        %3197 = vadd.xlane.f32.xlu0 %v3196
        %v3198 = vpop.xlane.xlu0 %3197
        %v3199 = vsel %vm519, %v3159, 0.0
        %3200 = vadd.xlane.f32.xlu0 %v3199
        %v3201 = vpop.xlane.xlu0 %3200
        %v3202 = vsel %vm519, %v3160, 0.0
        %3203 = vadd.xlane.f32.xlu0 %v3202
        %v3204 = vpop.xlane.xlu0 %3203
        %v3205 = vsel %vm519, %v3161, 0.0
        %3206 = vadd.xlane.f32.xlu0 %v3205
        %v3207 = vpop.xlane.xlu0 %3206
        %v3208 = vsel %vm519, %v3162, 0.0
        %3209 = vadd.xlane.f32.xlu0 %v3208
        %v3210 = vpop.xlane.xlu0 %3209
        %v3211 = vmul.f32 %v3165, %v691
        %v3212 = vmul.f32 %v3168, %v691
        %v3213 = vmul.f32 %v3171, %v691
        %v3214 = vmul.f32 %v3174, %v691
        %v3215 = vmul.f32 %v3177, %v691
        %v3216 = vmul.f32 %v3180, %v691
        %v3217 = vmul.f32 %v3183, %v691
        %v3218 = vmul.f32 %v3186, %v691
        %v3219 = vmul.f32 %v3189, %v691
        %v3220 = vmul.f32 %v3192, %v691
        %v3221 = vmul.f32 %v3195, %v691
        %v3222 = vmul.f32 %v3198, %v691
        %v3223 = vmul.f32 %v3201, %v691
        %v3224 = vmul.f32 %v3204, %v691
        %v3225 = vmul.f32 %v3207, %v691
        %v3226 = vmul.f32 %v3210, %v691
        %v3227 = vadd.f32 %v3211, 1e-05
        %v3228 = vadd.f32 %v3212, 1e-05
        %v3229 = vadd.f32 %v3213, 1e-05
        %v3230 = vadd.f32 %v3214, 1e-05
        %v3231 = vadd.f32 %v3215, 1e-05
        %v3232 = vadd.f32 %v3216, 1e-05
        %v3233 = vadd.f32 %v3217, 1e-05
        %v3234 = vadd.f32 %v3218, 1e-05
        %v3235 = vadd.f32 %v3219, 1e-05
        %v3236 = vadd.f32 %v3220, 1e-05
        %v3237 = vadd.f32 %v3221, 1e-05
        %v3238 = vadd.f32 %v3222, 1e-05
        %v3239 = vadd.f32 %v3223, 1e-05
        %v3240 = vadd.f32 %v3224, 1e-05
        %v3241 = vadd.f32 %v3225, 1e-05
        %v3242 = vadd.f32 %v3226, 1e-05
        %v3243 = vrsqrt.pop %v3227
        %v3244 = vrsqrt.pop %v3228
        %v3245 = vrsqrt.pop %v3229
        %v3246 = vrsqrt.pop %v3230
        %v3247 = vrsqrt.pop %v3231
        %v3248 = vrsqrt.pop %v3232
        %v3249 = vrsqrt.pop %v3233
        %v3250 = vrsqrt.pop %v3234
        %v3251 = vrsqrt.pop %v3235
        %v3252 = vrsqrt.pop %v3236
        %v3253 = vrsqrt.pop %v3237
        %v3254 = vrsqrt.pop %v3238
        %v3255 = vrsqrt.pop %v3239
        %v3256 = vrsqrt.pop %v3240
        %v3257 = vrsqrt.pop %v3241
        %v3258 = vrsqrt.pop %v3242
        %v3259 = vmul.f32 %v3131, %v3243
        %v3260 = vmul.f32 %v3132, %v3244
        %v3261 = vmul.f32 %v3133, %v3245
        %v3262 = vmul.f32 %v3134, %v3246
        %v3263 = vmul.f32 %v3135, %v3247
        %v3264 = vmul.f32 %v3136, %v3248
        %v3265 = vmul.f32 %v3137, %v3249
        %v3266 = vmul.f32 %v3138, %v3250
        %v3267 = vmul.f32 %v3139, %v3251
        %v3268 = vmul.f32 %v3140, %v3252
        %v3269 = vmul.f32 %v3141, %v3253
        %v3270 = vmul.f32 %v3142, %v3254
        %v3271 = vmul.f32 %v3143, %v3255
        %v3272 = vmul.f32 %v3144, %v3256
        %v3273 = vmul.f32 %v3145, %v3257
        %v3274 = vmul.f32 %v3146, %v3258
        %s3275 = scalar_lea.vmem %s6, 16
        %v3276 = vld [vmem:[%s3275] sm:$0xf]
        %v3277 = vld [vmem:[%s3275 + $0x4] sm:$0xf]
        %v3278 = vld [vmem:[%s3275 + $0x8] sm:$0xf]
        %v3279 = vld [vmem:[%s3275 + $0xc] sm:$0xf]
        %v3280 = vpack.c.bf16 %v3260, %v3259
        %v3281 = vpack.c.bf16 %v3262, %v3261
        %v3282 = vpack.c.bf16 %v3264, %v3263
        %v3283 = vpack.c.bf16 %v3266, %v3265
        %v3284 = vpack.c.bf16 %v3268, %v3267
        %v3285 = vpack.c.bf16 %v3270, %v3269
        %v3286 = vpack.c.bf16 %v3272, %v3271
        %v3287 = vpack.c.bf16 %v3274, %v3273
        %v3288 = vld [vmem:[%s9 + $0x1] sm:$0x1]
        %v3289 = vlaneseq
        %v3290 = vshrl.u32 %v3289, 7
        %v3291 = vsub.s32 0, %v3290
        %v3292 = vrot.slane %v3288, %v3291
        %v3297 = vunpack.c.l.b16 %v3276
        %v3298 = vunpack.c.l.b16 %v3277
        %v3299 = vunpack.c.l.b16 %v3278
        %v3300 = vunpack.c.l.b16 %v3279
        %v3301 = vpack.c.b16 %v3298, %v3297
        %v3302 = vpack.c.b16 %v3300, %v3299
        %v3306 = vsel %vm519, %v3280, 0
        %v3309 = vsel %vm519, %v3281, 0
        %v3312 = vsel %vm519, %v3282, 0
        %v3315 = vsel %vm519, %v3283, 0
        %v3318 = vsel %vm519, %v3284, 0
        %v3321 = vsel %vm519, %v3285, 0
        %v3324 = vsel %vm519, %v3286, 0
        %v3327 = vsel %vm519, %v3287, 0
        %3329 = vmatprep.subr.bf16.mxu0 0
        %3330 = vmatpush1.bf16.msra.mxu0 %v3301
        %3331 = vmatprep.subr.bf16.mxu0 0
        %3332 = vmatpush1.bf16.msra.mxu0 %v3302
        %3333 = vmatprep.subr.bf16.mxu0 0
        %3334 = vmatpush1.bf16.msra.mxu0 0
        %3335 = vmatprep.subr.bf16.mxu0 0
        %3336 = vmatpush1.bf16.msra.mxu0 0
        %3337 = vmatprep.subr.bf16.mxu0 0
        %3338 = vmatpush1.bf16.msra.mxu0 0
        %3339 = vmatprep.subr.bf16.mxu0 0
        %3340 = vmatpush1.bf16.msra.mxu0 0
        %3341 = vmatprep.subr.bf16.mxu0 0
        %3342 = vmatpush1.bf16.msra.mxu0 0
        %3343 = vmatprep.subr.bf16.mxu0 0
        %3344 = vmatpush1.bf16.msra.mxu0 0
        %3345 = vmatprep.subr.bf16.mxu0 0
        %3346 = vmatpush1.bf16.msra.mxu0 0
        %3347 = vmatprep.subr.bf16.mxu0 0
        %3348 = vmatpush1.bf16.msra.mxu0 0
        %3349 = vmatprep.subr.bf16.mxu0 0
        %3350 = vmatpush1.bf16.msra.mxu0 0
        %3351 = vmatprep.subr.bf16.mxu0 0
        %3352 = vmatpush1.bf16.msra.mxu0 0
        %3353 = vmatprep.subr.bf16.mxu0 0
        %3354 = vmatpush1.bf16.msra.mxu0 0
        %3355 = vmatprep.subr.bf16.mxu0 0
        %3356 = vmatpush1.bf16.msra.mxu0 0
        %3357 = vmatprep.subr.bf16.mxu0 0
        %3358 = vmatpush1.bf16.msra.mxu0 0
        %3359 = vmatprep.subr.bf16.mxu0 0
        %3360 = vmatpush1.bf16.msra.mxu0 0
        %3361 = vmatprep.mubr.bf16.mxu0 0
        %3362 = vmatmul.mubr.bf16.gmra.mrb[0].mxu0 %v3306
        %v3363 = vpop.f32.mrb[0].mxu0
        %v3364 = vadd.f32 %v3292, %v3363
        %v3365 = vpop.f32.mrb[0].mxu0
        %v3366 = vpop.f32.mrb[0].mxu0
        %v3367 = vadd.f32 %v3292, %v3366
        %v3368 = vpop.f32.mrb[0].mxu0
        %3369 = vmatprep.mubr.bf16.mxu0 0
        %3370 = vmatmul.mubr.bf16.gmra.mrb[0].mxu0 %v3309
        %v3371 = vpop.f32.mrb[0].mxu0
        %v3372 = vadd.f32 %v3292, %v3371
        %v3373 = vpop.f32.mrb[0].mxu0
        %v3374 = vpop.f32.mrb[0].mxu0
        %v3375 = vadd.f32 %v3292, %v3374
        %v3376 = vpop.f32.mrb[0].mxu0
        %3377 = vmatprep.mubr.bf16.mxu0 0
        %3378 = vmatmul.mubr.bf16.gmra.mrb[0].mxu0 %v3312
        %v3379 = vpop.f32.mrb[0].mxu0
        %v3380 = vadd.f32 %v3292, %v3379
        %v3381 = vpop.f32.mrb[0].mxu0
        %v3382 = vpop.f32.mrb[0].mxu0
        %v3383 = vadd.f32 %v3292, %v3382
        %v3384 = vpop.f32.mrb[0].mxu0
        %3385 = vmatprep.mubr.bf16.mxu0 0
        %3386 = vmatmul.mubr.bf16.gmra.mrb[0].mxu0 %v3315
        %v3387 = vpop.f32.mrb[0].mxu0
        %v3388 = vadd.f32 %v3292, %v3387
        %v3389 = vpop.f32.mrb[0].mxu0
        %v3390 = vpop.f32.mrb[0].mxu0
        %v3391 = vadd.f32 %v3292, %v3390
        %v3392 = vpop.f32.mrb[0].mxu0
        %3393 = vmatprep.mubr.bf16.mxu0 0
        %3394 = vmatmul.mubr.bf16.gmra.mrb[0].mxu0 %v3318
        %v3395 = vpop.f32.mrb[0].mxu0
        %v3396 = vadd.f32 %v3292, %v3395
        %v3397 = vpop.f32.mrb[0].mxu0
        %v3398 = vpop.f32.mrb[0].mxu0
        %v3399 = vadd.f32 %v3292, %v3398
        %v3400 = vpop.f32.mrb[0].mxu0
        %3401 = vmatprep.mubr.bf16.mxu0 0
        %3402 = vmatmul.mubr.bf16.gmra.mrb[0].mxu0 %v3321
        %v3403 = vpop.f32.mrb[0].mxu0
        %v3404 = vadd.f32 %v3292, %v3403
        %v3405 = vpop.f32.mrb[0].mxu0
        %v3406 = vpop.f32.mrb[0].mxu0
        %v3407 = vadd.f32 %v3292, %v3406
        %v3408 = vpop.f32.mrb[0].mxu0
        %3409 = vmatprep.mubr.bf16.mxu0 0
        %3410 = vmatmul.mubr.bf16.gmra.mrb[0].mxu0 %v3324
        %v3411 = vpop.f32.mrb[0].mxu0
        %v3412 = vadd.f32 %v3292, %v3411
        %v3413 = vpop.f32.mrb[0].mxu0
        %v3414 = vpop.f32.mrb[0].mxu0
        %v3415 = vadd.f32 %v3292, %v3414
        %v3416 = vpop.f32.mrb[0].mxu0
        %3417 = vmatprep.mubr.bf16.mxu0 0
        %3418 = vmatmul.mubr.bf16.gmra.mrb[0].mxu0 %v3327
        %v3419 = vpop.f32.mrb[0].mxu0
        %v3420 = vadd.f32 %v3292, %v3419
        %v3421 = vpop.f32.mrb[0].mxu0
        %v3422 = vpop.f32.mrb[0].mxu0
        %v3423 = vadd.f32 %v3292, %v3422
        %v3424 = vpop.f32.mrb[0].mxu0
        %3425 = vdwg.mxu0
        %v3426 = vmul.f32 %v3364, 0.5
        %v3427 = vmul.f32 %v3367, 0.5
        %v3428 = vmul.f32 %v3372, 0.5
        %v3429 = vmul.f32 %v3375, 0.5
        %v3430 = vmul.f32 %v3380, 0.5
        %v3431 = vmul.f32 %v3383, 0.5
        %v3432 = vmul.f32 %v3388, 0.5
        %v3433 = vmul.f32 %v3391, 0.5
        %v3434 = vmul.f32 %v3396, 0.5
        %v3435 = vmul.f32 %v3399, 0.5
        %v3436 = vmul.f32 %v3404, 0.5
        %v3437 = vmul.f32 %v3407, 0.5
        %v3438 = vmul.f32 %v3412, 0.5
        %v3439 = vmul.f32 %v3415, 0.5
        %v3440 = vmul.f32 %v3420, 0.5
        %v3441 = vmul.f32 %v3423, 0.5
        %v3442 = vmul.f32 %v3364, 0.70710677
        %v3443 = vmul.f32 %v3367, 0.70710677
        %v3444 = vmul.f32 %v3372, 0.70710677
        %v3445 = vmul.f32 %v3375, 0.70710677
        %v3446 = vmul.f32 %v3380, 0.70710677
        %v3447 = vmul.f32 %v3383, 0.70710677
        %v3448 = vmul.f32 %v3388, 0.70710677
        %v3449 = vmul.f32 %v3391, 0.70710677
        %v3450 = vmul.f32 %v3396, 0.70710677
        %v3451 = vmul.f32 %v3399, 0.70710677
        %v3452 = vmul.f32 %v3404, 0.70710677
        %v3453 = vmul.f32 %v3407, 0.70710677
        %v3454 = vmul.f32 %v3412, 0.70710677
        %v3455 = vmul.f32 %v3415, 0.70710677
        %v3456 = vmul.f32 %v3420, 0.70710677
        %v3457 = vmul.f32 %v3423, 0.70710677
        %v3458 = verf.f32.pop %v3442
        %v3459 = verf.f32.pop %v3443
        %v3460 = verf.f32.pop %v3444
        %v3461 = verf.f32.pop %v3445
        %v3462 = verf.f32.pop %v3446
        %v3463 = verf.f32.pop %v3447
        %v3464 = verf.f32.pop %v3448
        %v3465 = verf.f32.pop %v3449
        %v3466 = verf.f32.pop %v3450
        %v3467 = verf.f32.pop %v3451
        %v3468 = verf.f32.pop %v3452
        %v3469 = verf.f32.pop %v3453
        %v3470 = verf.f32.pop %v3454
        %v3471 = verf.f32.pop %v3455
        %v3472 = verf.f32.pop %v3456
        %v3473 = verf.f32.pop %v3457
        %v3474 = vadd.f32 %v3458, 1.0
        %v3475 = vadd.f32 %v3459, 1.0
        %v3476 = vadd.f32 %v3460, 1.0
        %v3477 = vadd.f32 %v3461, 1.0
        %v3478 = vadd.f32 %v3462, 1.0
        %v3479 = vadd.f32 %v3463, 1.0
        %v3480 = vadd.f32 %v3464, 1.0
        %v3481 = vadd.f32 %v3465, 1.0
        %v3482 = vadd.f32 %v3466, 1.0
        %v3483 = vadd.f32 %v3467, 1.0
        %v3484 = vadd.f32 %v3468, 1.0
        %v3485 = vadd.f32 %v3469, 1.0
        %v3486 = vadd.f32 %v3470, 1.0
        %v3487 = vadd.f32 %v3471, 1.0
        %v3488 = vadd.f32 %v3472, 1.0
        %v3489 = vadd.f32 %v3473, 1.0
        %v3490 = vmul.f32 %v3426, %v3474
        %v3491 = vmul.f32 %v3427, %v3475
        %v3492 = vmul.f32 %v3428, %v3476
        %v3493 = vmul.f32 %v3429, %v3477
        %v3494 = vmul.f32 %v3430, %v3478
        %v3495 = vmul.f32 %v3431, %v3479
        %v3496 = vmul.f32 %v3432, %v3480
        %v3497 = vmul.f32 %v3433, %v3481
        %v3498 = vmul.f32 %v3434, %v3482
        %v3499 = vmul.f32 %v3435, %v3483
        %v3500 = vmul.f32 %v3436, %v3484
        %v3501 = vmul.f32 %v3437, %v3485
        %v3502 = vmul.f32 %v3438, %v3486
        %v3503 = vmul.f32 %v3439, %v3487
        %v3504 = vmul.f32 %v3440, %v3488
        %v3505 = vmul.f32 %v3441, %v3489
        %s3506 = scalar_lea.vmem %s7, 32
        %v3507 = vld [vmem:[%s3506] sm:$0xf]
        %v3508 = vld [vmem:[%s3506 + $0x4] sm:$0xf]
        %v3509 = vld [vmem:[%s3506 + $0x8] sm:$0xf]
        %v3510 = vld [vmem:[%s3506 + $0xc] sm:$0xf]
        %v3511 = vld [vmem:[%s3506 + $0x10] sm:$0xf]
        %v3512 = vld [vmem:[%s3506 + $0x14] sm:$0xf]
        %v3513 = vld [vmem:[%s3506 + $0x18] sm:$0xf]
        %v3514 = vld [vmem:[%s3506 + $0x1c] sm:$0xf]
        %v3515 = vpack.c.bf16 %v3491, %v3490
        %v3516 = vpack.c.bf16 %v3493, %v3492
        %v3517 = vpack.c.bf16 %v3495, %v3494
        %v3518 = vpack.c.bf16 %v3497, %v3496
        %v3519 = vpack.c.bf16 %v3499, %v3498
        %v3520 = vpack.c.bf16 %v3501, %v3500
        %v3521 = vpack.c.bf16 %v3503, %v3502
        %v3522 = vpack.c.bf16 %v3505, %v3504
        %v3531 = vunpack.c.l.b16 %v3507
        %v3532 = vunpack.c.l.b16 %v3508
        %v3533 = vunpack.c.l.b16 %v3509
        %v3534 = vunpack.c.l.b16 %v3510
        %v3535 = vunpack.c.l.b16 %v3511
        %v3536 = vunpack.c.l.b16 %v3512
        %v3537 = vunpack.c.l.b16 %v3513
        %v3538 = vunpack.c.l.b16 %v3514
        %v3539 = vpack.c.b16 %v3532, %v3531
        %v3540 = vpack.c.b16 %v3534, %v3533
        %v3541 = vpack.c.b16 %v3536, %v3535
        %v3542 = vpack.c.b16 %v3538, %v3537
        %v3548 = vsel %vm2012, %v3515, 0
        %v3551 = vsel %vm2012, %v3516, 0
        %v3554 = vsel %vm2012, %v3517, 0
        %v3557 = vsel %vm2012, %v3518, 0
        %v3560 = vsel %vm2012, %v3519, 0
        %v3563 = vsel %vm2012, %v3520, 0
        %v3566 = vsel %vm2012, %v3521, 0
        %v3569 = vsel %vm2012, %v3522, 0
        %3571 = vmatprep.subr.bf16.mxu0 0
        %3572 = vmatpush1.bf16.msra.mxu0 %v3539
        %3573 = vmatprep.subr.bf16.mxu0 0
        %3574 = vmatpush1.bf16.msra.mxu0 %v3540
        %3575 = vmatprep.subr.bf16.mxu0 0
        %3576 = vmatpush1.bf16.msra.mxu0 %v3541
        %3577 = vmatprep.subr.bf16.mxu0 0
        %3578 = vmatpush1.bf16.msra.mxu0 %v3542
        %3579 = vmatprep.subr.bf16.mxu0 0
        %3580 = vmatpush1.bf16.msra.mxu0 0
        %3581 = vmatprep.subr.bf16.mxu0 0
        %3582 = vmatpush1.bf16.msra.mxu0 0
        %3583 = vmatprep.subr.bf16.mxu0 0
        %3584 = vmatpush1.bf16.msra.mxu0 0
        %3585 = vmatprep.subr.bf16.mxu0 0
        %3586 = vmatpush1.bf16.msra.mxu0 0
        %3587 = vmatprep.subr.bf16.mxu0 0
        %3588 = vmatpush1.bf16.msra.mxu0 0
        %3589 = vmatprep.subr.bf16.mxu0 0
        %3590 = vmatpush1.bf16.msra.mxu0 0
        %3591 = vmatprep.subr.bf16.mxu0 0
        %3592 = vmatpush1.bf16.msra.mxu0 0
        %3593 = vmatprep.subr.bf16.mxu0 0
        %3594 = vmatpush1.bf16.msra.mxu0 0
        %3595 = vmatprep.subr.bf16.mxu0 0
        %3596 = vmatpush1.bf16.msra.mxu0 0
        %3597 = vmatprep.subr.bf16.mxu0 0
        %3598 = vmatpush1.bf16.msra.mxu0 0
        %3599 = vmatprep.subr.bf16.mxu0 0
        %3600 = vmatpush1.bf16.msra.mxu0 0
        %3601 = vmatprep.subr.bf16.mxu0 0
        %3602 = vmatpush1.bf16.msra.mxu0 0
        %3603 = vmatprep.mubr.bf16.mxu0 0
        %3604 = vmatmul.mubr.bf16.gmra.mrb[0].mxu0 %v3548
        %v3605 = vpop.f32.mrb[0].mxu0
        %v3606 = vadd.f32 0.0, %v3605
        %v3607 = vpop.f32.mrb[0].mxu0
        %v3608 = vpop.f32.mrb[0].mxu0
        %v3609 = vadd.f32 0.0, %v3608
        %v3610 = vpop.f32.mrb[0].mxu0
        %3611 = vmatprep.mubr.bf16.mxu0 0
        %3612 = vmatmul.mubr.bf16.gmra.mrb[0].mxu0 %v3551
        %v3613 = vpop.f32.mrb[0].mxu0
        %v3614 = vadd.f32 0.0, %v3613
        %v3615 = vpop.f32.mrb[0].mxu0
        %v3616 = vpop.f32.mrb[0].mxu0
        %v3617 = vadd.f32 0.0, %v3616
        %v3618 = vpop.f32.mrb[0].mxu0
        %3619 = vmatprep.mubr.bf16.mxu0 0
        %3620 = vmatmul.mubr.bf16.gmra.mrb[0].mxu0 %v3554
        %v3621 = vpop.f32.mrb[0].mxu0
        %v3622 = vadd.f32 0.0, %v3621
        %v3623 = vpop.f32.mrb[0].mxu0
        %v3624 = vpop.f32.mrb[0].mxu0
        %v3625 = vadd.f32 0.0, %v3624
        %v3626 = vpop.f32.mrb[0].mxu0
        %3627 = vmatprep.mubr.bf16.mxu0 0
        %3628 = vmatmul.mubr.bf16.gmra.mrb[0].mxu0 %v3557
        %v3629 = vpop.f32.mrb[0].mxu0
        %v3630 = vadd.f32 0.0, %v3629
        %v3631 = vpop.f32.mrb[0].mxu0
        %v3632 = vpop.f32.mrb[0].mxu0
        %v3633 = vadd.f32 0.0, %v3632
        %v3634 = vpop.f32.mrb[0].mxu0
        %3635 = vmatprep.mubr.bf16.mxu0 0
        %3636 = vmatmul.mubr.bf16.gmra.mrb[0].mxu0 %v3560
        %v3637 = vpop.f32.mrb[0].mxu0
        %v3638 = vadd.f32 0.0, %v3637
        %v3639 = vpop.f32.mrb[0].mxu0
        %v3640 = vpop.f32.mrb[0].mxu0
        %v3641 = vadd.f32 0.0, %v3640
        %v3642 = vpop.f32.mrb[0].mxu0
        %3643 = vmatprep.mubr.bf16.mxu0 0
        %3644 = vmatmul.mubr.bf16.gmra.mrb[0].mxu0 %v3563
        %v3645 = vpop.f32.mrb[0].mxu0
        %v3646 = vadd.f32 0.0, %v3645
        %v3647 = vpop.f32.mrb[0].mxu0
        %v3648 = vpop.f32.mrb[0].mxu0
        %v3649 = vadd.f32 0.0, %v3648
        %v3650 = vpop.f32.mrb[0].mxu0
        %3651 = vmatprep.mubr.bf16.mxu0 0
        %3652 = vmatmul.mubr.bf16.gmra.mrb[0].mxu0 %v3566
        %v3653 = vpop.f32.mrb[0].mxu0
        %v3654 = vadd.f32 0.0, %v3653
        %v3655 = vpop.f32.mrb[0].mxu0
        %v3656 = vpop.f32.mrb[0].mxu0
        %v3657 = vadd.f32 0.0, %v3656
        %v3658 = vpop.f32.mrb[0].mxu0
        %3659 = vmatprep.mubr.bf16.mxu0 0
        %3660 = vmatmul.mubr.bf16.gmra.mrb[0].mxu0 %v3569
        %v3661 = vpop.f32.mrb[0].mxu0
        %v3662 = vadd.f32 0.0, %v3661
        %v3663 = vpop.f32.mrb[0].mxu0
        %v3664 = vpop.f32.mrb[0].mxu0
        %v3665 = vadd.f32 0.0, %v3664
        %v3666 = vpop.f32.mrb[0].mxu0
        %3667 = vdwg.mxu0
        %v3668 = vadd.f32 %v3051, %v3606
        %v3669 = vadd.f32 %v3052, %v3609
        %v3670 = vadd.f32 %v3053, %v3614
        %v3671 = vadd.f32 %v3054, %v3617
        %v3672 = vadd.f32 %v3055, %v3622
        %v3673 = vadd.f32 %v3056, %v3625
        %v3674 = vadd.f32 %v3057, %v3630
        %v3675 = vadd.f32 %v3058, %v3633
        %v3676 = vadd.f32 %v3059, %v3638
        %v3677 = vadd.f32 %v3060, %v3641
        %v3678 = vadd.f32 %v3061, %v3646
        %v3679 = vadd.f32 %v3062, %v3649
        %v3680 = vadd.f32 %v3063, %v3654
        %v3681 = vadd.f32 %v3064, %v3657
        %v3682 = vadd.f32 %v3065, %v3662
        %v3683 = vadd.f32 %v3066, %v3665
        %v3684 = vld [vmem:[%s8 + $0x6] sm:$0x1]
        %v3685 = vlaneseq
        %v3686 = vshrl.u32 %v3685, 7
        %v3687 = vsub.s32 0, %v3686
        %v3688 = vrot.slane %v3684, %v3687
        %v3689 = vadd.f32 %v3668, %v3688
        %v3690 = vadd.f32 %v3669, %v3688
        %v3691 = vadd.f32 %v3670, %v3688
        %v3692 = vadd.f32 %v3671, %v3688
        %v3693 = vadd.f32 %v3672, %v3688
        %v3694 = vadd.f32 %v3673, %v3688
        %v3695 = vadd.f32 %v3674, %v3688
        %v3696 = vadd.f32 %v3675, %v3688
        %v3697 = vadd.f32 %v3676, %v3688
        %v3698 = vadd.f32 %v3677, %v3688
        %v3699 = vadd.f32 %v3678, %v3688
        %v3700 = vadd.f32 %v3679, %v3688
        %v3701 = vadd.f32 %v3680, %v3688
        %v3702 = vadd.f32 %v3681, %v3688
        %v3703 = vadd.f32 %v3682, %v3688
        %v3704 = vadd.f32 %v3683, %v3688
        %v3705 = vsel %vm519, %v3689, 0.0
        %3706 = vadd.xlane.f32.xlu0 %v3705
        %v3707 = vpop.xlane.xlu0 %3706
        %v3708 = vsel %vm519, %v3690, 0.0
        %3709 = vadd.xlane.f32.xlu0 %v3708
        %v3710 = vpop.xlane.xlu0 %3709
        %v3711 = vsel %vm519, %v3691, 0.0
        %3712 = vadd.xlane.f32.xlu0 %v3711
        %v3713 = vpop.xlane.xlu0 %3712
        %v3714 = vsel %vm519, %v3692, 0.0
        %3715 = vadd.xlane.f32.xlu0 %v3714
        %v3716 = vpop.xlane.xlu0 %3715
        %v3717 = vsel %vm519, %v3693, 0.0
        %3718 = vadd.xlane.f32.xlu0 %v3717
        %v3719 = vpop.xlane.xlu0 %3718
        %v3720 = vsel %vm519, %v3694, 0.0
        %3721 = vadd.xlane.f32.xlu0 %v3720
        %v3722 = vpop.xlane.xlu0 %3721
        %v3723 = vsel %vm519, %v3695, 0.0
        %3724 = vadd.xlane.f32.xlu0 %v3723
        %v3725 = vpop.xlane.xlu0 %3724
        %v3726 = vsel %vm519, %v3696, 0.0
        %3727 = vadd.xlane.f32.xlu0 %v3726
        %v3728 = vpop.xlane.xlu0 %3727
        %v3729 = vsel %vm519, %v3697, 0.0
        %3730 = vadd.xlane.f32.xlu0 %v3729
        %v3731 = vpop.xlane.xlu0 %3730
        %v3732 = vsel %vm519, %v3698, 0.0
        %3733 = vadd.xlane.f32.xlu0 %v3732
        %v3734 = vpop.xlane.xlu0 %3733
        %v3735 = vsel %vm519, %v3699, 0.0
        %3736 = vadd.xlane.f32.xlu0 %v3735
        %v3737 = vpop.xlane.xlu0 %3736
        %v3738 = vsel %vm519, %v3700, 0.0
        %3739 = vadd.xlane.f32.xlu0 %v3738
        %v3740 = vpop.xlane.xlu0 %3739
        %v3741 = vsel %vm519, %v3701, 0.0
        %3742 = vadd.xlane.f32.xlu0 %v3741
        %v3743 = vpop.xlane.xlu0 %3742
        %v3744 = vsel %vm519, %v3702, 0.0
        %3745 = vadd.xlane.f32.xlu0 %v3744
        %v3746 = vpop.xlane.xlu0 %3745
        %v3747 = vsel %vm519, %v3703, 0.0
        %3748 = vadd.xlane.f32.xlu0 %v3747
        %v3749 = vpop.xlane.xlu0 %3748
        %v3750 = vsel %vm519, %v3704, 0.0
        %3751 = vadd.xlane.f32.xlu0 %v3750
        %v3752 = vpop.xlane.xlu0 %3751
        %v3753 = vmul.f32 %v3707, %v691
        %v3754 = vmul.f32 %v3710, %v691
        %v3755 = vmul.f32 %v3713, %v691
        %v3756 = vmul.f32 %v3716, %v691
        %v3757 = vmul.f32 %v3719, %v691
        %v3758 = vmul.f32 %v3722, %v691
        %v3759 = vmul.f32 %v3725, %v691
        %v3760 = vmul.f32 %v3728, %v691
        %v3761 = vmul.f32 %v3731, %v691
        %v3762 = vmul.f32 %v3734, %v691
        %v3763 = vmul.f32 %v3737, %v691
        %v3764 = vmul.f32 %v3740, %v691
        %v3765 = vmul.f32 %v3743, %v691
        %v3766 = vmul.f32 %v3746, %v691
        %v3767 = vmul.f32 %v3749, %v691
        %v3768 = vmul.f32 %v3752, %v691
        %v3769 = vsub.f32 %v3689, %v3753
        %v3770 = vsub.f32 %v3690, %v3754
        %v3771 = vsub.f32 %v3691, %v3755
        %v3772 = vsub.f32 %v3692, %v3756
        %v3773 = vsub.f32 %v3693, %v3757
        %v3774 = vsub.f32 %v3694, %v3758
        %v3775 = vsub.f32 %v3695, %v3759
        %v3776 = vsub.f32 %v3696, %v3760
        %v3777 = vsub.f32 %v3697, %v3761
        %v3778 = vsub.f32 %v3698, %v3762
        %v3779 = vsub.f32 %v3699, %v3763
        %v3780 = vsub.f32 %v3700, %v3764
        %v3781 = vsub.f32 %v3701, %v3765
        %v3782 = vsub.f32 %v3702, %v3766
        %v3783 = vsub.f32 %v3703, %v3767
        %v3784 = vsub.f32 %v3704, %v3768
        %v3785 = vmul.f32 %v3769, %v3769
        %v3786 = vmul.f32 %v3770, %v3770
        %v3787 = vmul.f32 %v3771, %v3771
        %v3788 = vmul.f32 %v3772, %v3772
        %v3789 = vmul.f32 %v3773, %v3773
        %v3790 = vmul.f32 %v3774, %v3774
        %v3791 = vmul.f32 %v3775, %v3775
        %v3792 = vmul.f32 %v3776, %v3776
        %v3793 = vmul.f32 %v3777, %v3777
        %v3794 = vmul.f32 %v3778, %v3778
        %v3795 = vmul.f32 %v3779, %v3779
        %v3796 = vmul.f32 %v3780, %v3780
        %v3797 = vmul.f32 %v3781, %v3781
        %v3798 = vmul.f32 %v3782, %v3782
        %v3799 = vmul.f32 %v3783, %v3783
        %v3800 = vmul.f32 %v3784, %v3784
        %v3801 = vsel %vm519, %v3785, 0.0
        %3802 = vadd.xlane.f32.xlu0 %v3801
        %v3803 = vpop.xlane.xlu0 %3802
        %v3804 = vsel %vm519, %v3786, 0.0
        %3805 = vadd.xlane.f32.xlu0 %v3804
        %v3806 = vpop.xlane.xlu0 %3805
        %v3807 = vsel %vm519, %v3787, 0.0
        %3808 = vadd.xlane.f32.xlu0 %v3807
        %v3809 = vpop.xlane.xlu0 %3808
        %v3810 = vsel %vm519, %v3788, 0.0
        %3811 = vadd.xlane.f32.xlu0 %v3810
        %v3812 = vpop.xlane.xlu0 %3811
        %v3813 = vsel %vm519, %v3789, 0.0
        %3814 = vadd.xlane.f32.xlu0 %v3813
        %v3815 = vpop.xlane.xlu0 %3814
        %v3816 = vsel %vm519, %v3790, 0.0
        %3817 = vadd.xlane.f32.xlu0 %v3816
        %v3818 = vpop.xlane.xlu0 %3817
        %v3819 = vsel %vm519, %v3791, 0.0
        %3820 = vadd.xlane.f32.xlu0 %v3819
        %v3821 = vpop.xlane.xlu0 %3820
        %v3822 = vsel %vm519, %v3792, 0.0
        %3823 = vadd.xlane.f32.xlu0 %v3822
        %v3824 = vpop.xlane.xlu0 %3823
        %v3825 = vsel %vm519, %v3793, 0.0
        %3826 = vadd.xlane.f32.xlu0 %v3825
        %v3827 = vpop.xlane.xlu0 %3826
        %v3828 = vsel %vm519, %v3794, 0.0
        %3829 = vadd.xlane.f32.xlu0 %v3828
        %v3830 = vpop.xlane.xlu0 %3829
        %v3831 = vsel %vm519, %v3795, 0.0
        %3832 = vadd.xlane.f32.xlu0 %v3831
        %v3833 = vpop.xlane.xlu0 %3832
        %v3834 = vsel %vm519, %v3796, 0.0
        %3835 = vadd.xlane.f32.xlu0 %v3834
        %v3836 = vpop.xlane.xlu0 %3835
        %v3837 = vsel %vm519, %v3797, 0.0
        %3838 = vadd.xlane.f32.xlu0 %v3837
        %v3839 = vpop.xlane.xlu0 %3838
        %v3840 = vsel %vm519, %v3798, 0.0
        %3841 = vadd.xlane.f32.xlu0 %v3840
        %v3842 = vpop.xlane.xlu0 %3841
        %v3843 = vsel %vm519, %v3799, 0.0
        %3844 = vadd.xlane.f32.xlu0 %v3843
        %v3845 = vpop.xlane.xlu0 %3844
        %v3846 = vsel %vm519, %v3800, 0.0
        %3847 = vadd.xlane.f32.xlu0 %v3846
        %v3848 = vpop.xlane.xlu0 %3847
        %v3849 = vmul.f32 %v3803, %v691
        %v3850 = vmul.f32 %v3806, %v691
        %v3851 = vmul.f32 %v3809, %v691
        %v3852 = vmul.f32 %v3812, %v691
        %v3853 = vmul.f32 %v3815, %v691
        %v3854 = vmul.f32 %v3818, %v691
        %v3855 = vmul.f32 %v3821, %v691
        %v3856 = vmul.f32 %v3824, %v691
        %v3857 = vmul.f32 %v3827, %v691
        %v3858 = vmul.f32 %v3830, %v691
        %v3859 = vmul.f32 %v3833, %v691
        %v3860 = vmul.f32 %v3836, %v691
        %v3861 = vmul.f32 %v3839, %v691
        %v3862 = vmul.f32 %v3842, %v691
        %v3863 = vmul.f32 %v3845, %v691
        %v3864 = vmul.f32 %v3848, %v691
        %v3865 = vadd.f32 %v3849, 1e-05
        %v3866 = vadd.f32 %v3850, 1e-05
        %v3867 = vadd.f32 %v3851, 1e-05
        %v3868 = vadd.f32 %v3852, 1e-05
        %v3869 = vadd.f32 %v3853, 1e-05
        %v3870 = vadd.f32 %v3854, 1e-05
        %v3871 = vadd.f32 %v3855, 1e-05
        %v3872 = vadd.f32 %v3856, 1e-05
        %v3873 = vadd.f32 %v3857, 1e-05
        %v3874 = vadd.f32 %v3858, 1e-05
        %v3875 = vadd.f32 %v3859, 1e-05
        %v3876 = vadd.f32 %v3860, 1e-05
        %v3877 = vadd.f32 %v3861, 1e-05
        %v3878 = vadd.f32 %v3862, 1e-05
        %v3879 = vadd.f32 %v3863, 1e-05
        %v3880 = vadd.f32 %v3864, 1e-05
        %v3881 = vrsqrt.pop %v3865
        %v3882 = vrsqrt.pop %v3866
        %v3883 = vrsqrt.pop %v3867
        %v3884 = vrsqrt.pop %v3868
        %v3885 = vrsqrt.pop %v3869
        %v3886 = vrsqrt.pop %v3870
        %v3887 = vrsqrt.pop %v3871
        %v3888 = vrsqrt.pop %v3872
        %v3889 = vrsqrt.pop %v3873
        %v3890 = vrsqrt.pop %v3874
        %v3891 = vrsqrt.pop %v3875
        %v3892 = vrsqrt.pop %v3876
        %v3893 = vrsqrt.pop %v3877
        %v3894 = vrsqrt.pop %v3878
        %v3895 = vrsqrt.pop %v3879
        %v3896 = vrsqrt.pop %v3880
        %v3897 = vmul.f32 %v3769, %v3881
        %v3898 = vmul.f32 %v3770, %v3882
        %v3899 = vmul.f32 %v3771, %v3883
        %v3900 = vmul.f32 %v3772, %v3884
        %v3901 = vmul.f32 %v3773, %v3885
        %v3902 = vmul.f32 %v3774, %v3886
        %v3903 = vmul.f32 %v3775, %v3887
        %v3904 = vmul.f32 %v3776, %v3888
        %v3905 = vmul.f32 %v3777, %v3889
        %v3906 = vmul.f32 %v3778, %v3890
        %v3907 = vmul.f32 %v3779, %v3891
        %v3908 = vmul.f32 %v3780, %v3892
        %v3909 = vmul.f32 %v3781, %v3893
        %v3910 = vmul.f32 %v3782, %v3894
        %v3911 = vmul.f32 %v3783, %v3895
        %v3912 = vmul.f32 %v3784, %v3896
        %v3913 = vld [vmem:[%s10] sm:$0xf]
        %v3914 = vpack.c.bf16 %v3898, %v3897
        %v3915 = vpack.c.bf16 %v3900, %v3899
        %v3916 = vpack.c.bf16 %v3902, %v3901
        %v3917 = vpack.c.bf16 %v3904, %v3903
        %v3918 = vpack.c.bf16 %v3906, %v3905
        %v3919 = vpack.c.bf16 %v3908, %v3907
        %v3920 = vpack.c.bf16 %v3910, %v3909
        %v3921 = vpack.c.bf16 %v3912, %v3911
        %3922 = vmatprep.subr.bf16.mxu0 0
        %3923 = vmatpush1.bf16.msra.mxu0 %v3914
        %3924 = vmatprep.subr.bf16.mxu0 0
        %3925 = vmatpush1.bf16.msra.mxu0 %v3915
        %3926 = vmatprep.subr.bf16.mxu0 0
        %3927 = vmatpush1.bf16.msra.mxu0 %v3916
        %3928 = vmatprep.subr.bf16.mxu0 0
        %3929 = vmatpush1.bf16.msra.mxu0 %v3917
        %3930 = vmatprep.subr.bf16.mxu0 0
        %3931 = vmatpush1.bf16.msra.mxu0 %v3918
        %3932 = vmatprep.subr.bf16.mxu0 0
        %3933 = vmatpush1.bf16.msra.mxu0 %v3919
        %3934 = vmatprep.subr.bf16.mxu0 0
        %3935 = vmatpush1.bf16.msra.mxu0 %v3920
        %3936 = vmatprep.subr.bf16.mxu0 0
        %3937 = vmatpush1.bf16.msra.mxu0 %v3921
        %3938 = vmatprep.subr.bf16.mxu0 0
        %3939 = vmatpush1.bf16.msra.mxu0 0
        %3940 = vmatprep.subr.bf16.mxu0 0
        %3941 = vmatpush1.bf16.msra.mxu0 0
        %3942 = vmatprep.subr.bf16.mxu0 0
        %3943 = vmatpush1.bf16.msra.mxu0 0
        %3944 = vmatprep.subr.bf16.mxu0 0
        %3945 = vmatpush1.bf16.msra.mxu0 0
        %3946 = vmatprep.subr.bf16.mxu0 0
        %3947 = vmatpush1.bf16.msra.mxu0 0
        %3948 = vmatprep.subr.bf16.mxu0 0
        %3949 = vmatpush1.bf16.msra.mxu0 0
        %3950 = vmatprep.subr.bf16.mxu0 0
        %3951 = vmatpush1.bf16.msra.mxu0 0
        %3952 = vmatprep.subr.bf16.mxu0 0
        %3953 = vmatpush1.bf16.msra.mxu0 0
        %3954 = vmatprep.mubr.bf16.mxu0 0
        %3955 = vmatmul.mubr.bf16.gmra.mrb[0].mxu0 %v3913
        %v3956 = vpop.f32.mrb[0].mxu0
        %v3957 = vadd.f32 0.0, %v3956
        %v3958 = vpop.f32.mrb[0].mxu0
        %v3959 = vpop.f32.mrb[0].mxu0
        %v3960 = vpop.f32.mrb[0].mxu0
        %3961 = vdwg.mxu0
        %v3962 = vld [vmem:[%s11] sm:$0xf]
        %v3963 = vld [vmem:[%s11 + $0x4] sm:$0xf]
        %v3964 = vld [vmem:[%s11 + $0x8] sm:$0xf]
        %v3965 = vld [vmem:[%s11 + $0xc] sm:$0xf]
        %v3966 = vpack.c.bf16 %v3957, %v3957
        %v3967 = vld [vmem:[%s12] sm:$0x1]
        %v3969 = vlaneseq
        %v3970 = vshrl.u32 %v3969, 7
        %v3971 = vsub.s32 0, %v3970
        %v3972 = vrot.slane %v3967, %v3971
        %v3978 = vunpack.c.l.b16 %v3962
        %v3979 = vunpack.c.l.b16 %v3963
        %v3980 = vunpack.c.l.b16 %v3964
        %v3981 = vunpack.c.l.b16 %v3965
        %v3982 = vpack.c.b16 %v3979, %v3978
        %v3983 = vpack.c.b16 %v3981, %v3980
        %v3987 = vsel %vm519, %v3966, 0
        %3989 = vmatprep.subr.bf16.mxu0 0
        %3990 = vmatpush1.bf16.msra.mxu0 %v3982
        %3991 = vmatprep.subr.bf16.mxu0 0
        %3992 = vmatpush1.bf16.msra.mxu0 %v3983
        %3993 = vmatprep.subr.bf16.mxu0 0
        %3994 = vmatpush1.bf16.msra.mxu0 0
        %3995 = vmatprep.subr.bf16.mxu0 0
        %3996 = vmatpush1.bf16.msra.mxu0 0
        %3997 = vmatprep.subr.bf16.mxu0 0
        %3998 = vmatpush1.bf16.msra.mxu0 0
        %3999 = vmatprep.subr.bf16.mxu0 0
        %4000 = vmatpush1.bf16.msra.mxu0 0
        %4001 = vmatprep.subr.bf16.mxu0 0
        %4002 = vmatpush1.bf16.msra.mxu0 0
        %4003 = vmatprep.subr.bf16.mxu0 0
        %4004 = vmatpush1.bf16.msra.mxu0 0
        %4005 = vmatprep.subr.bf16.mxu0 0
        %4006 = vmatpush1.bf16.msra.mxu0 0
        %4007 = vmatprep.subr.bf16.mxu0 0
        %4008 = vmatpush1.bf16.msra.mxu0 0
        %4009 = vmatprep.subr.bf16.mxu0 0
        %4010 = vmatpush1.bf16.msra.mxu0 0
        %4011 = vmatprep.subr.bf16.mxu0 0
        %4012 = vmatpush1.bf16.msra.mxu0 0
        %4013 = vmatprep.subr.bf16.mxu0 0
        %4014 = vmatpush1.bf16.msra.mxu0 0
        %4015 = vmatprep.subr.bf16.mxu0 0
        %4016 = vmatpush1.bf16.msra.mxu0 0
        %4017 = vmatprep.subr.bf16.mxu0 0
        %4018 = vmatpush1.bf16.msra.mxu0 0
        %4019 = vmatprep.subr.bf16.mxu0 0
        %4020 = vmatpush1.bf16.msra.mxu0 0
        %4021 = vmatprep.mubr.bf16.mxu0 0
        %4022 = vmatmul.mubr.bf16.gmra.mrb[0].mxu0 %v3987
        %v4023 = vpop.f32.mrb[0].mxu0
        %v4024 = vadd.f32 %v3972, %v4023
        %v4025 = vpop.f32.mrb[0].mxu0
        %v4026 = vpop.f32.mrb[0].mxu0
        %v4027 = vpop.f32.mrb[0].mxu0
        %4028 = vdwg.mxu0
        %4029 = vst [vmem:[%s434] sm:$0xff] %v4024
        %s4030 = sand.u32 %s313, 1
        %s4031 = scalar_lea.sflag [#allocation3], %s4030
        %s4032 = sand.u32 %s313, 1
        %s4033 = smul.addr %s4032, 8
        %s4034 = scalar_lea.vmem [#allocation2], %s4033
        // Predicated region
        $region73: #{tpu_custom_call.1} parent=71 // pred_check
          %p4035 = pneg %p323
        $region74: #{tpu_custom_call.1} parent=71 // pred_check_branch
          %4037 = sbr.rel (%p4035) target = $region76
        $region75: #{tpu_custom_call.1} parent=71 // pred_region
          %s4039 = ssub.s32 128, 128
          %4040 = vsyncadd %s4031, %s4039
          %s4041 = smul.addr %s27, 128
          %s4042 = scalar_lea.hbm %s13, %s4041
          %s4044 = sshll.u32 %s4034, 4
          %s4045 = int_to_ptr.vmem [resolvable:$true] %s4044
          %4047 = dma.vmem_to_hbm [thread:$0]  %s4045, 128, %s4042, %s4031
        $region76: #{tpu_custom_call.1} parent=71 // pred_fallthru
          _
      $region72: #{tpu_custom_call.1} parent=5 // pred_fallthru
        _
      %p4048 = scmp.le.s32.totalorder 2, %s22
      // Predicated region
      $region77: #{tpu_custom_call.1} parent=5 // pred_check
        %p4049 = pneg %p4048
      $region78: #{tpu_custom_call.1} parent=5 // pred_check_branch
        %4051 = sbr.rel (%p4049) target = $region80
      $region79: #{tpu_custom_call.1} parent=5 // pred_region
        %s4052 = ssub.s32 %s22, 2
        // Predicated region
        $region81: #{tpu_custom_call.1} parent=79 // pred_check
          %p4053 = pneg %p329
        $region82: #{tpu_custom_call.1} parent=79 // pred_check_branch
          %4055 = sbr.rel (%p4053) target = $region84
        $region83: #{tpu_custom_call.1} parent=79 // pred_region
          %s4056 = sand.u32 %s314, 1
          %s4057 = scalar_lea.sflag [#allocation3], %s4056
          %s4058 = sand.u32 %s314, 1
          %s4059 = smul.addr %s4058, 8
          %s4060 = scalar_lea.vmem [#allocation2], %s4059
          %4061 = dma.done %s4057, 128
        $region84: #{tpu_custom_call.1} parent=79 // pred_fallthru
          _
      $region80: #{tpu_custom_call.1} parent=5 // pred_fallthru
        _
    $region6: #{tpu_custom_call.1} parent=1 // loop_footer
      %s26 = sadd.s32 1, %s22
    $region7: #{tpu_custom_call.1} parent=1 // loop_footer_branch
      %21 = sbr.rel target = $region3
    $region8: #{tpu_custom_call.1} parent=1 // loop_exit
      _
    %4062 = vsyncpa [#allocation3], 1
    %s4063 = scalar_lea.sflag [#allocation3], 1
    %4064 = vsyncpa %s4063, 1

// kernel: tpu_custom_call.1
$region0: #{tpu_custom_call.1}
  #allocation0 [shape = 'u32[]', space=smem, size = 0x4, offset = 0x4, fixed_abs, tag = 'smem constant byte address 0x4 - core index']
  #allocation1 [shape = 'u32[144,128]{1,0:T(1,128)}', space=vmem, size = 0x12000, scoped, tag = 'internal scratch']
  %s0 = inlined_call_operand.vmem [shape: bf16[256,32], index: 0, kind: input, shape index: {}]
  %s1 = inlined_call_operand.vmem [shape: bf16[32,32], index: 1, kind: input, shape index: {}]
  %s2 = inlined_call_operand.vmem [shape: bf16[2,128,128], index: 2, kind: input, shape index: {}]
  %s3 = inlined_call_operand.vmem [shape: f32[2,128,1], index: 3, kind: input, shape index: {}]
  %s4 = inlined_call_operand.vmem [shape: bf16[2,128,128], index: 4, kind: input, shape index: {}]
  %s5 = inlined_call_operand.vmem [shape: f32[2,128,1], index: 5, kind: input, shape index: {}]
  %s6 = inlined_call_operand.vmem [shape: bf16[2,32,64], index: 6, kind: input, shape index: {}]
  %s7 = inlined_call_operand.vmem [shape: bf16[2,64,32], index: 7, kind: input, shape index: {}]
  %s8 = inlined_call_operand.vmem [shape: f32[7,32], index: 8, kind: input, shape index: {}]
  %s9 = inlined_call_operand.vmem [shape: f32[2,64], index: 9, kind: input, shape index: {}]
  %s10 = inlined_call_operand.vmem [shape: bf16[8,128], index: 10, kind: input, shape index: {}]
  %s11 = inlined_call_operand.vmem [shape: bf16[32,128], index: 11, kind: input, shape index: {}]
  %s12 = inlined_call_operand.vmem [shape: f32[1,128], index: 12, kind: input, shape index: {}]
  %s13 = inlined_call_operand.hbm [shape: f32[16,128], index: 13, kind: output, shape index: {}]
  %s14 = sld [smem:[#allocation0]]
  $region85: #{tpu_custom_call.1} parent=0
    _
  %s16 = ssub.s32 1, %s14
  %s17 = scalar_select 0, %s16, %s14
  $region1: #{tpu_custom_call.1} parent=0
    #allocation2 [shape = 'u8[8192]{0}', space=vmem, size = 0x2000, scoped, tag = 'output window, operand 0']
    #allocation3 [shape = 's32[2]{0}', space=sflag, size = 0x8, scoped, tag = 'scoped memory for tpu_custom_call.1']
    %18 = vsyncpa [#allocation3], 0
    %s19 = scalar_lea.sflag [#allocation3], 1
    %20 = vsyncpa %s19, 0
    loop: start=0, step=1, limit=4
    $region2: #{tpu_custom_call.1} parent=1 // loop_pre_header
      _
    $region3: #{tpu_custom_call.1} parent=1 // loop_header
      %s22 = sphi 0, %s26
      %p23 = scmp.ge.s32.totalorder %s22, 4
      %s32 = sphi 0, %s34
      %s35 = sphi 0, %s32
      %s36 = sphi 0, %s35
      %s52 = sphi 0, %s36
      %s56 = sphi 0, %s56
      %s58 = sphi 0, %s56
      %s59 = sphi 0, %s58
      %s73 = sphi 0, %s59
      %s77 = sphi 0, %s77
      %s79 = sphi 0, %s77
      %s80 = sphi 0, %s79
      %s94 = sphi 0, %s80
      %s98 = sphi 0, %s98
      %s100 = sphi 0, %s98
      %s101 = sphi 0, %s100
      %s115 = sphi 0, %s101
      %s119 = sphi 0, %s119
      %s121 = sphi 0, %s119
      %s122 = sphi 0, %s121
      %s136 = sphi 0, %s122
      %s140 = sphi 0, %s140
      %s142 = sphi 0, %s140
      %s143 = sphi 0, %s142
      %s157 = sphi 0, %s143
      %s161 = sphi 0, %s161
      %s163 = sphi 0, %s161
      %s164 = sphi 0, %s163
      %s178 = sphi 0, %s164
      %s182 = sphi 0, %s182
      %s184 = sphi 0, %s182
      %s185 = sphi 0, %s184
      %s199 = sphi 0, %s185
      %s203 = sphi 0, %s203
      %s205 = sphi 0, %s203
      %s206 = sphi 0, %s205
      %s220 = sphi 0, %s206
      %s224 = sphi 0, %s224
      %s226 = sphi 0, %s224
      %s227 = sphi 0, %s226
      %s241 = sphi 0, %s227
      %s245 = sphi 0, %s245
      %s247 = sphi 0, %s245
      %s248 = sphi 0, %s247
      %s262 = sphi 0, %s248
      %s266 = sphi 0, %s266
      %s268 = sphi 0, %s266
      %s269 = sphi 0, %s268
      %s283 = sphi 0, %s269
      %s287 = sphi 0, %s287
      %s289 = sphi 0, %s287
      %s290 = sphi 0, %s289
      %s304 = sphi 0, %s290
      %s310 = sphi 0, %s312
      %s313 = sphi 0, %s310
      %s314 = sphi 0, %s313
      %s330 = sphi 0, %s314
    $region4: #{tpu_custom_call.1} parent=1 // loop_header_branch
      %25 = sbr.rel (%p23) target = $region8
    $region5: #{tpu_custom_call.1} parent=1 // loop_body
      %s27 = ssub.s32 %s22, 1
      %s28 = ssub.s32 %s22, 2
      %s29 = sadd.s32 %s22, 1
      %s30 = ssub.s32 %s22, %s29
      %p31 = scmp.eq.s32.totalorder %s30, 0
      %s33 = sadd.s32 %s32, 1
      %s34 = scalar_select %p31, %s32, %s33
      %p37 = pneg %p31
      %p38 = scmp.eq.s32.totalorder %s22, 1
      %p39 = por %p37, %p38
      %p40 = scmp.ne.s32.totalorder %s32, %s35
      %p41 = scmp.eq.s32.totalorder %s22, 0
      %p42 = por %p40, %p41
      %p43 = scmp.ne.s32.totalorder %s32, %s35
      %p44 = scmp.eq.s32.totalorder %s27, 1
      %p45 = por %p43, %p44
      %p46 = scmp.ne.s32.totalorder %s35, %s36
      %p47 = scmp.eq.s32.totalorder %s27, 0
      %p48 = por %p46, %p47
      %p49 = scmp.ne.s32.totalorder %s35, %s36
      %p50 = scmp.eq.s32.totalorder %s28, 1
      %p51 = por %p49, %p50
      %p53 = scmp.ne.s32.totalorder %s36, %s52
      %p54 = scmp.eq.s32.totalorder %s28, 0
      %p55 = por %p53, %p54
      %s57 = sadd.s32 %s56, 1
      %p60 = scmp.eq.s32.totalorder %s22, 1
      %p61 = scmp.ne.s32.totalorder %s56, %s58
      %p62 = scmp.eq.s32.totalorder %s22, 0
      %p63 = por %p61, %p62
      %p64 = scmp.ne.s32.totalorder %s56, %s58
      %p65 = scmp.eq.s32.totalorder %s27, 1
      %p66 = por %p64, %p65
      %p67 = scmp.ne.s32.totalorder %s58, %s59
      %p68 = scmp.eq.s32.totalorder %s27, 0
      %p69 = por %p67, %p68
      %p70 = scmp.ne.s32.totalorder %s58, %s59
      %p71 = scmp.eq.s32.totalorder %s28, 1
      %p72 = por %p70, %p71
      %p74 = scmp.ne.s32.totalorder %s59, %s73
      %p75 = scmp.eq.s32.totalorder %s28, 0
      %p76 = por %p74, %p75
      %s78 = sadd.s32 %s77, 1
      %p81 = scmp.eq.s32.totalorder %s22, 1
      %p82 = scmp.ne.s32.totalorder %s77, %s79
      %p83 = scmp.eq.s32.totalorder %s22, 0
      %p84 = por %p82, %p83
      %p85 = scmp.ne.s32.totalorder %s77, %s79
      %p86 = scmp.eq.s32.totalorder %s27, 1
      %p87 = por %p85, %p86
      %p88 = scmp.ne.s32.totalorder %s79, %s80
      %p89 = scmp.eq.s32.totalorder %s27, 0
      %p90 = por %p88, %p89
      %p91 = scmp.ne.s32.totalorder %s79, %s80
      %p92 = scmp.eq.s32.totalorder %s28, 1
      %p93 = por %p91, %p92
      %p95 = scmp.ne.s32.totalorder %s80, %s94
      %p96 = scmp.eq.s32.totalorder %s28, 0
      %p97 = por %p95, %p96
      %s99 = sadd.s32 %s98, 1
      %p102 = scmp.eq.s32.totalorder %s22, 1
      %p103 = scmp.ne.s32.totalorder %s98, %s100
      %p104 = scmp.eq.s32.totalorder %s22, 0
      %p105 = por %p103, %p104
      %p106 = scmp.ne.s32.totalorder %s98, %s100
      %p107 = scmp.eq.s32.totalorder %s27, 1
      %p108 = por %p106, %p107
      %p109 = scmp.ne.s32.totalorder %s100, %s101
      %p110 = scmp.eq.s32.totalorder %s27, 0
      %p111 = por %p109, %p110
      %p112 = scmp.ne.s32.totalorder %s100, %s101
      %p113 = scmp.eq.s32.totalorder %s28, 1
      %p114 = por %p112, %p113
      %p116 = scmp.ne.s32.totalorder %s101, %s115
      %p117 = scmp.eq.s32.totalorder %s28, 0
      %p118 = por %p116, %p117
      %s120 = sadd.s32 %s119, 1
      %p123 = scmp.eq.s32.totalorder %s22, 1
      %p124 = scmp.ne.s32.totalorder %s119, %s121
      %p125 = scmp.eq.s32.totalorder %s22, 0
      %p126 = por %p124, %p125
      %p127 = scmp.ne.s32.totalorder %s119, %s121
      %p128 = scmp.eq.s32.totalorder %s27, 1
      %p129 = por %p127, %p128
      %p130 = scmp.ne.s32.totalorder %s121, %s122
      %p131 = scmp.eq.s32.totalorder %s27, 0
      %p132 = por %p130, %p131
      %p133 = scmp.ne.s32.totalorder %s121, %s122
      %p134 = scmp.eq.s32.totalorder %s28, 1
      %p135 = por %p133, %p134
      %p137 = scmp.ne.s32.totalorder %s122, %s136
      %p138 = scmp.eq.s32.totalorder %s28, 0
      %p139 = por %p137, %p138
      %s141 = sadd.s32 %s140, 1
      %p144 = scmp.eq.s32.totalorder %s22, 1
      %p145 = scmp.ne.s32.totalorder %s140, %s142
      %p146 = scmp.eq.s32.totalorder %s22, 0
      %p147 = por %p145, %p146
      %p148 = scmp.ne.s32.totalorder %s140, %s142
      %p149 = scmp.eq.s32.totalorder %s27, 1
      %p150 = por %p148, %p149
      %p151 = scmp.ne.s32.totalorder %s142, %s143
      %p152 = scmp.eq.s32.totalorder %s27, 0
      %p153 = por %p151, %p152
      %p154 = scmp.ne.s32.totalorder %s142, %s143
      %p155 = scmp.eq.s32.totalorder %s28, 1
      %p156 = por %p154, %p155
      %p158 = scmp.ne.s32.totalorder %s143, %s157
      %p159 = scmp.eq.s32.totalorder %s28, 0
      %p160 = por %p158, %p159
      %s162 = sadd.s32 %s161, 1
      %p165 = scmp.eq.s32.totalorder %s22, 1
      %p166 = scmp.ne.s32.totalorder %s161, %s163
      %p167 = scmp.eq.s32.totalorder %s22, 0
      %p168 = por %p166, %p167
      %p169 = scmp.ne.s32.totalorder %s161, %s163
      %p170 = scmp.eq.s32.totalorder %s27, 1
      %p171 = por %p169, %p170
      %p172 = scmp.ne.s32.totalorder %s163, %s164
      %p173 = scmp.eq.s32.totalorder %s27, 0
      %p174 = por %p172, %p173
      %p175 = scmp.ne.s32.totalorder %s163, %s164
      %p176 = scmp.eq.s32.totalorder %s28, 1
      %p177 = por %p175, %p176
      %p179 = scmp.ne.s32.totalorder %s164, %s178
      %p180 = scmp.eq.s32.totalorder %s28, 0
      %p181 = por %p179, %p180
      %s183 = sadd.s32 %s182, 1
      %p186 = scmp.eq.s32.totalorder %s22, 1
      %p187 = scmp.ne.s32.totalorder %s182, %s184
      %p188 = scmp.eq.s32.totalorder %s22, 0
      %p189 = por %p187, %p188
      %p190 = scmp.ne.s32.totalorder %s182, %s184
      %p191 = scmp.eq.s32.totalorder %s27, 1
      %p192 = por %p190, %p191
      %p193 = scmp.ne.s32.totalorder %s184, %s185
      %p194 = scmp.eq.s32.totalorder %s27, 0
      %p195 = por %p193, %p194
      %p196 = scmp.ne.s32.totalorder %s184, %s185
      %p197 = scmp.eq.s32.totalorder %s28, 1
      %p198 = por %p196, %p197
      %p200 = scmp.ne.s32.totalorder %s185, %s199
      %p201 = scmp.eq.s32.totalorder %s28, 0
      %p202 = por %p200, %p201
      %s204 = sadd.s32 %s203, 1
      %p207 = scmp.eq.s32.totalorder %s22, 1
      %p208 = scmp.ne.s32.totalorder %s203, %s205
      %p209 = scmp.eq.s32.totalorder %s22, 0
      %p210 = por %p208, %p209
      %p211 = scmp.ne.s32.totalorder %s203, %s205
      %p212 = scmp.eq.s32.totalorder %s27, 1
      %p213 = por %p211, %p212
      %p214 = scmp.ne.s32.totalorder %s205, %s206
      %p215 = scmp.eq.s32.totalorder %s27, 0
      %p216 = por %p214, %p215
      %p217 = scmp.ne.s32.totalorder %s205, %s206
      %p218 = scmp.eq.s32.totalorder %s28, 1
      %p219 = por %p217, %p218
      %p221 = scmp.ne.s32.totalorder %s206, %s220
      %p222 = scmp.eq.s32.totalorder %s28, 0
      %p223 = por %p221, %p222
      %s225 = sadd.s32 %s224, 1
      %p228 = scmp.eq.s32.totalorder %s22, 1
      %p229 = scmp.ne.s32.totalorder %s224, %s226
      %p230 = scmp.eq.s32.totalorder %s22, 0
      %p231 = por %p229, %p230
      %p232 = scmp.ne.s32.totalorder %s224, %s226
      %p233 = scmp.eq.s32.totalorder %s27, 1
      %p234 = por %p232, %p233
      %p235 = scmp.ne.s32.totalorder %s226, %s227
      %p236 = scmp.eq.s32.totalorder %s27, 0
      %p237 = por %p235, %p236
      %p238 = scmp.ne.s32.totalorder %s226, %s227
      %p239 = scmp.eq.s32.totalorder %s28, 1
      %p240 = por %p238, %p239
      %p242 = scmp.ne.s32.totalorder %s227, %s241
      %p243 = scmp.eq.s32.totalorder %s28, 0
      %p244 = por %p242, %p243
      %s246 = sadd.s32 %s245, 1
      %p249 = scmp.eq.s32.totalorder %s22, 1
      %p250 = scmp.ne.s32.totalorder %s245, %s247
      %p251 = scmp.eq.s32.totalorder %s22, 0
      %p252 = por %p250, %p251
      %p253 = scmp.ne.s32.totalorder %s245, %s247
      %p254 = scmp.eq.s32.totalorder %s27, 1
      %p255 = por %p253, %p254
      %p256 = scmp.ne.s32.totalorder %s247, %s248
      %p257 = scmp.eq.s32.totalorder %s27, 0
      %p258 = por %p256, %p257
      %p259 = scmp.ne.s32.totalorder %s247, %s248
      %p260 = scmp.eq.s32.totalorder %s28, 1
      %p261 = por %p259, %p260
      %p263 = scmp.ne.s32.totalorder %s248, %s262
      %p264 = scmp.eq.s32.totalorder %s28, 0
      %p265 = por %p263, %p264
      %s267 = sadd.s32 %s266, 1
      %p270 = scmp.eq.s32.totalorder %s22, 1
      %p271 = scmp.ne.s32.totalorder %s266, %s268
      %p272 = scmp.eq.s32.totalorder %s22, 0
      %p273 = por %p271, %p272
      %p274 = scmp.ne.s32.totalorder %s266, %s268
      %p275 = scmp.eq.s32.totalorder %s27, 1
      %p276 = por %p274, %p275
      %p277 = scmp.ne.s32.totalorder %s268, %s269
      %p278 = scmp.eq.s32.totalorder %s27, 0
      %p279 = por %p277, %p278
      %p280 = scmp.ne.s32.totalorder %s268, %s269
      %p281 = scmp.eq.s32.totalorder %s28, 1
      %p282 = por %p280, %p281
      %p284 = scmp.ne.s32.totalorder %s269, %s283
      %p285 = scmp.eq.s32.totalorder %s28, 0
      %p286 = por %p284, %p285
      %s288 = sadd.s32 %s287, 1
      %p291 = scmp.eq.s32.totalorder %s22, 1
      %p292 = scmp.ne.s32.totalorder %s287, %s289
      %p293 = scmp.eq.s32.totalorder %s22, 0
      %p294 = por %p292, %p293
      %p295 = scmp.ne.s32.totalorder %s287, %s289
      %p296 = scmp.eq.s32.totalorder %s27, 1
      %p297 = por %p295, %p296
      %p298 = scmp.ne.s32.totalorder %s289, %s290
      %p299 = scmp.eq.s32.totalorder %s27, 0
      %p300 = por %p298, %p299
      %p301 = scmp.ne.s32.totalorder %s289, %s290
      %p302 = scmp.eq.s32.totalorder %s28, 1
      %p303 = por %p301, %p302
      %p305 = scmp.ne.s32.totalorder %s290, %s304
      %p306 = scmp.eq.s32.totalorder %s28, 0
      %p307 = por %p305, %p306
      %s308 = ssub.s32 %s22, %s29
      %p309 = scmp.eq.s32.totalorder %s308, 0
      %s311 = sadd.s32 %s310, 1
      %s312 = scalar_select %p309, %s310, %s311
      %p315 = pneg %p309
      %p316 = scmp.eq.s32.totalorder %s22, 1
      %p317 = por %p315, %p316
      %p318 = scmp.ne.s32.totalorder %s310, %s313
      %p319 = scmp.eq.s32.totalorder %s22, 0
      %p320 = por %p318, %p319
      %p321 = scmp.ne.s32.totalorder %s310, %s313
      %p322 = scmp.eq.s32.totalorder %s27, 1
      %p323 = por %p321, %p322
      %p324 = scmp.ne.s32.totalorder %s313, %s314
      %p325 = scmp.eq.s32.totalorder %s27, 0
      %p326 = por %p324, %p325
      %p327 = scmp.ne.s32.totalorder %s313, %s314
      %p328 = scmp.eq.s32.totalorder %s28, 1
      %p329 = por %p327, %p328
      %p331 = scmp.ne.s32.totalorder %s314, %s330
      %p332 = scmp.eq.s32.totalorder %s28, 0
      %p333 = por %p331, %p332
      %p334 = scmp.le.s32.totalorder 1, %s22
      %p335 = scmp.lt.s32.totalorder %s22, 3
      %p336 = pnand %p334, %p335
      %p337 = pneg %p336
      // Predicated region
      $region9: #{tpu_custom_call.1} parent=5 // pred_check
        _
      $region10: #{tpu_custom_call.1} parent=5 // pred_check_branch
        %339 = sbr.rel (%p336) target = $region12
      $region11: #{tpu_custom_call.1} parent=5 // pred_region
        %s340 = ssub.s32 %s22, 1
        // Predicated region
        $region13: #{tpu_custom_call.1} parent=11 // pred_check
          %p341 = pneg %p69
        $region14: #{tpu_custom_call.1} parent=11 // pred_check_branch
          %343 = sbr.rel (%p341) target = $region16
        $region15: #{tpu_custom_call.1} parent=11 // pred_region
          _
        $region16: #{tpu_custom_call.1} parent=11 // pred_fallthru
          _
        // Predicated region
        $region17: #{tpu_custom_call.1} parent=11 // pred_check
          %p344 = pneg %p90
        $region18: #{tpu_custom_call.1} parent=11 // pred_check_branch
          %346 = sbr.rel (%p344) target = $region20
        $region19: #{tpu_custom_call.1} parent=11 // pred_region
          _
        $region20: #{tpu_custom_call.1} parent=11 // pred_fallthru
          _
        // Predicated region
        $region21: #{tpu_custom_call.1} parent=11 // pred_check
          %p347 = pneg %p111
        $region22: #{tpu_custom_call.1} parent=11 // pred_check_branch
          %349 = sbr.rel (%p347) target = $region24
        $region23: #{tpu_custom_call.1} parent=11 // pred_region
          _
        $region24: #{tpu_custom_call.1} parent=11 // pred_fallthru
          _
        // Predicated region
        $region25: #{tpu_custom_call.1} parent=11 // pred_check
          %p350 = pneg %p132
        $region26: #{tpu_custom_call.1} parent=11 // pred_check_branch
          %352 = sbr.rel (%p350) target = $region28
        $region27: #{tpu_custom_call.1} parent=11 // pred_region
          _
        $region28: #{tpu_custom_call.1} parent=11 // pred_fallthru
          _
        // Predicated region
        $region29: #{tpu_custom_call.1} parent=11 // pred_check
          %p353 = pneg %p153
        $region30: #{tpu_custom_call.1} parent=11 // pred_check_branch
          %355 = sbr.rel (%p353) target = $region32
        $region31: #{tpu_custom_call.1} parent=11 // pred_region
          _
        $region32: #{tpu_custom_call.1} parent=11 // pred_fallthru
          _
        // Predicated region
        $region33: #{tpu_custom_call.1} parent=11 // pred_check
          %p356 = pneg %p174
        $region34: #{tpu_custom_call.1} parent=11 // pred_check_branch
          %358 = sbr.rel (%p356) target = $region36
        $region35: #{tpu_custom_call.1} parent=11 // pred_region
          _
        $region36: #{tpu_custom_call.1} parent=11 // pred_fallthru
          _
        // Predicated region
        $region37: #{tpu_custom_call.1} parent=11 // pred_check
          %p359 = pneg %p195
        $region38: #{tpu_custom_call.1} parent=11 // pred_check_branch
          %361 = sbr.rel (%p359) target = $region40
        $region39: #{tpu_custom_call.1} parent=11 // pred_region
          _
        $region40: #{tpu_custom_call.1} parent=11 // pred_fallthru
          _
        // Predicated region
        $region41: #{tpu_custom_call.1} parent=11 // pred_check
          %p362 = pneg %p216
        $region42: #{tpu_custom_call.1} parent=11 // pred_check_branch
          %364 = sbr.rel (%p362) target = $region44
        $region43: #{tpu_custom_call.1} parent=11 // pred_region
          _
        $region44: #{tpu_custom_call.1} parent=11 // pred_fallthru
          _
        // Predicated region
        $region45: #{tpu_custom_call.1} parent=11 // pred_check
          %p365 = pneg %p237
        $region46: #{tpu_custom_call.1} parent=11 // pred_check_branch
          %367 = sbr.rel (%p365) target = $region48
        $region47: #{tpu_custom_call.1} parent=11 // pred_region
          _
        $region48: #{tpu_custom_call.1} parent=11 // pred_fallthru
          _
        // Predicated region
        $region49: #{tpu_custom_call.1} parent=11 // pred_check
          %p368 = pneg %p258
        $region50: #{tpu_custom_call.1} parent=11 // pred_check_branch
          %370 = sbr.rel (%p368) target = $region52
        $region51: #{tpu_custom_call.1} parent=11 // pred_region
          _
        $region52: #{tpu_custom_call.1} parent=11 // pred_fallthru
          _
        // Predicated region
        $region53: #{tpu_custom_call.1} parent=11 // pred_check
          %p371 = pneg %p279
        $region54: #{tpu_custom_call.1} parent=11 // pred_check_branch
          %373 = sbr.rel (%p371) target = $region56
        $region55: #{tpu_custom_call.1} parent=11 // pred_region
          _
        $region56: #{tpu_custom_call.1} parent=11 // pred_fallthru
          _
        // Predicated region
        $region57: #{tpu_custom_call.1} parent=11 // pred_check
          %p374 = pneg %p300
        $region58: #{tpu_custom_call.1} parent=11 // pred_check_branch
          %376 = sbr.rel (%p374) target = $region60
        $region59: #{tpu_custom_call.1} parent=11 // pred_region
          _
        $region60: #{tpu_custom_call.1} parent=11 // pred_fallthru
          _
      $region12: #{tpu_custom_call.1} parent=5 // pred_fallthru
        _
      %p377 = scmp.lt.s32.totalorder %s22, 2
      // Predicated region
      $region61: #{tpu_custom_call.1} parent=5 // pred_check
        %p378 = pneg %p377
      $region62: #{tpu_custom_call.1} parent=5 // pred_check_branch
        %380 = sbr.rel (%p378) target = $region64
      $region63: #{tpu_custom_call.1} parent=5 // pred_region
        // Predicated region
        $region65: #{tpu_custom_call.1} parent=63 // pred_check
          %p381 = pneg %p42
        $region66: #{tpu_custom_call.1} parent=63 // pred_check_branch
          %383 = sbr.rel (%p381) target = $region68
        $region67: #{tpu_custom_call.1} parent=63 // pred_region
          %s384 = smul.u32 16, %s22
          %p385 = scmp.lt.s32.totalorder %s384, 31
          %s386 = scalar_select %p385, %s384, 31
          %s387 = smul.addr %s386, 4
          %s388 = scalar_lea.vmem %s0, %s387
          %s389 = smul.u32 16, %s22
        $region68: #{tpu_custom_call.1} parent=63 // pred_fallthru
          _
      $region64: #{tpu_custom_call.1} parent=5 // pred_fallthru
        _
      %p390 = scmp.le.s32.totalorder 1, %s22
      %p391 = scmp.lt.s32.totalorder %s22, 3
      %p392 = pnand %p390, %p391
      %p393 = pneg %p392
      // Predicated region
      $region69: #{tpu_custom_call.1} parent=5 // pred_check
        _
      $region70: #{tpu_custom_call.1} parent=5 // pred_check_branch
        %395 = sbr.rel (%p392) target = $region72
      $region71: #{tpu_custom_call.1} parent=5 // pred_region
        %s396 = ssub.s32 %s22, 1
        %s397 = smul.u32 16, %s27
        %p398 = scmp.lt.s32.totalorder %s397, 31
        %s399 = scalar_select %p398, %s397, 31
        %s400 = smul.addr %s399, 4
        %s401 = scalar_lea.vmem %s0, %s400
        %p402 = pneg %p48
        %p403 = pneg %p45
        %p404 = pneg %p69
        %p405 = pneg %p66
        %p406 = pneg %p90
        %p407 = pneg %p87
        %p408 = pneg %p111
        %p409 = pneg %p108
        %p410 = pneg %p132
        %p411 = pneg %p129
        %p412 = pneg %p153
        %p413 = pneg %p150
        %p414 = pneg %p174
        %p415 = pneg %p171
        %p416 = pneg %p195
        %p417 = pneg %p192
        %p418 = pneg %p216
        %p419 = pneg %p213
        %p420 = pneg %p237
        %p421 = pneg %p234
        %p422 = pneg %p258
        %p423 = pneg %p255
        %p424 = pneg %p279
        %p425 = pneg %p276
        %p426 = pneg %p300
        %p427 = pneg %p297
        %p428 = pneg %p326
        %p429 = pneg %p323
        %s430 = sand.u32 %s313, 1
        %s431 = scalar_lea.sflag [#allocation3], %s430
        %s432 = sand.u32 %s313, 1
        %s433 = smul.addr %s432, 8
        %s434 = scalar_lea.vmem [#allocation2], %s433
        %s435 = smul.u32 16, %s27
        %p436 = scmp.lt.s32.totalorder %s435, 31
        %s437 = scalar_select %p436, %s435, 31
        %s438 = smul.addr %s437, 4
        %s439 = scalar_lea.vmem %s0, %s438
        %s440 = smul.u32 16, %s27
        %v442 = vld [vmem:[%s439] sm:$0xf]
        %v443 = vld [vmem:[%s439 + $0x4] sm:$0xf]
        %v444 = vld [vmem:[%s439 + $0x8] sm:$0xf]
        %v445 = vld [vmem:[%s439 + $0xc] sm:$0xf]
        %v446 = vld [vmem:[%s439 + $0x10] sm:$0xf]
        %v447 = vld [vmem:[%s439 + $0x14] sm:$0xf]
        %v448 = vld [vmem:[%s439 + $0x18] sm:$0xf]
        %v449 = vld [vmem:[%s439 + $0x1c] sm:$0xf]
        %v450 = vld [vmem:[%s439 + $0x20] sm:$0xf]
        %v451 = vld [vmem:[%s439 + $0x24] sm:$0xf]
        %v452 = vld [vmem:[%s439 + $0x28] sm:$0xf]
        %v453 = vld [vmem:[%s439 + $0x2c] sm:$0xf]
        %v454 = vld [vmem:[%s439 + $0x30] sm:$0xf]
        %v455 = vld [vmem:[%s439 + $0x34] sm:$0xf]
        %v456 = vld [vmem:[%s439 + $0x38] sm:$0xf]
        %v457 = vld [vmem:[%s439 + $0x3c] sm:$0xf]
        %v458 = vld [vmem:[%s1] sm:$0xf]
        %v459 = vld [vmem:[%s1 + $0x4] sm:$0xf]
        %v460 = vld [vmem:[%s1 + $0x8] sm:$0xf]
        %v461 = vld [vmem:[%s1 + $0xc] sm:$0xf]
        %v462 = vld [vmem:[%s8] sm:$0x1]
        %v463 = vlaneseq
        %v464 = vshrl.u32 %v463, 7
        %v465 = vsub.s32 0, %v464
        %v466 = vrot.slane %v462, %v465
        %v483 = vunpack.c.l.b16 %v442
        %v484 = vunpack.c.l.b16 %v443
        %v485 = vunpack.c.l.b16 %v444
        %v486 = vunpack.c.l.b16 %v445
        %v487 = vunpack.c.l.b16 %v446
        %v488 = vunpack.c.l.b16 %v447
        %v489 = vunpack.c.l.b16 %v448
        %v490 = vunpack.c.l.b16 %v449
        %v491 = vunpack.c.l.b16 %v450
        %v492 = vunpack.c.l.b16 %v451
        %v493 = vunpack.c.l.b16 %v452
        %v494 = vunpack.c.l.b16 %v453
        %v495 = vunpack.c.l.b16 %v454
        %v496 = vunpack.c.l.b16 %v455
        %v497 = vunpack.c.l.b16 %v456
        %v498 = vunpack.c.l.b16 %v457
        %v499 = vpack.c.b16 %v484, %v483
        %v500 = vpack.c.b16 %v486, %v485
        %v501 = vpack.c.b16 %v488, %v487
        %v502 = vpack.c.b16 %v490, %v489
        %v503 = vpack.c.b16 %v492, %v491
        %v504 = vpack.c.b16 %v494, %v493
        %v505 = vpack.c.b16 %v496, %v495
        %v506 = vpack.c.b16 %v498, %v497
        %v511 = vunpack.c.l.b16 %v458
        %v512 = vunpack.c.l.b16 %v459
        %v513 = vunpack.c.l.b16 %v460
        %v514 = vunpack.c.l.b16 %v461
        %v515 = vpack.c.b16 %v512, %v511
        %v516 = vpack.c.b16 %v514, %v513
        %vm519 = vcmask 261120
        %v521 = vsel %vm519, %v499, 0
        %v524 = vsel %vm519, %v500, 0
        %v527 = vsel %vm519, %v501, 0
        %v530 = vsel %vm519, %v502, 0
        %v533 = vsel %vm519, %v503, 0
        %v536 = vsel %vm519, %v504, 0
        %v539 = vsel %vm519, %v505, 0
        %v542 = vsel %vm519, %v506, 0
        %544 = vmatprep.subr.bf16.mxu0 0
        %545 = vmatpush1.bf16.msra.mxu0 %v515
        %546 = vmatprep.subr.bf16.mxu0 0
        %547 = vmatpush1.bf16.msra.mxu0 %v516
        %548 = vmatprep.subr.bf16.mxu0 0
        %549 = vmatpush1.bf16.msra.mxu0 0
        %550 = vmatprep.subr.bf16.mxu0 0
        %551 = vmatpush1.bf16.msra.mxu0 0
        %552 = vmatprep.subr.bf16.mxu0 0
        %553 = vmatpush1.bf16.msra.mxu0 0
        %554 = vmatprep.subr.bf16.mxu0 0
        %555 = vmatpush1.bf16.msra.mxu0 0
        %556 = vmatprep.subr.bf16.mxu0 0
        %557 = vmatpush1.bf16.msra.mxu0 0
        %558 = vmatprep.subr.bf16.mxu0 0
        %559 = vmatpush1.bf16.msra.mxu0 0
        %560 = vmatprep.subr.bf16.mxu0 0
        %561 = vmatpush1.bf16.msra.mxu0 0
        %562 = vmatprep.subr.bf16.mxu0 0
        %563 = vmatpush1.bf16.msra.mxu0 0
        %564 = vmatprep.subr.bf16.mxu0 0
        %565 = vmatpush1.bf16.msra.mxu0 0
        %566 = vmatprep.subr.bf16.mxu0 0
        %567 = vmatpush1.bf16.msra.mxu0 0
        %568 = vmatprep.subr.bf16.mxu0 0
        %569 = vmatpush1.bf16.msra.mxu0 0
        %570 = vmatprep.subr.bf16.mxu0 0
        %571 = vmatpush1.bf16.msra.mxu0 0
        %572 = vmatprep.subr.bf16.mxu0 0
        %573 = vmatpush1.bf16.msra.mxu0 0
        %574 = vmatprep.subr.bf16.mxu0 0
        %575 = vmatpush1.bf16.msra.mxu0 0
        %576 = vmatprep.mubr.bf16.mxu0 0
        %577 = vmatmul.mubr.bf16.gmra.mrb[0].mxu0 %v521
        %v578 = vpop.f32.mrb[0].mxu0
        %v579 = vadd.f32 %v466, %v578
        %v580 = vpop.f32.mrb[0].mxu0
        %v581 = vpop.f32.mrb[0].mxu0
        %v582 = vadd.f32 %v466, %v581
        %v583 = vpop.f32.mrb[0].mxu0
        %584 = vmatprep.mubr.bf16.mxu0 0
        %585 = vmatmul.mubr.bf16.gmra.mrb[0].mxu0 %v524
        %v586 = vpop.f32.mrb[0].mxu0
        %v587 = vadd.f32 %v466, %v586
        %v588 = vpop.f32.mrb[0].mxu0
        %v589 = vpop.f32.mrb[0].mxu0
        %v590 = vadd.f32 %v466, %v589
        %v591 = vpop.f32.mrb[0].mxu0
        %592 = vmatprep.mubr.bf16.mxu0 0
        %593 = vmatmul.mubr.bf16.gmra.mrb[0].mxu0 %v527
        %v594 = vpop.f32.mrb[0].mxu0
        %v595 = vadd.f32 %v466, %v594
        %v596 = vpop.f32.mrb[0].mxu0
        %v597 = vpop.f32.mrb[0].mxu0
        %v598 = vadd.f32 %v466, %v597
        %v599 = vpop.f32.mrb[0].mxu0
        %600 = vmatprep.mubr.bf16.mxu0 0
        %601 = vmatmul.mubr.bf16.gmra.mrb[0].mxu0 %v530
        %v602 = vpop.f32.mrb[0].mxu0
        %v603 = vadd.f32 %v466, %v602
        %v604 = vpop.f32.mrb[0].mxu0
        %v605 = vpop.f32.mrb[0].mxu0
        %v606 = vadd.f32 %v466, %v605
        %v607 = vpop.f32.mrb[0].mxu0
        %608 = vmatprep.mubr.bf16.mxu0 0
        %609 = vmatmul.mubr.bf16.gmra.mrb[0].mxu0 %v533
        %v610 = vpop.f32.mrb[0].mxu0
        %v611 = vadd.f32 %v466, %v610
        %v612 = vpop.f32.mrb[0].mxu0
        %v613 = vpop.f32.mrb[0].mxu0
        %v614 = vadd.f32 %v466, %v613
        %v615 = vpop.f32.mrb[0].mxu0
        %616 = vmatprep.mubr.bf16.mxu0 0
        %617 = vmatmul.mubr.bf16.gmra.mrb[0].mxu0 %v536
        %v618 = vpop.f32.mrb[0].mxu0
        %v619 = vadd.f32 %v466, %v618
        %v620 = vpop.f32.mrb[0].mxu0
        %v621 = vpop.f32.mrb[0].mxu0
        %v622 = vadd.f32 %v466, %v621
        %v623 = vpop.f32.mrb[0].mxu0
        %624 = vmatprep.mubr.bf16.mxu0 0
        %625 = vmatmul.mubr.bf16.gmra.mrb[0].mxu0 %v539
        %v626 = vpop.f32.mrb[0].mxu0
        %v627 = vadd.f32 %v466, %v626
        %v628 = vpop.f32.mrb[0].mxu0
        %v629 = vpop.f32.mrb[0].mxu0
        %v630 = vadd.f32 %v466, %v629
        %v631 = vpop.f32.mrb[0].mxu0
        %632 = vmatprep.mubr.bf16.mxu0 0
        %633 = vmatmul.mubr.bf16.gmra.mrb[0].mxu0 %v542
        %v634 = vpop.f32.mrb[0].mxu0
        %v635 = vadd.f32 %v466, %v634
        %v636 = vpop.f32.mrb[0].mxu0
        %v637 = vpop.f32.mrb[0].mxu0
        %v638 = vadd.f32 %v466, %v637
        %v639 = vpop.f32.mrb[0].mxu0
        %640 = vdwg.mxu0
        %v641 = vld [vmem:[%s8 + $0x1] sm:$0x1]
        %v642 = vld [vmem:[%s8 + $0x2] sm:$0x1]
        %v643 = vsel %vm519, %v579, 0.0
        %644 = vadd.xlane.f32.xlu0 %v643
        %v645 = vpop.xlane.xlu0 %644
        %v646 = vsel %vm519, %v582, 0.0
        %647 = vadd.xlane.f32.xlu0 %v646
        %v648 = vpop.xlane.xlu0 %647
        %v649 = vsel %vm519, %v587, 0.0
        %650 = vadd.xlane.f32.xlu0 %v649
        %v651 = vpop.xlane.xlu0 %650
        %v652 = vsel %vm519, %v590, 0.0
        %653 = vadd.xlane.f32.xlu0 %v652
        %v654 = vpop.xlane.xlu0 %653
        %v655 = vsel %vm519, %v595, 0.0
        %656 = vadd.xlane.f32.xlu0 %v655
        %v657 = vpop.xlane.xlu0 %656
        %v658 = vsel %vm519, %v598, 0.0
        %659 = vadd.xlane.f32.xlu0 %v658
        %v660 = vpop.xlane.xlu0 %659
        %v661 = vsel %vm519, %v603, 0.0
        %662 = vadd.xlane.f32.xlu0 %v661
        %v663 = vpop.xlane.xlu0 %662
        %v664 = vsel %vm519, %v606, 0.0
        %665 = vadd.xlane.f32.xlu0 %v664
        %v666 = vpop.xlane.xlu0 %665
        %v667 = vsel %vm519, %v611, 0.0
        %668 = vadd.xlane.f32.xlu0 %v667
        %v669 = vpop.xlane.xlu0 %668
        %v670 = vsel %vm519, %v614, 0.0
        %671 = vadd.xlane.f32.xlu0 %v670
        %v672 = vpop.xlane.xlu0 %671
        %v673 = vsel %vm519, %v619, 0.0
        %674 = vadd.xlane.f32.xlu0 %v673
        %v675 = vpop.xlane.xlu0 %674
        %v676 = vsel %vm519, %v622, 0.0
        %677 = vadd.xlane.f32.xlu0 %v676
        %v678 = vpop.xlane.xlu0 %677
        %v679 = vsel %vm519, %v627, 0.0
        %680 = vadd.xlane.f32.xlu0 %v679
        %v681 = vpop.xlane.xlu0 %680
        %v682 = vsel %vm519, %v630, 0.0
        %683 = vadd.xlane.f32.xlu0 %v682
        %v684 = vpop.xlane.xlu0 %683
        %v685 = vsel %vm519, %v635, 0.0
        %686 = vadd.xlane.f32.xlu0 %v685
        %v687 = vpop.xlane.xlu0 %686
        %v688 = vsel %vm519, %v638, 0.0
        %689 = vadd.xlane.f32.xlu0 %v688
        %v690 = vpop.xlane.xlu0 %689
        %v691 = vrcp.pop 32.0
        %v692 = vmul.f32 %v645, %v691
        %v693 = vmul.f32 %v648, %v691
        %v694 = vmul.f32 %v651, %v691
        %v695 = vmul.f32 %v654, %v691
        %v696 = vmul.f32 %v657, %v691
        %v697 = vmul.f32 %v660, %v691
        %v698 = vmul.f32 %v663, %v691
        %v699 = vmul.f32 %v666, %v691
        %v700 = vmul.f32 %v669, %v691
        %v701 = vmul.f32 %v672, %v691
        %v702 = vmul.f32 %v675, %v691
        %v703 = vmul.f32 %v678, %v691
        %v704 = vmul.f32 %v681, %v691
        %v705 = vmul.f32 %v684, %v691
        %v706 = vmul.f32 %v687, %v691
        %v707 = vmul.f32 %v690, %v691
        %v708 = vsub.f32 %v579, %v692
        %v709 = vsub.f32 %v582, %v693
        %v710 = vsub.f32 %v587, %v694
        %v711 = vsub.f32 %v590, %v695
        %v712 = vsub.f32 %v595, %v696
        %v713 = vsub.f32 %v598, %v697
        %v714 = vsub.f32 %v603, %v698
        %v715 = vsub.f32 %v606, %v699
        %v716 = vsub.f32 %v611, %v700
        %v717 = vsub.f32 %v614, %v701
        %v718 = vsub.f32 %v619, %v702
        %v719 = vsub.f32 %v622, %v703
        %v720 = vsub.f32 %v627, %v704
        %v721 = vsub.f32 %v630, %v705
        %v722 = vsub.f32 %v635, %v706
        %v723 = vsub.f32 %v638, %v707
        %v724 = vmul.f32 %v708, %v708
        %v725 = vmul.f32 %v709, %v709
        %v726 = vmul.f32 %v710, %v710
        %v727 = vmul.f32 %v711, %v711
        %v728 = vmul.f32 %v712, %v712
        %v729 = vmul.f32 %v713, %v713
        %v730 = vmul.f32 %v714, %v714
        %v731 = vmul.f32 %v715, %v715
        %v732 = vmul.f32 %v716, %v716
        %v733 = vmul.f32 %v717, %v717
        %v734 = vmul.f32 %v718, %v718
        %v735 = vmul.f32 %v719, %v719
        %v736 = vmul.f32 %v720, %v720
        %v737 = vmul.f32 %v721, %v721
        %v738 = vmul.f32 %v722, %v722
        %v739 = vmul.f32 %v723, %v723
        %v740 = vsel %vm519, %v724, 0.0
        %741 = vadd.xlane.f32.xlu0 %v740
        %v742 = vpop.xlane.xlu0 %741
        %v743 = vsel %vm519, %v725, 0.0
        %744 = vadd.xlane.f32.xlu0 %v743
        %v745 = vpop.xlane.xlu0 %744
        %v746 = vsel %vm519, %v726, 0.0
        %747 = vadd.xlane.f32.xlu0 %v746
        %v748 = vpop.xlane.xlu0 %747
        %v749 = vsel %vm519, %v727, 0.0
        %750 = vadd.xlane.f32.xlu0 %v749
        %v751 = vpop.xlane.xlu0 %750
        %v752 = vsel %vm519, %v728, 0.0
        %753 = vadd.xlane.f32.xlu0 %v752
        %v754 = vpop.xlane.xlu0 %753
        %v755 = vsel %vm519, %v729, 0.0
        %756 = vadd.xlane.f32.xlu0 %v755
        %v757 = vpop.xlane.xlu0 %756
        %v758 = vsel %vm519, %v730, 0.0
        %759 = vadd.xlane.f32.xlu0 %v758
        %v760 = vpop.xlane.xlu0 %759
        %v761 = vsel %vm519, %v731, 0.0
        %762 = vadd.xlane.f32.xlu0 %v761
        %v763 = vpop.xlane.xlu0 %762
        %v764 = vsel %vm519, %v732, 0.0
        %765 = vadd.xlane.f32.xlu0 %v764
        %v766 = vpop.xlane.xlu0 %765
        %v767 = vsel %vm519, %v733, 0.0
        %768 = vadd.xlane.f32.xlu0 %v767
        %v769 = vpop.xlane.xlu0 %768
        %v770 = vsel %vm519, %v734, 0.0
        %771 = vadd.xlane.f32.xlu0 %v770
        %v772 = vpop.xlane.xlu0 %771
        %v773 = vsel %vm519, %v735, 0.0
        %774 = vadd.xlane.f32.xlu0 %v773
        %v775 = vpop.xlane.xlu0 %774
        %v776 = vsel %vm519, %v736, 0.0
        %777 = vadd.xlane.f32.xlu0 %v776
        %v778 = vpop.xlane.xlu0 %777
        %v779 = vsel %vm519, %v737, 0.0
        %780 = vadd.xlane.f32.xlu0 %v779
        %v781 = vpop.xlane.xlu0 %780
        %v782 = vsel %vm519, %v738, 0.0
        %783 = vadd.xlane.f32.xlu0 %v782
        %v784 = vpop.xlane.xlu0 %783
        %v785 = vsel %vm519, %v739, 0.0
        %786 = vadd.xlane.f32.xlu0 %v785
        %v787 = vpop.xlane.xlu0 %786
        %v788 = vmul.f32 %v742, %v691
        %v789 = vmul.f32 %v745, %v691
        %v790 = vmul.f32 %v748, %v691
        %v791 = vmul.f32 %v751, %v691
        %v792 = vmul.f32 %v754, %v691
        %v793 = vmul.f32 %v757, %v691
        %v794 = vmul.f32 %v760, %v691
        %v795 = vmul.f32 %v763, %v691
        %v796 = vmul.f32 %v766, %v691
        %v797 = vmul.f32 %v769, %v691
        %v798 = vmul.f32 %v772, %v691
        %v799 = vmul.f32 %v775, %v691
        %v800 = vmul.f32 %v778, %v691
        %v801 = vmul.f32 %v781, %v691
        %v802 = vmul.f32 %v784, %v691
        %v803 = vmul.f32 %v787, %v691
        %v804 = vadd.f32 %v788, 1e-05
        %v805 = vadd.f32 %v789, 1e-05
        %v806 = vadd.f32 %v790, 1e-05
        %v807 = vadd.f32 %v791, 1e-05
        %v808 = vadd.f32 %v792, 1e-05
        %v809 = vadd.f32 %v793, 1e-05
        %v810 = vadd.f32 %v794, 1e-05
        %v811 = vadd.f32 %v795, 1e-05
        %v812 = vadd.f32 %v796, 1e-05
        %v813 = vadd.f32 %v797, 1e-05
        %v814 = vadd.f32 %v798, 1e-05
        %v815 = vadd.f32 %v799, 1e-05
        %v816 = vadd.f32 %v800, 1e-05
        %v817 = vadd.f32 %v801, 1e-05
        %v818 = vadd.f32 %v802, 1e-05
        %v819 = vadd.f32 %v803, 1e-05
        %v820 = vrsqrt.pop %v804
        %v821 = vrsqrt.pop %v805
        %v822 = vrsqrt.pop %v806
        %v823 = vrsqrt.pop %v807
        %v824 = vrsqrt.pop %v808
        %v825 = vrsqrt.pop %v809
        %v826 = vrsqrt.pop %v810
        %v827 = vrsqrt.pop %v811
        %v828 = vrsqrt.pop %v812
        %v829 = vrsqrt.pop %v813
        %v830 = vrsqrt.pop %v814
        %v831 = vrsqrt.pop %v815
        %v832 = vrsqrt.pop %v816
        %v833 = vrsqrt.pop %v817
        %v834 = vrsqrt.pop %v818
        %v835 = vrsqrt.pop %v819
        %v836 = vmul.f32 %v708, %v820
        %v837 = vmul.f32 %v709, %v821
        %v838 = vmul.f32 %v710, %v822
        %v839 = vmul.f32 %v711, %v823
        %v840 = vmul.f32 %v712, %v824
        %v841 = vmul.f32 %v713, %v825
        %v842 = vmul.f32 %v714, %v826
        %v843 = vmul.f32 %v715, %v827
        %v844 = vmul.f32 %v716, %v828
        %v845 = vmul.f32 %v717, %v829
        %v846 = vmul.f32 %v718, %v830
        %v847 = vmul.f32 %v719, %v831
        %v848 = vmul.f32 %v720, %v832
        %v849 = vmul.f32 %v721, %v833
        %v850 = vmul.f32 %v722, %v834
        %v851 = vmul.f32 %v723, %v835
        %v852 = vlaneseq
        %v853 = vshrl.u32 %v852, 7
        %v854 = vsub.s32 0, %v853
        %v855 = vrot.slane %v641, %v854
        %v856 = vmul.f32 %v836, %v855
        %v857 = vmul.f32 %v837, %v855
        %v858 = vmul.f32 %v838, %v855
        %v859 = vmul.f32 %v839, %v855
        %v860 = vmul.f32 %v840, %v855
        %v861 = vmul.f32 %v841, %v855
        %v862 = vmul.f32 %v842, %v855
        %v863 = vmul.f32 %v843, %v855
        %v864 = vmul.f32 %v844, %v855
        %v865 = vmul.f32 %v845, %v855
        %v866 = vmul.f32 %v846, %v855
        %v867 = vmul.f32 %v847, %v855
        %v868 = vmul.f32 %v848, %v855
        %v869 = vmul.f32 %v849, %v855
        %v870 = vmul.f32 %v850, %v855
        %v871 = vmul.f32 %v851, %v855
        %v872 = vlaneseq
        %v873 = vshrl.u32 %v872, 7
        %v874 = vsub.s32 0, %v873
        %v875 = vrot.slane %v642, %v874
        %v876 = vadd.f32 %v856, %v875
        %v877 = vadd.f32 %v857, %v875
        %v878 = vadd.f32 %v858, %v875
        %v879 = vadd.f32 %v859, %v875
        %v880 = vadd.f32 %v860, %v875
        %v881 = vadd.f32 %v861, %v875
        %v882 = vadd.f32 %v862, %v875
        %v883 = vadd.f32 %v863, %v875
        %v884 = vadd.f32 %v864, %v875
        %v885 = vadd.f32 %v865, %v875
        %v886 = vadd.f32 %v866, %v875
        %v887 = vadd.f32 %v867, %v875
        %v888 = vadd.f32 %v868, %v875
        %v889 = vadd.f32 %v869, %v875
        %v890 = vadd.f32 %v870, %v875
        %v891 = vadd.f32 %v871, %v875
        %v892 = vld [vmem:[%s2] sm:$0xf]
        %v893 = vld [vmem:[%s2 + $0x4] sm:$0xf]
        %v894 = vld [vmem:[%s2 + $0x8] sm:$0xf]
        %v895 = vld [vmem:[%s2 + $0xc] sm:$0xf]
        %v896 = vld [vmem:[%s2 + $0x10] sm:$0xf]
        %v897 = vld [vmem:[%s2 + $0x14] sm:$0xf]
        %v898 = vld [vmem:[%s2 + $0x18] sm:$0xf]
        %v899 = vld [vmem:[%s2 + $0x1c] sm:$0xf]
        %v900 = vld [vmem:[%s2 + $0x20] sm:$0xf]
        %v901 = vld [vmem:[%s2 + $0x24] sm:$0xf]
        %v902 = vld [vmem:[%s2 + $0x28] sm:$0xf]
        %v903 = vld [vmem:[%s2 + $0x2c] sm:$0xf]
        %v904 = vld [vmem:[%s2 + $0x30] sm:$0xf]
        %v905 = vld [vmem:[%s2 + $0x34] sm:$0xf]
        %v906 = vld [vmem:[%s2 + $0x38] sm:$0xf]
        %v907 = vld [vmem:[%s2 + $0x3c] sm:$0xf]
        %v908 = vpack.c.bf16 %v877, %v876
        %v909 = vpack.c.bf16 %v879, %v878
        %v910 = vpack.c.bf16 %v881, %v880
        %v911 = vpack.c.bf16 %v883, %v882
        %v912 = vpack.c.bf16 %v885, %v884
        %v913 = vpack.c.bf16 %v887, %v886
        %v914 = vpack.c.bf16 %v889, %v888
        %v915 = vpack.c.bf16 %v891, %v890
        %v916 = vld [vmem:[%s3] sm:$0xff]
        %v917 = vld [vmem:[%s3 + $0x8] sm:$0xff]
        %v918 = vld [vmem:[%s3 + $0x10] sm:$0xff]
        %v919 = vld [vmem:[%s3 + $0x18] sm:$0xff]
        %v920 = vld [vmem:[%s3 + $0x20] sm:$0xff]
        %v921 = vld [vmem:[%s3 + $0x28] sm:$0xff]
        %v922 = vld [vmem:[%s3 + $0x30] sm:$0xff]
        %v923 = vld [vmem:[%s3 + $0x38] sm:$0xff]
        %v924 = vld [vmem:[%s3 + $0x40] sm:$0xff]
        %v925 = vld [vmem:[%s3 + $0x48] sm:$0xff]
        %v926 = vld [vmem:[%s3 + $0x50] sm:$0xff]
        %v927 = vld [vmem:[%s3 + $0x58] sm:$0xff]
        %v928 = vld [vmem:[%s3 + $0x60] sm:$0xff]
        %v929 = vld [vmem:[%s3 + $0x68] sm:$0xff]
        %v930 = vld [vmem:[%s3 + $0x70] sm:$0xff]
        %v931 = vld [vmem:[%s3 + $0x78] sm:$0xff]
        %933 = vset.pattern.permute.xlu0 0
        %934 = vperm.xlu0 %933, %v916
        %v935 = vpop.permute.xlu0 %934
        %938 = vset.pattern.permute.xlu0 0
        %939 = vperm.xlu0 %938, %v917
        %v940 = vpop.permute.xlu0 %939
        %943 = vset.pattern.permute.xlu0 0
        %944 = vperm.xlu0 %943, %v918
        %v945 = vpop.permute.xlu0 %944
        %948 = vset.pattern.permute.xlu0 0
        %949 = vperm.xlu0 %948, %v919
        %v950 = vpop.permute.xlu0 %949
        %953 = vset.pattern.permute.xlu0 0
        %954 = vperm.xlu0 %953, %v920
        %v955 = vpop.permute.xlu0 %954
        %958 = vset.pattern.permute.xlu0 0
        %959 = vperm.xlu0 %958, %v921
        %v960 = vpop.permute.xlu0 %959
        %963 = vset.pattern.permute.xlu0 0
        %964 = vperm.xlu0 %963, %v922
        %v965 = vpop.permute.xlu0 %964
        %968 = vset.pattern.permute.xlu0 0
        %969 = vperm.xlu0 %968, %v923
        %v970 = vpop.permute.xlu0 %969
        %973 = vset.pattern.permute.xlu0 0
        %974 = vperm.xlu0 %973, %v924
        %v975 = vpop.permute.xlu0 %974
        %978 = vset.pattern.permute.xlu0 0
        %979 = vperm.xlu0 %978, %v925
        %v980 = vpop.permute.xlu0 %979
        %983 = vset.pattern.permute.xlu0 0
        %984 = vperm.xlu0 %983, %v926
        %v985 = vpop.permute.xlu0 %984
        %988 = vset.pattern.permute.xlu0 0
        %989 = vperm.xlu0 %988, %v927
        %v990 = vpop.permute.xlu0 %989
        %993 = vset.pattern.permute.xlu0 0
        %994 = vperm.xlu0 %993, %v928
        %v995 = vpop.permute.xlu0 %994
        %998 = vset.pattern.permute.xlu0 0
        %999 = vperm.xlu0 %998, %v929
        %v1000 = vpop.permute.xlu0 %999
        %1003 = vset.pattern.permute.xlu0 0
        %1004 = vperm.xlu0 %1003, %v930
        %v1005 = vpop.permute.xlu0 %1004
        %1008 = vset.pattern.permute.xlu0 0
        %1009 = vperm.xlu0 %1008, %v931
        %v1010 = vpop.permute.xlu0 %1009
        %v1028 = vunpack.c.l.b16 %v892
        %v1029 = vunpack.c.l.b16 %v893
        %v1030 = vunpack.c.l.b16 %v894
        %v1031 = vunpack.c.l.b16 %v895
        %v1032 = vunpack.c.l.b16 %v896
        %v1033 = vunpack.c.l.b16 %v897
        %v1034 = vunpack.c.l.b16 %v898
        %v1035 = vunpack.c.l.b16 %v899
        %v1036 = vunpack.c.l.b16 %v900
        %v1037 = vunpack.c.l.b16 %v901
        %v1038 = vunpack.c.l.b16 %v902
        %v1039 = vunpack.c.l.b16 %v903
        %v1040 = vunpack.c.l.b16 %v904
        %v1041 = vunpack.c.l.b16 %v905
        %v1042 = vunpack.c.l.b16 %v906
        %v1043 = vunpack.c.l.b16 %v907
        %v1044 = vpack.c.b16 %v1029, %v1028
        %v1045 = vpack.c.b16 %v1031, %v1030
        %v1046 = vpack.c.b16 %v1033, %v1032
        %v1047 = vpack.c.b16 %v1035, %v1034
        %v1048 = vpack.c.b16 %v1037, %v1036
        %v1049 = vpack.c.b16 %v1039, %v1038
        %v1050 = vpack.c.b16 %v1041, %v1040
        %v1051 = vpack.c.b16 %v1043, %v1042
        %1060 = vmatprep.subr.bf16.mxu0 0
        %1061 = vmatpush1.bf16.msra.mxu0 %v908
        %1062 = vmatprep.subr.bf16.mxu0 0
        %1063 = vmatpush1.bf16.msra.mxu0 %v909
        %1064 = vmatprep.subr.bf16.mxu0 0
        %1065 = vmatpush1.bf16.msra.mxu0 %v910
        %1066 = vmatprep.subr.bf16.mxu0 0
        %1067 = vmatpush1.bf16.msra.mxu0 %v911
        %1068 = vmatprep.subr.bf16.mxu0 0
        %1069 = vmatpush1.bf16.msra.mxu0 %v912
        %1070 = vmatprep.subr.bf16.mxu0 0
        %1071 = vmatpush1.bf16.msra.mxu0 %v913
        %1072 = vmatprep.subr.bf16.mxu0 0
        %1073 = vmatpush1.bf16.msra.mxu0 %v914
        %1074 = vmatprep.subr.bf16.mxu0 0
        %1075 = vmatpush1.bf16.msra.mxu0 %v915
        %1076 = vmatprep.subr.bf16.mxu0 0
        %1077 = vmatpush1.bf16.msra.mxu0 0
        %1078 = vmatprep.subr.bf16.mxu0 0
        %1079 = vmatpush1.bf16.msra.mxu0 0
        %1080 = vmatprep.subr.bf16.mxu0 0
        %1081 = vmatpush1.bf16.msra.mxu0 0
        %1082 = vmatprep.subr.bf16.mxu0 0
        %1083 = vmatpush1.bf16.msra.mxu0 0
        %1084 = vmatprep.subr.bf16.mxu0 0
        %1085 = vmatpush1.bf16.msra.mxu0 0
        %1086 = vmatprep.subr.bf16.mxu0 0
        %1087 = vmatpush1.bf16.msra.mxu0 0
        %1088 = vmatprep.subr.bf16.mxu0 0
        %1089 = vmatpush1.bf16.msra.mxu0 0
        %1090 = vmatprep.subr.bf16.mxu0 0
        %1091 = vmatpush1.bf16.msra.mxu0 0
        %1092 = vmatprep.mubr.bf16.mxu0 0
        %1093 = vmatmul.mubr.bf16.gmra.mrb[0].mxu0 %v1044
        %v1094 = vpop.f32.mrb[0].mxu0
        %v1095 = vadd.f32 %v935, %v1094
        %v1096 = vpop.f32.mrb[0].mxu0
        %v1097 = vpop.f32.mrb[0].mxu0
        %v1098 = vadd.f32 %v940, %v1097
        %v1099 = vpop.f32.mrb[0].mxu0
        %1100 = vmatprep.mubr.bf16.mxu0 0
        %1101 = vmatmul.mubr.bf16.gmra.mrb[0].mxu0 %v1045
        %v1102 = vpop.f32.mrb[0].mxu0
        %v1103 = vadd.f32 %v945, %v1102
        %v1104 = vpop.f32.mrb[0].mxu0
        %v1105 = vpop.f32.mrb[0].mxu0
        %v1106 = vadd.f32 %v950, %v1105
        %v1107 = vpop.f32.mrb[0].mxu0
        %1108 = vmatprep.mubr.bf16.mxu0 0
        %1109 = vmatmul.mubr.bf16.gmra.mrb[0].mxu0 %v1046
        %v1110 = vpop.f32.mrb[0].mxu0
        %v1111 = vadd.f32 %v955, %v1110
        %v1112 = vpop.f32.mrb[0].mxu0
        %v1113 = vpop.f32.mrb[0].mxu0
        %v1114 = vadd.f32 %v960, %v1113
        %v1115 = vpop.f32.mrb[0].mxu0
        %1116 = vmatprep.mubr.bf16.mxu0 0
        %1117 = vmatmul.mubr.bf16.gmra.mrb[0].mxu0 %v1047
        %v1118 = vpop.f32.mrb[0].mxu0
        %v1119 = vadd.f32 %v965, %v1118
        %v1120 = vpop.f32.mrb[0].mxu0
        %v1121 = vpop.f32.mrb[0].mxu0
        %v1122 = vadd.f32 %v970, %v1121
        %v1123 = vpop.f32.mrb[0].mxu0
        %1124 = vmatprep.mubr.bf16.mxu0 0
        %1125 = vmatmul.mubr.bf16.gmra.mrb[0].mxu0 %v1048
        %v1126 = vpop.f32.mrb[0].mxu0
        %v1127 = vadd.f32 %v975, %v1126
        %v1128 = vpop.f32.mrb[0].mxu0
        %v1129 = vpop.f32.mrb[0].mxu0
        %v1130 = vadd.f32 %v980, %v1129
        %v1131 = vpop.f32.mrb[0].mxu0
        %1132 = vmatprep.mubr.bf16.mxu0 0
        %1133 = vmatmul.mubr.bf16.gmra.mrb[0].mxu0 %v1049
        %v1134 = vpop.f32.mrb[0].mxu0
        %v1135 = vadd.f32 %v985, %v1134
        %v1136 = vpop.f32.mrb[0].mxu0
        %v1137 = vpop.f32.mrb[0].mxu0
        %v1138 = vadd.f32 %v990, %v1137
        %v1139 = vpop.f32.mrb[0].mxu0
        %1140 = vmatprep.mubr.bf16.mxu0 0
        %1141 = vmatmul.mubr.bf16.gmra.mrb[0].mxu0 %v1050
        %v1142 = vpop.f32.mrb[0].mxu0
        %v1143 = vadd.f32 %v995, %v1142
        %v1144 = vpop.f32.mrb[0].mxu0
        %v1145 = vpop.f32.mrb[0].mxu0
        %v1146 = vadd.f32 %v1000, %v1145
        %v1147 = vpop.f32.mrb[0].mxu0
        %1148 = vmatprep.mubr.bf16.mxu0 0
        %1149 = vmatmul.mubr.bf16.gmra.mrb[0].mxu0 %v1051
        %v1150 = vpop.f32.mrb[0].mxu0
        %v1151 = vadd.f32 %v1005, %v1150
        %v1152 = vpop.f32.mrb[0].mxu0
        %v1153 = vpop.f32.mrb[0].mxu0
        %v1154 = vadd.f32 %v1010, %v1153
        %v1155 = vpop.f32.mrb[0].mxu0
        %1156 = vdwg.mxu0
        %v1157 = vmul.f32 %v1095, 0.5
        %v1158 = vmul.f32 %v1098, 0.5
        %v1159 = vmul.f32 %v1103, 0.5
        %v1160 = vmul.f32 %v1106, 0.5
        %v1161 = vmul.f32 %v1111, 0.5
        %v1162 = vmul.f32 %v1114, 0.5
        %v1163 = vmul.f32 %v1119, 0.5
        %v1164 = vmul.f32 %v1122, 0.5
        %v1165 = vmul.f32 %v1127, 0.5
        %v1166 = vmul.f32 %v1130, 0.5
        %v1167 = vmul.f32 %v1135, 0.5
        %v1168 = vmul.f32 %v1138, 0.5
        %v1169 = vmul.f32 %v1143, 0.5
        %v1170 = vmul.f32 %v1146, 0.5
        %v1171 = vmul.f32 %v1151, 0.5
        %v1172 = vmul.f32 %v1154, 0.5
        %v1173 = vmul.f32 %v1095, 0.70710677
        %v1174 = vmul.f32 %v1098, 0.70710677
        %v1175 = vmul.f32 %v1103, 0.70710677
        %v1176 = vmul.f32 %v1106, 0.70710677
        %v1177 = vmul.f32 %v1111, 0.70710677
        %v1178 = vmul.f32 %v1114, 0.70710677
        %v1179 = vmul.f32 %v1119, 0.70710677
        %v1180 = vmul.f32 %v1122, 0.70710677
        %v1181 = vmul.f32 %v1127, 0.70710677
        %v1182 = vmul.f32 %v1130, 0.70710677
        %v1183 = vmul.f32 %v1135, 0.70710677
        %v1184 = vmul.f32 %v1138, 0.70710677
        %v1185 = vmul.f32 %v1143, 0.70710677
        %v1186 = vmul.f32 %v1146, 0.70710677
        %v1187 = vmul.f32 %v1151, 0.70710677
        %v1188 = vmul.f32 %v1154, 0.70710677
        %v1189 = verf.f32.pop %v1173
        %v1190 = verf.f32.pop %v1174
        %v1191 = verf.f32.pop %v1175
        %v1192 = verf.f32.pop %v1176
        %v1193 = verf.f32.pop %v1177
        %v1194 = verf.f32.pop %v1178
        %v1195 = verf.f32.pop %v1179
        %v1196 = verf.f32.pop %v1180
        %v1197 = verf.f32.pop %v1181
        %v1198 = verf.f32.pop %v1182
        %v1199 = verf.f32.pop %v1183
        %v1200 = verf.f32.pop %v1184
        %v1201 = verf.f32.pop %v1185
        %v1202 = verf.f32.pop %v1186
        %v1203 = verf.f32.pop %v1187
        %v1204 = verf.f32.pop %v1188
        %v1205 = vadd.f32 %v1189, 1.0
        %v1206 = vadd.f32 %v1190, 1.0
        %v1207 = vadd.f32 %v1191, 1.0
        %v1208 = vadd.f32 %v1192, 1.0
        %v1209 = vadd.f32 %v1193, 1.0
        %v1210 = vadd.f32 %v1194, 1.0
        %v1211 = vadd.f32 %v1195, 1.0
        %v1212 = vadd.f32 %v1196, 1.0
        %v1213 = vadd.f32 %v1197, 1.0
        %v1214 = vadd.f32 %v1198, 1.0
        %v1215 = vadd.f32 %v1199, 1.0
        %v1216 = vadd.f32 %v1200, 1.0
        %v1217 = vadd.f32 %v1201, 1.0
        %v1218 = vadd.f32 %v1202, 1.0
        %v1219 = vadd.f32 %v1203, 1.0
        %v1220 = vadd.f32 %v1204, 1.0
        %v1221 = vmul.f32 %v1157, %v1205
        %v1222 = vmul.f32 %v1158, %v1206
        %v1223 = vmul.f32 %v1159, %v1207
        %v1224 = vmul.f32 %v1160, %v1208
        %v1225 = vmul.f32 %v1161, %v1209
        %v1226 = vmul.f32 %v1162, %v1210
        %v1227 = vmul.f32 %v1163, %v1211
        %v1228 = vmul.f32 %v1164, %v1212
        %v1229 = vmul.f32 %v1165, %v1213
        %v1230 = vmul.f32 %v1166, %v1214
        %v1231 = vmul.f32 %v1167, %v1215
        %v1232 = vmul.f32 %v1168, %v1216
        %v1233 = vmul.f32 %v1169, %v1217
        %v1234 = vmul.f32 %v1170, %v1218
        %v1235 = vmul.f32 %v1171, %v1219
        %v1236 = vmul.f32 %v1172, %v1220
        %v1237 = vld [vmem:[%s4] sm:$0xf]
        %v1238 = vld [vmem:[%s4 + $0x4] sm:$0xf]
        %v1239 = vld [vmem:[%s4 + $0x8] sm:$0xf]
        %v1240 = vld [vmem:[%s4 + $0xc] sm:$0xf]
        %v1241 = vld [vmem:[%s4 + $0x10] sm:$0xf]
        %v1242 = vld [vmem:[%s4 + $0x14] sm:$0xf]
        %v1243 = vld [vmem:[%s4 + $0x18] sm:$0xf]
        %v1244 = vld [vmem:[%s4 + $0x1c] sm:$0xf]
        %v1245 = vld [vmem:[%s4 + $0x20] sm:$0xf]
        %v1246 = vld [vmem:[%s4 + $0x24] sm:$0xf]
        %v1247 = vld [vmem:[%s4 + $0x28] sm:$0xf]
        %v1248 = vld [vmem:[%s4 + $0x2c] sm:$0xf]
        %v1249 = vld [vmem:[%s4 + $0x30] sm:$0xf]
        %v1250 = vld [vmem:[%s4 + $0x34] sm:$0xf]
        %v1251 = vld [vmem:[%s4 + $0x38] sm:$0xf]
        %v1252 = vld [vmem:[%s4 + $0x3c] sm:$0xf]
        %v1253 = vpack.c.bf16 %v1222, %v1221
        %v1254 = vpack.c.bf16 %v1224, %v1223
        %v1255 = vpack.c.bf16 %v1226, %v1225
        %v1256 = vpack.c.bf16 %v1228, %v1227
        %v1257 = vpack.c.bf16 %v1230, %v1229
        %v1258 = vpack.c.bf16 %v1232, %v1231
        %v1259 = vpack.c.bf16 %v1234, %v1233
        %v1260 = vpack.c.bf16 %v1236, %v1235
        %v1277 = vunpack.c.l.b16 %v1237
        %v1278 = vunpack.c.l.b16 %v1238
        %v1279 = vunpack.c.l.b16 %v1239
        %v1280 = vunpack.c.l.b16 %v1240
        %v1281 = vunpack.c.l.b16 %v1241
        %v1282 = vunpack.c.l.b16 %v1242
        %v1283 = vunpack.c.l.b16 %v1243
        %v1284 = vunpack.c.l.b16 %v1244
        %v1285 = vunpack.c.l.b16 %v1245
        %v1286 = vunpack.c.l.b16 %v1246
        %v1287 = vunpack.c.l.b16 %v1247
        %v1288 = vunpack.c.l.b16 %v1248
        %v1289 = vunpack.c.l.b16 %v1249
        %v1290 = vunpack.c.l.b16 %v1250
        %v1291 = vunpack.c.l.b16 %v1251
        %v1292 = vunpack.c.l.b16 %v1252
        %v1293 = vpack.c.b16 %v1278, %v1277
        %v1294 = vpack.c.b16 %v1280, %v1279
        %v1295 = vpack.c.b16 %v1282, %v1281
        %v1296 = vpack.c.b16 %v1284, %v1283
        %v1297 = vpack.c.b16 %v1286, %v1285
        %v1298 = vpack.c.b16 %v1288, %v1287
        %v1299 = vpack.c.b16 %v1290, %v1289
        %v1300 = vpack.c.b16 %v1292, %v1291
        %1309 = vmatprep.subr.bf16.mxu0 0
        %1310 = vmatpush1.bf16.msra.mxu0 %v1253
        %1311 = vmatprep.subr.bf16.mxu0 0
        %1312 = vmatpush1.bf16.msra.mxu0 %v1254
        %1313 = vmatprep.subr.bf16.mxu0 0
        %1314 = vmatpush1.bf16.msra.mxu0 %v1255
        %1315 = vmatprep.subr.bf16.mxu0 0
        %1316 = vmatpush1.bf16.msra.mxu0 %v1256
        %1317 = vmatprep.subr.bf16.mxu0 0
        %1318 = vmatpush1.bf16.msra.mxu0 %v1257
        %1319 = vmatprep.subr.bf16.mxu0 0
        %1320 = vmatpush1.bf16.msra.mxu0 %v1258
        %1321 = vmatprep.subr.bf16.mxu0 0
        %1322 = vmatpush1.bf16.msra.mxu0 %v1259
        %1323 = vmatprep.subr.bf16.mxu0 0
        %1324 = vmatpush1.bf16.msra.mxu0 %v1260
        %1325 = vmatprep.subr.bf16.mxu0 0
        %1326 = vmatpush1.bf16.msra.mxu0 0
        %1327 = vmatprep.subr.bf16.mxu0 0
        %1328 = vmatpush1.bf16.msra.mxu0 0
        %1329 = vmatprep.subr.bf16.mxu0 0
        %1330 = vmatpush1.bf16.msra.mxu0 0
        %1331 = vmatprep.subr.bf16.mxu0 0
        %1332 = vmatpush1.bf16.msra.mxu0 0
        %1333 = vmatprep.subr.bf16.mxu0 0
        %1334 = vmatpush1.bf16.msra.mxu0 0
        %1335 = vmatprep.subr.bf16.mxu0 0
        %1336 = vmatpush1.bf16.msra.mxu0 0
        %1337 = vmatprep.subr.bf16.mxu0 0
        %1338 = vmatpush1.bf16.msra.mxu0 0
        %1339 = vmatprep.subr.bf16.mxu0 0
        %1340 = vmatpush1.bf16.msra.mxu0 0
        %1341 = vmatprep.mubr.bf16.mxu0 0
        %1342 = vmatmul.mubr.bf16.gmra.mrb[0].mxu0 %v1293
        %v1343 = vpop.f32.mrb[0].mxu0
        %v1344 = vadd.f32 0.0, %v1343
        %v1345 = vpop.f32.mrb[0].mxu0
        %v1346 = vpop.f32.mrb[0].mxu0
        %v1347 = vadd.f32 0.0, %v1346
        %v1348 = vpop.f32.mrb[0].mxu0
        %1349 = vmatprep.mubr.bf16.mxu0 0
        %1350 = vmatmul.mubr.bf16.gmra.mrb[0].mxu0 %v1294
        %v1351 = vpop.f32.mrb[0].mxu0
        %v1352 = vadd.f32 0.0, %v1351
        %v1353 = vpop.f32.mrb[0].mxu0
        %v1354 = vpop.f32.mrb[0].mxu0
        %v1355 = vadd.f32 0.0, %v1354
        %v1356 = vpop.f32.mrb[0].mxu0
        %1357 = vmatprep.mubr.bf16.mxu0 0
        %1358 = vmatmul.mubr.bf16.gmra.mrb[0].mxu0 %v1295
        %v1359 = vpop.f32.mrb[0].mxu0
        %v1360 = vadd.f32 0.0, %v1359
        %v1361 = vpop.f32.mrb[0].mxu0
        %v1362 = vpop.f32.mrb[0].mxu0
        %v1363 = vadd.f32 0.0, %v1362
        %v1364 = vpop.f32.mrb[0].mxu0
        %1365 = vmatprep.mubr.bf16.mxu0 0
        %1366 = vmatmul.mubr.bf16.gmra.mrb[0].mxu0 %v1296
        %v1367 = vpop.f32.mrb[0].mxu0
        %v1368 = vadd.f32 0.0, %v1367
        %v1369 = vpop.f32.mrb[0].mxu0
        %v1370 = vpop.f32.mrb[0].mxu0
        %v1371 = vadd.f32 0.0, %v1370
        %v1372 = vpop.f32.mrb[0].mxu0
        %1373 = vmatprep.mubr.bf16.mxu0 0
        %1374 = vmatmul.mubr.bf16.gmra.mrb[0].mxu0 %v1297
        %v1375 = vpop.f32.mrb[0].mxu0
        %v1376 = vadd.f32 0.0, %v1375
        %v1377 = vpop.f32.mrb[0].mxu0
        %v1378 = vpop.f32.mrb[0].mxu0
        %v1379 = vadd.f32 0.0, %v1378
        %v1380 = vpop.f32.mrb[0].mxu0
        %1381 = vmatprep.mubr.bf16.mxu0 0
        %1382 = vmatmul.mubr.bf16.gmra.mrb[0].mxu0 %v1298
        %v1383 = vpop.f32.mrb[0].mxu0
        %v1384 = vadd.f32 0.0, %v1383
        %v1385 = vpop.f32.mrb[0].mxu0
        %v1386 = vpop.f32.mrb[0].mxu0
        %v1387 = vadd.f32 0.0, %v1386
        %v1388 = vpop.f32.mrb[0].mxu0
        %1389 = vmatprep.mubr.bf16.mxu0 0
        %1390 = vmatmul.mubr.bf16.gmra.mrb[0].mxu0 %v1299
        %v1391 = vpop.f32.mrb[0].mxu0
        %v1392 = vadd.f32 0.0, %v1391
        %v1393 = vpop.f32.mrb[0].mxu0
        %v1394 = vpop.f32.mrb[0].mxu0
        %v1395 = vadd.f32 0.0, %v1394
        %v1396 = vpop.f32.mrb[0].mxu0
        %1397 = vmatprep.mubr.bf16.mxu0 0
        %1398 = vmatmul.mubr.bf16.gmra.mrb[0].mxu0 %v1300
        %v1399 = vpop.f32.mrb[0].mxu0
        %v1400 = vadd.f32 0.0, %v1399
        %v1401 = vpop.f32.mrb[0].mxu0
        %v1402 = vpop.f32.mrb[0].mxu0
        %v1403 = vadd.f32 0.0, %v1402
        %v1404 = vpop.f32.mrb[0].mxu0
        %1405 = vdwg.mxu0
        %v1406 = vadd.f32 %v579, %v1344
        %v1407 = vadd.f32 %v582, %v1347
        %v1408 = vadd.f32 %v587, %v1352
        %v1409 = vadd.f32 %v590, %v1355
        %v1410 = vadd.f32 %v595, %v1360
        %v1411 = vadd.f32 %v598, %v1363
        %v1412 = vadd.f32 %v603, %v1368
        %v1413 = vadd.f32 %v606, %v1371
        %v1414 = vadd.f32 %v611, %v1376
        %v1415 = vadd.f32 %v614, %v1379
        %v1416 = vadd.f32 %v619, %v1384
        %v1417 = vadd.f32 %v622, %v1387
        %v1418 = vadd.f32 %v627, %v1392
        %v1419 = vadd.f32 %v630, %v1395
        %v1420 = vadd.f32 %v635, %v1400
        %v1421 = vadd.f32 %v638, %v1403
        %v1422 = vld [vmem:[%s5] sm:$0xff]
        %v1423 = vld [vmem:[%s5 + $0x8] sm:$0xff]
        %v1424 = vld [vmem:[%s5 + $0x10] sm:$0xff]
        %v1425 = vld [vmem:[%s5 + $0x18] sm:$0xff]
        %v1426 = vld [vmem:[%s5 + $0x20] sm:$0xff]
        %v1427 = vld [vmem:[%s5 + $0x28] sm:$0xff]
        %v1428 = vld [vmem:[%s5 + $0x30] sm:$0xff]
        %v1429 = vld [vmem:[%s5 + $0x38] sm:$0xff]
        %v1430 = vld [vmem:[%s5 + $0x40] sm:$0xff]
        %v1431 = vld [vmem:[%s5 + $0x48] sm:$0xff]
        %v1432 = vld [vmem:[%s5 + $0x50] sm:$0xff]
        %v1433 = vld [vmem:[%s5 + $0x58] sm:$0xff]
        %v1434 = vld [vmem:[%s5 + $0x60] sm:$0xff]
        %v1435 = vld [vmem:[%s5 + $0x68] sm:$0xff]
        %v1436 = vld [vmem:[%s5 + $0x70] sm:$0xff]
        %v1437 = vld [vmem:[%s5 + $0x78] sm:$0xff]
        %1439 = vset.pattern.permute.xlu0 0
        %1440 = vperm.xlu0 %1439, %v1422
        %v1441 = vpop.permute.xlu0 %1440
        %1444 = vset.pattern.permute.xlu0 0
        %1445 = vperm.xlu0 %1444, %v1423
        %v1446 = vpop.permute.xlu0 %1445
        %1449 = vset.pattern.permute.xlu0 0
        %1450 = vperm.xlu0 %1449, %v1424
        %v1451 = vpop.permute.xlu0 %1450
        %1454 = vset.pattern.permute.xlu0 0
        %1455 = vperm.xlu0 %1454, %v1425
        %v1456 = vpop.permute.xlu0 %1455
        %1459 = vset.pattern.permute.xlu0 0
        %1460 = vperm.xlu0 %1459, %v1426
        %v1461 = vpop.permute.xlu0 %1460
        %1464 = vset.pattern.permute.xlu0 0
        %1465 = vperm.xlu0 %1464, %v1427
        %v1466 = vpop.permute.xlu0 %1465
        %1469 = vset.pattern.permute.xlu0 0
        %1470 = vperm.xlu0 %1469, %v1428
        %v1471 = vpop.permute.xlu0 %1470
        %1474 = vset.pattern.permute.xlu0 0
        %1475 = vperm.xlu0 %1474, %v1429
        %v1476 = vpop.permute.xlu0 %1475
        %1479 = vset.pattern.permute.xlu0 0
        %1480 = vperm.xlu0 %1479, %v1430
        %v1481 = vpop.permute.xlu0 %1480
        %1484 = vset.pattern.permute.xlu0 0
        %1485 = vperm.xlu0 %1484, %v1431
        %v1486 = vpop.permute.xlu0 %1485
        %1489 = vset.pattern.permute.xlu0 0
        %1490 = vperm.xlu0 %1489, %v1432
        %v1491 = vpop.permute.xlu0 %1490
        %1494 = vset.pattern.permute.xlu0 0
        %1495 = vperm.xlu0 %1494, %v1433
        %v1496 = vpop.permute.xlu0 %1495
        %1499 = vset.pattern.permute.xlu0 0
        %1500 = vperm.xlu0 %1499, %v1434
        %v1501 = vpop.permute.xlu0 %1500
        %1504 = vset.pattern.permute.xlu0 0
        %1505 = vperm.xlu0 %1504, %v1435
        %v1506 = vpop.permute.xlu0 %1505
        %1509 = vset.pattern.permute.xlu0 0
        %1510 = vperm.xlu0 %1509, %v1436
        %v1511 = vpop.permute.xlu0 %1510
        %1514 = vset.pattern.permute.xlu0 0
        %1515 = vperm.xlu0 %1514, %v1437
        %v1516 = vpop.permute.xlu0 %1515
        %v1518 = vadd.f32 %v1406, %v1441
        %v1519 = vadd.f32 %v1407, %v1446
        %v1520 = vadd.f32 %v1408, %v1451
        %v1521 = vadd.f32 %v1409, %v1456
        %v1522 = vadd.f32 %v1410, %v1461
        %v1523 = vadd.f32 %v1411, %v1466
        %v1524 = vadd.f32 %v1412, %v1471
        %v1525 = vadd.f32 %v1413, %v1476
        %v1526 = vadd.f32 %v1414, %v1481
        %v1527 = vadd.f32 %v1415, %v1486
        %v1528 = vadd.f32 %v1416, %v1491
        %v1529 = vadd.f32 %v1417, %v1496
        %v1530 = vadd.f32 %v1418, %v1501
        %v1531 = vadd.f32 %v1419, %v1506
        %v1532 = vadd.f32 %v1420, %v1511
        %v1533 = vadd.f32 %v1421, %v1516
        %v1534 = vsel %vm519, %v1518, 0.0
        %1535 = vadd.xlane.f32.xlu0 %v1534
        %v1536 = vpop.xlane.xlu0 %1535
        %v1537 = vsel %vm519, %v1519, 0.0
        %1538 = vadd.xlane.f32.xlu0 %v1537
        %v1539 = vpop.xlane.xlu0 %1538
        %v1540 = vsel %vm519, %v1520, 0.0
        %1541 = vadd.xlane.f32.xlu0 %v1540
        %v1542 = vpop.xlane.xlu0 %1541
        %v1543 = vsel %vm519, %v1521, 0.0
        %1544 = vadd.xlane.f32.xlu0 %v1543
        %v1545 = vpop.xlane.xlu0 %1544
        %v1546 = vsel %vm519, %v1522, 0.0
        %1547 = vadd.xlane.f32.xlu0 %v1546
        %v1548 = vpop.xlane.xlu0 %1547
        %v1549 = vsel %vm519, %v1523, 0.0
        %1550 = vadd.xlane.f32.xlu0 %v1549
        %v1551 = vpop.xlane.xlu0 %1550
        %v1552 = vsel %vm519, %v1524, 0.0
        %1553 = vadd.xlane.f32.xlu0 %v1552
        %v1554 = vpop.xlane.xlu0 %1553
        %v1555 = vsel %vm519, %v1525, 0.0
        %1556 = vadd.xlane.f32.xlu0 %v1555
        %v1557 = vpop.xlane.xlu0 %1556
        %v1558 = vsel %vm519, %v1526, 0.0
        %1559 = vadd.xlane.f32.xlu0 %v1558
        %v1560 = vpop.xlane.xlu0 %1559
        %v1561 = vsel %vm519, %v1527, 0.0
        %1562 = vadd.xlane.f32.xlu0 %v1561
        %v1563 = vpop.xlane.xlu0 %1562
        %v1564 = vsel %vm519, %v1528, 0.0
        %1565 = vadd.xlane.f32.xlu0 %v1564
        %v1566 = vpop.xlane.xlu0 %1565
        %v1567 = vsel %vm519, %v1529, 0.0
        %1568 = vadd.xlane.f32.xlu0 %v1567
        %v1569 = vpop.xlane.xlu0 %1568
        %v1570 = vsel %vm519, %v1530, 0.0
        %1571 = vadd.xlane.f32.xlu0 %v1570
        %v1572 = vpop.xlane.xlu0 %1571
        %v1573 = vsel %vm519, %v1531, 0.0
        %1574 = vadd.xlane.f32.xlu0 %v1573
        %v1575 = vpop.xlane.xlu0 %1574
        %v1576 = vsel %vm519, %v1532, 0.0
        %1577 = vadd.xlane.f32.xlu0 %v1576
        %v1578 = vpop.xlane.xlu0 %1577
        %v1579 = vsel %vm519, %v1533, 0.0
        %1580 = vadd.xlane.f32.xlu0 %v1579
        %v1581 = vpop.xlane.xlu0 %1580
        %v1582 = vmul.f32 %v1536, %v691
        %v1583 = vmul.f32 %v1539, %v691
        %v1584 = vmul.f32 %v1542, %v691
        %v1585 = vmul.f32 %v1545, %v691
        %v1586 = vmul.f32 %v1548, %v691
        %v1587 = vmul.f32 %v1551, %v691
        %v1588 = vmul.f32 %v1554, %v691
        %v1589 = vmul.f32 %v1557, %v691
        %v1590 = vmul.f32 %v1560, %v691
        %v1591 = vmul.f32 %v1563, %v691
        %v1592 = vmul.f32 %v1566, %v691
        %v1593 = vmul.f32 %v1569, %v691
        %v1594 = vmul.f32 %v1572, %v691
        %v1595 = vmul.f32 %v1575, %v691
        %v1596 = vmul.f32 %v1578, %v691
        %v1597 = vmul.f32 %v1581, %v691
        %v1598 = vsub.f32 %v1518, %v1582
        %v1599 = vsub.f32 %v1519, %v1583
        %v1600 = vsub.f32 %v1520, %v1584
        %v1601 = vsub.f32 %v1521, %v1585
        %v1602 = vsub.f32 %v1522, %v1586
        %v1603 = vsub.f32 %v1523, %v1587
        %v1604 = vsub.f32 %v1524, %v1588
        %v1605 = vsub.f32 %v1525, %v1589
        %v1606 = vsub.f32 %v1526, %v1590
        %v1607 = vsub.f32 %v1527, %v1591
        %v1608 = vsub.f32 %v1528, %v1592
        %v1609 = vsub.f32 %v1529, %v1593
        %v1610 = vsub.f32 %v1530, %v1594
        %v1611 = vsub.f32 %v1531, %v1595
        %v1612 = vsub.f32 %v1532, %v1596
        %v1613 = vsub.f32 %v1533, %v1597
        %v1614 = vmul.f32 %v1598, %v1598
        %v1615 = vmul.f32 %v1599, %v1599
        %v1616 = vmul.f32 %v1600, %v1600
        %v1617 = vmul.f32 %v1601, %v1601
        %v1618 = vmul.f32 %v1602, %v1602
        %v1619 = vmul.f32 %v1603, %v1603
        %v1620 = vmul.f32 %v1604, %v1604
        %v1621 = vmul.f32 %v1605, %v1605
        %v1622 = vmul.f32 %v1606, %v1606
        %v1623 = vmul.f32 %v1607, %v1607
        %v1624 = vmul.f32 %v1608, %v1608
        %v1625 = vmul.f32 %v1609, %v1609
        %v1626 = vmul.f32 %v1610, %v1610
        %v1627 = vmul.f32 %v1611, %v1611
        %v1628 = vmul.f32 %v1612, %v1612
        %v1629 = vmul.f32 %v1613, %v1613
        %v1630 = vsel %vm519, %v1614, 0.0
        %1631 = vadd.xlane.f32.xlu0 %v1630
        %v1632 = vpop.xlane.xlu0 %1631
        %v1633 = vsel %vm519, %v1615, 0.0
        %1634 = vadd.xlane.f32.xlu0 %v1633
        %v1635 = vpop.xlane.xlu0 %1634
        %v1636 = vsel %vm519, %v1616, 0.0
        %1637 = vadd.xlane.f32.xlu0 %v1636
        %v1638 = vpop.xlane.xlu0 %1637
        %v1639 = vsel %vm519, %v1617, 0.0
        %1640 = vadd.xlane.f32.xlu0 %v1639
        %v1641 = vpop.xlane.xlu0 %1640
        %v1642 = vsel %vm519, %v1618, 0.0
        %1643 = vadd.xlane.f32.xlu0 %v1642
        %v1644 = vpop.xlane.xlu0 %1643
        %v1645 = vsel %vm519, %v1619, 0.0
        %1646 = vadd.xlane.f32.xlu0 %v1645
        %v1647 = vpop.xlane.xlu0 %1646
        %v1648 = vsel %vm519, %v1620, 0.0
        %1649 = vadd.xlane.f32.xlu0 %v1648
        %v1650 = vpop.xlane.xlu0 %1649
        %v1651 = vsel %vm519, %v1621, 0.0
        %1652 = vadd.xlane.f32.xlu0 %v1651
        %v1653 = vpop.xlane.xlu0 %1652
        %v1654 = vsel %vm519, %v1622, 0.0
        %1655 = vadd.xlane.f32.xlu0 %v1654
        %v1656 = vpop.xlane.xlu0 %1655
        %v1657 = vsel %vm519, %v1623, 0.0
        %1658 = vadd.xlane.f32.xlu0 %v1657
        %v1659 = vpop.xlane.xlu0 %1658
        %v1660 = vsel %vm519, %v1624, 0.0
        %1661 = vadd.xlane.f32.xlu0 %v1660
        %v1662 = vpop.xlane.xlu0 %1661
        %v1663 = vsel %vm519, %v1625, 0.0
        %1664 = vadd.xlane.f32.xlu0 %v1663
        %v1665 = vpop.xlane.xlu0 %1664
        %v1666 = vsel %vm519, %v1626, 0.0
        %1667 = vadd.xlane.f32.xlu0 %v1666
        %v1668 = vpop.xlane.xlu0 %1667
        %v1669 = vsel %vm519, %v1627, 0.0
        %1670 = vadd.xlane.f32.xlu0 %v1669
        %v1671 = vpop.xlane.xlu0 %1670
        %v1672 = vsel %vm519, %v1628, 0.0
        %1673 = vadd.xlane.f32.xlu0 %v1672
        %v1674 = vpop.xlane.xlu0 %1673
        %v1675 = vsel %vm519, %v1629, 0.0
        %1676 = vadd.xlane.f32.xlu0 %v1675
        %v1677 = vpop.xlane.xlu0 %1676
        %v1678 = vmul.f32 %v1632, %v691
        %v1679 = vmul.f32 %v1635, %v691
        %v1680 = vmul.f32 %v1638, %v691
        %v1681 = vmul.f32 %v1641, %v691
        %v1682 = vmul.f32 %v1644, %v691
        %v1683 = vmul.f32 %v1647, %v691
        %v1684 = vmul.f32 %v1650, %v691
        %v1685 = vmul.f32 %v1653, %v691
        %v1686 = vmul.f32 %v1656, %v691
        %v1687 = vmul.f32 %v1659, %v691
        %v1688 = vmul.f32 %v1662, %v691
        %v1689 = vmul.f32 %v1665, %v691
        %v1690 = vmul.f32 %v1668, %v691
        %v1691 = vmul.f32 %v1671, %v691
        %v1692 = vmul.f32 %v1674, %v691
        %v1693 = vmul.f32 %v1677, %v691
        %v1694 = vadd.f32 %v1678, 1e-05
        %v1695 = vadd.f32 %v1679, 1e-05
        %v1696 = vadd.f32 %v1680, 1e-05
        %v1697 = vadd.f32 %v1681, 1e-05
        %v1698 = vadd.f32 %v1682, 1e-05
        %v1699 = vadd.f32 %v1683, 1e-05
        %v1700 = vadd.f32 %v1684, 1e-05
        %v1701 = vadd.f32 %v1685, 1e-05
        %v1702 = vadd.f32 %v1686, 1e-05
        %v1703 = vadd.f32 %v1687, 1e-05
        %v1704 = vadd.f32 %v1688, 1e-05
        %v1705 = vadd.f32 %v1689, 1e-05
        %v1706 = vadd.f32 %v1690, 1e-05
        %v1707 = vadd.f32 %v1691, 1e-05
        %v1708 = vadd.f32 %v1692, 1e-05
        %v1709 = vadd.f32 %v1693, 1e-05
        %v1710 = vrsqrt.pop %v1694
        %v1711 = vrsqrt.pop %v1695
        %v1712 = vrsqrt.pop %v1696
        %v1713 = vrsqrt.pop %v1697
        %v1714 = vrsqrt.pop %v1698
        %v1715 = vrsqrt.pop %v1699
        %v1716 = vrsqrt.pop %v1700
        %v1717 = vrsqrt.pop %v1701
        %v1718 = vrsqrt.pop %v1702
        %v1719 = vrsqrt.pop %v1703
        %v1720 = vrsqrt.pop %v1704
        %v1721 = vrsqrt.pop %v1705
        %v1722 = vrsqrt.pop %v1706
        %v1723 = vrsqrt.pop %v1707
        %v1724 = vrsqrt.pop %v1708
        %v1725 = vrsqrt.pop %v1709
        %v1726 = vmul.f32 %v1598, %v1710
        %v1727 = vmul.f32 %v1599, %v1711
        %v1728 = vmul.f32 %v1600, %v1712
        %v1729 = vmul.f32 %v1601, %v1713
        %v1730 = vmul.f32 %v1602, %v1714
        %v1731 = vmul.f32 %v1603, %v1715
        %v1732 = vmul.f32 %v1604, %v1716
        %v1733 = vmul.f32 %v1605, %v1717
        %v1734 = vmul.f32 %v1606, %v1718
        %v1735 = vmul.f32 %v1607, %v1719
        %v1736 = vmul.f32 %v1608, %v1720
        %v1737 = vmul.f32 %v1609, %v1721
        %v1738 = vmul.f32 %v1610, %v1722
        %v1739 = vmul.f32 %v1611, %v1723
        %v1740 = vmul.f32 %v1612, %v1724
        %v1741 = vmul.f32 %v1613, %v1725
        %v1742 = vld [vmem:[%s6] sm:$0xf]
        %v1743 = vld [vmem:[%s6 + $0x4] sm:$0xf]
        %v1744 = vld [vmem:[%s6 + $0x8] sm:$0xf]
        %v1745 = vld [vmem:[%s6 + $0xc] sm:$0xf]
        %v1746 = vpack.c.bf16 %v1727, %v1726
        %v1747 = vpack.c.bf16 %v1729, %v1728
        %v1748 = vpack.c.bf16 %v1731, %v1730
        %v1749 = vpack.c.bf16 %v1733, %v1732
        %v1750 = vpack.c.bf16 %v1735, %v1734
        %v1751 = vpack.c.bf16 %v1737, %v1736
        %v1752 = vpack.c.bf16 %v1739, %v1738
        %v1753 = vpack.c.bf16 %v1741, %v1740
        %v1754 = vld [vmem:[%s9] sm:$0x1]
        %v1755 = vlaneseq
        %v1756 = vshrl.u32 %v1755, 7
        %v1757 = vsub.s32 0, %v1756
        %v1758 = vrot.slane %v1754, %v1757
        %v1763 = vunpack.c.l.b16 %v1742
        %v1764 = vunpack.c.l.b16 %v1743
        %v1765 = vunpack.c.l.b16 %v1744
        %v1766 = vunpack.c.l.b16 %v1745
        %v1767 = vpack.c.b16 %v1764, %v1763
        %v1768 = vpack.c.b16 %v1766, %v1765
        %v1772 = vsel %vm519, %v1746, 0
        %v1775 = vsel %vm519, %v1747, 0
        %v1778 = vsel %vm519, %v1748, 0
        %v1781 = vsel %vm519, %v1749, 0
        %v1784 = vsel %vm519, %v1750, 0
        %v1787 = vsel %vm519, %v1751, 0
        %v1790 = vsel %vm519, %v1752, 0
        %v1793 = vsel %vm519, %v1753, 0
        %1795 = vmatprep.subr.bf16.mxu0 0
        %1796 = vmatpush1.bf16.msra.mxu0 %v1767
        %1797 = vmatprep.subr.bf16.mxu0 0
        %1798 = vmatpush1.bf16.msra.mxu0 %v1768
        %1799 = vmatprep.subr.bf16.mxu0 0
        %1800 = vmatpush1.bf16.msra.mxu0 0
        %1801 = vmatprep.subr.bf16.mxu0 0
        %1802 = vmatpush1.bf16.msra.mxu0 0
        %1803 = vmatprep.subr.bf16.mxu0 0
        %1804 = vmatpush1.bf16.msra.mxu0 0
        %1805 = vmatprep.subr.bf16.mxu0 0
        %1806 = vmatpush1.bf16.msra.mxu0 0
        %1807 = vmatprep.subr.bf16.mxu0 0
        %1808 = vmatpush1.bf16.msra.mxu0 0
        %1809 = vmatprep.subr.bf16.mxu0 0
        %1810 = vmatpush1.bf16.msra.mxu0 0
        %1811 = vmatprep.subr.bf16.mxu0 0
        %1812 = vmatpush1.bf16.msra.mxu0 0
        %1813 = vmatprep.subr.bf16.mxu0 0
        %1814 = vmatpush1.bf16.msra.mxu0 0
        %1815 = vmatprep.subr.bf16.mxu0 0
        %1816 = vmatpush1.bf16.msra.mxu0 0
        %1817 = vmatprep.subr.bf16.mxu0 0
        %1818 = vmatpush1.bf16.msra.mxu0 0
        %1819 = vmatprep.subr.bf16.mxu0 0
        %1820 = vmatpush1.bf16.msra.mxu0 0
        %1821 = vmatprep.subr.bf16.mxu0 0
        %1822 = vmatpush1.bf16.msra.mxu0 0
        %1823 = vmatprep.subr.bf16.mxu0 0
        %1824 = vmatpush1.bf16.msra.mxu0 0
        %1825 = vmatprep.subr.bf16.mxu0 0
        %1826 = vmatpush1.bf16.msra.mxu0 0
        %1827 = vmatprep.mubr.bf16.mxu0 0
        %1828 = vmatmul.mubr.bf16.gmra.mrb[0].mxu0 %v1772
        %v1829 = vpop.f32.mrb[0].mxu0
        %v1830 = vadd.f32 %v1758, %v1829
        %v1831 = vpop.f32.mrb[0].mxu0
        %v1832 = vpop.f32.mrb[0].mxu0
        %v1833 = vadd.f32 %v1758, %v1832
        %v1834 = vpop.f32.mrb[0].mxu0
        %1835 = vmatprep.mubr.bf16.mxu0 0
        %1836 = vmatmul.mubr.bf16.gmra.mrb[0].mxu0 %v1775
        %v1837 = vpop.f32.mrb[0].mxu0
        %v1838 = vadd.f32 %v1758, %v1837
        %v1839 = vpop.f32.mrb[0].mxu0
        %v1840 = vpop.f32.mrb[0].mxu0
        %v1841 = vadd.f32 %v1758, %v1840
        %v1842 = vpop.f32.mrb[0].mxu0
        %1843 = vmatprep.mubr.bf16.mxu0 0
        %1844 = vmatmul.mubr.bf16.gmra.mrb[0].mxu0 %v1778
        %v1845 = vpop.f32.mrb[0].mxu0
        %v1846 = vadd.f32 %v1758, %v1845
        %v1847 = vpop.f32.mrb[0].mxu0
        %v1848 = vpop.f32.mrb[0].mxu0
        %v1849 = vadd.f32 %v1758, %v1848
        %v1850 = vpop.f32.mrb[0].mxu0
        %1851 = vmatprep.mubr.bf16.mxu0 0
        %1852 = vmatmul.mubr.bf16.gmra.mrb[0].mxu0 %v1781
        %v1853 = vpop.f32.mrb[0].mxu0
        %v1854 = vadd.f32 %v1758, %v1853
        %v1855 = vpop.f32.mrb[0].mxu0
        %v1856 = vpop.f32.mrb[0].mxu0
        %v1857 = vadd.f32 %v1758, %v1856
        %v1858 = vpop.f32.mrb[0].mxu0
        %1859 = vmatprep.mubr.bf16.mxu0 0
        %1860 = vmatmul.mubr.bf16.gmra.mrb[0].mxu0 %v1784
        %v1861 = vpop.f32.mrb[0].mxu0
        %v1862 = vadd.f32 %v1758, %v1861
        %v1863 = vpop.f32.mrb[0].mxu0
        %v1864 = vpop.f32.mrb[0].mxu0
        %v1865 = vadd.f32 %v1758, %v1864
        %v1866 = vpop.f32.mrb[0].mxu0
        %1867 = vmatprep.mubr.bf16.mxu0 0
        %1868 = vmatmul.mubr.bf16.gmra.mrb[0].mxu0 %v1787
        %v1869 = vpop.f32.mrb[0].mxu0
        %v1870 = vadd.f32 %v1758, %v1869
        %v1871 = vpop.f32.mrb[0].mxu0
        %v1872 = vpop.f32.mrb[0].mxu0
        %v1873 = vadd.f32 %v1758, %v1872
        %v1874 = vpop.f32.mrb[0].mxu0
        %1875 = vmatprep.mubr.bf16.mxu0 0
        %1876 = vmatmul.mubr.bf16.gmra.mrb[0].mxu0 %v1790
        %v1877 = vpop.f32.mrb[0].mxu0
        %v1878 = vadd.f32 %v1758, %v1877
        %v1879 = vpop.f32.mrb[0].mxu0
        %v1880 = vpop.f32.mrb[0].mxu0
        %v1881 = vadd.f32 %v1758, %v1880
        %v1882 = vpop.f32.mrb[0].mxu0
        %1883 = vmatprep.mubr.bf16.mxu0 0
        %1884 = vmatmul.mubr.bf16.gmra.mrb[0].mxu0 %v1793
        %v1885 = vpop.f32.mrb[0].mxu0
        %v1886 = vadd.f32 %v1758, %v1885
        %v1887 = vpop.f32.mrb[0].mxu0
        %v1888 = vpop.f32.mrb[0].mxu0
        %v1889 = vadd.f32 %v1758, %v1888
        %v1890 = vpop.f32.mrb[0].mxu0
        %1891 = vdwg.mxu0
        %v1892 = vmul.f32 %v1830, 0.5
        %v1893 = vmul.f32 %v1833, 0.5
        %v1894 = vmul.f32 %v1838, 0.5
        %v1895 = vmul.f32 %v1841, 0.5
        %v1896 = vmul.f32 %v1846, 0.5
        %v1897 = vmul.f32 %v1849, 0.5
        %v1898 = vmul.f32 %v1854, 0.5
        %v1899 = vmul.f32 %v1857, 0.5
        %v1900 = vmul.f32 %v1862, 0.5
        %v1901 = vmul.f32 %v1865, 0.5
        %v1902 = vmul.f32 %v1870, 0.5
        %v1903 = vmul.f32 %v1873, 0.5
        %v1904 = vmul.f32 %v1878, 0.5
        %v1905 = vmul.f32 %v1881, 0.5
        %v1906 = vmul.f32 %v1886, 0.5
        %v1907 = vmul.f32 %v1889, 0.5
        %v1908 = vmul.f32 %v1830, 0.70710677
        %v1909 = vmul.f32 %v1833, 0.70710677
        %v1910 = vmul.f32 %v1838, 0.70710677
        %v1911 = vmul.f32 %v1841, 0.70710677
        %v1912 = vmul.f32 %v1846, 0.70710677
        %v1913 = vmul.f32 %v1849, 0.70710677
        %v1914 = vmul.f32 %v1854, 0.70710677
        %v1915 = vmul.f32 %v1857, 0.70710677
        %v1916 = vmul.f32 %v1862, 0.70710677
        %v1917 = vmul.f32 %v1865, 0.70710677
        %v1918 = vmul.f32 %v1870, 0.70710677
        %v1919 = vmul.f32 %v1873, 0.70710677
        %v1920 = vmul.f32 %v1878, 0.70710677
        %v1921 = vmul.f32 %v1881, 0.70710677
        %v1922 = vmul.f32 %v1886, 0.70710677
        %v1923 = vmul.f32 %v1889, 0.70710677
        %v1924 = verf.f32.pop %v1908
        %v1925 = verf.f32.pop %v1909
        %v1926 = verf.f32.pop %v1910
        %v1927 = verf.f32.pop %v1911
        %v1928 = verf.f32.pop %v1912
        %v1929 = verf.f32.pop %v1913
        %v1930 = verf.f32.pop %v1914
        %v1931 = verf.f32.pop %v1915
        %v1932 = verf.f32.pop %v1916
        %v1933 = verf.f32.pop %v1917
        %v1934 = verf.f32.pop %v1918
        %v1935 = verf.f32.pop %v1919
        %v1936 = verf.f32.pop %v1920
        %v1937 = verf.f32.pop %v1921
        %v1938 = verf.f32.pop %v1922
        %v1939 = verf.f32.pop %v1923
        %v1940 = vadd.f32 %v1924, 1.0
        %v1941 = vadd.f32 %v1925, 1.0
        %v1942 = vadd.f32 %v1926, 1.0
        %v1943 = vadd.f32 %v1927, 1.0
        %v1944 = vadd.f32 %v1928, 1.0
        %v1945 = vadd.f32 %v1929, 1.0
        %v1946 = vadd.f32 %v1930, 1.0
        %v1947 = vadd.f32 %v1931, 1.0
        %v1948 = vadd.f32 %v1932, 1.0
        %v1949 = vadd.f32 %v1933, 1.0
        %v1950 = vadd.f32 %v1934, 1.0
        %v1951 = vadd.f32 %v1935, 1.0
        %v1952 = vadd.f32 %v1936, 1.0
        %v1953 = vadd.f32 %v1937, 1.0
        %v1954 = vadd.f32 %v1938, 1.0
        %v1955 = vadd.f32 %v1939, 1.0
        %v1956 = vmul.f32 %v1892, %v1940
        %v1957 = vmul.f32 %v1893, %v1941
        %v1958 = vmul.f32 %v1894, %v1942
        %v1959 = vmul.f32 %v1895, %v1943
        %v1960 = vmul.f32 %v1896, %v1944
        %v1961 = vmul.f32 %v1897, %v1945
        %v1962 = vmul.f32 %v1898, %v1946
        %v1963 = vmul.f32 %v1899, %v1947
        %v1964 = vmul.f32 %v1900, %v1948
        %v1965 = vmul.f32 %v1901, %v1949
        %v1966 = vmul.f32 %v1902, %v1950
        %v1967 = vmul.f32 %v1903, %v1951
        %v1968 = vmul.f32 %v1904, %v1952
        %v1969 = vmul.f32 %v1905, %v1953
        %v1970 = vmul.f32 %v1906, %v1954
        %v1971 = vmul.f32 %v1907, %v1955
        %v1972 = vld [vmem:[%s7] sm:$0xf]
        %v1973 = vld [vmem:[%s7 + $0x4] sm:$0xf]
        %v1974 = vld [vmem:[%s7 + $0x8] sm:$0xf]
        %v1975 = vld [vmem:[%s7 + $0xc] sm:$0xf]
        %v1976 = vld [vmem:[%s7 + $0x10] sm:$0xf]
        %v1977 = vld [vmem:[%s7 + $0x14] sm:$0xf]
        %v1978 = vld [vmem:[%s7 + $0x18] sm:$0xf]
        %v1979 = vld [vmem:[%s7 + $0x1c] sm:$0xf]
        %v1980 = vpack.c.bf16 %v1957, %v1956
        %v1981 = vpack.c.bf16 %v1959, %v1958
        %v1982 = vpack.c.bf16 %v1961, %v1960
        %v1983 = vpack.c.bf16 %v1963, %v1962
        %v1984 = vpack.c.bf16 %v1965, %v1964
        %v1985 = vpack.c.bf16 %v1967, %v1966
        %v1986 = vpack.c.bf16 %v1969, %v1968
        %v1987 = vpack.c.bf16 %v1971, %v1970
        %v1996 = vunpack.c.l.b16 %v1972
        %v1997 = vunpack.c.l.b16 %v1973
        %v1998 = vunpack.c.l.b16 %v1974
        %v1999 = vunpack.c.l.b16 %v1975
        %v2000 = vunpack.c.l.b16 %v1976
        %v2001 = vunpack.c.l.b16 %v1977
        %v2002 = vunpack.c.l.b16 %v1978
        %v2003 = vunpack.c.l.b16 %v1979
        %v2004 = vpack.c.b16 %v1997, %v1996
        %v2005 = vpack.c.b16 %v1999, %v1998
        %v2006 = vpack.c.b16 %v2001, %v2000
        %v2007 = vpack.c.b16 %v2003, %v2002
        %vm2012 = vcmask 523264
        %v2014 = vsel %vm2012, %v1980, 0
        %v2017 = vsel %vm2012, %v1981, 0
        %v2020 = vsel %vm2012, %v1982, 0
        %v2023 = vsel %vm2012, %v1983, 0
        %v2026 = vsel %vm2012, %v1984, 0
        %v2029 = vsel %vm2012, %v1985, 0
        %v2032 = vsel %vm2012, %v1986, 0
        %v2035 = vsel %vm2012, %v1987, 0
        %2037 = vmatprep.subr.bf16.mxu0 0
        %2038 = vmatpush1.bf16.msra.mxu0 %v2004
        %2039 = vmatprep.subr.bf16.mxu0 0
        %2040 = vmatpush1.bf16.msra.mxu0 %v2005
        %2041 = vmatprep.subr.bf16.mxu0 0
        %2042 = vmatpush1.bf16.msra.mxu0 %v2006
        %2043 = vmatprep.subr.bf16.mxu0 0
        %2044 = vmatpush1.bf16.msra.mxu0 %v2007
        %2045 = vmatprep.subr.bf16.mxu0 0
        %2046 = vmatpush1.bf16.msra.mxu0 0
        %2047 = vmatprep.subr.bf16.mxu0 0
        %2048 = vmatpush1.bf16.msra.mxu0 0
        %2049 = vmatprep.subr.bf16.mxu0 0
        %2050 = vmatpush1.bf16.msra.mxu0 0
        %2051 = vmatprep.subr.bf16.mxu0 0
        %2052 = vmatpush1.bf16.msra.mxu0 0
        %2053 = vmatprep.subr.bf16.mxu0 0
        %2054 = vmatpush1.bf16.msra.mxu0 0
        %2055 = vmatprep.subr.bf16.mxu0 0
        %2056 = vmatpush1.bf16.msra.mxu0 0
        %2057 = vmatprep.subr.bf16.mxu0 0
        %2058 = vmatpush1.bf16.msra.mxu0 0
        %2059 = vmatprep.subr.bf16.mxu0 0
        %2060 = vmatpush1.bf16.msra.mxu0 0
        %2061 = vmatprep.subr.bf16.mxu0 0
        %2062 = vmatpush1.bf16.msra.mxu0 0
        %2063 = vmatprep.subr.bf16.mxu0 0
        %2064 = vmatpush1.bf16.msra.mxu0 0
        %2065 = vmatprep.subr.bf16.mxu0 0
        %2066 = vmatpush1.bf16.msra.mxu0 0
        %2067 = vmatprep.subr.bf16.mxu0 0
        %2068 = vmatpush1.bf16.msra.mxu0 0
        %2069 = vmatprep.mubr.bf16.mxu0 0
        %2070 = vmatmul.mubr.bf16.gmra.mrb[0].mxu0 %v2014
        %v2071 = vpop.f32.mrb[0].mxu0
        %v2072 = vadd.f32 0.0, %v2071
        %v2073 = vpop.f32.mrb[0].mxu0
        %v2074 = vpop.f32.mrb[0].mxu0
        %v2075 = vadd.f32 0.0, %v2074
        %v2076 = vpop.f32.mrb[0].mxu0
        %2077 = vmatprep.mubr.bf16.mxu0 0
        %2078 = vmatmul.mubr.bf16.gmra.mrb[0].mxu0 %v2017
        %v2079 = vpop.f32.mrb[0].mxu0
        %v2080 = vadd.f32 0.0, %v2079
        %v2081 = vpop.f32.mrb[0].mxu0
        %v2082 = vpop.f32.mrb[0].mxu0
        %v2083 = vadd.f32 0.0, %v2082
        %v2084 = vpop.f32.mrb[0].mxu0
        %2085 = vmatprep.mubr.bf16.mxu0 0
        %2086 = vmatmul.mubr.bf16.gmra.mrb[0].mxu0 %v2020
        %v2087 = vpop.f32.mrb[0].mxu0
        %v2088 = vadd.f32 0.0, %v2087
        %v2089 = vpop.f32.mrb[0].mxu0
        %v2090 = vpop.f32.mrb[0].mxu0
        %v2091 = vadd.f32 0.0, %v2090
        %v2092 = vpop.f32.mrb[0].mxu0
        %2093 = vmatprep.mubr.bf16.mxu0 0
        %2094 = vmatmul.mubr.bf16.gmra.mrb[0].mxu0 %v2023
        %v2095 = vpop.f32.mrb[0].mxu0
        %v2096 = vadd.f32 0.0, %v2095
        %v2097 = vpop.f32.mrb[0].mxu0
        %v2098 = vpop.f32.mrb[0].mxu0
        %v2099 = vadd.f32 0.0, %v2098
        %v2100 = vpop.f32.mrb[0].mxu0
        %2101 = vmatprep.mubr.bf16.mxu0 0
        %2102 = vmatmul.mubr.bf16.gmra.mrb[0].mxu0 %v2026
        %v2103 = vpop.f32.mrb[0].mxu0
        %v2104 = vadd.f32 0.0, %v2103
        %v2105 = vpop.f32.mrb[0].mxu0
        %v2106 = vpop.f32.mrb[0].mxu0
        %v2107 = vadd.f32 0.0, %v2106
        %v2108 = vpop.f32.mrb[0].mxu0
        %2109 = vmatprep.mubr.bf16.mxu0 0
        %2110 = vmatmul.mubr.bf16.gmra.mrb[0].mxu0 %v2029
        %v2111 = vpop.f32.mrb[0].mxu0
        %v2112 = vadd.f32 0.0, %v2111
        %v2113 = vpop.f32.mrb[0].mxu0
        %v2114 = vpop.f32.mrb[0].mxu0
        %v2115 = vadd.f32 0.0, %v2114
        %v2116 = vpop.f32.mrb[0].mxu0
        %2117 = vmatprep.mubr.bf16.mxu0 0
        %2118 = vmatmul.mubr.bf16.gmra.mrb[0].mxu0 %v2032
        %v2119 = vpop.f32.mrb[0].mxu0
        %v2120 = vadd.f32 0.0, %v2119
        %v2121 = vpop.f32.mrb[0].mxu0
        %v2122 = vpop.f32.mrb[0].mxu0
        %v2123 = vadd.f32 0.0, %v2122
        %v2124 = vpop.f32.mrb[0].mxu0
        %2125 = vmatprep.mubr.bf16.mxu0 0
        %2126 = vmatmul.mubr.bf16.gmra.mrb[0].mxu0 %v2035
        %v2127 = vpop.f32.mrb[0].mxu0
        %v2128 = vadd.f32 0.0, %v2127
        %v2129 = vpop.f32.mrb[0].mxu0
        %v2130 = vpop.f32.mrb[0].mxu0
        %v2131 = vadd.f32 0.0, %v2130
        %v2132 = vpop.f32.mrb[0].mxu0
        %2133 = vdwg.mxu0
        %v2134 = vadd.f32 %v1518, %v2072
        %v2135 = vadd.f32 %v1519, %v2075
        %v2136 = vadd.f32 %v1520, %v2080
        %v2137 = vadd.f32 %v1521, %v2083
        %v2138 = vadd.f32 %v1522, %v2088
        %v2139 = vadd.f32 %v1523, %v2091
        %v2140 = vadd.f32 %v1524, %v2096
        %v2141 = vadd.f32 %v1525, %v2099
        %v2142 = vadd.f32 %v1526, %v2104
        %v2143 = vadd.f32 %v1527, %v2107
        %v2144 = vadd.f32 %v1528, %v2112
        %v2145 = vadd.f32 %v1529, %v2115
        %v2146 = vadd.f32 %v1530, %v2120
        %v2147 = vadd.f32 %v1531, %v2123
        %v2148 = vadd.f32 %v1532, %v2128
        %v2149 = vadd.f32 %v1533, %v2131
        %v2150 = vld [vmem:[%s8 + $0x3] sm:$0x1]
        %v2151 = vlaneseq
        %v2152 = vshrl.u32 %v2151, 7
        %v2153 = vsub.s32 0, %v2152
        %v2154 = vrot.slane %v2150, %v2153
        %v2155 = vadd.f32 %v2134, %v2154
        %v2156 = vadd.f32 %v2135, %v2154
        %v2157 = vadd.f32 %v2136, %v2154
        %v2158 = vadd.f32 %v2137, %v2154
        %v2159 = vadd.f32 %v2138, %v2154
        %v2160 = vadd.f32 %v2139, %v2154
        %v2161 = vadd.f32 %v2140, %v2154
        %v2162 = vadd.f32 %v2141, %v2154
        %v2163 = vadd.f32 %v2142, %v2154
        %v2164 = vadd.f32 %v2143, %v2154
        %v2165 = vadd.f32 %v2144, %v2154
        %v2166 = vadd.f32 %v2145, %v2154
        %v2167 = vadd.f32 %v2146, %v2154
        %v2168 = vadd.f32 %v2147, %v2154
        %v2169 = vadd.f32 %v2148, %v2154
        %v2170 = vadd.f32 %v2149, %v2154
        %v2171 = vld [vmem:[%s8 + $0x4] sm:$0x1]
        %v2172 = vld [vmem:[%s8 + $0x5] sm:$0x1]
        %v2173 = vsel %vm519, %v2155, 0.0
        %2174 = vadd.xlane.f32.xlu0 %v2173
        %v2175 = vpop.xlane.xlu0 %2174
        %v2176 = vsel %vm519, %v2156, 0.0
        %2177 = vadd.xlane.f32.xlu0 %v2176
        %v2178 = vpop.xlane.xlu0 %2177
        %v2179 = vsel %vm519, %v2157, 0.0
        %2180 = vadd.xlane.f32.xlu0 %v2179
        %v2181 = vpop.xlane.xlu0 %2180
        %v2182 = vsel %vm519, %v2158, 0.0
        %2183 = vadd.xlane.f32.xlu0 %v2182
        %v2184 = vpop.xlane.xlu0 %2183
        %v2185 = vsel %vm519, %v2159, 0.0
        %2186 = vadd.xlane.f32.xlu0 %v2185
        %v2187 = vpop.xlane.xlu0 %2186
        %v2188 = vsel %vm519, %v2160, 0.0
        %2189 = vadd.xlane.f32.xlu0 %v2188
        %v2190 = vpop.xlane.xlu0 %2189
        %v2191 = vsel %vm519, %v2161, 0.0
        %2192 = vadd.xlane.f32.xlu0 %v2191
        %v2193 = vpop.xlane.xlu0 %2192
        %v2194 = vsel %vm519, %v2162, 0.0
        %2195 = vadd.xlane.f32.xlu0 %v2194
        %v2196 = vpop.xlane.xlu0 %2195
        %v2197 = vsel %vm519, %v2163, 0.0
        %2198 = vadd.xlane.f32.xlu0 %v2197
        %v2199 = vpop.xlane.xlu0 %2198
        %v2200 = vsel %vm519, %v2164, 0.0
        %2201 = vadd.xlane.f32.xlu0 %v2200
        %v2202 = vpop.xlane.xlu0 %2201
        %v2203 = vsel %vm519, %v2165, 0.0
        %2204 = vadd.xlane.f32.xlu0 %v2203
        %v2205 = vpop.xlane.xlu0 %2204
        %v2206 = vsel %vm519, %v2166, 0.0
        %2207 = vadd.xlane.f32.xlu0 %v2206
        %v2208 = vpop.xlane.xlu0 %2207
        %v2209 = vsel %vm519, %v2167, 0.0
        %2210 = vadd.xlane.f32.xlu0 %v2209
        %v2211 = vpop.xlane.xlu0 %2210
        %v2212 = vsel %vm519, %v2168, 0.0
        %2213 = vadd.xlane.f32.xlu0 %v2212
        %v2214 = vpop.xlane.xlu0 %2213
        %v2215 = vsel %vm519, %v2169, 0.0
        %2216 = vadd.xlane.f32.xlu0 %v2215
        %v2217 = vpop.xlane.xlu0 %2216
        %v2218 = vsel %vm519, %v2170, 0.0
        %2219 = vadd.xlane.f32.xlu0 %v2218
        %v2220 = vpop.xlane.xlu0 %2219
        %v2221 = vmul.f32 %v2175, %v691
        %v2222 = vmul.f32 %v2178, %v691
        %v2223 = vmul.f32 %v2181, %v691
        %v2224 = vmul.f32 %v2184, %v691
        %v2225 = vmul.f32 %v2187, %v691
        %v2226 = vmul.f32 %v2190, %v691
        %v2227 = vmul.f32 %v2193, %v691
        %v2228 = vmul.f32 %v2196, %v691
        %v2229 = vmul.f32 %v2199, %v691
        %v2230 = vmul.f32 %v2202, %v691
        %v2231 = vmul.f32 %v2205, %v691
        %v2232 = vmul.f32 %v2208, %v691
        %v2233 = vmul.f32 %v2211, %v691
        %v2234 = vmul.f32 %v2214, %v691
        %v2235 = vmul.f32 %v2217, %v691
        %v2236 = vmul.f32 %v2220, %v691
        %v2237 = vsub.f32 %v2155, %v2221
        %v2238 = vsub.f32 %v2156, %v2222
        %v2239 = vsub.f32 %v2157, %v2223
        %v2240 = vsub.f32 %v2158, %v2224
        %v2241 = vsub.f32 %v2159, %v2225
        %v2242 = vsub.f32 %v2160, %v2226
        %v2243 = vsub.f32 %v2161, %v2227
        %v2244 = vsub.f32 %v2162, %v2228
        %v2245 = vsub.f32 %v2163, %v2229
        %v2246 = vsub.f32 %v2164, %v2230
        %v2247 = vsub.f32 %v2165, %v2231
        %v2248 = vsub.f32 %v2166, %v2232
        %v2249 = vsub.f32 %v2167, %v2233
        %v2250 = vsub.f32 %v2168, %v2234
        %v2251 = vsub.f32 %v2169, %v2235
        %v2252 = vsub.f32 %v2170, %v2236
        %v2253 = vmul.f32 %v2237, %v2237
        %v2254 = vmul.f32 %v2238, %v2238
        %v2255 = vmul.f32 %v2239, %v2239
        %v2256 = vmul.f32 %v2240, %v2240
        %v2257 = vmul.f32 %v2241, %v2241
        %v2258 = vmul.f32 %v2242, %v2242
        %v2259 = vmul.f32 %v2243, %v2243
        %v2260 = vmul.f32 %v2244, %v2244
        %v2261 = vmul.f32 %v2245, %v2245
        %v2262 = vmul.f32 %v2246, %v2246
        %v2263 = vmul.f32 %v2247, %v2247
        %v2264 = vmul.f32 %v2248, %v2248
        %v2265 = vmul.f32 %v2249, %v2249
        %v2266 = vmul.f32 %v2250, %v2250
        %v2267 = vmul.f32 %v2251, %v2251
        %v2268 = vmul.f32 %v2252, %v2252
        %v2269 = vsel %vm519, %v2253, 0.0
        %2270 = vadd.xlane.f32.xlu0 %v2269
        %v2271 = vpop.xlane.xlu0 %2270
        %v2272 = vsel %vm519, %v2254, 0.0
        %2273 = vadd.xlane.f32.xlu0 %v2272
        %v2274 = vpop.xlane.xlu0 %2273
        %v2275 = vsel %vm519, %v2255, 0.0
        %2276 = vadd.xlane.f32.xlu0 %v2275
        %v2277 = vpop.xlane.xlu0 %2276
        %v2278 = vsel %vm519, %v2256, 0.0
        %2279 = vadd.xlane.f32.xlu0 %v2278
        %v2280 = vpop.xlane.xlu0 %2279
        %v2281 = vsel %vm519, %v2257, 0.0
        %2282 = vadd.xlane.f32.xlu0 %v2281
        %v2283 = vpop.xlane.xlu0 %2282
        %v2284 = vsel %vm519, %v2258, 0.0
        %2285 = vadd.xlane.f32.xlu0 %v2284
        %v2286 = vpop.xlane.xlu0 %2285
        %v2287 = vsel %vm519, %v2259, 0.0
        %2288 = vadd.xlane.f32.xlu0 %v2287
        %v2289 = vpop.xlane.xlu0 %2288
        %v2290 = vsel %vm519, %v2260, 0.0
        %2291 = vadd.xlane.f32.xlu0 %v2290
        %v2292 = vpop.xlane.xlu0 %2291
        %v2293 = vsel %vm519, %v2261, 0.0
        %2294 = vadd.xlane.f32.xlu0 %v2293
        %v2295 = vpop.xlane.xlu0 %2294
        %v2296 = vsel %vm519, %v2262, 0.0
        %2297 = vadd.xlane.f32.xlu0 %v2296
        %v2298 = vpop.xlane.xlu0 %2297
        %v2299 = vsel %vm519, %v2263, 0.0
        %2300 = vadd.xlane.f32.xlu0 %v2299
        %v2301 = vpop.xlane.xlu0 %2300
        %v2302 = vsel %vm519, %v2264, 0.0
        %2303 = vadd.xlane.f32.xlu0 %v2302
        %v2304 = vpop.xlane.xlu0 %2303
        %v2305 = vsel %vm519, %v2265, 0.0
        %2306 = vadd.xlane.f32.xlu0 %v2305
        %v2307 = vpop.xlane.xlu0 %2306
        %v2308 = vsel %vm519, %v2266, 0.0
        %2309 = vadd.xlane.f32.xlu0 %v2308
        %v2310 = vpop.xlane.xlu0 %2309
        %v2311 = vsel %vm519, %v2267, 0.0
        %2312 = vadd.xlane.f32.xlu0 %v2311
        %v2313 = vpop.xlane.xlu0 %2312
        %v2314 = vsel %vm519, %v2268, 0.0
        %2315 = vadd.xlane.f32.xlu0 %v2314
        %v2316 = vpop.xlane.xlu0 %2315
        %v2317 = vmul.f32 %v2271, %v691
        %v2318 = vmul.f32 %v2274, %v691
        %v2319 = vmul.f32 %v2277, %v691
        %v2320 = vmul.f32 %v2280, %v691
        %v2321 = vmul.f32 %v2283, %v691
        %v2322 = vmul.f32 %v2286, %v691
        %v2323 = vmul.f32 %v2289, %v691
        %v2324 = vmul.f32 %v2292, %v691
        %v2325 = vmul.f32 %v2295, %v691
        %v2326 = vmul.f32 %v2298, %v691
        %v2327 = vmul.f32 %v2301, %v691
        %v2328 = vmul.f32 %v2304, %v691
        %v2329 = vmul.f32 %v2307, %v691
        %v2330 = vmul.f32 %v2310, %v691
        %v2331 = vmul.f32 %v2313, %v691
        %v2332 = vmul.f32 %v2316, %v691
        %v2333 = vadd.f32 %v2317, 1e-05
        %v2334 = vadd.f32 %v2318, 1e-05
        %v2335 = vadd.f32 %v2319, 1e-05
        %v2336 = vadd.f32 %v2320, 1e-05
        %v2337 = vadd.f32 %v2321, 1e-05
        %v2338 = vadd.f32 %v2322, 1e-05
        %v2339 = vadd.f32 %v2323, 1e-05
        %v2340 = vadd.f32 %v2324, 1e-05
        %v2341 = vadd.f32 %v2325, 1e-05
        %v2342 = vadd.f32 %v2326, 1e-05
        %v2343 = vadd.f32 %v2327, 1e-05
        %v2344 = vadd.f32 %v2328, 1e-05
        %v2345 = vadd.f32 %v2329, 1e-05
        %v2346 = vadd.f32 %v2330, 1e-05
        %v2347 = vadd.f32 %v2331, 1e-05
        %v2348 = vadd.f32 %v2332, 1e-05
        %v2349 = vrsqrt.pop %v2333
        %v2350 = vrsqrt.pop %v2334
        %v2351 = vrsqrt.pop %v2335
        %v2352 = vrsqrt.pop %v2336
        %v2353 = vrsqrt.pop %v2337
        %v2354 = vrsqrt.pop %v2338
        %v2355 = vrsqrt.pop %v2339
        %v2356 = vrsqrt.pop %v2340
        %v2357 = vrsqrt.pop %v2341
        %v2358 = vrsqrt.pop %v2342
        %v2359 = vrsqrt.pop %v2343
        %v2360 = vrsqrt.pop %v2344
        %v2361 = vrsqrt.pop %v2345
        %v2362 = vrsqrt.pop %v2346
        %v2363 = vrsqrt.pop %v2347
        %v2364 = vrsqrt.pop %v2348
        %v2365 = vmul.f32 %v2237, %v2349
        %v2366 = vmul.f32 %v2238, %v2350
        %v2367 = vmul.f32 %v2239, %v2351
        %v2368 = vmul.f32 %v2240, %v2352
        %v2369 = vmul.f32 %v2241, %v2353
        %v2370 = vmul.f32 %v2242, %v2354
        %v2371 = vmul.f32 %v2243, %v2355
        %v2372 = vmul.f32 %v2244, %v2356
        %v2373 = vmul.f32 %v2245, %v2357
        %v2374 = vmul.f32 %v2246, %v2358
        %v2375 = vmul.f32 %v2247, %v2359
        %v2376 = vmul.f32 %v2248, %v2360
        %v2377 = vmul.f32 %v2249, %v2361
        %v2378 = vmul.f32 %v2250, %v2362
        %v2379 = vmul.f32 %v2251, %v2363
        %v2380 = vmul.f32 %v2252, %v2364
        %v2381 = vlaneseq
        %v2382 = vshrl.u32 %v2381, 7
        %v2383 = vsub.s32 0, %v2382
        %v2384 = vrot.slane %v2171, %v2383
        %v2385 = vmul.f32 %v2365, %v2384
        %v2386 = vmul.f32 %v2366, %v2384
        %v2387 = vmul.f32 %v2367, %v2384
        %v2388 = vmul.f32 %v2368, %v2384
        %v2389 = vmul.f32 %v2369, %v2384
        %v2390 = vmul.f32 %v2370, %v2384
        %v2391 = vmul.f32 %v2371, %v2384
        %v2392 = vmul.f32 %v2372, %v2384
        %v2393 = vmul.f32 %v2373, %v2384
        %v2394 = vmul.f32 %v2374, %v2384
        %v2395 = vmul.f32 %v2375, %v2384
        %v2396 = vmul.f32 %v2376, %v2384
        %v2397 = vmul.f32 %v2377, %v2384
        %v2398 = vmul.f32 %v2378, %v2384
        %v2399 = vmul.f32 %v2379, %v2384
        %v2400 = vmul.f32 %v2380, %v2384
        %v2401 = vlaneseq
        %v2402 = vshrl.u32 %v2401, 7
        %v2403 = vsub.s32 0, %v2402
        %v2404 = vrot.slane %v2172, %v2403
        %v2405 = vadd.f32 %v2385, %v2404
        %v2406 = vadd.f32 %v2386, %v2404
        %v2407 = vadd.f32 %v2387, %v2404
        %v2408 = vadd.f32 %v2388, %v2404
        %v2409 = vadd.f32 %v2389, %v2404
        %v2410 = vadd.f32 %v2390, %v2404
        %v2411 = vadd.f32 %v2391, %v2404
        %v2412 = vadd.f32 %v2392, %v2404
        %v2413 = vadd.f32 %v2393, %v2404
        %v2414 = vadd.f32 %v2394, %v2404
        %v2415 = vadd.f32 %v2395, %v2404
        %v2416 = vadd.f32 %v2396, %v2404
        %v2417 = vadd.f32 %v2397, %v2404
        %v2418 = vadd.f32 %v2398, %v2404
        %v2419 = vadd.f32 %v2399, %v2404
        %v2420 = vadd.f32 %v2400, %v2404
        %s2421 = scalar_lea.vmem %s2, 64
        %v2422 = vld [vmem:[%s2421] sm:$0xf]
        %v2423 = vld [vmem:[%s2421 + $0x4] sm:$0xf]
        %v2424 = vld [vmem:[%s2421 + $0x8] sm:$0xf]
        %v2425 = vld [vmem:[%s2421 + $0xc] sm:$0xf]
        %v2426 = vld [vmem:[%s2421 + $0x10] sm:$0xf]
        %v2427 = vld [vmem:[%s2421 + $0x14] sm:$0xf]
        %v2428 = vld [vmem:[%s2421 + $0x18] sm:$0xf]
        %v2429 = vld [vmem:[%s2421 + $0x1c] sm:$0xf]
        %v2430 = vld [vmem:[%s2421 + $0x20] sm:$0xf]
        %v2431 = vld [vmem:[%s2421 + $0x24] sm:$0xf]
        %v2432 = vld [vmem:[%s2421 + $0x28] sm:$0xf]
        %v2433 = vld [vmem:[%s2421 + $0x2c] sm:$0xf]
        %v2434 = vld [vmem:[%s2421 + $0x30] sm:$0xf]
        %v2435 = vld [vmem:[%s2421 + $0x34] sm:$0xf]
        %v2436 = vld [vmem:[%s2421 + $0x38] sm:$0xf]
        %v2437 = vld [vmem:[%s2421 + $0x3c] sm:$0xf]
        %v2438 = vpack.c.bf16 %v2406, %v2405
        %v2439 = vpack.c.bf16 %v2408, %v2407
        %v2440 = vpack.c.bf16 %v2410, %v2409
        %v2441 = vpack.c.bf16 %v2412, %v2411
        %v2442 = vpack.c.bf16 %v2414, %v2413
        %v2443 = vpack.c.bf16 %v2416, %v2415
        %v2444 = vpack.c.bf16 %v2418, %v2417
        %v2445 = vpack.c.bf16 %v2420, %v2419
        %s2446 = scalar_lea.vmem %s3, 128
        %v2447 = vld [vmem:[%s2446] sm:$0xff]
        %v2448 = vld [vmem:[%s2446 + $0x8] sm:$0xff]
        %v2449 = vld [vmem:[%s2446 + $0x10] sm:$0xff]
        %v2450 = vld [vmem:[%s2446 + $0x18] sm:$0xff]
        %v2451 = vld [vmem:[%s2446 + $0x20] sm:$0xff]
        %v2452 = vld [vmem:[%s2446 + $0x28] sm:$0xff]
        %v2453 = vld [vmem:[%s2446 + $0x30] sm:$0xff]
        %v2454 = vld [vmem:[%s2446 + $0x38] sm:$0xff]
        %v2455 = vld [vmem:[%s2446 + $0x40] sm:$0xff]
        %v2456 = vld [vmem:[%s2446 + $0x48] sm:$0xff]
        %v2457 = vld [vmem:[%s2446 + $0x50] sm:$0xff]
        %v2458 = vld [vmem:[%s2446 + $0x58] sm:$0xff]
        %v2459 = vld [vmem:[%s2446 + $0x60] sm:$0xff]
        %v2460 = vld [vmem:[%s2446 + $0x68] sm:$0xff]
        %v2461 = vld [vmem:[%s2446 + $0x70] sm:$0xff]
        %v2462 = vld [vmem:[%s2446 + $0x78] sm:$0xff]
        %2464 = vset.pattern.permute.xlu0 0
        %2465 = vperm.xlu0 %2464, %v2447
        %v2466 = vpop.permute.xlu0 %2465
        %2469 = vset.pattern.permute.xlu0 0
        %2470 = vperm.xlu0 %2469, %v2448
        %v2471 = vpop.permute.xlu0 %2470
        %2474 = vset.pattern.permute.xlu0 0
        %2475 = vperm.xlu0 %2474, %v2449
        %v2476 = vpop.permute.xlu0 %2475
        %2479 = vset.pattern.permute.xlu0 0
        %2480 = vperm.xlu0 %2479, %v2450
        %v2481 = vpop.permute.xlu0 %2480
        %2484 = vset.pattern.permute.xlu0 0
        %2485 = vperm.xlu0 %2484, %v2451
        %v2486 = vpop.permute.xlu0 %2485
        %2489 = vset.pattern.permute.xlu0 0
        %2490 = vperm.xlu0 %2489, %v2452
        %v2491 = vpop.permute.xlu0 %2490
        %2494 = vset.pattern.permute.xlu0 0
        %2495 = vperm.xlu0 %2494, %v2453
        %v2496 = vpop.permute.xlu0 %2495
        %2499 = vset.pattern.permute.xlu0 0
        %2500 = vperm.xlu0 %2499, %v2454
        %v2501 = vpop.permute.xlu0 %2500
        %2504 = vset.pattern.permute.xlu0 0
        %2505 = vperm.xlu0 %2504, %v2455
        %v2506 = vpop.permute.xlu0 %2505
        %2509 = vset.pattern.permute.xlu0 0
        %2510 = vperm.xlu0 %2509, %v2456
        %v2511 = vpop.permute.xlu0 %2510
        %2514 = vset.pattern.permute.xlu0 0
        %2515 = vperm.xlu0 %2514, %v2457
        %v2516 = vpop.permute.xlu0 %2515
        %2519 = vset.pattern.permute.xlu0 0
        %2520 = vperm.xlu0 %2519, %v2458
        %v2521 = vpop.permute.xlu0 %2520
        %2524 = vset.pattern.permute.xlu0 0
        %2525 = vperm.xlu0 %2524, %v2459
        %v2526 = vpop.permute.xlu0 %2525
        %2529 = vset.pattern.permute.xlu0 0
        %2530 = vperm.xlu0 %2529, %v2460
        %v2531 = vpop.permute.xlu0 %2530
        %2534 = vset.pattern.permute.xlu0 0
        %2535 = vperm.xlu0 %2534, %v2461
        %v2536 = vpop.permute.xlu0 %2535
        %2539 = vset.pattern.permute.xlu0 0
        %2540 = vperm.xlu0 %2539, %v2462
        %v2541 = vpop.permute.xlu0 %2540
        %v2559 = vunpack.c.l.b16 %v2422
        %v2560 = vunpack.c.l.b16 %v2423
        %v2561 = vunpack.c.l.b16 %v2424
        %v2562 = vunpack.c.l.b16 %v2425
        %v2563 = vunpack.c.l.b16 %v2426
        %v2564 = vunpack.c.l.b16 %v2427
        %v2565 = vunpack.c.l.b16 %v2428
        %v2566 = vunpack.c.l.b16 %v2429
        %v2567 = vunpack.c.l.b16 %v2430
        %v2568 = vunpack.c.l.b16 %v2431
        %v2569 = vunpack.c.l.b16 %v2432
        %v2570 = vunpack.c.l.b16 %v2433
        %v2571 = vunpack.c.l.b16 %v2434
        %v2572 = vunpack.c.l.b16 %v2435
        %v2573 = vunpack.c.l.b16 %v2436
        %v2574 = vunpack.c.l.b16 %v2437
        %v2575 = vpack.c.b16 %v2560, %v2559
        %v2576 = vpack.c.b16 %v2562, %v2561
        %v2577 = vpack.c.b16 %v2564, %v2563
        %v2578 = vpack.c.b16 %v2566, %v2565
        %v2579 = vpack.c.b16 %v2568, %v2567
        %v2580 = vpack.c.b16 %v2570, %v2569
        %v2581 = vpack.c.b16 %v2572, %v2571
        %v2582 = vpack.c.b16 %v2574, %v2573
        %2591 = vmatprep.subr.bf16.mxu0 0
        %2592 = vmatpush1.bf16.msra.mxu0 %v2438
        %2593 = vmatprep.subr.bf16.mxu0 0
        %2594 = vmatpush1.bf16.msra.mxu0 %v2439
        %2595 = vmatprep.subr.bf16.mxu0 0
        %2596 = vmatpush1.bf16.msra.mxu0 %v2440
        %2597 = vmatprep.subr.bf16.mxu0 0
        %2598 = vmatpush1.bf16.msra.mxu0 %v2441
        %2599 = vmatprep.subr.bf16.mxu0 0
        %2600 = vmatpush1.bf16.msra.mxu0 %v2442
        %2601 = vmatprep.subr.bf16.mxu0 0
        %2602 = vmatpush1.bf16.msra.mxu0 %v2443
        %2603 = vmatprep.subr.bf16.mxu0 0
        %2604 = vmatpush1.bf16.msra.mxu0 %v2444
        %2605 = vmatprep.subr.bf16.mxu0 0
        %2606 = vmatpush1.bf16.msra.mxu0 %v2445
        %2607 = vmatprep.subr.bf16.mxu0 0
        %2608 = vmatpush1.bf16.msra.mxu0 0
        %2609 = vmatprep.subr.bf16.mxu0 0
        %2610 = vmatpush1.bf16.msra.mxu0 0
        %2611 = vmatprep.subr.bf16.mxu0 0
        %2612 = vmatpush1.bf16.msra.mxu0 0
        %2613 = vmatprep.subr.bf16.mxu0 0
        %2614 = vmatpush1.bf16.msra.mxu0 0
        %2615 = vmatprep.subr.bf16.mxu0 0
        %2616 = vmatpush1.bf16.msra.mxu0 0
        %2617 = vmatprep.subr.bf16.mxu0 0
        %2618 = vmatpush1.bf16.msra.mxu0 0
        %2619 = vmatprep.subr.bf16.mxu0 0
        %2620 = vmatpush1.bf16.msra.mxu0 0
        %2621 = vmatprep.subr.bf16.mxu0 0
        %2622 = vmatpush1.bf16.msra.mxu0 0
        %2623 = vmatprep.mubr.bf16.mxu0 0
        %2624 = vmatmul.mubr.bf16.gmra.mrb[0].mxu0 %v2575
        %v2625 = vpop.f32.mrb[0].mxu0
        %v2626 = vadd.f32 %v2466, %v2625
        %v2627 = vpop.f32.mrb[0].mxu0
        %v2628 = vpop.f32.mrb[0].mxu0
        %v2629 = vadd.f32 %v2471, %v2628
        %v2630 = vpop.f32.mrb[0].mxu0
        %2631 = vmatprep.mubr.bf16.mxu0 0
        %2632 = vmatmul.mubr.bf16.gmra.mrb[0].mxu0 %v2576
        %v2633 = vpop.f32.mrb[0].mxu0
        %v2634 = vadd.f32 %v2476, %v2633
        %v2635 = vpop.f32.mrb[0].mxu0
        %v2636 = vpop.f32.mrb[0].mxu0
        %v2637 = vadd.f32 %v2481, %v2636
        %v2638 = vpop.f32.mrb[0].mxu0
        %2639 = vmatprep.mubr.bf16.mxu0 0
        %2640 = vmatmul.mubr.bf16.gmra.mrb[0].mxu0 %v2577
        %v2641 = vpop.f32.mrb[0].mxu0
        %v2642 = vadd.f32 %v2486, %v2641
        %v2643 = vpop.f32.mrb[0].mxu0
        %v2644 = vpop.f32.mrb[0].mxu0
        %v2645 = vadd.f32 %v2491, %v2644
        %v2646 = vpop.f32.mrb[0].mxu0
        %2647 = vmatprep.mubr.bf16.mxu0 0
        %2648 = vmatmul.mubr.bf16.gmra.mrb[0].mxu0 %v2578
        %v2649 = vpop.f32.mrb[0].mxu0
        %v2650 = vadd.f32 %v2496, %v2649
        %v2651 = vpop.f32.mrb[0].mxu0
        %v2652 = vpop.f32.mrb[0].mxu0
        %v2653 = vadd.f32 %v2501, %v2652
        %v2654 = vpop.f32.mrb[0].mxu0
        %2655 = vmatprep.mubr.bf16.mxu0 0
        %2656 = vmatmul.mubr.bf16.gmra.mrb[0].mxu0 %v2579
        %v2657 = vpop.f32.mrb[0].mxu0
        %v2658 = vadd.f32 %v2506, %v2657
        %v2659 = vpop.f32.mrb[0].mxu0
        %v2660 = vpop.f32.mrb[0].mxu0
        %v2661 = vadd.f32 %v2511, %v2660
        %v2662 = vpop.f32.mrb[0].mxu0
        %2663 = vmatprep.mubr.bf16.mxu0 0
        %2664 = vmatmul.mubr.bf16.gmra.mrb[0].mxu0 %v2580
        %v2665 = vpop.f32.mrb[0].mxu0
        %v2666 = vadd.f32 %v2516, %v2665
        %v2667 = vpop.f32.mrb[0].mxu0
        %v2668 = vpop.f32.mrb[0].mxu0
        %v2669 = vadd.f32 %v2521, %v2668
        %v2670 = vpop.f32.mrb[0].mxu0
        %2671 = vmatprep.mubr.bf16.mxu0 0
        %2672 = vmatmul.mubr.bf16.gmra.mrb[0].mxu0 %v2581
        %v2673 = vpop.f32.mrb[0].mxu0
        %v2674 = vadd.f32 %v2526, %v2673
        %v2675 = vpop.f32.mrb[0].mxu0
        %v2676 = vpop.f32.mrb[0].mxu0
        %v2677 = vadd.f32 %v2531, %v2676
        %v2678 = vpop.f32.mrb[0].mxu0
        %2679 = vmatprep.mubr.bf16.mxu0 0
        %2680 = vmatmul.mubr.bf16.gmra.mrb[0].mxu0 %v2582
        %v2681 = vpop.f32.mrb[0].mxu0
        %v2682 = vadd.f32 %v2536, %v2681
        %v2683 = vpop.f32.mrb[0].mxu0
        %v2684 = vpop.f32.mrb[0].mxu0
        %v2685 = vadd.f32 %v2541, %v2684
        %v2686 = vpop.f32.mrb[0].mxu0
        %2687 = vdwg.mxu0
        %v2688 = vmul.f32 %v2626, 0.5
        %v2689 = vmul.f32 %v2629, 0.5
        %v2690 = vmul.f32 %v2634, 0.5
        %v2691 = vmul.f32 %v2637, 0.5
        %v2692 = vmul.f32 %v2642, 0.5
        %v2693 = vmul.f32 %v2645, 0.5
        %v2694 = vmul.f32 %v2650, 0.5
        %v2695 = vmul.f32 %v2653, 0.5
        %v2696 = vmul.f32 %v2658, 0.5
        %v2697 = vmul.f32 %v2661, 0.5
        %v2698 = vmul.f32 %v2666, 0.5
        %v2699 = vmul.f32 %v2669, 0.5
        %v2700 = vmul.f32 %v2674, 0.5
        %v2701 = vmul.f32 %v2677, 0.5
        %v2702 = vmul.f32 %v2682, 0.5
        %v2703 = vmul.f32 %v2685, 0.5
        %v2704 = vmul.f32 %v2626, 0.70710677
        %v2705 = vmul.f32 %v2629, 0.70710677
        %v2706 = vmul.f32 %v2634, 0.70710677
        %v2707 = vmul.f32 %v2637, 0.70710677
        %v2708 = vmul.f32 %v2642, 0.70710677
        %v2709 = vmul.f32 %v2645, 0.70710677
        %v2710 = vmul.f32 %v2650, 0.70710677
        %v2711 = vmul.f32 %v2653, 0.70710677
        %v2712 = vmul.f32 %v2658, 0.70710677
        %v2713 = vmul.f32 %v2661, 0.70710677
        %v2714 = vmul.f32 %v2666, 0.70710677
        %v2715 = vmul.f32 %v2669, 0.70710677
        %v2716 = vmul.f32 %v2674, 0.70710677
        %v2717 = vmul.f32 %v2677, 0.70710677
        %v2718 = vmul.f32 %v2682, 0.70710677
        %v2719 = vmul.f32 %v2685, 0.70710677
        %v2720 = verf.f32.pop %v2704
        %v2721 = verf.f32.pop %v2705
        %v2722 = verf.f32.pop %v2706
        %v2723 = verf.f32.pop %v2707
        %v2724 = verf.f32.pop %v2708
        %v2725 = verf.f32.pop %v2709
        %v2726 = verf.f32.pop %v2710
        %v2727 = verf.f32.pop %v2711
        %v2728 = verf.f32.pop %v2712
        %v2729 = verf.f32.pop %v2713
        %v2730 = verf.f32.pop %v2714
        %v2731 = verf.f32.pop %v2715
        %v2732 = verf.f32.pop %v2716
        %v2733 = verf.f32.pop %v2717
        %v2734 = verf.f32.pop %v2718
        %v2735 = verf.f32.pop %v2719
        %v2736 = vadd.f32 %v2720, 1.0
        %v2737 = vadd.f32 %v2721, 1.0
        %v2738 = vadd.f32 %v2722, 1.0
        %v2739 = vadd.f32 %v2723, 1.0
        %v2740 = vadd.f32 %v2724, 1.0
        %v2741 = vadd.f32 %v2725, 1.0
        %v2742 = vadd.f32 %v2726, 1.0
        %v2743 = vadd.f32 %v2727, 1.0
        %v2744 = vadd.f32 %v2728, 1.0
        %v2745 = vadd.f32 %v2729, 1.0
        %v2746 = vadd.f32 %v2730, 1.0
        %v2747 = vadd.f32 %v2731, 1.0
        %v2748 = vadd.f32 %v2732, 1.0
        %v2749 = vadd.f32 %v2733, 1.0
        %v2750 = vadd.f32 %v2734, 1.0
        %v2751 = vadd.f32 %v2735, 1.0
        %v2752 = vmul.f32 %v2688, %v2736
        %v2753 = vmul.f32 %v2689, %v2737
        %v2754 = vmul.f32 %v2690, %v2738
        %v2755 = vmul.f32 %v2691, %v2739
        %v2756 = vmul.f32 %v2692, %v2740
        %v2757 = vmul.f32 %v2693, %v2741
        %v2758 = vmul.f32 %v2694, %v2742
        %v2759 = vmul.f32 %v2695, %v2743
        %v2760 = vmul.f32 %v2696, %v2744
        %v2761 = vmul.f32 %v2697, %v2745
        %v2762 = vmul.f32 %v2698, %v2746
        %v2763 = vmul.f32 %v2699, %v2747
        %v2764 = vmul.f32 %v2700, %v2748
        %v2765 = vmul.f32 %v2701, %v2749
        %v2766 = vmul.f32 %v2702, %v2750
        %v2767 = vmul.f32 %v2703, %v2751
        %s2768 = scalar_lea.vmem %s4, 64
        %v2769 = vld [vmem:[%s2768] sm:$0xf]
        %v2770 = vld [vmem:[%s2768 + $0x4] sm:$0xf]
        %v2771 = vld [vmem:[%s2768 + $0x8] sm:$0xf]
        %v2772 = vld [vmem:[%s2768 + $0xc] sm:$0xf]
        %v2773 = vld [vmem:[%s2768 + $0x10] sm:$0xf]
        %v2774 = vld [vmem:[%s2768 + $0x14] sm:$0xf]
        %v2775 = vld [vmem:[%s2768 + $0x18] sm:$0xf]
        %v2776 = vld [vmem:[%s2768 + $0x1c] sm:$0xf]
        %v2777 = vld [vmem:[%s2768 + $0x20] sm:$0xf]
        %v2778 = vld [vmem:[%s2768 + $0x24] sm:$0xf]
        %v2779 = vld [vmem:[%s2768 + $0x28] sm:$0xf]
        %v2780 = vld [vmem:[%s2768 + $0x2c] sm:$0xf]
        %v2781 = vld [vmem:[%s2768 + $0x30] sm:$0xf]
        %v2782 = vld [vmem:[%s2768 + $0x34] sm:$0xf]
        %v2783 = vld [vmem:[%s2768 + $0x38] sm:$0xf]
        %v2784 = vld [vmem:[%s2768 + $0x3c] sm:$0xf]
        %v2785 = vpack.c.bf16 %v2753, %v2752
        %v2786 = vpack.c.bf16 %v2755, %v2754
        %v2787 = vpack.c.bf16 %v2757, %v2756
        %v2788 = vpack.c.bf16 %v2759, %v2758
        %v2789 = vpack.c.bf16 %v2761, %v2760
        %v2790 = vpack.c.bf16 %v2763, %v2762
        %v2791 = vpack.c.bf16 %v2765, %v2764
        %v2792 = vpack.c.bf16 %v2767, %v2766
        %v2809 = vunpack.c.l.b16 %v2769
        %v2810 = vunpack.c.l.b16 %v2770
        %v2811 = vunpack.c.l.b16 %v2771
        %v2812 = vunpack.c.l.b16 %v2772
        %v2813 = vunpack.c.l.b16 %v2773
        %v2814 = vunpack.c.l.b16 %v2774
        %v2815 = vunpack.c.l.b16 %v2775
        %v2816 = vunpack.c.l.b16 %v2776
        %v2817 = vunpack.c.l.b16 %v2777
        %v2818 = vunpack.c.l.b16 %v2778
        %v2819 = vunpack.c.l.b16 %v2779
        %v2820 = vunpack.c.l.b16 %v2780
        %v2821 = vunpack.c.l.b16 %v2781
        %v2822 = vunpack.c.l.b16 %v2782
        %v2823 = vunpack.c.l.b16 %v2783
        %v2824 = vunpack.c.l.b16 %v2784
        %v2825 = vpack.c.b16 %v2810, %v2809
        %v2826 = vpack.c.b16 %v2812, %v2811
        %v2827 = vpack.c.b16 %v2814, %v2813
        %v2828 = vpack.c.b16 %v2816, %v2815
        %v2829 = vpack.c.b16 %v2818, %v2817
        %v2830 = vpack.c.b16 %v2820, %v2819
        %v2831 = vpack.c.b16 %v2822, %v2821
        %v2832 = vpack.c.b16 %v2824, %v2823
        %2841 = vmatprep.subr.bf16.mxu0 0
        %2842 = vmatpush1.bf16.msra.mxu0 %v2785
        %2843 = vmatprep.subr.bf16.mxu0 0
        %2844 = vmatpush1.bf16.msra.mxu0 %v2786
        %2845 = vmatprep.subr.bf16.mxu0 0
        %2846 = vmatpush1.bf16.msra.mxu0 %v2787
        %2847 = vmatprep.subr.bf16.mxu0 0
        %2848 = vmatpush1.bf16.msra.mxu0 %v2788
        %2849 = vmatprep.subr.bf16.mxu0 0
        %2850 = vmatpush1.bf16.msra.mxu0 %v2789
        %2851 = vmatprep.subr.bf16.mxu0 0
        %2852 = vmatpush1.bf16.msra.mxu0 %v2790
        %2853 = vmatprep.subr.bf16.mxu0 0
        %2854 = vmatpush1.bf16.msra.mxu0 %v2791
        %2855 = vmatprep.subr.bf16.mxu0 0
        %2856 = vmatpush1.bf16.msra.mxu0 %v2792
        %2857 = vmatprep.subr.bf16.mxu0 0
        %2858 = vmatpush1.bf16.msra.mxu0 0
        %2859 = vmatprep.subr.bf16.mxu0 0
        %2860 = vmatpush1.bf16.msra.mxu0 0
        %2861 = vmatprep.subr.bf16.mxu0 0
        %2862 = vmatpush1.bf16.msra.mxu0 0
        %2863 = vmatprep.subr.bf16.mxu0 0
        %2864 = vmatpush1.bf16.msra.mxu0 0
        %2865 = vmatprep.subr.bf16.mxu0 0
        %2866 = vmatpush1.bf16.msra.mxu0 0
        %2867 = vmatprep.subr.bf16.mxu0 0
        %2868 = vmatpush1.bf16.msra.mxu0 0
        %2869 = vmatprep.subr.bf16.mxu0 0
        %2870 = vmatpush1.bf16.msra.mxu0 0
        %2871 = vmatprep.subr.bf16.mxu0 0
        %2872 = vmatpush1.bf16.msra.mxu0 0
        %2873 = vmatprep.mubr.bf16.mxu0 0
        %2874 = vmatmul.mubr.bf16.gmra.mrb[0].mxu0 %v2825
        %v2875 = vpop.f32.mrb[0].mxu0
        %v2876 = vadd.f32 0.0, %v2875
        %v2877 = vpop.f32.mrb[0].mxu0
        %v2878 = vpop.f32.mrb[0].mxu0
        %v2879 = vadd.f32 0.0, %v2878
        %v2880 = vpop.f32.mrb[0].mxu0
        %2881 = vmatprep.mubr.bf16.mxu0 0
        %2882 = vmatmul.mubr.bf16.gmra.mrb[0].mxu0 %v2826
        %v2883 = vpop.f32.mrb[0].mxu0
        %v2884 = vadd.f32 0.0, %v2883
        %v2885 = vpop.f32.mrb[0].mxu0
        %v2886 = vpop.f32.mrb[0].mxu0
        %v2887 = vadd.f32 0.0, %v2886
        %v2888 = vpop.f32.mrb[0].mxu0
        %2889 = vmatprep.mubr.bf16.mxu0 0
        %2890 = vmatmul.mubr.bf16.gmra.mrb[0].mxu0 %v2827
        %v2891 = vpop.f32.mrb[0].mxu0
        %v2892 = vadd.f32 0.0, %v2891
        %v2893 = vpop.f32.mrb[0].mxu0
        %v2894 = vpop.f32.mrb[0].mxu0
        %v2895 = vadd.f32 0.0, %v2894
        %v2896 = vpop.f32.mrb[0].mxu0
        %2897 = vmatprep.mubr.bf16.mxu0 0
        %2898 = vmatmul.mubr.bf16.gmra.mrb[0].mxu0 %v2828
        %v2899 = vpop.f32.mrb[0].mxu0
        %v2900 = vadd.f32 0.0, %v2899
        %v2901 = vpop.f32.mrb[0].mxu0
        %v2902 = vpop.f32.mrb[0].mxu0
        %v2903 = vadd.f32 0.0, %v2902
        %v2904 = vpop.f32.mrb[0].mxu0
        %2905 = vmatprep.mubr.bf16.mxu0 0
        %2906 = vmatmul.mubr.bf16.gmra.mrb[0].mxu0 %v2829
        %v2907 = vpop.f32.mrb[0].mxu0
        %v2908 = vadd.f32 0.0, %v2907
        %v2909 = vpop.f32.mrb[0].mxu0
        %v2910 = vpop.f32.mrb[0].mxu0
        %v2911 = vadd.f32 0.0, %v2910
        %v2912 = vpop.f32.mrb[0].mxu0
        %2913 = vmatprep.mubr.bf16.mxu0 0
        %2914 = vmatmul.mubr.bf16.gmra.mrb[0].mxu0 %v2830
        %v2915 = vpop.f32.mrb[0].mxu0
        %v2916 = vadd.f32 0.0, %v2915
        %v2917 = vpop.f32.mrb[0].mxu0
        %v2918 = vpop.f32.mrb[0].mxu0
        %v2919 = vadd.f32 0.0, %v2918
        %v2920 = vpop.f32.mrb[0].mxu0
        %2921 = vmatprep.mubr.bf16.mxu0 0
        %2922 = vmatmul.mubr.bf16.gmra.mrb[0].mxu0 %v2831
        %v2923 = vpop.f32.mrb[0].mxu0
        %v2924 = vadd.f32 0.0, %v2923
        %v2925 = vpop.f32.mrb[0].mxu0
        %v2926 = vpop.f32.mrb[0].mxu0
        %v2927 = vadd.f32 0.0, %v2926
        %v2928 = vpop.f32.mrb[0].mxu0
        %2929 = vmatprep.mubr.bf16.mxu0 0
        %2930 = vmatmul.mubr.bf16.gmra.mrb[0].mxu0 %v2832
        %v2931 = vpop.f32.mrb[0].mxu0
        %v2932 = vadd.f32 0.0, %v2931
        %v2933 = vpop.f32.mrb[0].mxu0
        %v2934 = vpop.f32.mrb[0].mxu0
        %v2935 = vadd.f32 0.0, %v2934
        %v2936 = vpop.f32.mrb[0].mxu0
        %2937 = vdwg.mxu0
        %v2938 = vadd.f32 %v2155, %v2876
        %v2939 = vadd.f32 %v2156, %v2879
        %v2940 = vadd.f32 %v2157, %v2884
        %v2941 = vadd.f32 %v2158, %v2887
        %v2942 = vadd.f32 %v2159, %v2892
        %v2943 = vadd.f32 %v2160, %v2895
        %v2944 = vadd.f32 %v2161, %v2900
        %v2945 = vadd.f32 %v2162, %v2903
        %v2946 = vadd.f32 %v2163, %v2908
        %v2947 = vadd.f32 %v2164, %v2911
        %v2948 = vadd.f32 %v2165, %v2916
        %v2949 = vadd.f32 %v2166, %v2919
        %v2950 = vadd.f32 %v2167, %v2924
        %v2951 = vadd.f32 %v2168, %v2927
        %v2952 = vadd.f32 %v2169, %v2932
        %v2953 = vadd.f32 %v2170, %v2935
        %s2954 = scalar_lea.vmem %s5, 128
        %v2955 = vld [vmem:[%s2954] sm:$0xff]
        %v2956 = vld [vmem:[%s2954 + $0x8] sm:$0xff]
        %v2957 = vld [vmem:[%s2954 + $0x10] sm:$0xff]
        %v2958 = vld [vmem:[%s2954 + $0x18] sm:$0xff]
        %v2959 = vld [vmem:[%s2954 + $0x20] sm:$0xff]
        %v2960 = vld [vmem:[%s2954 + $0x28] sm:$0xff]
        %v2961 = vld [vmem:[%s2954 + $0x30] sm:$0xff]
        %v2962 = vld [vmem:[%s2954 + $0x38] sm:$0xff]
        %v2963 = vld [vmem:[%s2954 + $0x40] sm:$0xff]
        %v2964 = vld [vmem:[%s2954 + $0x48] sm:$0xff]
        %v2965 = vld [vmem:[%s2954 + $0x50] sm:$0xff]
        %v2966 = vld [vmem:[%s2954 + $0x58] sm:$0xff]
        %v2967 = vld [vmem:[%s2954 + $0x60] sm:$0xff]
        %v2968 = vld [vmem:[%s2954 + $0x68] sm:$0xff]
        %v2969 = vld [vmem:[%s2954 + $0x70] sm:$0xff]
        %v2970 = vld [vmem:[%s2954 + $0x78] sm:$0xff]
        %2972 = vset.pattern.permute.xlu0 0
        %2973 = vperm.xlu0 %2972, %v2955
        %v2974 = vpop.permute.xlu0 %2973
        %2977 = vset.pattern.permute.xlu0 0
        %2978 = vperm.xlu0 %2977, %v2956
        %v2979 = vpop.permute.xlu0 %2978
        %2982 = vset.pattern.permute.xlu0 0
        %2983 = vperm.xlu0 %2982, %v2957
        %v2984 = vpop.permute.xlu0 %2983
        %2987 = vset.pattern.permute.xlu0 0
        %2988 = vperm.xlu0 %2987, %v2958
        %v2989 = vpop.permute.xlu0 %2988
        %2992 = vset.pattern.permute.xlu0 0
        %2993 = vperm.xlu0 %2992, %v2959
        %v2994 = vpop.permute.xlu0 %2993
        %2997 = vset.pattern.permute.xlu0 0
        %2998 = vperm.xlu0 %2997, %v2960
        %v2999 = vpop.permute.xlu0 %2998
        %3002 = vset.pattern.permute.xlu0 0
        %3003 = vperm.xlu0 %3002, %v2961
        %v3004 = vpop.permute.xlu0 %3003
        %3007 = vset.pattern.permute.xlu0 0
        %3008 = vperm.xlu0 %3007, %v2962
        %v3009 = vpop.permute.xlu0 %3008
        %3012 = vset.pattern.permute.xlu0 0
        %3013 = vperm.xlu0 %3012, %v2963
        %v3014 = vpop.permute.xlu0 %3013
        %3017 = vset.pattern.permute.xlu0 0
        %3018 = vperm.xlu0 %3017, %v2964
        %v3019 = vpop.permute.xlu0 %3018
        %3022 = vset.pattern.permute.xlu0 0
        %3023 = vperm.xlu0 %3022, %v2965
        %v3024 = vpop.permute.xlu0 %3023
        %3027 = vset.pattern.permute.xlu0 0
        %3028 = vperm.xlu0 %3027, %v2966
        %v3029 = vpop.permute.xlu0 %3028
        %3032 = vset.pattern.permute.xlu0 0
        %3033 = vperm.xlu0 %3032, %v2967
        %v3034 = vpop.permute.xlu0 %3033
        %3037 = vset.pattern.permute.xlu0 0
        %3038 = vperm.xlu0 %3037, %v2968
        %v3039 = vpop.permute.xlu0 %3038
        %3042 = vset.pattern.permute.xlu0 0
        %3043 = vperm.xlu0 %3042, %v2969
        %v3044 = vpop.permute.xlu0 %3043
        %3047 = vset.pattern.permute.xlu0 0
        %3048 = vperm.xlu0 %3047, %v2970
        %v3049 = vpop.permute.xlu0 %3048
        %v3051 = vadd.f32 %v2938, %v2974
        %v3052 = vadd.f32 %v2939, %v2979
        %v3053 = vadd.f32 %v2940, %v2984
        %v3054 = vadd.f32 %v2941, %v2989
        %v3055 = vadd.f32 %v2942, %v2994
        %v3056 = vadd.f32 %v2943, %v2999
        %v3057 = vadd.f32 %v2944, %v3004
        %v3058 = vadd.f32 %v2945, %v3009
        %v3059 = vadd.f32 %v2946, %v3014
        %v3060 = vadd.f32 %v2947, %v3019
        %v3061 = vadd.f32 %v2948, %v3024
        %v3062 = vadd.f32 %v2949, %v3029
        %v3063 = vadd.f32 %v2950, %v3034
        %v3064 = vadd.f32 %v2951, %v3039
        %v3065 = vadd.f32 %v2952, %v3044
        %v3066 = vadd.f32 %v2953, %v3049
        %v3067 = vsel %vm519, %v3051, 0.0
        %3068 = vadd.xlane.f32.xlu0 %v3067
        %v3069 = vpop.xlane.xlu0 %3068
        %v3070 = vsel %vm519, %v3052, 0.0
        %3071 = vadd.xlane.f32.xlu0 %v3070
        %v3072 = vpop.xlane.xlu0 %3071
        %v3073 = vsel %vm519, %v3053, 0.0
        %3074 = vadd.xlane.f32.xlu0 %v3073
        %v3075 = vpop.xlane.xlu0 %3074
        %v3076 = vsel %vm519, %v3054, 0.0
        %3077 = vadd.xlane.f32.xlu0 %v3076
        %v3078 = vpop.xlane.xlu0 %3077
        %v3079 = vsel %vm519, %v3055, 0.0
        %3080 = vadd.xlane.f32.xlu0 %v3079
        %v3081 = vpop.xlane.xlu0 %3080
        %v3082 = vsel %vm519, %v3056, 0.0
        %3083 = vadd.xlane.f32.xlu0 %v3082
        %v3084 = vpop.xlane.xlu0 %3083
        %v3085 = vsel %vm519, %v3057, 0.0
        %3086 = vadd.xlane.f32.xlu0 %v3085
        %v3087 = vpop.xlane.xlu0 %3086
        %v3088 = vsel %vm519, %v3058, 0.0
        %3089 = vadd.xlane.f32.xlu0 %v3088
        %v3090 = vpop.xlane.xlu0 %3089
        %v3091 = vsel %vm519, %v3059, 0.0
        %3092 = vadd.xlane.f32.xlu0 %v3091
        %v3093 = vpop.xlane.xlu0 %3092
        %v3094 = vsel %vm519, %v3060, 0.0
        %3095 = vadd.xlane.f32.xlu0 %v3094
        %v3096 = vpop.xlane.xlu0 %3095
        %v3097 = vsel %vm519, %v3061, 0.0
        %3098 = vadd.xlane.f32.xlu0 %v3097
        %v3099 = vpop.xlane.xlu0 %3098
        %v3100 = vsel %vm519, %v3062, 0.0
        %3101 = vadd.xlane.f32.xlu0 %v3100
        %v3102 = vpop.xlane.xlu0 %3101
        %v3103 = vsel %vm519, %v3063, 0.0
        %3104 = vadd.xlane.f32.xlu0 %v3103
        %v3105 = vpop.xlane.xlu0 %3104
        %v3106 = vsel %vm519, %v3064, 0.0
        %3107 = vadd.xlane.f32.xlu0 %v3106
        %v3108 = vpop.xlane.xlu0 %3107
        %v3109 = vsel %vm519, %v3065, 0.0
        %3110 = vadd.xlane.f32.xlu0 %v3109
        %v3111 = vpop.xlane.xlu0 %3110
        %v3112 = vsel %vm519, %v3066, 0.0
        %3113 = vadd.xlane.f32.xlu0 %v3112
        %v3114 = vpop.xlane.xlu0 %3113
        %v3115 = vmul.f32 %v3069, %v691
        %v3116 = vmul.f32 %v3072, %v691
        %v3117 = vmul.f32 %v3075, %v691
        %v3118 = vmul.f32 %v3078, %v691
        %v3119 = vmul.f32 %v3081, %v691
        %v3120 = vmul.f32 %v3084, %v691
        %v3121 = vmul.f32 %v3087, %v691
        %v3122 = vmul.f32 %v3090, %v691
        %v3123 = vmul.f32 %v3093, %v691
        %v3124 = vmul.f32 %v3096, %v691
        %v3125 = vmul.f32 %v3099, %v691
        %v3126 = vmul.f32 %v3102, %v691
        %v3127 = vmul.f32 %v3105, %v691
        %v3128 = vmul.f32 %v3108, %v691
        %v3129 = vmul.f32 %v3111, %v691
        %v3130 = vmul.f32 %v3114, %v691
        %v3131 = vsub.f32 %v3051, %v3115
        %v3132 = vsub.f32 %v3052, %v3116
        %v3133 = vsub.f32 %v3053, %v3117
        %v3134 = vsub.f32 %v3054, %v3118
        %v3135 = vsub.f32 %v3055, %v3119
        %v3136 = vsub.f32 %v3056, %v3120
        %v3137 = vsub.f32 %v3057, %v3121
        %v3138 = vsub.f32 %v3058, %v3122
        %v3139 = vsub.f32 %v3059, %v3123
        %v3140 = vsub.f32 %v3060, %v3124
        %v3141 = vsub.f32 %v3061, %v3125
        %v3142 = vsub.f32 %v3062, %v3126
        %v3143 = vsub.f32 %v3063, %v3127
        %v3144 = vsub.f32 %v3064, %v3128
        %v3145 = vsub.f32 %v3065, %v3129
        %v3146 = vsub.f32 %v3066, %v3130
        %v3147 = vmul.f32 %v3131, %v3131
        %v3148 = vmul.f32 %v3132, %v3132
        %v3149 = vmul.f32 %v3133, %v3133
        %v3150 = vmul.f32 %v3134, %v3134
        %v3151 = vmul.f32 %v3135, %v3135
        %v3152 = vmul.f32 %v3136, %v3136
        %v3153 = vmul.f32 %v3137, %v3137
        %v3154 = vmul.f32 %v3138, %v3138
        %v3155 = vmul.f32 %v3139, %v3139
        %v3156 = vmul.f32 %v3140, %v3140
        %v3157 = vmul.f32 %v3141, %v3141
        %v3158 = vmul.f32 %v3142, %v3142
        %v3159 = vmul.f32 %v3143, %v3143
        %v3160 = vmul.f32 %v3144, %v3144
        %v3161 = vmul.f32 %v3145, %v3145
        %v3162 = vmul.f32 %v3146, %v3146
        %v3163 = vsel %vm519, %v3147, 0.0
        %3164 = vadd.xlane.f32.xlu0 %v3163
        %v3165 = vpop.xlane.xlu0 %3164
        %v3166 = vsel %vm519, %v3148, 0.0
        %3167 = vadd.xlane.f32.xlu0 %v3166
        %v3168 = vpop.xlane.xlu0 %3167
        %v3169 = vsel %vm519, %v3149, 0.0
        %3170 = vadd.xlane.f32.xlu0 %v3169
        %v3171 = vpop.xlane.xlu0 %3170
        %v3172 = vsel %vm519, %v3150, 0.0
        %3173 = vadd.xlane.f32.xlu0 %v3172
        %v3174 = vpop.xlane.xlu0 %3173
        %v3175 = vsel %vm519, %v3151, 0.0
        %3176 = vadd.xlane.f32.xlu0 %v3175
        %v3177 = vpop.xlane.xlu0 %3176
        %v3178 = vsel %vm519, %v3152, 0.0
        %3179 = vadd.xlane.f32.xlu0 %v3178
        %v3180 = vpop.xlane.xlu0 %3179
        %v3181 = vsel %vm519, %v3153, 0.0
        %3182 = vadd.xlane.f32.xlu0 %v3181
        %v3183 = vpop.xlane.xlu0 %3182
        %v3184 = vsel %vm519, %v3154, 0.0
        %3185 = vadd.xlane.f32.xlu0 %v3184
        %v3186 = vpop.xlane.xlu0 %3185
        %v3187 = vsel %vm519, %v3155, 0.0
        %3188 = vadd.xlane.f32.xlu0 %v3187
        %v3189 = vpop.xlane.xlu0 %3188
        %v3190 = vsel %vm519, %v3156, 0.0
        %3191 = vadd.xlane.f32.xlu0 %v3190
        %v3192 = vpop.xlane.xlu0 %3191
        %v3193 = vsel %vm519, %v3157, 0.0
        %3194 = vadd.xlane.f32.xlu0 %v3193
        %v3195 = vpop.xlane.xlu0 %3194
        %v3196 = vsel %vm519, %v3158, 0.0
        %3197 = vadd.xlane.f32.xlu0 %v3196
        %v3198 = vpop.xlane.xlu0 %3197
        %v3199 = vsel %vm519, %v3159, 0.0
        %3200 = vadd.xlane.f32.xlu0 %v3199
        %v3201 = vpop.xlane.xlu0 %3200
        %v3202 = vsel %vm519, %v3160, 0.0
        %3203 = vadd.xlane.f32.xlu0 %v3202
        %v3204 = vpop.xlane.xlu0 %3203
        %v3205 = vsel %vm519, %v3161, 0.0
        %3206 = vadd.xlane.f32.xlu0 %v3205
        %v3207 = vpop.xlane.xlu0 %3206
        %v3208 = vsel %vm519, %v3162, 0.0
        %3209 = vadd.xlane.f32.xlu0 %v3208
        %v3210 = vpop.xlane.xlu0 %3209
        %v3211 = vmul.f32 %v3165, %v691
        %v3212 = vmul.f32 %v3168, %v691
        %v3213 = vmul.f32 %v3171, %v691
        %v3214 = vmul.f32 %v3174, %v691
        %v3215 = vmul.f32 %v3177, %v691
        %v3216 = vmul.f32 %v3180, %v691
        %v3217 = vmul.f32 %v3183, %v691
        %v3218 = vmul.f32 %v3186, %v691
        %v3219 = vmul.f32 %v3189, %v691
        %v3220 = vmul.f32 %v3192, %v691
        %v3221 = vmul.f32 %v3195, %v691
        %v3222 = vmul.f32 %v3198, %v691
        %v3223 = vmul.f32 %v3201, %v691
        %v3224 = vmul.f32 %v3204, %v691
        %v3225 = vmul.f32 %v3207, %v691
        %v3226 = vmul.f32 %v3210, %v691
        %v3227 = vadd.f32 %v3211, 1e-05
        %v3228 = vadd.f32 %v3212, 1e-05
        %v3229 = vadd.f32 %v3213, 1e-05
        %v3230 = vadd.f32 %v3214, 1e-05
        %v3231 = vadd.f32 %v3215, 1e-05
        %v3232 = vadd.f32 %v3216, 1e-05
        %v3233 = vadd.f32 %v3217, 1e-05
        %v3234 = vadd.f32 %v3218, 1e-05
        %v3235 = vadd.f32 %v3219, 1e-05
        %v3236 = vadd.f32 %v3220, 1e-05
        %v3237 = vadd.f32 %v3221, 1e-05
        %v3238 = vadd.f32 %v3222, 1e-05
        %v3239 = vadd.f32 %v3223, 1e-05
        %v3240 = vadd.f32 %v3224, 1e-05
        %v3241 = vadd.f32 %v3225, 1e-05
        %v3242 = vadd.f32 %v3226, 1e-05
        %v3243 = vrsqrt.pop %v3227
        %v3244 = vrsqrt.pop %v3228
        %v3245 = vrsqrt.pop %v3229
        %v3246 = vrsqrt.pop %v3230
        %v3247 = vrsqrt.pop %v3231
        %v3248 = vrsqrt.pop %v3232
        %v3249 = vrsqrt.pop %v3233
        %v3250 = vrsqrt.pop %v3234
        %v3251 = vrsqrt.pop %v3235
        %v3252 = vrsqrt.pop %v3236
        %v3253 = vrsqrt.pop %v3237
        %v3254 = vrsqrt.pop %v3238
        %v3255 = vrsqrt.pop %v3239
        %v3256 = vrsqrt.pop %v3240
        %v3257 = vrsqrt.pop %v3241
        %v3258 = vrsqrt.pop %v3242
        %v3259 = vmul.f32 %v3131, %v3243
        %v3260 = vmul.f32 %v3132, %v3244
        %v3261 = vmul.f32 %v3133, %v3245
        %v3262 = vmul.f32 %v3134, %v3246
        %v3263 = vmul.f32 %v3135, %v3247
        %v3264 = vmul.f32 %v3136, %v3248
        %v3265 = vmul.f32 %v3137, %v3249
        %v3266 = vmul.f32 %v3138, %v3250
        %v3267 = vmul.f32 %v3139, %v3251
        %v3268 = vmul.f32 %v3140, %v3252
        %v3269 = vmul.f32 %v3141, %v3253
        %v3270 = vmul.f32 %v3142, %v3254
        %v3271 = vmul.f32 %v3143, %v3255
        %v3272 = vmul.f32 %v3144, %v3256
        %v3273 = vmul.f32 %v3145, %v3257
        %v3274 = vmul.f32 %v3146, %v3258
        %s3275 = scalar_lea.vmem %s6, 16
        %v3276 = vld [vmem:[%s3275] sm:$0xf]
        %v3277 = vld [vmem:[%s3275 + $0x4] sm:$0xf]
        %v3278 = vld [vmem:[%s3275 + $0x8] sm:$0xf]
        %v3279 = vld [vmem:[%s3275 + $0xc] sm:$0xf]
        %v3280 = vpack.c.bf16 %v3260, %v3259
        %v3281 = vpack.c.bf16 %v3262, %v3261
        %v3282 = vpack.c.bf16 %v3264, %v3263
        %v3283 = vpack.c.bf16 %v3266, %v3265
        %v3284 = vpack.c.bf16 %v3268, %v3267
        %v3285 = vpack.c.bf16 %v3270, %v3269
        %v3286 = vpack.c.bf16 %v3272, %v3271
        %v3287 = vpack.c.bf16 %v3274, %v3273
        %v3288 = vld [vmem:[%s9 + $0x1] sm:$0x1]
        %v3289 = vlaneseq
        %v3290 = vshrl.u32 %v3289, 7
        %v3291 = vsub.s32 0, %v3290
        %v3292 = vrot.slane %v3288, %v3291
        %v3297 = vunpack.c.l.b16 %v3276
        %v3298 = vunpack.c.l.b16 %v3277
        %v3299 = vunpack.c.l.b16 %v3278
        %v3300 = vunpack.c.l.b16 %v3279
        %v3301 = vpack.c.b16 %v3298, %v3297
        %v3302 = vpack.c.b16 %v3300, %v3299
        %v3306 = vsel %vm519, %v3280, 0
        %v3309 = vsel %vm519, %v3281, 0
        %v3312 = vsel %vm519, %v3282, 0
        %v3315 = vsel %vm519, %v3283, 0
        %v3318 = vsel %vm519, %v3284, 0
        %v3321 = vsel %vm519, %v3285, 0
        %v3324 = vsel %vm519, %v3286, 0
        %v3327 = vsel %vm519, %v3287, 0
        %3329 = vmatprep.subr.bf16.mxu0 0
        %3330 = vmatpush1.bf16.msra.mxu0 %v3301
        %3331 = vmatprep.subr.bf16.mxu0 0
        %3332 = vmatpush1.bf16.msra.mxu0 %v3302
        %3333 = vmatprep.subr.bf16.mxu0 0
        %3334 = vmatpush1.bf16.msra.mxu0 0
        %3335 = vmatprep.subr.bf16.mxu0 0
        %3336 = vmatpush1.bf16.msra.mxu0 0
        %3337 = vmatprep.subr.bf16.mxu0 0
        %3338 = vmatpush1.bf16.msra.mxu0 0
        %3339 = vmatprep.subr.bf16.mxu0 0
        %3340 = vmatpush1.bf16.msra.mxu0 0
        %3341 = vmatprep.subr.bf16.mxu0 0
        %3342 = vmatpush1.bf16.msra.mxu0 0
        %3343 = vmatprep.subr.bf16.mxu0 0
        %3344 = vmatpush1.bf16.msra.mxu0 0
        %3345 = vmatprep.subr.bf16.mxu0 0
        %3346 = vmatpush1.bf16.msra.mxu0 0
        %3347 = vmatprep.subr.bf16.mxu0 0
        %3348 = vmatpush1.bf16.msra.mxu0 0
        %3349 = vmatprep.subr.bf16.mxu0 0
        %3350 = vmatpush1.bf16.msra.mxu0 0
        %3351 = vmatprep.subr.bf16.mxu0 0
        %3352 = vmatpush1.bf16.msra.mxu0 0
        %3353 = vmatprep.subr.bf16.mxu0 0
        %3354 = vmatpush1.bf16.msra.mxu0 0
        %3355 = vmatprep.subr.bf16.mxu0 0
        %3356 = vmatpush1.bf16.msra.mxu0 0
        %3357 = vmatprep.subr.bf16.mxu0 0
        %3358 = vmatpush1.bf16.msra.mxu0 0
        %3359 = vmatprep.subr.bf16.mxu0 0
        %3360 = vmatpush1.bf16.msra.mxu0 0
        %3361 = vmatprep.mubr.bf16.mxu0 0
        %3362 = vmatmul.mubr.bf16.gmra.mrb[0].mxu0 %v3306
        %v3363 = vpop.f32.mrb[0].mxu0
        %v3364 = vadd.f32 %v3292, %v3363
        %v3365 = vpop.f32.mrb[0].mxu0
        %v3366 = vpop.f32.mrb[0].mxu0
        %v3367 = vadd.f32 %v3292, %v3366
        %v3368 = vpop.f32.mrb[0].mxu0
        %3369 = vmatprep.mubr.bf16.mxu0 0
        %3370 = vmatmul.mubr.bf16.gmra.mrb[0].mxu0 %v3309
        %v3371 = vpop.f32.mrb[0].mxu0
        %v3372 = vadd.f32 %v3292, %v3371
        %v3373 = vpop.f32.mrb[0].mxu0
        %v3374 = vpop.f32.mrb[0].mxu0
        %v3375 = vadd.f32 %v3292, %v3374
        %v3376 = vpop.f32.mrb[0].mxu0
        %3377 = vmatprep.mubr.bf16.mxu0 0
        %3378 = vmatmul.mubr.bf16.gmra.mrb[0].mxu0 %v3312
        %v3379 = vpop.f32.mrb[0].mxu0
        %v3380 = vadd.f32 %v3292, %v3379
        %v3381 = vpop.f32.mrb[0].mxu0
        %v3382 = vpop.f32.mrb[0].mxu0
        %v3383 = vadd.f32 %v3292, %v3382
        %v3384 = vpop.f32.mrb[0].mxu0
        %3385 = vmatprep.mubr.bf16.mxu0 0
        %3386 = vmatmul.mubr.bf16.gmra.mrb[0].mxu0 %v3315
        %v3387 = vpop.f32.mrb[0].mxu0
        %v3388 = vadd.f32 %v3292, %v3387
        %v3389 = vpop.f32.mrb[0].mxu0
        %v3390 = vpop.f32.mrb[0].mxu0
        %v3391 = vadd.f32 %v3292, %v3390
        %v3392 = vpop.f32.mrb[0].mxu0
        %3393 = vmatprep.mubr.bf16.mxu0 0
        %3394 = vmatmul.mubr.bf16.gmra.mrb[0].mxu0 %v3318
        %v3395 = vpop.f32.mrb[0].mxu0
        %v3396 = vadd.f32 %v3292, %v3395
        %v3397 = vpop.f32.mrb[0].mxu0
        %v3398 = vpop.f32.mrb[0].mxu0
        %v3399 = vadd.f32 %v3292, %v3398
        %v3400 = vpop.f32.mrb[0].mxu0
        %3401 = vmatprep.mubr.bf16.mxu0 0
        %3402 = vmatmul.mubr.bf16.gmra.mrb[0].mxu0 %v3321
        %v3403 = vpop.f32.mrb[0].mxu0
        %v3404 = vadd.f32 %v3292, %v3403
        %v3405 = vpop.f32.mrb[0].mxu0
        %v3406 = vpop.f32.mrb[0].mxu0
        %v3407 = vadd.f32 %v3292, %v3406
        %v3408 = vpop.f32.mrb[0].mxu0
        %3409 = vmatprep.mubr.bf16.mxu0 0
        %3410 = vmatmul.mubr.bf16.gmra.mrb[0].mxu0 %v3324
        %v3411 = vpop.f32.mrb[0].mxu0
        %v3412 = vadd.f32 %v3292, %v3411
        %v3413 = vpop.f32.mrb[0].mxu0
        %v3414 = vpop.f32.mrb[0].mxu0
        %v3415 = vadd.f32 %v3292, %v3414
        %v3416 = vpop.f32.mrb[0].mxu0
        %3417 = vmatprep.mubr.bf16.mxu0 0
        %3418 = vmatmul.mubr.bf16.gmra.mrb[0].mxu0 %v3327
        %v3419 = vpop.f32.mrb[0].mxu0
        %v3420 = vadd.f32 %v3292, %v3419
        %v3421 = vpop.f32.mrb[0].mxu0
        %v3422 = vpop.f32.mrb[0].mxu0
        %v3423 = vadd.f32 %v3292, %v3422
        %v3424 = vpop.f32.mrb[0].mxu0
        %3425 = vdwg.mxu0
        %v3426 = vmul.f32 %v3364, 0.5
        %v3427 = vmul.f32 %v3367, 0.5
        %v3428 = vmul.f32 %v3372, 0.5
        %v3429 = vmul.f32 %v3375, 0.5
        %v3430 = vmul.f32 %v3380, 0.5
        %v3431 = vmul.f32 %v3383, 0.5
        %v3432 = vmul.f32 %v3388, 0.5
        %v3433 = vmul.f32 %v3391, 0.5
        %v3434 = vmul.f32 %v3396, 0.5
        %v3435 = vmul.f32 %v3399, 0.5
        %v3436 = vmul.f32 %v3404, 0.5
        %v3437 = vmul.f32 %v3407, 0.5
        %v3438 = vmul.f32 %v3412, 0.5
        %v3439 = vmul.f32 %v3415, 0.5
        %v3440 = vmul.f32 %v3420, 0.5
        %v3441 = vmul.f32 %v3423, 0.5
        %v3442 = vmul.f32 %v3364, 0.70710677
        %v3443 = vmul.f32 %v3367, 0.70710677
        %v3444 = vmul.f32 %v3372, 0.70710677
        %v3445 = vmul.f32 %v3375, 0.70710677
        %v3446 = vmul.f32 %v3380, 0.70710677
        %v3447 = vmul.f32 %v3383, 0.70710677
        %v3448 = vmul.f32 %v3388, 0.70710677
        %v3449 = vmul.f32 %v3391, 0.70710677
        %v3450 = vmul.f32 %v3396, 0.70710677
        %v3451 = vmul.f32 %v3399, 0.70710677
        %v3452 = vmul.f32 %v3404, 0.70710677
        %v3453 = vmul.f32 %v3407, 0.70710677
        %v3454 = vmul.f32 %v3412, 0.70710677
        %v3455 = vmul.f32 %v3415, 0.70710677
        %v3456 = vmul.f32 %v3420, 0.70710677
        %v3457 = vmul.f32 %v3423, 0.70710677
        %v3458 = verf.f32.pop %v3442
        %v3459 = verf.f32.pop %v3443
        %v3460 = verf.f32.pop %v3444
        %v3461 = verf.f32.pop %v3445
        %v3462 = verf.f32.pop %v3446
        %v3463 = verf.f32.pop %v3447
        %v3464 = verf.f32.pop %v3448
        %v3465 = verf.f32.pop %v3449
        %v3466 = verf.f32.pop %v3450
        %v3467 = verf.f32.pop %v3451
        %v3468 = verf.f32.pop %v3452
        %v3469 = verf.f32.pop %v3453
        %v3470 = verf.f32.pop %v3454
        %v3471 = verf.f32.pop %v3455
        %v3472 = verf.f32.pop %v3456
        %v3473 = verf.f32.pop %v3457
        %v3474 = vadd.f32 %v3458, 1.0
        %v3475 = vadd.f32 %v3459, 1.0
        %v3476 = vadd.f32 %v3460, 1.0
        %v3477 = vadd.f32 %v3461, 1.0
        %v3478 = vadd.f32 %v3462, 1.0
        %v3479 = vadd.f32 %v3463, 1.0
        %v3480 = vadd.f32 %v3464, 1.0
        %v3481 = vadd.f32 %v3465, 1.0
        %v3482 = vadd.f32 %v3466, 1.0
        %v3483 = vadd.f32 %v3467, 1.0
        %v3484 = vadd.f32 %v3468, 1.0
        %v3485 = vadd.f32 %v3469, 1.0
        %v3486 = vadd.f32 %v3470, 1.0
        %v3487 = vadd.f32 %v3471, 1.0
        %v3488 = vadd.f32 %v3472, 1.0
        %v3489 = vadd.f32 %v3473, 1.0
        %v3490 = vmul.f32 %v3426, %v3474
        %v3491 = vmul.f32 %v3427, %v3475
        %v3492 = vmul.f32 %v3428, %v3476
        %v3493 = vmul.f32 %v3429, %v3477
        %v3494 = vmul.f32 %v3430, %v3478
        %v3495 = vmul.f32 %v3431, %v3479
        %v3496 = vmul.f32 %v3432, %v3480
        %v3497 = vmul.f32 %v3433, %v3481
        %v3498 = vmul.f32 %v3434, %v3482
        %v3499 = vmul.f32 %v3435, %v3483
        %v3500 = vmul.f32 %v3436, %v3484
        %v3501 = vmul.f32 %v3437, %v3485
        %v3502 = vmul.f32 %v3438, %v3486
        %v3503 = vmul.f32 %v3439, %v3487
        %v3504 = vmul.f32 %v3440, %v3488
        %v3505 = vmul.f32 %v3441, %v3489
        %s3506 = scalar_lea.vmem %s7, 32
        %v3507 = vld [vmem:[%s3506] sm:$0xf]
        %v3508 = vld [vmem:[%s3506 + $0x4] sm:$0xf]
        %v3509 = vld [vmem:[%s3506 + $0x8] sm:$0xf]
        %v3510 = vld [vmem:[%s3506 + $0xc] sm:$0xf]
        %v3511 = vld [vmem:[%s3506 + $0x10] sm:$0xf]
        %v3512 = vld [vmem:[%s3506 + $0x14] sm:$0xf]
        %v3513 = vld [vmem:[%s3506 + $0x18] sm:$0xf]
        %v3514 = vld [vmem:[%s3506 + $0x1c] sm:$0xf]
        %v3515 = vpack.c.bf16 %v3491, %v3490
        %v3516 = vpack.c.bf16 %v3493, %v3492
        %v3517 = vpack.c.bf16 %v3495, %v3494
        %v3518 = vpack.c.bf16 %v3497, %v3496
        %v3519 = vpack.c.bf16 %v3499, %v3498
        %v3520 = vpack.c.bf16 %v3501, %v3500
        %v3521 = vpack.c.bf16 %v3503, %v3502
        %v3522 = vpack.c.bf16 %v3505, %v3504
        %v3531 = vunpack.c.l.b16 %v3507
        %v3532 = vunpack.c.l.b16 %v3508
        %v3533 = vunpack.c.l.b16 %v3509
        %v3534 = vunpack.c.l.b16 %v3510
        %v3535 = vunpack.c.l.b16 %v3511
        %v3536 = vunpack.c.l.b16 %v3512
        %v3537 = vunpack.c.l.b16 %v3513
        %v3538 = vunpack.c.l.b16 %v3514
        %v3539 = vpack.c.b16 %v3532, %v3531
        %v3540 = vpack.c.b16 %v3534, %v3533
        %v3541 = vpack.c.b16 %v3536, %v3535
        %v3542 = vpack.c.b16 %v3538, %v3537
        %v3548 = vsel %vm2012, %v3515, 0
        %v3551 = vsel %vm2012, %v3516, 0
        %v3554 = vsel %vm2012, %v3517, 0
        %v3557 = vsel %vm2012, %v3518, 0
        %v3560 = vsel %vm2012, %v3519, 0
        %v3563 = vsel %vm2012, %v3520, 0
        %v3566 = vsel %vm2012, %v3521, 0
        %v3569 = vsel %vm2012, %v3522, 0
        %3571 = vmatprep.subr.bf16.mxu0 0
        %3572 = vmatpush1.bf16.msra.mxu0 %v3539
        %3573 = vmatprep.subr.bf16.mxu0 0
        %3574 = vmatpush1.bf16.msra.mxu0 %v3540
        %3575 = vmatprep.subr.bf16.mxu0 0
        %3576 = vmatpush1.bf16.msra.mxu0 %v3541
        %3577 = vmatprep.subr.bf16.mxu0 0
        %3578 = vmatpush1.bf16.msra.mxu0 %v3542
        %3579 = vmatprep.subr.bf16.mxu0 0
        %3580 = vmatpush1.bf16.msra.mxu0 0
        %3581 = vmatprep.subr.bf16.mxu0 0
        %3582 = vmatpush1.bf16.msra.mxu0 0
        %3583 = vmatprep.subr.bf16.mxu0 0
        %3584 = vmatpush1.bf16.msra.mxu0 0
        %3585 = vmatprep.subr.bf16.mxu0 0
        %3586 = vmatpush1.bf16.msra.mxu0 0
        %3587 = vmatprep.subr.bf16.mxu0 0
        %3588 = vmatpush1.bf16.msra.mxu0 0
        %3589 = vmatprep.subr.bf16.mxu0 0
        %3590 = vmatpush1.bf16.msra.mxu0 0
        %3591 = vmatprep.subr.bf16.mxu0 0
        %3592 = vmatpush1.bf16.msra.mxu0 0
        %3593 = vmatprep.subr.bf16.mxu0 0
        %3594 = vmatpush1.bf16.msra.mxu0 0
        %3595 = vmatprep.subr.bf16.mxu0 0
        %3596 = vmatpush1.bf16.msra.mxu0 0
        %3597 = vmatprep.subr.bf16.mxu0 0
        %3598 = vmatpush1.bf16.msra.mxu0 0
        %3599 = vmatprep.subr.bf16.mxu0 0
        %3600 = vmatpush1.bf16.msra.mxu0 0
        %3601 = vmatprep.subr.bf16.mxu0 0
        %3602 = vmatpush1.bf16.msra.mxu0 0
        %3603 = vmatprep.mubr.bf16.mxu0 0
        %3604 = vmatmul.mubr.bf16.gmra.mrb[0].mxu0 %v3548
        %v3605 = vpop.f32.mrb[0].mxu0
        %v3606 = vadd.f32 0.0, %v3605
        %v3607 = vpop.f32.mrb[0].mxu0
        %v3608 = vpop.f32.mrb[0].mxu0
        %v3609 = vadd.f32 0.0, %v3608
        %v3610 = vpop.f32.mrb[0].mxu0
        %3611 = vmatprep.mubr.bf16.mxu0 0
        %3612 = vmatmul.mubr.bf16.gmra.mrb[0].mxu0 %v3551
        %v3613 = vpop.f32.mrb[0].mxu0
        %v3614 = vadd.f32 0.0, %v3613
        %v3615 = vpop.f32.mrb[0].mxu0
        %v3616 = vpop.f32.mrb[0].mxu0
        %v3617 = vadd.f32 0.0, %v3616
        %v3618 = vpop.f32.mrb[0].mxu0
        %3619 = vmatprep.mubr.bf16.mxu0 0
        %3620 = vmatmul.mubr.bf16.gmra.mrb[0].mxu0 %v3554
        %v3621 = vpop.f32.mrb[0].mxu0
        %v3622 = vadd.f32 0.0, %v3621
        %v3623 = vpop.f32.mrb[0].mxu0
        %v3624 = vpop.f32.mrb[0].mxu0
        %v3625 = vadd.f32 0.0, %v3624
        %v3626 = vpop.f32.mrb[0].mxu0
        %3627 = vmatprep.mubr.bf16.mxu0 0
        %3628 = vmatmul.mubr.bf16.gmra.mrb[0].mxu0 %v3557
        %v3629 = vpop.f32.mrb[0].mxu0
        %v3630 = vadd.f32 0.0, %v3629
        %v3631 = vpop.f32.mrb[0].mxu0
        %v3632 = vpop.f32.mrb[0].mxu0
        %v3633 = vadd.f32 0.0, %v3632
        %v3634 = vpop.f32.mrb[0].mxu0
        %3635 = vmatprep.mubr.bf16.mxu0 0
        %3636 = vmatmul.mubr.bf16.gmra.mrb[0].mxu0 %v3560
        %v3637 = vpop.f32.mrb[0].mxu0
        %v3638 = vadd.f32 0.0, %v3637
        %v3639 = vpop.f32.mrb[0].mxu0
        %v3640 = vpop.f32.mrb[0].mxu0
        %v3641 = vadd.f32 0.0, %v3640
        %v3642 = vpop.f32.mrb[0].mxu0
        %3643 = vmatprep.mubr.bf16.mxu0 0
        %3644 = vmatmul.mubr.bf16.gmra.mrb[0].mxu0 %v3563
        %v3645 = vpop.f32.mrb[0].mxu0
        %v3646 = vadd.f32 0.0, %v3645
        %v3647 = vpop.f32.mrb[0].mxu0
        %v3648 = vpop.f32.mrb[0].mxu0
        %v3649 = vadd.f32 0.0, %v3648
        %v3650 = vpop.f32.mrb[0].mxu0
        %3651 = vmatprep.mubr.bf16.mxu0 0
        %3652 = vmatmul.mubr.bf16.gmra.mrb[0].mxu0 %v3566
        %v3653 = vpop.f32.mrb[0].mxu0
        %v3654 = vadd.f32 0.0, %v3653
        %v3655 = vpop.f32.mrb[0].mxu0
        %v3656 = vpop.f32.mrb[0].mxu0
        %v3657 = vadd.f32 0.0, %v3656
        %v3658 = vpop.f32.mrb[0].mxu0
        %3659 = vmatprep.mubr.bf16.mxu0 0
        %3660 = vmatmul.mubr.bf16.gmra.mrb[0].mxu0 %v3569
        %v3661 = vpop.f32.mrb[0].mxu0
        %v3662 = vadd.f32 0.0, %v3661
        %v3663 = vpop.f32.mrb[0].mxu0
        %v3664 = vpop.f32.mrb[0].mxu0
        %v3665 = vadd.f32 0.0, %v3664
        %v3666 = vpop.f32.mrb[0].mxu0
        %3667 = vdwg.mxu0
        %v3668 = vadd.f32 %v3051, %v3606
        %v3669 = vadd.f32 %v3052, %v3609
        %v3670 = vadd.f32 %v3053, %v3614
        %v3671 = vadd.f32 %v3054, %v3617
        %v3672 = vadd.f32 %v3055, %v3622
        %v3673 = vadd.f32 %v3056, %v3625
        %v3674 = vadd.f32 %v3057, %v3630
        %v3675 = vadd.f32 %v3058, %v3633
        %v3676 = vadd.f32 %v3059, %v3638
        %v3677 = vadd.f32 %v3060, %v3641
        %v3678 = vadd.f32 %v3061, %v3646
        %v3679 = vadd.f32 %v3062, %v3649
        %v3680 = vadd.f32 %v3063, %v3654
        %v3681 = vadd.f32 %v3064, %v3657
        %v3682 = vadd.f32 %v3065, %v3662
        %v3683 = vadd.f32 %v3066, %v3665
        %v3684 = vld [vmem:[%s8 + $0x6] sm:$0x1]
        %v3685 = vlaneseq
        %v3686 = vshrl.u32 %v3685, 7
        %v3687 = vsub.s32 0, %v3686
        %v3688 = vrot.slane %v3684, %v3687
        %v3689 = vadd.f32 %v3668, %v3688
        %v3690 = vadd.f32 %v3669, %v3688
        %v3691 = vadd.f32 %v3670, %v3688
        %v3692 = vadd.f32 %v3671, %v3688
        %v3693 = vadd.f32 %v3672, %v3688
        %v3694 = vadd.f32 %v3673, %v3688
        %v3695 = vadd.f32 %v3674, %v3688
        %v3696 = vadd.f32 %v3675, %v3688
        %v3697 = vadd.f32 %v3676, %v3688
        %v3698 = vadd.f32 %v3677, %v3688
        %v3699 = vadd.f32 %v3678, %v3688
        %v3700 = vadd.f32 %v3679, %v3688
        %v3701 = vadd.f32 %v3680, %v3688
        %v3702 = vadd.f32 %v3681, %v3688
        %v3703 = vadd.f32 %v3682, %v3688
        %v3704 = vadd.f32 %v3683, %v3688
        %v3705 = vsel %vm519, %v3689, 0.0
        %3706 = vadd.xlane.f32.xlu0 %v3705
        %v3707 = vpop.xlane.xlu0 %3706
        %v3708 = vsel %vm519, %v3690, 0.0
        %3709 = vadd.xlane.f32.xlu0 %v3708
        %v3710 = vpop.xlane.xlu0 %3709
        %v3711 = vsel %vm519, %v3691, 0.0
        %3712 = vadd.xlane.f32.xlu0 %v3711
        %v3713 = vpop.xlane.xlu0 %3712
        %v3714 = vsel %vm519, %v3692, 0.0
        %3715 = vadd.xlane.f32.xlu0 %v3714
        %v3716 = vpop.xlane.xlu0 %3715
        %v3717 = vsel %vm519, %v3693, 0.0
        %3718 = vadd.xlane.f32.xlu0 %v3717
        %v3719 = vpop.xlane.xlu0 %3718
        %v3720 = vsel %vm519, %v3694, 0.0
        %3721 = vadd.xlane.f32.xlu0 %v3720
        %v3722 = vpop.xlane.xlu0 %3721
        %v3723 = vsel %vm519, %v3695, 0.0
        %3724 = vadd.xlane.f32.xlu0 %v3723
        %v3725 = vpop.xlane.xlu0 %3724
        %v3726 = vsel %vm519, %v3696, 0.0
        %3727 = vadd.xlane.f32.xlu0 %v3726
        %v3728 = vpop.xlane.xlu0 %3727
        %v3729 = vsel %vm519, %v3697, 0.0
        %3730 = vadd.xlane.f32.xlu0 %v3729
        %v3731 = vpop.xlane.xlu0 %3730
        %v3732 = vsel %vm519, %v3698, 0.0
        %3733 = vadd.xlane.f32.xlu0 %v3732
        %v3734 = vpop.xlane.xlu0 %3733
        %v3735 = vsel %vm519, %v3699, 0.0
        %3736 = vadd.xlane.f32.xlu0 %v3735
        %v3737 = vpop.xlane.xlu0 %3736
        %v3738 = vsel %vm519, %v3700, 0.0
        %3739 = vadd.xlane.f32.xlu0 %v3738
        %v3740 = vpop.xlane.xlu0 %3739
        %v3741 = vsel %vm519, %v3701, 0.0
        %3742 = vadd.xlane.f32.xlu0 %v3741
        %v3743 = vpop.xlane.xlu0 %3742
        %v3744 = vsel %vm519, %v3702, 0.0
        %3745 = vadd.xlane.f32.xlu0 %v3744
        %v3746 = vpop.xlane.xlu0 %3745
        %v3747 = vsel %vm519, %v3703, 0.0
        %3748 = vadd.xlane.f32.xlu0 %v3747
        %v3749 = vpop.xlane.xlu0 %3748
        %v3750 = vsel %vm519, %v3704, 0.0
        %3751 = vadd.xlane.f32.xlu0 %v3750
        %v3752 = vpop.xlane.xlu0 %3751
        %v3753 = vmul.f32 %v3707, %v691
        %v3754 = vmul.f32 %v3710, %v691
        %v3755 = vmul.f32 %v3713, %v691
        %v3756 = vmul.f32 %v3716, %v691
        %v3757 = vmul.f32 %v3719, %v691
        %v3758 = vmul.f32 %v3722, %v691
        %v3759 = vmul.f32 %v3725, %v691
        %v3760 = vmul.f32 %v3728, %v691
        %v3761 = vmul.f32 %v3731, %v691
        %v3762 = vmul.f32 %v3734, %v691
        %v3763 = vmul.f32 %v3737, %v691
        %v3764 = vmul.f32 %v3740, %v691
        %v3765 = vmul.f32 %v3743, %v691
        %v3766 = vmul.f32 %v3746, %v691
        %v3767 = vmul.f32 %v3749, %v691
        %v3768 = vmul.f32 %v3752, %v691
        %v3769 = vsub.f32 %v3689, %v3753
        %v3770 = vsub.f32 %v3690, %v3754
        %v3771 = vsub.f32 %v3691, %v3755
        %v3772 = vsub.f32 %v3692, %v3756
        %v3773 = vsub.f32 %v3693, %v3757
        %v3774 = vsub.f32 %v3694, %v3758
        %v3775 = vsub.f32 %v3695, %v3759
        %v3776 = vsub.f32 %v3696, %v3760
        %v3777 = vsub.f32 %v3697, %v3761
        %v3778 = vsub.f32 %v3698, %v3762
        %v3779 = vsub.f32 %v3699, %v3763
        %v3780 = vsub.f32 %v3700, %v3764
        %v3781 = vsub.f32 %v3701, %v3765
        %v3782 = vsub.f32 %v3702, %v3766
        %v3783 = vsub.f32 %v3703, %v3767
        %v3784 = vsub.f32 %v3704, %v3768
        %v3785 = vmul.f32 %v3769, %v3769
        %v3786 = vmul.f32 %v3770, %v3770
        %v3787 = vmul.f32 %v3771, %v3771
        %v3788 = vmul.f32 %v3772, %v3772
        %v3789 = vmul.f32 %v3773, %v3773
        %v3790 = vmul.f32 %v3774, %v3774
        %v3791 = vmul.f32 %v3775, %v3775
        %v3792 = vmul.f32 %v3776, %v3776
        %v3793 = vmul.f32 %v3777, %v3777
        %v3794 = vmul.f32 %v3778, %v3778
        %v3795 = vmul.f32 %v3779, %v3779
        %v3796 = vmul.f32 %v3780, %v3780
        %v3797 = vmul.f32 %v3781, %v3781
        %v3798 = vmul.f32 %v3782, %v3782
        %v3799 = vmul.f32 %v3783, %v3783
        %v3800 = vmul.f32 %v3784, %v3784
        %v3801 = vsel %vm519, %v3785, 0.0
        %3802 = vadd.xlane.f32.xlu0 %v3801
        %v3803 = vpop.xlane.xlu0 %3802
        %v3804 = vsel %vm519, %v3786, 0.0
        %3805 = vadd.xlane.f32.xlu0 %v3804
        %v3806 = vpop.xlane.xlu0 %3805
        %v3807 = vsel %vm519, %v3787, 0.0
        %3808 = vadd.xlane.f32.xlu0 %v3807
        %v3809 = vpop.xlane.xlu0 %3808
        %v3810 = vsel %vm519, %v3788, 0.0
        %3811 = vadd.xlane.f32.xlu0 %v3810
        %v3812 = vpop.xlane.xlu0 %3811
        %v3813 = vsel %vm519, %v3789, 0.0
        %3814 = vadd.xlane.f32.xlu0 %v3813
        %v3815 = vpop.xlane.xlu0 %3814
        %v3816 = vsel %vm519, %v3790, 0.0
        %3817 = vadd.xlane.f32.xlu0 %v3816
        %v3818 = vpop.xlane.xlu0 %3817
        %v3819 = vsel %vm519, %v3791, 0.0
        %3820 = vadd.xlane.f32.xlu0 %v3819
        %v3821 = vpop.xlane.xlu0 %3820
        %v3822 = vsel %vm519, %v3792, 0.0
        %3823 = vadd.xlane.f32.xlu0 %v3822
        %v3824 = vpop.xlane.xlu0 %3823
        %v3825 = vsel %vm519, %v3793, 0.0
        %3826 = vadd.xlane.f32.xlu0 %v3825
        %v3827 = vpop.xlane.xlu0 %3826
        %v3828 = vsel %vm519, %v3794, 0.0
        %3829 = vadd.xlane.f32.xlu0 %v3828
        %v3830 = vpop.xlane.xlu0 %3829
        %v3831 = vsel %vm519, %v3795, 0.0
        %3832 = vadd.xlane.f32.xlu0 %v3831
        %v3833 = vpop.xlane.xlu0 %3832
        %v3834 = vsel %vm519, %v3796, 0.0
        %3835 = vadd.xlane.f32.xlu0 %v3834
        %v3836 = vpop.xlane.xlu0 %3835
        %v3837 = vsel %vm519, %v3797, 0.0
        %3838 = vadd.xlane.f32.xlu0 %v3837
        %v3839 = vpop.xlane.xlu0 %3838
        %v3840 = vsel %vm519, %v3798, 0.0
        %3841 = vadd.xlane.f32.xlu0 %v3840
        %v3842 = vpop.xlane.xlu0 %3841
        %v3843 = vsel %vm519, %v3799, 0.0
        %3844 = vadd.xlane.f32.xlu0 %v3843
        %v3845 = vpop.xlane.xlu0 %3844
        %v3846 = vsel %vm519, %v3800, 0.0
        %3847 = vadd.xlane.f32.xlu0 %v3846
        %v3848 = vpop.xlane.xlu0 %3847
        %v3849 = vmul.f32 %v3803, %v691
        %v3850 = vmul.f32 %v3806, %v691
        %v3851 = vmul.f32 %v3809, %v691
        %v3852 = vmul.f32 %v3812, %v691
        %v3853 = vmul.f32 %v3815, %v691
        %v3854 = vmul.f32 %v3818, %v691
        %v3855 = vmul.f32 %v3821, %v691
        %v3856 = vmul.f32 %v3824, %v691
        %v3857 = vmul.f32 %v3827, %v691
        %v3858 = vmul.f32 %v3830, %v691
        %v3859 = vmul.f32 %v3833, %v691
        %v3860 = vmul.f32 %v3836, %v691
        %v3861 = vmul.f32 %v3839, %v691
        %v3862 = vmul.f32 %v3842, %v691
        %v3863 = vmul.f32 %v3845, %v691
        %v3864 = vmul.f32 %v3848, %v691
        %v3865 = vadd.f32 %v3849, 1e-05
        %v3866 = vadd.f32 %v3850, 1e-05
        %v3867 = vadd.f32 %v3851, 1e-05
        %v3868 = vadd.f32 %v3852, 1e-05
        %v3869 = vadd.f32 %v3853, 1e-05
        %v3870 = vadd.f32 %v3854, 1e-05
        %v3871 = vadd.f32 %v3855, 1e-05
        %v3872 = vadd.f32 %v3856, 1e-05
        %v3873 = vadd.f32 %v3857, 1e-05
        %v3874 = vadd.f32 %v3858, 1e-05
        %v3875 = vadd.f32 %v3859, 1e-05
        %v3876 = vadd.f32 %v3860, 1e-05
        %v3877 = vadd.f32 %v3861, 1e-05
        %v3878 = vadd.f32 %v3862, 1e-05
        %v3879 = vadd.f32 %v3863, 1e-05
        %v3880 = vadd.f32 %v3864, 1e-05
        %v3881 = vrsqrt.pop %v3865
        %v3882 = vrsqrt.pop %v3866
        %v3883 = vrsqrt.pop %v3867
        %v3884 = vrsqrt.pop %v3868
        %v3885 = vrsqrt.pop %v3869
        %v3886 = vrsqrt.pop %v3870
        %v3887 = vrsqrt.pop %v3871
        %v3888 = vrsqrt.pop %v3872
        %v3889 = vrsqrt.pop %v3873
        %v3890 = vrsqrt.pop %v3874
        %v3891 = vrsqrt.pop %v3875
        %v3892 = vrsqrt.pop %v3876
        %v3893 = vrsqrt.pop %v3877
        %v3894 = vrsqrt.pop %v3878
        %v3895 = vrsqrt.pop %v3879
        %v3896 = vrsqrt.pop %v3880
        %v3897 = vmul.f32 %v3769, %v3881
        %v3898 = vmul.f32 %v3770, %v3882
        %v3899 = vmul.f32 %v3771, %v3883
        %v3900 = vmul.f32 %v3772, %v3884
        %v3901 = vmul.f32 %v3773, %v3885
        %v3902 = vmul.f32 %v3774, %v3886
        %v3903 = vmul.f32 %v3775, %v3887
        %v3904 = vmul.f32 %v3776, %v3888
        %v3905 = vmul.f32 %v3777, %v3889
        %v3906 = vmul.f32 %v3778, %v3890
        %v3907 = vmul.f32 %v3779, %v3891
        %v3908 = vmul.f32 %v3780, %v3892
        %v3909 = vmul.f32 %v3781, %v3893
        %v3910 = vmul.f32 %v3782, %v3894
        %v3911 = vmul.f32 %v3783, %v3895
        %v3912 = vmul.f32 %v3784, %v3896
        %v3913 = vld [vmem:[%s10] sm:$0xf]
        %v3914 = vpack.c.bf16 %v3898, %v3897
        %v3915 = vpack.c.bf16 %v3900, %v3899
        %v3916 = vpack.c.bf16 %v3902, %v3901
        %v3917 = vpack.c.bf16 %v3904, %v3903
        %v3918 = vpack.c.bf16 %v3906, %v3905
        %v3919 = vpack.c.bf16 %v3908, %v3907
        %v3920 = vpack.c.bf16 %v3910, %v3909
        %v3921 = vpack.c.bf16 %v3912, %v3911
        %3922 = vmatprep.subr.bf16.mxu0 0
        %3923 = vmatpush1.bf16.msra.mxu0 %v3914
        %3924 = vmatprep.subr.bf16.mxu0 0
        %3925 = vmatpush1.bf16.msra.mxu0 %v3915
        %3926 = vmatprep.subr.bf16.mxu0 0
        %3927 = vmatpush1.bf16.msra.mxu0 %v3916
        %3928 = vmatprep.subr.bf16.mxu0 0
        %3929 = vmatpush1.bf16.msra.mxu0 %v3917
        %3930 = vmatprep.subr.bf16.mxu0 0
        %3931 = vmatpush1.bf16.msra.mxu0 %v3918
        %3932 = vmatprep.subr.bf16.mxu0 0
        %3933 = vmatpush1.bf16.msra.mxu0 %v3919
        %3934 = vmatprep.subr.bf16.mxu0 0
        %3935 = vmatpush1.bf16.msra.mxu0 %v3920
        %3936 = vmatprep.subr.bf16.mxu0 0
        %3937 = vmatpush1.bf16.msra.mxu0 %v3921
        %3938 = vmatprep.subr.bf16.mxu0 0
        %3939 = vmatpush1.bf16.msra.mxu0 0
        %3940 = vmatprep.subr.bf16.mxu0 0
        %3941 = vmatpush1.bf16.msra.mxu0 0
        %3942 = vmatprep.subr.bf16.mxu0 0
        %3943 = vmatpush1.bf16.msra.mxu0 0
        %3944 = vmatprep.subr.bf16.mxu0 0
        %3945 = vmatpush1.bf16.msra.mxu0 0
        %3946 = vmatprep.subr.bf16.mxu0 0
        %3947 = vmatpush1.bf16.msra.mxu0 0
        %3948 = vmatprep.subr.bf16.mxu0 0
        %3949 = vmatpush1.bf16.msra.mxu0 0
        %3950 = vmatprep.subr.bf16.mxu0 0
        %3951 = vmatpush1.bf16.msra.mxu0 0
        %3952 = vmatprep.subr.bf16.mxu0 0
        %3953 = vmatpush1.bf16.msra.mxu0 0
        %3954 = vmatprep.mubr.bf16.mxu0 0
        %3955 = vmatmul.mubr.bf16.gmra.mrb[0].mxu0 %v3913
        %v3956 = vpop.f32.mrb[0].mxu0
        %v3957 = vadd.f32 0.0, %v3956
        %v3958 = vpop.f32.mrb[0].mxu0
        %v3959 = vpop.f32.mrb[0].mxu0
        %v3960 = vpop.f32.mrb[0].mxu0
        %3961 = vdwg.mxu0
        %v3962 = vld [vmem:[%s11] sm:$0xf]
        %v3963 = vld [vmem:[%s11 + $0x4] sm:$0xf]
        %v3964 = vld [vmem:[%s11 + $0x8] sm:$0xf]
        %v3965 = vld [vmem:[%s11 + $0xc] sm:$0xf]
        %v3966 = vpack.c.bf16 %v3957, %v3957
        %v3967 = vld [vmem:[%s12] sm:$0x1]
        %v3969 = vlaneseq
        %v3970 = vshrl.u32 %v3969, 7
        %v3971 = vsub.s32 0, %v3970
        %v3972 = vrot.slane %v3967, %v3971
        %v3978 = vunpack.c.l.b16 %v3962
        %v3979 = vunpack.c.l.b16 %v3963
        %v3980 = vunpack.c.l.b16 %v3964
        %v3981 = vunpack.c.l.b16 %v3965
        %v3982 = vpack.c.b16 %v3979, %v3978
        %v3983 = vpack.c.b16 %v3981, %v3980
        %v3987 = vsel %vm519, %v3966, 0
        %3989 = vmatprep.subr.bf16.mxu0 0
        %3990 = vmatpush1.bf16.msra.mxu0 %v3982
        %3991 = vmatprep.subr.bf16.mxu0 0
        %3992 = vmatpush1.bf16.msra.mxu0 %v3983
        %3993 = vmatprep.subr.bf16.mxu0 0
        %3994 = vmatpush1.bf16.msra.mxu0 0
        %3995 = vmatprep.subr.bf16.mxu0 0
        %3996 = vmatpush1.bf16.msra.mxu0 0
        %3997 = vmatprep.subr.bf16.mxu0 0
        %3998 = vmatpush1.bf16.msra.mxu0 0
        %3999 = vmatprep.subr.bf16.mxu0 0
        %4000 = vmatpush1.bf16.msra.mxu0 0
        %4001 = vmatprep.subr.bf16.mxu0 0
        %4002 = vmatpush1.bf16.msra.mxu0 0
        %4003 = vmatprep.subr.bf16.mxu0 0
        %4004 = vmatpush1.bf16.msra.mxu0 0
        %4005 = vmatprep.subr.bf16.mxu0 0
        %4006 = vmatpush1.bf16.msra.mxu0 0
        %4007 = vmatprep.subr.bf16.mxu0 0
        %4008 = vmatpush1.bf16.msra.mxu0 0
        %4009 = vmatprep.subr.bf16.mxu0 0
        %4010 = vmatpush1.bf16.msra.mxu0 0
        %4011 = vmatprep.subr.bf16.mxu0 0
        %4012 = vmatpush1.bf16.msra.mxu0 0
        %4013 = vmatprep.subr.bf16.mxu0 0
        %4014 = vmatpush1.bf16.msra.mxu0 0
        %4015 = vmatprep.subr.bf16.mxu0 0
        %4016 = vmatpush1.bf16.msra.mxu0 0
        %4017 = vmatprep.subr.bf16.mxu0 0
        %4018 = vmatpush1.bf16.msra.mxu0 0
        %4019 = vmatprep.subr.bf16.mxu0 0
        %4020 = vmatpush1.bf16.msra.mxu0 0
        %4021 = vmatprep.mubr.bf16.mxu0 0
        %4022 = vmatmul.mubr.bf16.gmra.mrb[0].mxu0 %v3987
        %v4023 = vpop.f32.mrb[0].mxu0
        %v4024 = vadd.f32 %v3972, %v4023
        %v4025 = vpop.f32.mrb[0].mxu0
        %v4026 = vpop.f32.mrb[0].mxu0
        %v4027 = vpop.f32.mrb[0].mxu0
        %4028 = vdwg.mxu0
        %4029 = vst [vmem:[%s434] sm:$0xff] %v4024
        %s4030 = sand.u32 %s313, 1
        %s4031 = scalar_lea.sflag [#allocation3], %s4030
        %s4032 = sand.u32 %s313, 1
        %s4033 = smul.addr %s4032, 8
        %s4034 = scalar_lea.vmem [#allocation2], %s4033
        // Predicated region
        $region73: #{tpu_custom_call.1} parent=71 // pred_check
          %p4035 = pneg %p323
        $region74: #{tpu_custom_call.1} parent=71 // pred_check_branch
          %4037 = sbr.rel (%p4035) target = $region76
        $region75: #{tpu_custom_call.1} parent=71 // pred_region
          %s4039 = ssub.s32 128, 128
          %4040 = vsyncadd %s4031, %s4039
          %s4041 = smul.addr %s27, 128
          %s4042 = scalar_lea.hbm %s13, %s4041
          %s4044 = sshll.u32 %s4034, 4
          %s4045 = int_to_ptr.vmem [resolvable:$true] %s4044
          %4047 = dma.vmem_to_hbm [thread:$0]  %s4045, 128, %s4042, %s4031
        $region76: #{tpu_custom_call.1} parent=71 // pred_fallthru
          _
      $region72: #{tpu_custom_call.1} parent=5 // pred_fallthru
        _
      %p4048 = scmp.le.s32.totalorder 2, %s22
      // Predicated region
      $region77: #{tpu_custom_call.1} parent=5 // pred_check
        %p4049 = pneg %p4048
      $region78: #{tpu_custom_call.1} parent=5 // pred_check_branch
        %4051 = sbr.rel (%p4049) target = $region80
      $region79: #{tpu_custom_call.1} parent=5 // pred_region
        %s4052 = ssub.s32 %s22, 2
        // Predicated region
        $region81: #{tpu_custom_call.1} parent=79 // pred_check
          %p4053 = pneg %p329
        $region82: #{tpu_custom_call.1} parent=79 // pred_check_branch
          %4055 = sbr.rel (%p4053) target = $region84
        $region83: #{tpu_custom_call.1} parent=79 // pred_region
          %s4056 = sand.u32 %s314, 1
          %s4057 = scalar_lea.sflag [#allocation3], %s4056
          %s4058 = sand.u32 %s314, 1
          %s4059 = smul.addr %s4058, 8
          %s4060 = scalar_lea.vmem [#allocation2], %s4059
          %4061 = dma.done %s4057, 128
        $region84: #{tpu_custom_call.1} parent=79 // pred_fallthru
          _
      $region80: #{tpu_custom_call.1} parent=5 // pred_fallthru
        _
    $region6: #{tpu_custom_call.1} parent=1 // loop_footer
      %s26 = sadd.s32 1, %s22
    $region7: #{tpu_custom_call.1} parent=1 // loop_footer_branch
      %21 = sbr.rel target = $region3
    $region8: #{tpu_custom_call.1} parent=1 // loop_exit
      _
    %4062 = vsyncpa [#allocation3], 1
    %s4063 = scalar_lea.sflag [#allocation3], 1
    %4064 = vsyncpa %s4063, 1

</llo_original>
